<compile_context>
chip_gen: v5e
topology: v5e:2x2
jax: 0.10.0
libtpu: 0.0.40
codegen_flags: <defaults>
</compile_context>

<pallas_src>
import functools
import math

import jax
import jax.numpy as jnp
from jax.experimental import pallas as pl
from jax.experimental.pallas import tpu as pltpu

LANE = 128


def _rup(x, m):
    return (x + m - 1) // m * m


def _cpad(c):
    return _rup(max(int(c), 1), LANE)


# ----------------------------------------------------------------------------
# One fused HG_Block kernel.
#   [optional depthwise 3x3/s2 downsample prologue] ->
#   3x3 ConvBNReLU chain (squeeze matmul folded into the loop) ->
#   1x1 squeeze -> 1x1 excite -> ReLU -> optional residual add.
# Everything stays in VMEM; the concat is never materialised.
# ----------------------------------------------------------------------------
def _make_block_kernel(H, W, L, Cp_in, Cp_mid, Cp_half, Cp_out, buf_len,
                       residual, fuse_downsample):
    Wp = W + 2
    P0 = Wp + 1                  # flat offset of spatial (0, 0) inside the slab
    Ms = H * Wp                  # flat strip covering all output rows
    tail = buf_len - (P0 + Ms)
    tap_offsets = [(dy - 1) * Wp + (dx - 1) for dy in range(3) for dx in range(3)]

    def kernel(*refs):
        it = iter(refs)
        if fuse_downsample:
            ph_ref = next(it)          # (1, 4, LQ, Cp_in) phase-decomposed input, f32
            wdw_ref = next(it)         # (9, Cp_in) depthwise weights (BN folded), f32
            bdw_ref = next(it)         # (1, Cp_in) f32
        else:
            xin_ref = next(it)         # (1, buf_len, Cp_in) padded-flat slab, bf16
        w_l, b_l = [], []
        for _ in range(L):
            w_l.append(next(it))       # (9, cp_src, Cp_mid) bf16
            b_l.append(next(it))       # (1, Cp_mid) f32
        wsq = [next(it) for _ in range(L + 1)]   # per-source squeeze pieces, bf16
        bsq_ref = next(it)             # (1, Cp_half) f32
        wex_ref = next(it)             # (Cp_half, Cp_out) bf16
        bex_ref = next(it)             # (1, Cp_out) f32
        out_ref = next(it)             # (1, buf_len, Cp_out) bf16
        hbuf_ref = next(it)            # (1, buf_len, Cp_mid) bf16 scratch (single slab)
        if fuse_downsample:
            xin_ref = next(it)         # (1, buf_len, Cp_in) bf16 scratch

        # Column-validity mask over the flat strip: row m is valid iff m % Wp < W.
        m_idx = jax.lax.broadcasted_iota(jnp.int32, (Ms, 1), 0)
        mask = ((m_idx % Wp) < W).astype(jnp.float32)

        def zero_pads(ref, cp):
            # zero the leading padding rows and the trailing tail ONCE
            ref[0, 0:P0, :] = jnp.zeros((P0, cp), ref.dtype)
            ref[0, P0 + Ms:buf_len, :] = jnp.zeros((tail, cp), ref.dtype)

        def store_strip(ref, y_f32):
            # ONE masked full-strip store (padding columns forced to zero)
            ref[0, P0:P0 + Ms, :] = (y_f32 * mask).astype(ref.dtype)

        # ---- fused depthwise 3x3 / stride-2 downsample prologue (block 0) ----
        if fuse_downsample:
            wrows = wdw_ref[...]                                  # hoisted single load
            acc = None
            for dy in range(3):
                for dx in range(3):
                    t = dy * 3 + dx
                    phase = (dy % 2) * 2 + (dx % 2)
                    shift = (dy // 2) * Wp + (dx // 2)
                    tap = ph_ref[0, phase, shift:shift + Ms, :]
                    term = tap * wrows[t:t + 1, :]                # depthwise MAC (VPU, f32)
                    acc = term if acc is None else acc + term
            zero_pads(xin_ref, Cp_in)
            store_strip(xin_ref, acc + bdw_ref[...])

        def conv3x3(src_ref, w_ref, b_ref):
            # 9 accumulating bf16 matmuls, one per tap (no packed-patch scratch)
            acc = None
            for t, off in enumerate(tap_offsets):
                tap = src_ref[0, P0 + off:P0 + off + Ms, :]       # bf16 unit-stride slice
                term = jnp.dot(tap, w_ref[t], preferred_element_type=jnp.float32)
                acc = term if acc is None else acc + term
            return jnp.maximum(acc + b_ref[...], 0.0)             # (Ms, Cp_mid) f32

        # ---- 3x3 chain with the squeeze matmul folded into the loop ----
        acc_sq = jnp.dot(xin_ref[0, P0:P0 + Ms, :], wsq[0][...],
                         preferred_element_type=jnp.float32)
        if L > 1:
            zero_pads(hbuf_ref, Cp_mid)
        src_ref = xin_ref
        for l in range(L):
            h = conv3x3(src_ref, w_l[l], b_l[l])
            acc_sq = acc_sq + jnp.dot(h.astype(jnp.bfloat16), wsq[l + 1][...],
                                      preferred_element_type=jnp.float32)
            if l < L - 1:
                # single-slab ping: safe to overwrite in place, the previous
                # layer's taps were already consumed as values above
                store_strip(hbuf_ref, h)
                src_ref = hbuf_ref

        # ---- aggregation squeeze / excite (+ residual) epilogue ----
        sq = jnp.maximum(acc_sq + bsq_ref[...], 0.0)
        y = jnp.dot(sq.astype(jnp.bfloat16), wex_ref[...],
                    preferred_element_type=jnp.float32)
        y = jnp.maximum(y + bex_ref[...], 0.0)
        if residual:
            # re-slice the input slab here instead of holding it live all kernel
            y = y + xin_ref[0, P0:P0 + Ms, :].astype(jnp.float32)
        zero_pads(out_ref, Cp_out)
        store_strip(out_ref, y)

    return kernel


# ----------------------------------------------------------------------------
# HG_Stage forward (downsample=True, light_block=False, kernel_size=3,
#                   use_lab=False, agg='se', drop_path=0.0)
# ----------------------------------------------------------------------------
def hg_stage_forward(params, x_nchw):
    x = jnp.transpose(x_nchw, (0, 2, 3, 1)).astype(jnp.float32)   # NCHW -> NHWC
    N, H0, W0, Cin = x.shape
    assert H0 % 2 == 0 and W0 % 2 == 0, "stride-2 downsample expects even H/W"
    H, W = H0 // 2, W0 // 2
    Wp = W + 2
    Ms = H * Wp
    buf_len = _rup((H + 2) * Wp + 2, 8)
    Cp_in = _cpad(Cin)
    act_dtype = jnp.bfloat16            # inter/intra-block activation storage

    # --- phase-decomposed (2x2), Wp-stride padded input for the fused s2 depthwise ---
    x_cp = jnp.pad(x, ((0, 0), (0, 0), (0, 0), (0, Cp_in - Cin)))
    xsp = jnp.pad(x_cp, ((0, 0), (1, 1), (1, 1), (0, 0)))
    Hq, Wq = (H0 + 2) // 2, (W0 + 2) // 2
    ph = xsp.reshape(N, Hq, 2, Wq, 2, Cp_in).transpose(0, 2, 4, 1, 3, 5)
    ph = ph.reshape(N, 4, Hq, Wq, Cp_in)
    ph = jnp.pad(ph, ((0, 0), (0, 0), (0, 0), (0, Wp - Wq), (0, 0)))  # stride Wq->Wp
    LQ = _rup(Hq * Wp + Wp + 2, 8)
    ph = ph.reshape(N, 4, Hq * Wp, Cp_in)
    ph = jnp.pad(ph, ((0, 0), (0, 0), (0, LQ - Hq * Wp), (0, 0)))

    ds = params["downsample"]
    w_dw = (jnp.transpose(ds["w"][:, 0], (1, 2, 0)).reshape(9, Cin)
            * ds["scale"][None, :])
    w_dw = jnp.pad(w_dw, ((0, 0), (0, Cp_in - Cin))).astype(jnp.float32)
    b_dw = jnp.pad(ds["bias"], (0, Cp_in - Cin)).reshape(1, Cp_in).astype(jnp.float32)

    buf = None
    prev_real, Cp_prev = Cin, Cp_in
    for bi, bp in enumerate(params["blocks"]):
        L = len(bp["layers"])
        mid = bp["layers"][0]["w"].shape[0]
        half = bp["sq"]["w"].shape[0]
        outc = bp["ex"]["w"].shape[0]
        Cp_mid, Cp_half, Cp_out = _cpad(mid), _cpad(half), _cpad(outc)
        residual = bi > 0
        fuse_ds = bi == 0
        if residual:
            assert prev_real == outc and Cp_prev == Cp_out

        args, in_specs = [], []
        vmem_in = 0

        def add_input(a, block_shape, index_map):
            nonlocal vmem_in
            args.append(a)
            in_specs.append(pl.BlockSpec(block_shape, index_map))
            vmem_in += 2 * math.prod(block_shape) * a.dtype.itemsize  # double-buffered

        if fuse_ds:
            add_input(ph, (1, 4, LQ, Cp_in), lambda n: (n, 0, 0, 0))
            add_input(w_dw, (9, Cp_in), lambda n: (0, 0))
            add_input(b_dw, (1, Cp_in), lambda n: (0, 0))
        else:
            add_input(buf, (1, buf_len, Cp_prev), lambda n: (n, 0, 0))

        flops = 0
        # 3x3 layer weights: fold BN scale, pad channels, keep as (9, cp, Cp_mid) bf16
        cin_l, cp_l = prev_real, Cp_prev
        for lp in bp["layers"]:
            wl = jnp.transpose(lp["w"], (2, 3, 1, 0)).reshape(9, cin_l, mid)
            wl = wl * lp["scale"][None, None, :]
            wl = jnp.pad(wl, ((0, 0), (0, cp_l - cin_l), (0, Cp_mid - mid)))
            bl = jnp.pad(lp["bias"], (0, Cp_mid - mid)).reshape(1, Cp_mid)
            add_input(wl.astype(jnp.bfloat16), (9, cp_l, Cp_mid), lambda n: (0, 0, 0))
            add_input(bl.astype(jnp.float32), (1, Cp_mid), lambda n: (0, 0))
            flops += 2 * Ms * 9 * cp_l * Cp_mid
            cin_l, cp_l = mid, Cp_mid

        # squeeze 1x1 over the (never materialised) concat, split per source
        wsq_full = (jnp.transpose(bp["sq"]["w"][:, :, 0, 0], (1, 0))
                    * bp["sq"]["scale"][None, :])
        off = 0
        for creal, cpadded in [(prev_real, Cp_prev)] + [(mid, Cp_mid)] * L:
            piece = wsq_full[off:off + creal, :]
            piece = jnp.pad(piece, ((0, cpadded - creal), (0, Cp_half - half)))
            add_input(piece.astype(jnp.bfloat16), (cpadded, Cp_half), lambda n: (0, 0))
            flops += 2 * Ms * cpadded * Cp_half
            off += creal
        bsq = jnp.pad(bp["sq"]["bias"], (0, Cp_half - half)).reshape(1, Cp_half)
        add_input(bsq.astype(jnp.float32), (1, Cp_half), lambda n: (0, 0))

        # excite 1x1
        wex = (jnp.transpose(bp["ex"]["w"][:, :, 0, 0], (1, 0))
               * bp["ex"]["scale"][None, :])
        wex = jnp.pad(wex, ((0, Cp_half - half), (0, Cp_out - outc)))
        add_input(wex.astype(jnp.bfloat16), (Cp_half, Cp_out), lambda n: (0, 0))
        bex = jnp.pad(bp["ex"]["bias"], (0, Cp_out - outc)).reshape(1, Cp_out)
        add_input(bex.astype(jnp.float32), (1, Cp_out), lambda n: (0, 0))
        flops += 2 * Ms * Cp_half * Cp_out

        scratch = [pltpu.VMEM((1, buf_len, Cp_mid), act_dtype)]        # single hbuf slab
        scratch_bytes = buf_len * Cp_mid * 2
        if fuse_ds:
            scratch.append(pltpu.VMEM((1, buf_len, Cp_in), act_dtype))  # downsample slab
            scratch_bytes += buf_len * Cp_in * 2

        # VMEM budget: double-buffered ins/outs + scratch + live f32 strips (headroom)
        vmem_bytes = (vmem_in
                      + 2 * buf_len * Cp_out * 2
                      + scratch_bytes
                      + 6 * _rup(Ms, 8) * max(Cp_prev, Cp_mid, Cp_half, Cp_out) * 4)
        vmem_limit = int(min(max(2 * vmem_bytes, 32 * 1024 * 1024), 64 * 1024 * 1024))

        bytes_accessed = sum(int(a.nbytes) for a in args) + N * buf_len * Cp_out * 2
        cost = pl.CostEstimate(flops=int(N * flops), transcendentals=0,
                               bytes_accessed=int(bytes_accessed))

        kernel = _make_block_kernel(H, W, L, Cp_prev, Cp_mid, Cp_half, Cp_out,
                                    buf_len, residual, fuse_ds)
        buf = pl.pallas_call(
            kernel,
            out_shape=jax.ShapeDtypeStruct((N, buf_len, Cp_out), act_dtype),
            grid=(N,),
            in_specs=in_specs,
            out_specs=pl.BlockSpec((1, buf_len, Cp_out), lambda n: (n, 0, 0)),
            scratch_shapes=scratch,
            compiler_params=pltpu.CompilerParams(
                dimension_semantics=("parallel",),
                vmem_limit_bytes=vmem_limit),
            cost_estimate=cost,
        )(*args)
        prev_real, Cp_prev = outc, Cp_out

    # extract the valid interior of the padded-flat slab, back to NCHW f32
    Hp = H + 2
    y = buf[:, :Hp * Wp, :].reshape(N, Hp, Wp, Cp_prev)
    y = y[:, 1:H + 1, 1:W + 1, :prev_real].astype(jnp.float32)
    return jnp.transpose(y, (0, 3, 1, 2))


# ----------------------------------------------------------------------------
# Deterministic parameter init (BatchNorm folded into eval-mode scale/bias)
# ----------------------------------------------------------------------------
def _init_conv_bn(key, cout, cin_per_group, k):
    k1, k2, k3, k4, k5 = jax.random.split(key, 5)
    w = jax.random.normal(k1, (cout, cin_per_group, k, k), jnp.float32) * 0.1
    gamma = jax.random.uniform(k2, (cout,), jnp.float32, 0.8, 1.2)
    beta = jax.random.uniform(k3, (cout,), jnp.float32, -0.1, 0.1)
    mean = jax.random.uniform(k4, (cout,), jnp.float32, -0.1, 0.1)
    var = jax.random.uniform(k5, (cout,), jnp.float32, 0.5, 1.5)
    scale = gamma / jnp.sqrt(var + 1e-5)
    bias = beta - mean * scale
    return {"w": w, "scale": scale, "bias": bias}


def init_hg_stage(key, in_chs, mid_chs, out_chs, block_num, layer_num, kernel_size=3):
    keys = iter(jax.random.split(key, 2 + block_num * (layer_num + 2)))
    params = {"downsample": _init_conv_bn(next(keys), in_chs, 1, 3)}  # depthwise 3x3 s2
    blocks = []
    for bi in range(block_num):
        bin_chs = in_chs if bi == 0 else out_chs
        layers = []
        for li in range(layer_num):
            lin = bin_chs if li == 0 else mid_chs
            layers.append(_init_conv_bn(next(keys), mid_chs, lin, kernel_size))
        total = bin_chs + layer_num * mid_chs
        blocks.append({
            "layers": layers,
            "sq": _init_conv_bn(next(keys), out_chs // 2, total, 1),    # agg='se' squeeze
            "ex": _init_conv_bn(next(keys), out_chs, out_chs // 2, 1),  # agg='se' excite
        })
    params["blocks"] = blocks
    return params


# ----------------------------------------------------------------------------
# Pure-JAX reference (lax conv, f32) for correctness check
# ----------------------------------------------------------------------------
def _ref_conv(x, p, stride, groups, relu):
    w = jnp.transpose(p["w"], (2, 3, 1, 0))  # -> HWIO
    K = p["w"].shape[-1]
    pad = (K - 1) // 2
    y = jax.lax.conv_general_dilated(
        x, w, (stride, stride), [(pad, pad), (pad, pad)],
        dimension_numbers=("NHWC", "HWIO", "NHWC"), feature_group_count=groups)
    y = y * p["scale"] + p["bias"]
    return jnp.maximum(y, 0.0) if relu else y


def ref_forward(params, x_nchw):
    x = jnp.transpose(x_nchw, (0, 2, 3, 1))
    x = _ref_conv(x, params["downsample"], 2, x.shape[-1], False)
    for bi, bp in enumerate(params["blocks"]):
        identity = x
        outs = [x]
        h = x
        for lp in bp["layers"]:
            h = _ref_conv(h, lp, 1, 1, True)
            outs.append(h)
        h = jnp.concatenate(outs, axis=-1)
        h = _ref_conv(h, bp["sq"], 1, 1, True)
        h = _ref_conv(h, bp["ex"], 1, 1, True)
        if bi > 0:
            h = h + identity
        x = h
    return jnp.transpose(x, (0, 3, 1, 2))


if __name__ == "__main__":
    # HG_Stage(in_chs=4, mid_chs=8, out_chs=16, block_num=2, layer_num=2,
    #          downsample=True, light_block=False, kernel_size=3,
    #          use_lab=False, agg='se', drop_path=0.0)
    in_chs, mid_chs, out_chs, block_num, layer_num = 4, 8, 16, 2, 2

    key = jax.random.PRNGKey(0)
    kx, kp = jax.random.split(key)
    x = jax.random.normal(kx, (2, in_chs, 16, 16), jnp.float32)  # NCHW like PyTorch
    params = init_hg_stage(kp, in_chs, mid_chs, out_chs, block_num, layer_num)

    fwd = jax.jit(functools.partial(hg_stage_forward, params))
    out = jax.block_until_ready(fwd(x))

    ref = jax.block_until_ready(ref_forward(params, x))
    assert out.shape == (2, out_chs, 8, 8), out.shape
    # bf16 MXU operands + bf16 activation slabs -> looser tolerance than pure f32
    err = float(jnp.max(jnp.abs(out - ref)))
    assert jnp.allclose(out, ref, atol=4e-2, rtol=4e-2), err

    print("KERNEL_OK")
</pallas_src>

<mosaic_0001>
module attributes {stable_mosaic.version = 11 : i64} {
  func.func @kernel(%arg0: i32, %arg1: memref<1x4x104x128xf32, #tpu.memory_space<vmem>>, %arg2: memref<9x128xf32, #tpu.memory_space<vmem>>, %arg3: memref<1x128xf32, #tpu.memory_space<vmem>>, %arg4: memref<9x128x128xbf16, #tpu.memory_space<vmem>>, %arg5: memref<1x128xf32, #tpu.memory_space<vmem>>, %arg6: memref<9x128x128xbf16, #tpu.memory_space<vmem>>, %arg7: memref<1x128xf32, #tpu.memory_space<vmem>>, %arg8: memref<128x128xbf16, #tpu.memory_space<vmem>>, %arg9: memref<128x128xbf16, #tpu.memory_space<vmem>>, %arg10: memref<128x128xbf16, #tpu.memory_space<vmem>>, %arg11: memref<1x128xf32, #tpu.memory_space<vmem>>, %arg12: memref<128x128xbf16, #tpu.memory_space<vmem>>, %arg13: memref<1x128xf32, #tpu.memory_space<vmem>>, %arg14: memref<1x104x128xbf16, #tpu.memory_space<vmem>>, %arg15: memref<1x104x128xbf16, #tpu.memory_space<vmem>>, %arg16: memref<1x104x128xbf16, #tpu.memory_space<vmem>>) attributes {dimension_semantics = [#tpu.dimension_semantics<parallel>], iteration_bounds = array<i64: 2>, scalar_prefetch = 0 : i64, scratch_operands = 2 : i64, tpu.core_type = #tpu.core_type<tc>, window_params = [{transform_indices = @transform_0, window_bounds = array<i64: 1, 4, 104, 128>}, {pipeline_mode = #tpu.pipeline_mode<synchronous>, transform_indices = @transform_1, window_bounds = array<i64: 9, 128>}, {pipeline_mode = #tpu.pipeline_mode<synchronous>, transform_indices = @transform_2, window_bounds = array<i64: 1, 128>}, {pipeline_mode = #tpu.pipeline_mode<synchronous>, transform_indices = @transform_3, window_bounds = array<i64: 9, 128, 128>}, {pipeline_mode = #tpu.pipeline_mode<synchronous>, transform_indices = @transform_4, window_bounds = array<i64: 1, 128>}, {pipeline_mode = #tpu.pipeline_mode<synchronous>, transform_indices = @transform_5, window_bounds = array<i64: 9, 128, 128>}, {pipeline_mode = #tpu.pipeline_mode<synchronous>, transform_indices = @transform_6, window_bounds = array<i64: 1, 128>}, {pipeline_mode = #tpu.pipeline_mode<synchronous>, transform_indices = @transform_7, window_bounds = array<i64: 128, 128>}, {pipeline_mode = #tpu.pipeline_mode<synchronous>, transform_indices = @transform_8, window_bounds = array<i64: 128, 128>}, {pipeline_mode = #tpu.pipeline_mode<synchronous>, transform_indices = @transform_9, window_bounds = array<i64: 128, 128>}, {pipeline_mode = #tpu.pipeline_mode<synchronous>, transform_indices = @transform_10, window_bounds = array<i64: 1, 128>}, {pipeline_mode = #tpu.pipeline_mode<synchronous>, transform_indices = @transform_11, window_bounds = array<i64: 128, 128>}, {pipeline_mode = #tpu.pipeline_mode<synchronous>, transform_indices = @transform_12, window_bounds = array<i64: 1, 128>}, {transform_indices = @transform_13, window_bounds = array<i64: 1, 104, 128>}]} {
    %0 = tpu.iota {dimensions = array<i32: 0>} : vector<80x1xi32>
    %c10_i32 = arith.constant 10 : i32
    %c0_i32 = arith.constant 0 : i32
    %1 = arith.cmpi eq, %c10_i32, %c0_i32 : i32
    %c1_i32 = arith.constant 1 : i32
    %2 = arith.select %1, %c1_i32, %c10_i32 : i32
    %3 = vector.broadcast %2 : i32 to vector<80x1xi32>
    %4 = arith.remsi %0, %3 : vector<80x1xi32>
    %c0_i32_0 = arith.constant 0 : i32
    %5 = vector.broadcast %c0_i32_0 : i32 to vector<80x1xi32>
    %6 = arith.cmpi ne, %4, %5 : vector<80x1xi32>
    %c0_i32_1 = arith.constant 0 : i32
    %7 = vector.broadcast %c0_i32_1 : i32 to vector<80x1xi32>
    %8 = arith.cmpi slt, %4, %7 : vector<80x1xi32>
    %c0_i32_2 = arith.constant 0 : i32
    %9 = arith.cmpi slt, %2, %c0_i32_2 : i32
    %10 = vector.broadcast %9 : i1 to vector<80x1xi1>
    %11 = vector.broadcast %10 : vector<80x1xi1> to vector<80x1xi1>
    %12 = arith.xori %8, %11 : vector<80x1xi1>
    %13 = arith.andi %12, %6 : vector<80x1xi1>
    %14 = vector.broadcast %2 : i32 to vector<80x1xi32>
    %15 = arith.addi %4, %14 : vector<80x1xi32>
    %16 = arith.select %13, %15, %4 : vector<80x1xi1>, vector<80x1xi32>
    %c8_i32 = arith.constant 8 : i32
    %17 = vector.broadcast %c8_i32 : i32 to vector<80x1xi32>
    %18 = arith.cmpi slt, %16, %17 : vector<80x1xi32>
    %19 = arith.extui %18 : vector<80x1xi1> to vector<80x1xi32>
    %20 = arith.sitofp %19 : vector<80x1xi32> to vector<80x1xf32>
    %c0 = arith.constant 0 : index
    %c0_3 = arith.constant 0 : index
    %21 = vector.load %arg2[%c0, %c0_3] : memref<9x128xf32, #tpu.memory_space<vmem>>, vector<9x128xf32>
    %c0_4 = arith.constant 0 : index
    %c0_5 = arith.constant 0 : index
    %c0_6 = arith.constant 0 : index
    %c0_7 = arith.constant 0 : index
    %22 = vector.load %arg1[%c0_4, %c0_5, %c0_6, %c0_7] : memref<1x4x104x128xf32, #tpu.memory_space<vmem>>, vector<1x1x80x128xf32>
    %23 = vector.shape_cast %22 : vector<1x1x80x128xf32> to vector<80x128xf32>
    %24 = vector.extract_strided_slice %21 {offsets = [0, 0], sizes = [1, 128], strides = [1, 1]} : vector<9x128xf32> to vector<1x128xf32>
    %25 = vector.broadcast %24 : vector<1x128xf32> to vector<80x128xf32>
    %26 = arith.mulf %23, %25 : vector<80x128xf32>
    %c0_8 = arith.constant 0 : index
    %c1 = arith.constant 1 : index
    %c0_9 = arith.constant 0 : index
    %c0_10 = arith.constant 0 : index
    %27 = vector.load %arg1[%c0_8, %c1, %c0_9, %c0_10] : memref<1x4x104x128xf32, #tpu.memory_space<vmem>>, vector<1x1x80x128xf32>
    %28 = vector.shape_cast %27 : vector<1x1x80x128xf32> to vector<80x128xf32>
    %29 = vector.extract_strided_slice %21 {offsets = [1, 0], sizes = [1, 128], strides = [1, 1]} : vector<9x128xf32> to vector<1x128xf32>
    %30 = vector.broadcast %29 : vector<1x128xf32> to vector<80x128xf32>
    %31 = arith.mulf %28, %30 : vector<80x128xf32>
    %32 = arith.addf %26, %31 : vector<80x128xf32>
    %c0_11 = arith.constant 0 : index
    %c0_12 = arith.constant 0 : index
    %c1_13 = arith.constant 1 : index
    %c0_14 = arith.constant 0 : index
    %33 = vector.load %arg1[%c0_11, %c0_12, %c1_13, %c0_14] : memref<1x4x104x128xf32, #tpu.memory_space<vmem>>, vector<1x1x80x128xf32>
    %34 = vector.shape_cast %33 : vector<1x1x80x128xf32> to vector<80x128xf32>
    %35 = vector.extract_strided_slice %21 {offsets = [2, 0], sizes = [1, 128], strides = [1, 1]} : vector<9x128xf32> to vector<1x128xf32>
    %36 = vector.broadcast %35 : vector<1x128xf32> to vector<80x128xf32>
    %37 = arith.mulf %34, %36 : vector<80x128xf32>
    %38 = arith.addf %32, %37 : vector<80x128xf32>
    %c0_15 = arith.constant 0 : index
    %c2 = arith.constant 2 : index
    %c0_16 = arith.constant 0 : index
    %c0_17 = arith.constant 0 : index
    %39 = vector.load %arg1[%c0_15, %c2, %c0_16, %c0_17] : memref<1x4x104x128xf32, #tpu.memory_space<vmem>>, vector<1x1x80x128xf32>
    %40 = vector.shape_cast %39 : vector<1x1x80x128xf32> to vector<80x128xf32>
    %41 = vector.extract_strided_slice %21 {offsets = [3, 0], sizes = [1, 128], strides = [1, 1]} : vector<9x128xf32> to vector<1x128xf32>
    %42 = vector.broadcast %41 : vector<1x128xf32> to vector<80x128xf32>
    %43 = arith.mulf %40, %42 : vector<80x128xf32>
    %44 = arith.addf %38, %43 : vector<80x128xf32>
    %c0_18 = arith.constant 0 : index
    %c3 = arith.constant 3 : index
    %c0_19 = arith.constant 0 : index
    %c0_20 = arith.constant 0 : index
    %45 = vector.load %arg1[%c0_18, %c3, %c0_19, %c0_20] : memref<1x4x104x128xf32, #tpu.memory_space<vmem>>, vector<1x1x80x128xf32>
    %46 = vector.shape_cast %45 : vector<1x1x80x128xf32> to vector<80x128xf32>
    %47 = vector.extract_strided_slice %21 {offsets = [4, 0], sizes = [1, 128], strides = [1, 1]} : vector<9x128xf32> to vector<1x128xf32>
    %48 = vector.broadcast %47 : vector<1x128xf32> to vector<80x128xf32>
    %49 = arith.mulf %46, %48 : vector<80x128xf32>
    %50 = arith.addf %44, %49 : vector<80x128xf32>
    %c0_21 = arith.constant 0 : index
    %c2_22 = arith.constant 2 : index
    %c1_23 = arith.constant 1 : index
    %c0_24 = arith.constant 0 : index
    %51 = vector.load %arg1[%c0_21, %c2_22, %c1_23, %c0_24] : memref<1x4x104x128xf32, #tpu.memory_space<vmem>>, vector<1x1x80x128xf32>
    %52 = vector.shape_cast %51 : vector<1x1x80x128xf32> to vector<80x128xf32>
    %53 = vector.extract_strided_slice %21 {offsets = [5, 0], sizes = [1, 128], strides = [1, 1]} : vector<9x128xf32> to vector<1x128xf32>
    %54 = vector.broadcast %53 : vector<1x128xf32> to vector<80x128xf32>
    %55 = arith.mulf %52, %54 : vector<80x128xf32>
    %56 = arith.addf %50, %55 : vector<80x128xf32>
    %c0_25 = arith.constant 0 : index
    %c0_26 = arith.constant 0 : index
    %c10 = arith.constant 10 : index
    %c0_27 = arith.constant 0 : index
    %57 = vector.load %arg1[%c0_25, %c0_26, %c10, %c0_27] : memref<1x4x104x128xf32, #tpu.memory_space<vmem>>, vector<1x1x80x128xf32>
    %58 = vector.shape_cast %57 : vector<1x1x80x128xf32> to vector<80x128xf32>
    %59 = vector.extract_strided_slice %21 {offsets = [6, 0], sizes = [1, 128], strides = [1, 1]} : vector<9x128xf32> to vector<1x128xf32>
    %60 = vector.broadcast %59 : vector<1x128xf32> to vector<80x128xf32>
    %61 = arith.mulf %58, %60 : vector<80x128xf32>
    %62 = arith.addf %56, %61 : vector<80x128xf32>
    %c0_28 = arith.constant 0 : index
    %c1_29 = arith.constant 1 : index
    %c10_30 = arith.constant 10 : index
    %c0_31 = arith.constant 0 : index
    %63 = vector.load %arg1[%c0_28, %c1_29, %c10_30, %c0_31] : memref<1x4x104x128xf32, #tpu.memory_space<vmem>>, vector<1x1x80x128xf32>
    %64 = vector.shape_cast %63 : vector<1x1x80x128xf32> to vector<80x128xf32>
    %65 = vector.extract_strided_slice %21 {offsets = [7, 0], sizes = [1, 128], strides = [1, 1]} : vector<9x128xf32> to vector<1x128xf32>
    %66 = vector.broadcast %65 : vector<1x128xf32> to vector<80x128xf32>
    %67 = arith.mulf %64, %66 : vector<80x128xf32>
    %68 = arith.addf %62, %67 : vector<80x128xf32>
    %c0_32 = arith.constant 0 : index
    %c0_33 = arith.constant 0 : index
    %c11 = arith.constant 11 : index
    %c0_34 = arith.constant 0 : index
    %69 = vector.load %arg1[%c0_32, %c0_33, %c11, %c0_34] : memref<1x4x104x128xf32, #tpu.memory_space<vmem>>, vector<1x1x80x128xf32>
    %70 = vector.shape_cast %69 : vector<1x1x80x128xf32> to vector<80x128xf32>
    %71 = vector.extract_strided_slice %21 {offsets = [8, 0], sizes = [1, 128], strides = [1, 1]} : vector<9x128xf32> to vector<1x128xf32>
    %72 = vector.broadcast %71 : vector<1x128xf32> to vector<80x128xf32>
    %73 = arith.mulf %70, %72 : vector<80x128xf32>
    %74 = arith.addf %68, %73 : vector<80x128xf32>
    %cst = arith.constant 0.000000e+00 : bf16
    %75 = vector.broadcast %cst : bf16 to vector<11x128xbf16>
    %c0_35 = arith.constant 0 : index
    %c0_36 = arith.constant 0 : index
    %c0_37 = arith.constant 0 : index
    %76 = vector.load %arg16[%c0_35, %c0_36, %c0_37] : memref<1x104x128xbf16, #tpu.memory_space<vmem>>, vector<1x11x128xbf16>
    %77 = vector.shape_cast %76 : vector<1x11x128xbf16> to vector<11x128xbf16>
    %78 = vector.shape_cast %75 : vector<11x128xbf16> to vector<1x11x128xbf16>
    tpu.vector_store %arg16[%c0_35, %c0_36, %c0_37], %78 {strides = array<i32>} : memref<1x104x128xbf16, #tpu.memory_space<vmem>>, vector<1x11x128xbf16>,
    %cst_38 = arith.constant 0.000000e+00 : bf16
    %79 = vector.broadcast %cst_38 : bf16 to vector<13x128xbf16>
    %c0_39 = arith.constant 0 : index
    %c91 = arith.constant 91 : index
    %c0_40 = arith.constant 0 : index
    %80 = vector.load %arg16[%c0_39, %c91, %c0_40] : memref<1x104x128xbf16, #tpu.memory_space<vmem>>, vector<1x13x128xbf16>
    %81 = vector.shape_cast %80 : vector<1x13x128xbf16> to vector<13x128xbf16>
    %82 = vector.shape_cast %79 : vector<13x128xbf16> to vector<1x13x128xbf16>
    tpu.vector_store %arg16[%c0_39, %c91, %c0_40], %82 {strides = array<i32>} : memref<1x104x128xbf16, #tpu.memory_space<vmem>>, vector<1x13x128xbf16>,
    %c0_41 = arith.constant 0 : index
    %c0_42 = arith.constant 0 : index
    %83 = vector.load %arg3[%c0_41, %c0_42] : memref<1x128xf32, #tpu.memory_space<vmem>>, vector<1x128xf32>
    %84 = vector.broadcast %83 : vector<1x128xf32> to vector<80x128xf32>
    %85 = arith.addf %74, %84 : vector<80x128xf32>
    %86 = vector.broadcast %20 : vector<80x1xf32> to vector<80x128xf32>
    %87 = arith.mulf %85, %86 : vector<80x128xf32>
    %88 = arith.truncf %87 : vector<80x128xf32> to vector<80x128xbf16>
    %c0_43 = arith.constant 0 : index
    %c11_44 = arith.constant 11 : index
    %c0_45 = arith.constant 0 : index
    %89 = vector.load %arg16[%c0_43, %c11_44, %c0_45] : memref<1x104x128xbf16, #tpu.memory_space<vmem>>, vector<1x80x128xbf16>
    %90 = vector.shape_cast %89 : vector<1x80x128xbf16> to vector<80x128xbf16>
    %91 = vector.shape_cast %88 : vector<80x128xbf16> to vector<1x80x128xbf16>
    tpu.vector_store %arg16[%c0_43, %c11_44, %c0_45], %91 {strides = array<i32>} : memref<1x104x128xbf16, #tpu.memory_space<vmem>>, vector<1x80x128xbf16>,
    %c0_46 = arith.constant 0 : index
    %c11_47 = arith.constant 11 : index
    %c0_48 = arith.constant 0 : index
    %92 = vector.load %arg16[%c0_46, %c11_47, %c0_48] : memref<1x104x128xbf16, #tpu.memory_space<vmem>>, vector<1x80x128xbf16>
    %93 = vector.shape_cast %92 : vector<1x80x128xbf16> to vector<80x128xbf16>
    %c0_49 = arith.constant 0 : index
    %c0_50 = arith.constant 0 : index
    %94 = vector.load %arg8[%c0_49, %c0_50] : memref<128x128xbf16, #tpu.memory_space<vmem>>, vector<128x128xbf16>
    %cst_51 = arith.constant dense<0.000000e+00> : vector<80x128xf32>
    %95 = tpu.matmul %93, %94, %cst_51 {dimension_numbers = #tpu.dot_dimension_numbers<[1], [0], [0], [1], [0, 0, 1, 1], [], []>} : vector<80x128xbf16>, vector<128x128xbf16>, vector<80x128xf32> -> vector<80x128xf32>
    %cst_52 = arith.constant 0.000000e+00 : bf16
    %96 = vector.broadcast %cst_52 : bf16 to vector<11x128xbf16>
    %c0_53 = arith.constant 0 : index
    %c0_54 = arith.constant 0 : index
    %c0_55 = arith.constant 0 : index
    %97 = vector.load %arg15[%c0_53, %c0_54, %c0_55] : memref<1x104x128xbf16, #tpu.memory_space<vmem>>, vector<1x11x128xbf16>
    %98 = vector.shape_cast %97 : vector<1x11x128xbf16> to vector<11x128xbf16>
    %99 = vector.shape_cast %96 : vector<11x128xbf16> to vector<1x11x128xbf16>
    tpu.vector_store %arg15[%c0_53, %c0_54, %c0_55], %99 {strides = array<i32>} : memref<1x104x128xbf16, #tpu.memory_space<vmem>>, vector<1x11x128xbf16>,
    %cst_56 = arith.constant 0.000000e+00 : bf16
    %100 = vector.broadcast %cst_56 : bf16 to vector<13x128xbf16>
    %c0_57 = arith.constant 0 : index
    %c91_58 = arith.constant 91 : index
    %c0_59 = arith.constant 0 : index
    %101 = vector.load %arg15[%c0_57, %c91_58, %c0_59] : memref<1x104x128xbf16, #tpu.memory_space<vmem>>, vector<1x13x128xbf16>
    %102 = vector.shape_cast %101 : vector<1x13x128xbf16> to vector<13x128xbf16>
    %103 = vector.shape_cast %100 : vector<13x128xbf16> to vector<1x13x128xbf16>
    tpu.vector_store %arg15[%c0_57, %c91_58, %c0_59], %103 {strides = array<i32>} : memref<1x104x128xbf16, #tpu.memory_space<vmem>>, vector<1x13x128xbf16>,
    %c0_60 = arith.constant 0 : index
    %c0_61 = arith.constant 0 : index
    %c0_62 = arith.constant 0 : index
    %104 = vector.load %arg16[%c0_60, %c0_61, %c0_62] : memref<1x104x128xbf16, #tpu.memory_space<vmem>>, vector<1x80x128xbf16>
    %105 = vector.shape_cast %104 : vector<1x80x128xbf16> to vector<80x128xbf16>
    %c0_63 = arith.constant 0 : index
    %c0_64 = arith.constant 0 : index
    %c0_65 = arith.constant 0 : index
    %106 = vector.load %arg4[%c0_63, %c0_64, %c0_65] : memref<9x128x128xbf16, #tpu.memory_space<vmem>>, vector<1x128x128xbf16>
    %107 = vector.shape_cast %106 : vector<1x128x128xbf16> to vector<128x128xbf16>
    %cst_66 = arith.constant dense<0.000000e+00> : vector<80x128xf32>
    %108 = tpu.matmul %105, %107, %cst_66 {dimension_numbers = #tpu.dot_dimension_numbers<[1], [0], [0], [1], [0, 0, 1, 1], [], []>} : vector<80x128xbf16>, vector<128x128xbf16>, vector<80x128xf32> -> vector<80x128xf32>
    %c0_67 = arith.constant 0 : index
    %c1_68 = arith.constant 1 : index
    %c0_69 = arith.constant 0 : index
    %109 = vector.load %arg16[%c0_67, %c1_68, %c0_69] : memref<1x104x128xbf16, #tpu.memory_space<vmem>>, vector<1x80x128xbf16>
    %110 = vector.shape_cast %109 : vector<1x80x128xbf16> to vector<80x128xbf16>
    %c1_70 = arith.constant 1 : index
    %c0_71 = arith.constant 0 : index
    %c0_72 = arith.constant 0 : index
    %111 = vector.load %arg4[%c1_70, %c0_71, %c0_72] : memref<9x128x128xbf16, #tpu.memory_space<vmem>>, vector<1x128x128xbf16>
    %112 = vector.shape_cast %111 : vector<1x128x128xbf16> to vector<128x128xbf16>
    %cst_73 = arith.constant dense<0.000000e+00> : vector<80x128xf32>
    %113 = tpu.matmul %110, %112, %cst_73 {dimension_numbers = #tpu.dot_dimension_numbers<[1], [0], [0], [1], [0, 0, 1, 1], [], []>} : vector<80x128xbf16>, vector<128x128xbf16>, vector<80x128xf32> -> vector<80x128xf32>
    %114 = arith.addf %108, %113 : vector<80x128xf32>
    %c0_74 = arith.constant 0 : index
    %c2_75 = arith.constant 2 : index
    %c0_76 = arith.constant 0 : index
    %115 = vector.load %arg16[%c0_74, %c2_75, %c0_76] : memref<1x104x128xbf16, #tpu.memory_space<vmem>>, vector<1x80x128xbf16>
    %116 = vector.shape_cast %115 : vector<1x80x128xbf16> to vector<80x128xbf16>
    %c2_77 = arith.constant 2 : index
    %c0_78 = arith.constant 0 : index
    %c0_79 = arith.constant 0 : index
    %117 = vector.load %arg4[%c2_77, %c0_78, %c0_79] : memref<9x128x128xbf16, #tpu.memory_space<vmem>>, vector<1x128x128xbf16>
    %118 = vector.shape_cast %117 : vector<1x128x128xbf16> to vector<128x128xbf16>
    %cst_80 = arith.constant dense<0.000000e+00> : vector<80x128xf32>
    %119 = tpu.matmul %116, %118, %cst_80 {dimension_numbers = #tpu.dot_dimension_numbers<[1], [0], [0], [1], [0, 0, 1, 1], [], []>} : vector<80x128xbf16>, vector<128x128xbf16>, vector<80x128xf32> -> vector<80x128xf32>
    %120 = arith.addf %114, %119 : vector<80x128xf32>
    %c0_81 = arith.constant 0 : index
    %c10_82 = arith.constant 10 : index
    %c0_83 = arith.constant 0 : index
    %121 = vector.load %arg16[%c0_81, %c10_82, %c0_83] : memref<1x104x128xbf16, #tpu.memory_space<vmem>>, vector<1x80x128xbf16>
    %122 = vector.shape_cast %121 : vector<1x80x128xbf16> to vector<80x128xbf16>
    %c3_84 = arith.constant 3 : index
    %c0_85 = arith.constant 0 : index
    %c0_86 = arith.constant 0 : index
    %123 = vector.load %arg4[%c3_84, %c0_85, %c0_86] : memref<9x128x128xbf16, #tpu.memory_space<vmem>>, vector<1x128x128xbf16>
    %124 = vector.shape_cast %123 : vector<1x128x128xbf16> to vector<128x128xbf16>
    %cst_87 = arith.constant dense<0.000000e+00> : vector<80x128xf32>
    %125 = tpu.matmul %122, %124, %cst_87 {dimension_numbers = #tpu.dot_dimension_numbers<[1], [0], [0], [1], [0, 0, 1, 1], [], []>} : vector<80x128xbf16>, vector<128x128xbf16>, vector<80x128xf32> -> vector<80x128xf32>
    %126 = arith.addf %120, %125 : vector<80x128xf32>
    %c0_88 = arith.constant 0 : index
    %c11_89 = arith.constant 11 : index
    %c0_90 = arith.constant 0 : index
    %127 = vector.load %arg16[%c0_88, %c11_89, %c0_90] : memref<1x104x128xbf16, #tpu.memory_space<vmem>>, vector<1x80x128xbf16>
    %128 = vector.shape_cast %127 : vector<1x80x128xbf16> to vector<80x128xbf16>
    %c4 = arith.constant 4 : index
    %c0_91 = arith.constant 0 : index
    %c0_92 = arith.constant 0 : index
    %129 = vector.load %arg4[%c4, %c0_91, %c0_92] : memref<9x128x128xbf16, #tpu.memory_space<vmem>>, vector<1x128x128xbf16>
    %130 = vector.shape_cast %129 : vector<1x128x128xbf16> to vector<128x128xbf16>
    %cst_93 = arith.constant dense<0.000000e+00> : vector<80x128xf32>
    %131 = tpu.matmul %128, %130, %cst_93 {dimension_numbers = #tpu.dot_dimension_numbers<[1], [0], [0], [1], [0, 0, 1, 1], [], []>} : vector<80x128xbf16>, vector<128x128xbf16>, vector<80x128xf32> -> vector<80x128xf32>
    %132 = arith.addf %126, %131 : vector<80x128xf32>
    %c0_94 = arith.constant 0 : index
    %c12 = arith.constant 12 : index
    %c0_95 = arith.constant 0 : index
    %133 = vector.load %arg16[%c0_94, %c12, %c0_95] : memref<1x104x128xbf16, #tpu.memory_space<vmem>>, vector<1x80x128xbf16>
    %134 = vector.shape_cast %133 : vector<1x80x128xbf16> to vector<80x128xbf16>
    %c5 = arith.constant 5 : index
    %c0_96 = arith.constant 0 : index
    %c0_97 = arith.constant 0 : index
    %135 = vector.load %arg4[%c5, %c0_96, %c0_97] : memref<9x128x128xbf16, #tpu.memory_space<vmem>>, vector<1x128x128xbf16>
    %136 = vector.shape_cast %135 : vector<1x128x128xbf16> to vector<128x128xbf16>
    %cst_98 = arith.constant dense<0.000000e+00> : vector<80x128xf32>
    %137 = tpu.matmul %134, %136, %cst_98 {dimension_numbers = #tpu.dot_dimension_numbers<[1], [0], [0], [1], [0, 0, 1, 1], [], []>} : vector<80x128xbf16>, vector<128x128xbf16>, vector<80x128xf32> -> vector<80x128xf32>
    %138 = arith.addf %132, %137 : vector<80x128xf32>
    %c0_99 = arith.constant 0 : index
    %c20 = arith.constant 20 : index
    %c0_100 = arith.constant 0 : index
    %139 = vector.load %arg16[%c0_99, %c20, %c0_100] : memref<1x104x128xbf16, #tpu.memory_space<vmem>>, vector<1x80x128xbf16>
    %140 = vector.shape_cast %139 : vector<1x80x128xbf16> to vector<80x128xbf16>
    %c6 = arith.constant 6 : index
    %c0_101 = arith.constant 0 : index
    %c0_102 = arith.constant 0 : index
    %141 = vector.load %arg4[%c6, %c0_101, %c0_102] : memref<9x128x128xbf16, #tpu.memory_space<vmem>>, vector<1x128x128xbf16>
    %142 = vector.shape_cast %141 : vector<1x128x128xbf16> to vector<128x128xbf16>
    %cst_103 = arith.constant dense<0.000000e+00> : vector<80x128xf32>
    %143 = tpu.matmul %140, %142, %cst_103 {dimension_numbers = #tpu.dot_dimension_numbers<[1], [0], [0], [1], [0, 0, 1, 1], [], []>} : vector<80x128xbf16>, vector<128x128xbf16>, vector<80x128xf32> -> vector<80x128xf32>
    %144 = arith.addf %138, %143 : vector<80x128xf32>
    %c0_104 = arith.constant 0 : index
    %c21 = arith.constant 21 : index
    %c0_105 = arith.constant 0 : index
    %145 = vector.load %arg16[%c0_104, %c21, %c0_105] : memref<1x104x128xbf16, #tpu.memory_space<vmem>>, vector<1x80x128xbf16>
    %146 = vector.shape_cast %145 : vector<1x80x128xbf16> to vector<80x128xbf16>
    %c7 = arith.constant 7 : index
    %c0_106 = arith.constant 0 : index
    %c0_107 = arith.constant 0 : index
    %147 = vector.load %arg4[%c7, %c0_106, %c0_107] : memref<9x128x128xbf16, #tpu.memory_space<vmem>>, vector<1x128x128xbf16>
    %148 = vector.shape_cast %147 : vector<1x128x128xbf16> to vector<128x128xbf16>
    %cst_108 = arith.constant dense<0.000000e+00> : vector<80x128xf32>
    %149 = tpu.matmul %146, %148, %cst_108 {dimension_numbers = #tpu.dot_dimension_numbers<[1], [0], [0], [1], [0, 0, 1, 1], [], []>} : vector<80x128xbf16>, vector<128x128xbf16>, vector<80x128xf32> -> vector<80x128xf32>
    %150 = arith.addf %144, %149 : vector<80x128xf32>
    %c0_109 = arith.constant 0 : index
    %c22 = arith.constant 22 : index
    %c0_110 = arith.constant 0 : index
    %151 = vector.load %arg16[%c0_109, %c22, %c0_110] : memref<1x104x128xbf16, #tpu.memory_space<vmem>>, vector<1x80x128xbf16>
    %152 = vector.shape_cast %151 : vector<1x80x128xbf16> to vector<80x128xbf16>
    %c8 = arith.constant 8 : index
    %c0_111 = arith.constant 0 : index
    %c0_112 = arith.constant 0 : index
    %153 = vector.load %arg4[%c8, %c0_111, %c0_112] : memref<9x128x128xbf16, #tpu.memory_space<vmem>>, vector<1x128x128xbf16>
    %154 = vector.shape_cast %153 : vector<1x128x128xbf16> to vector<128x128xbf16>
    %cst_113 = arith.constant dense<0.000000e+00> : vector<80x128xf32>
    %155 = tpu.matmul %152, %154, %cst_113 {dimension_numbers = #tpu.dot_dimension_numbers<[1], [0], [0], [1], [0, 0, 1, 1], [], []>} : vector<80x128xbf16>, vector<128x128xbf16>, vector<80x128xf32> -> vector<80x128xf32>
    %156 = arith.addf %150, %155 : vector<80x128xf32>
    %c0_114 = arith.constant 0 : index
    %c0_115 = arith.constant 0 : index
    %157 = vector.load %arg5[%c0_114, %c0_115] : memref<1x128xf32, #tpu.memory_space<vmem>>, vector<1x128xf32>
    %158 = vector.broadcast %157 : vector<1x128xf32> to vector<80x128xf32>
    %159 = arith.addf %156, %158 : vector<80x128xf32>
    %cst_116 = arith.constant 0.000000e+00 : f32
    %160 = vector.broadcast %cst_116 : f32 to vector<80x128xf32>
    %161 = arith.maximumf %159, %160 : vector<80x128xf32>
    %162 = arith.truncf %161 : vector<80x128xf32> to vector<80x128xbf16>
    %c0_117 = arith.constant 0 : index
    %c0_118 = arith.constant 0 : index
    %163 = vector.load %arg9[%c0_117, %c0_118] : memref<128x128xbf16, #tpu.memory_space<vmem>>, vector<128x128xbf16>
    %cst_119 = arith.constant dense<0.000000e+00> : vector<80x128xf32>
    %164 = tpu.matmul %162, %163, %cst_119 {dimension_numbers = #tpu.dot_dimension_numbers<[1], [0], [0], [1], [0, 0, 1, 1], [], []>} : vector<80x128xbf16>, vector<128x128xbf16>, vector<80x128xf32> -> vector<80x128xf32>
    %165 = arith.addf %95, %164 : vector<80x128xf32>
    %166 = vector.broadcast %20 : vector<80x1xf32> to vector<80x128xf32>
    %167 = arith.mulf %161, %166 : vector<80x128xf32>
    %168 = arith.truncf %167 : vector<80x128xf32> to vector<80x128xbf16>
    %c0_120 = arith.constant 0 : index
    %c11_121 = arith.constant 11 : index
    %c0_122 = arith.constant 0 : index
    %169 = vector.load %arg15[%c0_120, %c11_121, %c0_122] : memref<1x104x128xbf16, #tpu.memory_space<vmem>>, vector<1x80x128xbf16>
    %170 = vector.shape_cast %169 : vector<1x80x128xbf16> to vector<80x128xbf16>
    %171 = vector.shape_cast %168 : vector<80x128xbf16> to vector<1x80x128xbf16>
    tpu.vector_store %arg15[%c0_120, %c11_121, %c0_122], %171 {strides = array<i32>} : memref<1x104x128xbf16, #tpu.memory_space<vmem>>, vector<1x80x128xbf16>,
    %c0_123 = arith.constant 0 : index
    %c0_124 = arith.constant 0 : index
    %c0_125 = arith.constant 0 : index
    %172 = vector.load %arg15[%c0_123, %c0_124, %c0_125] : memref<1x104x128xbf16, #tpu.memory_space<vmem>>, vector<1x80x128xbf16>
    %173 = vector.shape_cast %172 : vector<1x80x128xbf16> to vector<80x128xbf16>
    %c0_126 = arith.constant 0 : index
    %c0_127 = arith.constant 0 : index
    %c0_128 = arith.constant 0 : index
    %174 = vector.load %arg6[%c0_126, %c0_127, %c0_128] : memref<9x128x128xbf16, #tpu.memory_space<vmem>>, vector<1x128x128xbf16>
    %175 = vector.shape_cast %174 : vector<1x128x128xbf16> to vector<128x128xbf16>
    %cst_129 = arith.constant dense<0.000000e+00> : vector<80x128xf32>
    %176 = tpu.matmul %173, %175, %cst_129 {dimension_numbers = #tpu.dot_dimension_numbers<[1], [0], [0], [1], [0, 0, 1, 1], [], []>} : vector<80x128xbf16>, vector<128x128xbf16>, vector<80x128xf32> -> vector<80x128xf32>
    %c0_130 = arith.constant 0 : index
    %c1_131 = arith.constant 1 : index
    %c0_132 = arith.constant 0 : index
    %177 = vector.load %arg15[%c0_130, %c1_131, %c0_132] : memref<1x104x128xbf16, #tpu.memory_space<vmem>>, vector<1x80x128xbf16>
    %178 = vector.shape_cast %177 : vector<1x80x128xbf16> to vector<80x128xbf16>
    %c1_133 = arith.constant 1 : index
    %c0_134 = arith.constant 0 : index
    %c0_135 = arith.constant 0 : index
    %179 = vector.load %arg6[%c1_133, %c0_134, %c0_135] : memref<9x128x128xbf16, #tpu.memory_space<vmem>>, vector<1x128x128xbf16>
    %180 = vector.shape_cast %179 : vector<1x128x128xbf16> to vector<128x128xbf16>
    %cst_136 = arith.constant dense<0.000000e+00> : vector<80x128xf32>
    %181 = tpu.matmul %178, %180, %cst_136 {dimension_numbers = #tpu.dot_dimension_numbers<[1], [0], [0], [1], [0, 0, 1, 1], [], []>} : vector<80x128xbf16>, vector<128x128xbf16>, vector<80x128xf32> -> vector<80x128xf32>
    %182 = arith.addf %176, %181 : vector<80x128xf32>
    %c0_137 = arith.constant 0 : index
    %c2_138 = arith.constant 2 : index
    %c0_139 = arith.constant 0 : index
    %183 = vector.load %arg15[%c0_137, %c2_138, %c0_139] : memref<1x104x128xbf16, #tpu.memory_space<vmem>>, vector<1x80x128xbf16>
    %184 = vector.shape_cast %183 : vector<1x80x128xbf16> to vector<80x128xbf16>
    %c2_140 = arith.constant 2 : index
    %c0_141 = arith.constant 0 : index
    %c0_142 = arith.constant 0 : index
    %185 = vector.load %arg6[%c2_140, %c0_141, %c0_142] : memref<9x128x128xbf16, #tpu.memory_space<vmem>>, vector<1x128x128xbf16>
    %186 = vector.shape_cast %185 : vector<1x128x128xbf16> to vector<128x128xbf16>
    %cst_143 = arith.constant dense<0.000000e+00> : vector<80x128xf32>
    %187 = tpu.matmul %184, %186, %cst_143 {dimension_numbers = #tpu.dot_dimension_numbers<[1], [0], [0], [1], [0, 0, 1, 1], [], []>} : vector<80x128xbf16>, vector<128x128xbf16>, vector<80x128xf32> -> vector<80x128xf32>
    %188 = arith.addf %182, %187 : vector<80x128xf32>
    %c0_144 = arith.constant 0 : index
    %c10_145 = arith.constant 10 : index
    %c0_146 = arith.constant 0 : index
    %189 = vector.load %arg15[%c0_144, %c10_145, %c0_146] : memref<1x104x128xbf16, #tpu.memory_space<vmem>>, vector<1x80x128xbf16>
    %190 = vector.shape_cast %189 : vector<1x80x128xbf16> to vector<80x128xbf16>
    %c3_147 = arith.constant 3 : index
    %c0_148 = arith.constant 0 : index
    %c0_149 = arith.constant 0 : index
    %191 = vector.load %arg6[%c3_147, %c0_148, %c0_149] : memref<9x128x128xbf16, #tpu.memory_space<vmem>>, vector<1x128x128xbf16>
    %192 = vector.shape_cast %191 : vector<1x128x128xbf16> to vector<128x128xbf16>
    %cst_150 = arith.constant dense<0.000000e+00> : vector<80x128xf32>
    %193 = tpu.matmul %190, %192, %cst_150 {dimension_numbers = #tpu.dot_dimension_numbers<[1], [0], [0], [1], [0, 0, 1, 1], [], []>} : vector<80x128xbf16>, vector<128x128xbf16>, vector<80x128xf32> -> vector<80x128xf32>
    %194 = arith.addf %188, %193 : vector<80x128xf32>
    %c0_151 = arith.constant 0 : index
    %c11_152 = arith.constant 11 : index
    %c0_153 = arith.constant 0 : index
    %195 = vector.load %arg15[%c0_151, %c11_152, %c0_153] : memref<1x104x128xbf16, #tpu.memory_space<vmem>>, vector<1x80x128xbf16>
    %196 = vector.shape_cast %195 : vector<1x80x128xbf16> to vector<80x128xbf16>
    %c4_154 = arith.constant 4 : index
    %c0_155 = arith.constant 0 : index
    %c0_156 = arith.constant 0 : index
    %197 = vector.load %arg6[%c4_154, %c0_155, %c0_156] : memref<9x128x128xbf16, #tpu.memory_space<vmem>>, vector<1x128x128xbf16>
    %198 = vector.shape_cast %197 : vector<1x128x128xbf16> to vector<128x128xbf16>
    %cst_157 = arith.constant dense<0.000000e+00> : vector<80x128xf32>
    %199 = tpu.matmul %196, %198, %cst_157 {dimension_numbers = #tpu.dot_dimension_numbers<[1], [0], [0], [1], [0, 0, 1, 1], [], []>} : vector<80x128xbf16>, vector<128x128xbf16>, vector<80x128xf32> -> vector<80x128xf32>
    %200 = arith.addf %194, %199 : vector<80x128xf32>
    %c0_158 = arith.constant 0 : index
    %c12_159 = arith.constant 12 : index
    %c0_160 = arith.constant 0 : index
    %201 = vector.load %arg15[%c0_158, %c12_159, %c0_160] : memref<1x104x128xbf16, #tpu.memory_space<vmem>>, vector<1x80x128xbf16>
    %202 = vector.shape_cast %201 : vector<1x80x128xbf16> to vector<80x128xbf16>
    %c5_161 = arith.constant 5 : index
    %c0_162 = arith.constant 0 : index
    %c0_163 = arith.constant 0 : index
    %203 = vector.load %arg6[%c5_161, %c0_162, %c0_163] : memref<9x128x128xbf16, #tpu.memory_space<vmem>>, vector<1x128x128xbf16>
    %204 = vector.shape_cast %203 : vector<1x128x128xbf16> to vector<128x128xbf16>
    %cst_164 = arith.constant dense<0.000000e+00> : vector<80x128xf32>
    %205 = tpu.matmul %202, %204, %cst_164 {dimension_numbers = #tpu.dot_dimension_numbers<[1], [0], [0], [1], [0, 0, 1, 1], [], []>} : vector<80x128xbf16>, vector<128x128xbf16>, vector<80x128xf32> -> vector<80x128xf32>
    %206 = arith.addf %200, %205 : vector<80x128xf32>
    %c0_165 = arith.constant 0 : index
    %c20_166 = arith.constant 20 : index
    %c0_167 = arith.constant 0 : index
    %207 = vector.load %arg15[%c0_165, %c20_166, %c0_167] : memref<1x104x128xbf16, #tpu.memory_space<vmem>>, vector<1x80x128xbf16>
    %208 = vector.shape_cast %207 : vector<1x80x128xbf16> to vector<80x128xbf16>
    %c6_168 = arith.constant 6 : index
    %c0_169 = arith.constant 0 : index
    %c0_170 = arith.constant 0 : index
    %209 = vector.load %arg6[%c6_168, %c0_169, %c0_170] : memref<9x128x128xbf16, #tpu.memory_space<vmem>>, vector<1x128x128xbf16>
    %210 = vector.shape_cast %209 : vector<1x128x128xbf16> to vector<128x128xbf16>
    %cst_171 = arith.constant dense<0.000000e+00> : vector<80x128xf32>
    %211 = tpu.matmul %208, %210, %cst_171 {dimension_numbers = #tpu.dot_dimension_numbers<[1], [0], [0], [1], [0, 0, 1, 1], [], []>} : vector<80x128xbf16>, vector<128x128xbf16>, vector<80x128xf32> -> vector<80x128xf32>
    %212 = arith.addf %206, %211 : vector<80x128xf32>
    %c0_172 = arith.constant 0 : index
    %c21_173 = arith.constant 21 : index
    %c0_174 = arith.constant 0 : index
    %213 = vector.load %arg15[%c0_172, %c21_173, %c0_174] : memref<1x104x128xbf16, #tpu.memory_space<vmem>>, vector<1x80x128xbf16>
    %214 = vector.shape_cast %213 : vector<1x80x128xbf16> to vector<80x128xbf16>
    %c7_175 = arith.constant 7 : index
    %c0_176 = arith.constant 0 : index
    %c0_177 = arith.constant 0 : index
    %215 = vector.load %arg6[%c7_175, %c0_176, %c0_177] : memref<9x128x128xbf16, #tpu.memory_space<vmem>>, vector<1x128x128xbf16>
    %216 = vector.shape_cast %215 : vector<1x128x128xbf16> to vector<128x128xbf16>
    %cst_178 = arith.constant dense<0.000000e+00> : vector<80x128xf32>
    %217 = tpu.matmul %214, %216, %cst_178 {dimension_numbers = #tpu.dot_dimension_numbers<[1], [0], [0], [1], [0, 0, 1, 1], [], []>} : vector<80x128xbf16>, vector<128x128xbf16>, vector<80x128xf32> -> vector<80x128xf32>
    %218 = arith.addf %212, %217 : vector<80x128xf32>
    %c0_179 = arith.constant 0 : index
    %c22_180 = arith.constant 22 : index
    %c0_181 = arith.constant 0 : index
    %219 = vector.load %arg15[%c0_179, %c22_180, %c0_181] : memref<1x104x128xbf16, #tpu.memory_space<vmem>>, vector<1x80x128xbf16>
    %220 = vector.shape_cast %219 : vector<1x80x128xbf16> to vector<80x128xbf16>
    %c8_182 = arith.constant 8 : index
    %c0_183 = arith.constant 0 : index
    %c0_184 = arith.constant 0 : index
    %221 = vector.load %arg6[%c8_182, %c0_183, %c0_184] : memref<9x128x128xbf16, #tpu.memory_space<vmem>>, vector<1x128x128xbf16>
    %222 = vector.shape_cast %221 : vector<1x128x128xbf16> to vector<128x128xbf16>
    %cst_185 = arith.constant dense<0.000000e+00> : vector<80x128xf32>
    %223 = tpu.matmul %220, %222, %cst_185 {dimension_numbers = #tpu.dot_dimension_numbers<[1], [0], [0], [1], [0, 0, 1, 1], [], []>} : vector<80x128xbf16>, vector<128x128xbf16>, vector<80x128xf32> -> vector<80x128xf32>
    %224 = arith.addf %218, %223 : vector<80x128xf32>
    %c0_186 = arith.constant 0 : index
    %c0_187 = arith.constant 0 : index
    %225 = vector.load %arg7[%c0_186, %c0_187] : memref<1x128xf32, #tpu.memory_space<vmem>>, vector<1x128xf32>
    %226 = vector.broadcast %225 : vector<1x128xf32> to vector<80x128xf32>
    %227 = arith.addf %224, %226 : vector<80x128xf32>
    %cst_188 = arith.constant 0.000000e+00 : f32
    %228 = vector.broadcast %cst_188 : f32 to vector<80x128xf32>
    %229 = arith.maximumf %227, %228 : vector<80x128xf32>
    %230 = arith.truncf %229 : vector<80x128xf32> to vector<80x128xbf16>
    %c0_189 = arith.constant 0 : index
    %c0_190 = arith.constant 0 : index
    %231 = vector.load %arg10[%c0_189, %c0_190] : memref<128x128xbf16, #tpu.memory_space<vmem>>, vector<128x128xbf16>
    %cst_191 = arith.constant dense<0.000000e+00> : vector<80x128xf32>
    %232 = tpu.matmul %230, %231, %cst_191 {dimension_numbers = #tpu.dot_dimension_numbers<[1], [0], [0], [1], [0, 0, 1, 1], [], []>} : vector<80x128xbf16>, vector<128x128xbf16>, vector<80x128xf32> -> vector<80x128xf32>
    %233 = arith.addf %165, %232 : vector<80x128xf32>
    %c0_192 = arith.constant 0 : index
    %c0_193 = arith.constant 0 : index
    %234 = vector.load %arg11[%c0_192, %c0_193] : memref<1x128xf32, #tpu.memory_space<vmem>>, vector<1x128xf32>
    %235 = vector.broadcast %234 : vector<1x128xf32> to vector<80x128xf32>
    %236 = arith.addf %233, %235 : vector<80x128xf32>
    %cst_194 = arith.constant 0.000000e+00 : f32
    %237 = vector.broadcast %cst_194 : f32 to vector<80x128xf32>
    %238 = arith.maximumf %236, %237 : vector<80x128xf32>
    %239 = arith.truncf %238 : vector<80x128xf32> to vector<80x128xbf16>
    %c0_195 = arith.constant 0 : index
    %c0_196 = arith.constant 0 : index
    %240 = vector.load %arg12[%c0_195, %c0_196] : memref<128x128xbf16, #tpu.memory_space<vmem>>, vector<128x128xbf16>
    %cst_197 = arith.constant dense<0.000000e+00> : vector<80x128xf32>
    %241 = tpu.matmul %239, %240, %cst_197 {dimension_numbers = #tpu.dot_dimension_numbers<[1], [0], [0], [1], [0, 0, 1, 1], [], []>} : vector<80x128xbf16>, vector<128x128xbf16>, vector<80x128xf32> -> vector<80x128xf32>
    %c0_198 = arith.constant 0 : index
    %c0_199 = arith.constant 0 : index
    %242 = vector.load %arg13[%c0_198, %c0_199] : memref<1x128xf32, #tpu.memory_space<vmem>>, vector<1x128xf32>
    %243 = vector.broadcast %242 : vector<1x128xf32> to vector<80x128xf32>
    %244 = arith.addf %241, %243 : vector<80x128xf32>
    %cst_200 = arith.constant 0.000000e+00 : f32
    %245 = vector.broadcast %cst_200 : f32 to vector<80x128xf32>
    %246 = arith.maximumf %244, %245 : vector<80x128xf32>
    %cst_201 = arith.constant 0.000000e+00 : bf16
    %247 = vector.broadcast %cst_201 : bf16 to vector<11x128xbf16>
    %c0_202 = arith.constant 0 : index
    %c0_203 = arith.constant 0 : index
    %c0_204 = arith.constant 0 : index
    %248 = vector.load %arg14[%c0_202, %c0_203, %c0_204] : memref<1x104x128xbf16, #tpu.memory_space<vmem>>, vector<1x11x128xbf16>
    %249 = vector.shape_cast %248 : vector<1x11x128xbf16> to vector<11x128xbf16>
    %250 = vector.shape_cast %247 : vector<11x128xbf16> to vector<1x11x128xbf16>
    tpu.vector_store %arg14[%c0_202, %c0_203, %c0_204], %250 {strides = array<i32>} : memref<1x104x128xbf16, #tpu.memory_space<vmem>>, vector<1x11x128xbf16>,
    %cst_205 = arith.constant 0.000000e+00 : bf16
    %251 = vector.broadcast %cst_205 : bf16 to vector<13x128xbf16>
    %c0_206 = arith.constant 0 : index
    %c91_207 = arith.constant 91 : index
    %c0_208 = arith.constant 0 : index
    %252 = vector.load %arg14[%c0_206, %c91_207, %c0_208] : memref<1x104x128xbf16, #tpu.memory_space<vmem>>, vector<1x13x128xbf16>
    %253 = vector.shape_cast %252 : vector<1x13x128xbf16> to vector<13x128xbf16>
    %254 = vector.shape_cast %251 : vector<13x128xbf16> to vector<1x13x128xbf16>
    tpu.vector_store %arg14[%c0_206, %c91_207, %c0_208], %254 {strides = array<i32>} : memref<1x104x128xbf16, #tpu.memory_space<vmem>>, vector<1x13x128xbf16>,
    %255 = vector.broadcast %20 : vector<80x1xf32> to vector<80x128xf32>
    %256 = arith.mulf %246, %255 : vector<80x128xf32>
    %257 = arith.truncf %256 : vector<80x128xf32> to vector<80x128xbf16>
    %c0_209 = arith.constant 0 : index
    %c11_210 = arith.constant 11 : index
    %c0_211 = arith.constant 0 : index
    %258 = vector.load %arg14[%c0_209, %c11_210, %c0_211] : memref<1x104x128xbf16, #tpu.memory_space<vmem>>, vector<1x80x128xbf16>
    %259 = vector.shape_cast %258 : vector<1x80x128xbf16> to vector<80x128xbf16>
    %260 = vector.shape_cast %257 : vector<80x128xbf16> to vector<1x80x128xbf16>
    tpu.vector_store %arg14[%c0_209, %c11_210, %c0_211], %260 {strides = array<i32>} : memref<1x104x128xbf16, #tpu.memory_space<vmem>>, vector<1x80x128xbf16>,
    return
  }
  func.func @transform_0(%arg0: i32) -> (i32, i32, i32, i32) {
    %c0_i32 = arith.constant 0 : i32
    %c0_i32_0 = arith.constant 0 : i32
    %c0_i32_1 = arith.constant 0 : i32
    %c0_i32_2 = arith.constant 0 : i32
    return %arg0, %c0_i32, %c0_i32_0, %c0_i32_1 : i32, i32, i32, i32
  }
  func.func @transform_1(%arg0: i32) -> (i32, i32) {
    %c0_i32 = arith.constant 0 : i32
    %c0_i32_0 = arith.constant 0 : i32
    %c0_i32_1 = arith.constant 0 : i32
    return %c0_i32, %c0_i32_0 : i32, i32
  }
  func.func @transform_2(%arg0: i32) -> (i32, i32) {
    %c0_i32 = arith.constant 0 : i32
    %c0_i32_0 = arith.constant 0 : i32
    %c0_i32_1 = arith.constant 0 : i32
    return %c0_i32, %c0_i32_0 : i32, i32
  }
  func.func @transform_3(%arg0: i32) -> (i32, i32, i32) {
    %c0_i32 = arith.constant 0 : i32
    %c0_i32_0 = arith.constant 0 : i32
    %c0_i32_1 = arith.constant 0 : i32
    %c0_i32_2 = arith.constant 0 : i32
    return %c0_i32, %c0_i32_0, %c0_i32_1 : i32, i32, i32
  }
  func.func @transform_4(%arg0: i32) -> (i32, i32) {
    %c0_i32 = arith.constant 0 : i32
    %c0_i32_0 = arith.constant 0 : i32
    %c0_i32_1 = arith.constant 0 : i32
    return %c0_i32, %c0_i32_0 : i32, i32
  }
  func.func @transform_5(%arg0: i32) -> (i32, i32, i32) {
    %c0_i32 = arith.constant 0 : i32
    %c0_i32_0 = arith.constant 0 : i32
    %c0_i32_1 = arith.constant 0 : i32
    %c0_i32_2 = arith.constant 0 : i32
    return %c0_i32, %c0_i32_0, %c0_i32_1 : i32, i32, i32
  }
  func.func @transform_6(%arg0: i32) -> (i32, i32) {
    %c0_i32 = arith.constant 0 : i32
    %c0_i32_0 = arith.constant 0 : i32
    %c0_i32_1 = arith.constant 0 : i32
    return %c0_i32, %c0_i32_0 : i32, i32
  }
  func.func @transform_7(%arg0: i32) -> (i32, i32) {
    %c0_i32 = arith.constant 0 : i32
    %c0_i32_0 = arith.constant 0 : i32
    %c0_i32_1 = arith.constant 0 : i32
    return %c0_i32, %c0_i32_0 : i32, i32
  }
  func.func @transform_8(%arg0: i32) -> (i32, i32) {
    %c0_i32 = arith.constant 0 : i32
    %c0_i32_0 = arith.constant 0 : i32
    %c0_i32_1 = arith.constant 0 : i32
    return %c0_i32, %c0_i32_0 : i32, i32
  }
  func.func @transform_9(%arg0: i32) -> (i32, i32) {
    %c0_i32 = arith.constant 0 : i32
    %c0_i32_0 = arith.constant 0 : i32
    %c0_i32_1 = arith.constant 0 : i32
    return %c0_i32, %c0_i32_0 : i32, i32
  }
  func.func @transform_10(%arg0: i32) -> (i32, i32) {
    %c0_i32 = arith.constant 0 : i32
    %c0_i32_0 = arith.constant 0 : i32
    %c0_i32_1 = arith.constant 0 : i32
    return %c0_i32, %c0_i32_0 : i32, i32
  }
  func.func @transform_11(%arg0: i32) -> (i32, i32) {
    %c0_i32 = arith.constant 0 : i32
    %c0_i32_0 = arith.constant 0 : i32
    %c0_i32_1 = arith.constant 0 : i32
    return %c0_i32, %c0_i32_0 : i32, i32
  }
  func.func @transform_12(%arg0: i32) -> (i32, i32) {
    %c0_i32 = arith.constant 0 : i32
    %c0_i32_0 = arith.constant 0 : i32
    %c0_i32_1 = arith.constant 0 : i32
    return %c0_i32, %c0_i32_0 : i32, i32
  }
  func.func @transform_13(%arg0: i32) -> (i32, i32, i32) {
    %c0_i32 = arith.constant 0 : i32
    %c0_i32_0 = arith.constant 0 : i32
    %c0_i32_1 = arith.constant 0 : i32
    return %arg0, %c0_i32, %c0_i32_0 : i32, i32, i32
  }
}

module attributes {stable_mosaic.version = 11 : i64} {
  func.func @kernel(%arg0: i32, %arg1: memref<1x104x128xbf16, #tpu.memory_space<vmem>>, %arg2: memref<9x128x128xbf16, #tpu.memory_space<vmem>>, %arg3: memref<1x128xf32, #tpu.memory_space<vmem>>, %arg4: memref<9x128x128xbf16, #tpu.memory_space<vmem>>, %arg5: memref<1x128xf32, #tpu.memory_space<vmem>>, %arg6: memref<128x128xbf16, #tpu.memory_space<vmem>>, %arg7: memref<128x128xbf16, #tpu.memory_space<vmem>>, %arg8: memref<128x128xbf16, #tpu.memory_space<vmem>>, %arg9: memref<1x128xf32, #tpu.memory_space<vmem>>, %arg10: memref<128x128xbf16, #tpu.memory_space<vmem>>, %arg11: memref<1x128xf32, #tpu.memory_space<vmem>>, %arg12: memref<1x104x128xbf16, #tpu.memory_space<vmem>>, %arg13: memref<1x104x128xbf16, #tpu.memory_space<vmem>>) attributes {dimension_semantics = [#tpu.dimension_semantics<parallel>], iteration_bounds = array<i64: 2>, scalar_prefetch = 0 : i64, scratch_operands = 1 : i64, tpu.core_type = #tpu.core_type<tc>, window_params = [{transform_indices = @transform_0, window_bounds = array<i64: 1, 104, 128>}, {pipeline_mode = #tpu.pipeline_mode<synchronous>, transform_indices = @transform_1, window_bounds = array<i64: 9, 128, 128>}, {pipeline_mode = #tpu.pipeline_mode<synchronous>, transform_indices = @transform_2, window_bounds = array<i64: 1, 128>}, {pipeline_mode = #tpu.pipeline_mode<synchronous>, transform_indices = @transform_3, window_bounds = array<i64: 9, 128, 128>}, {pipeline_mode = #tpu.pipeline_mode<synchronous>, transform_indices = @transform_4, window_bounds = array<i64: 1, 128>}, {pipeline_mode = #tpu.pipeline_mode<synchronous>, transform_indices = @transform_5, window_bounds = array<i64: 128, 128>}, {pipeline_mode = #tpu.pipeline_mode<synchronous>, transform_indices = @transform_6, window_bounds = array<i64: 128, 128>}, {pipeline_mode = #tpu.pipeline_mode<synchronous>, transform_indices = @transform_7, window_bounds = array<i64: 128, 128>}, {pipeline_mode = #tpu.pipeline_mode<synchronous>, transform_indices = @transform_8, window_bounds = array<i64: 1, 128>}, {pipeline_mode = #tpu.pipeline_mode<synchronous>, transform_indices = @transform_9, window_bounds = array<i64: 128, 128>}, {pipeline_mode = #tpu.pipeline_mode<synchronous>, transform_indices = @transform_10, window_bounds = array<i64: 1, 128>}, {transform_indices = @transform_11, window_bounds = array<i64: 1, 104, 128>}]} {
    %0 = tpu.iota {dimensions = array<i32: 0>} : vector<80x1xi32>
    %c10_i32 = arith.constant 10 : i32
    %c0_i32 = arith.constant 0 : i32
    %1 = arith.cmpi eq, %c10_i32, %c0_i32 : i32
    %c1_i32 = arith.constant 1 : i32
    %2 = arith.select %1, %c1_i32, %c10_i32 : i32
    %3 = vector.broadcast %2 : i32 to vector<80x1xi32>
    %4 = arith.remsi %0, %3 : vector<80x1xi32>
    %c0_i32_0 = arith.constant 0 : i32
    %5 = vector.broadcast %c0_i32_0 : i32 to vector<80x1xi32>
    %6 = arith.cmpi ne, %4, %5 : vector<80x1xi32>
    %c0_i32_1 = arith.constant 0 : i32
    %7 = vector.broadcast %c0_i32_1 : i32 to vector<80x1xi32>
    %8 = arith.cmpi slt, %4, %7 : vector<80x1xi32>
    %c0_i32_2 = arith.constant 0 : i32
    %9 = arith.cmpi slt, %2, %c0_i32_2 : i32
    %10 = vector.broadcast %9 : i1 to vector<80x1xi1>
    %11 = vector.broadcast %10 : vector<80x1xi1> to vector<80x1xi1>
    %12 = arith.xori %8, %11 : vector<80x1xi1>
    %13 = arith.andi %12, %6 : vector<80x1xi1>
    %14 = vector.broadcast %2 : i32 to vector<80x1xi32>
    %15 = arith.addi %4, %14 : vector<80x1xi32>
    %16 = arith.select %13, %15, %4 : vector<80x1xi1>, vector<80x1xi32>
    %c8_i32 = arith.constant 8 : i32
    %17 = vector.broadcast %c8_i32 : i32 to vector<80x1xi32>
    %18 = arith.cmpi slt, %16, %17 : vector<80x1xi32>
    %19 = arith.extui %18 : vector<80x1xi1> to vector<80x1xi32>
    %20 = arith.sitofp %19 : vector<80x1xi32> to vector<80x1xf32>
    %c0 = arith.constant 0 : index
    %c11 = arith.constant 11 : index
    %c0_3 = arith.constant 0 : index
    %21 = vector.load %arg1[%c0, %c11, %c0_3] : memref<1x104x128xbf16, #tpu.memory_space<vmem>>, vector<1x80x128xbf16>
    %22 = vector.shape_cast %21 : vector<1x80x128xbf16> to vector<80x128xbf16>
    %c0_4 = arith.constant 0 : index
    %c0_5 = arith.constant 0 : index
    %23 = vector.load %arg6[%c0_4, %c0_5] : memref<128x128xbf16, #tpu.memory_space<vmem>>, vector<128x128xbf16>
    %cst = arith.constant dense<0.000000e+00> : vector<80x128xf32>
    %24 = tpu.matmul %22, %23, %cst {dimension_numbers = #tpu.dot_dimension_numbers<[1], [0], [0], [1], [0, 0, 1, 1], [], []>} : vector<80x128xbf16>, vector<128x128xbf16>, vector<80x128xf32> -> vector<80x128xf32>
    %cst_6 = arith.constant 0.000000e+00 : bf16
    %25 = vector.broadcast %cst_6 : bf16 to vector<11x128xbf16>
    %c0_7 = arith.constant 0 : index
    %c0_8 = arith.constant 0 : index
    %c0_9 = arith.constant 0 : index
    %26 = vector.load %arg13[%c0_7, %c0_8, %c0_9] : memref<1x104x128xbf16, #tpu.memory_space<vmem>>, vector<1x11x128xbf16>
    %27 = vector.shape_cast %26 : vector<1x11x128xbf16> to vector<11x128xbf16>
    %28 = vector.shape_cast %25 : vector<11x128xbf16> to vector<1x11x128xbf16>
    tpu.vector_store %arg13[%c0_7, %c0_8, %c0_9], %28 {strides = array<i32>} : memref<1x104x128xbf16, #tpu.memory_space<vmem>>, vector<1x11x128xbf16>,
    %cst_10 = arith.constant 0.000000e+00 : bf16
    %29 = vector.broadcast %cst_10 : bf16 to vector<13x128xbf16>
    %c0_11 = arith.constant 0 : index
    %c91 = arith.constant 91 : index
    %c0_12 = arith.constant 0 : index
    %30 = vector.load %arg13[%c0_11, %c91, %c0_12] : memref<1x104x128xbf16, #tpu.memory_space<vmem>>, vector<1x13x128xbf16>
    %31 = vector.shape_cast %30 : vector<1x13x128xbf16> to vector<13x128xbf16>
    %32 = vector.shape_cast %29 : vector<13x128xbf16> to vector<1x13x128xbf16>
    tpu.vector_store %arg13[%c0_11, %c91, %c0_12], %32 {strides = array<i32>} : memref<1x104x128xbf16, #tpu.memory_space<vmem>>, vector<1x13x128xbf16>,
    %c0_13 = arith.constant 0 : index
    %c0_14 = arith.constant 0 : index
    %c0_15 = arith.constant 0 : index
    %33 = vector.load %arg1[%c0_13, %c0_14, %c0_15] : memref<1x104x128xbf16, #tpu.memory_space<vmem>>, vector<1x80x128xbf16>
    %34 = vector.shape_cast %33 : vector<1x80x128xbf16> to vector<80x128xbf16>
    %c0_16 = arith.constant 0 : index
    %c0_17 = arith.constant 0 : index
    %c0_18 = arith.constant 0 : index
    %35 = vector.load %arg2[%c0_16, %c0_17, %c0_18] : memref<9x128x128xbf16, #tpu.memory_space<vmem>>, vector<1x128x128xbf16>
    %36 = vector.shape_cast %35 : vector<1x128x128xbf16> to vector<128x128xbf16>
    %cst_19 = arith.constant dense<0.000000e+00> : vector<80x128xf32>
    %37 = tpu.matmul %34, %36, %cst_19 {dimension_numbers = #tpu.dot_dimension_numbers<[1], [0], [0], [1], [0, 0, 1, 1], [], []>} : vector<80x128xbf16>, vector<128x128xbf16>, vector<80x128xf32> -> vector<80x128xf32>
    %c0_20 = arith.constant 0 : index
    %c1 = arith.constant 1 : index
    %c0_21 = arith.constant 0 : index
    %38 = vector.load %arg1[%c0_20, %c1, %c0_21] : memref<1x104x128xbf16, #tpu.memory_space<vmem>>, vector<1x80x128xbf16>
    %39 = vector.shape_cast %38 : vector<1x80x128xbf16> to vector<80x128xbf16>
    %c1_22 = arith.constant 1 : index
    %c0_23 = arith.constant 0 : index
    %c0_24 = arith.constant 0 : index
    %40 = vector.load %arg2[%c1_22, %c0_23, %c0_24] : memref<9x128x128xbf16, #tpu.memory_space<vmem>>, vector<1x128x128xbf16>
    %41 = vector.shape_cast %40 : vector<1x128x128xbf16> to vector<128x128xbf16>
    %cst_25 = arith.constant dense<0.000000e+00> : vector<80x128xf32>
    %42 = tpu.matmul %39, %41, %cst_25 {dimension_numbers = #tpu.dot_dimension_numbers<[1], [0], [0], [1], [0, 0, 1, 1], [], []>} : vector<80x128xbf16>, vector<128x128xbf16>, vector<80x128xf32> -> vector<80x128xf32>
    %43 = arith.addf %37, %42 : vector<80x128xf32>
    %c0_26 = arith.constant 0 : index
    %c2 = arith.constant 2 : index
    %c0_27 = arith.constant 0 : index
    %44 = vector.load %arg1[%c0_26, %c2, %c0_27] : memref<1x104x128xbf16, #tpu.memory_space<vmem>>, vector<1x80x128xbf16>
    %45 = vector.shape_cast %44 : vector<1x80x128xbf16> to vector<80x128xbf16>
    %c2_28 = arith.constant 2 : index
    %c0_29 = arith.constant 0 : index
    %c0_30 = arith.constant 0 : index
    %46 = vector.load %arg2[%c2_28, %c0_29, %c0_30] : memref<9x128x128xbf16, #tpu.memory_space<vmem>>, vector<1x128x128xbf16>
    %47 = vector.shape_cast %46 : vector<1x128x128xbf16> to vector<128x128xbf16>
    %cst_31 = arith.constant dense<0.000000e+00> : vector<80x128xf32>
    %48 = tpu.matmul %45, %47, %cst_31 {dimension_numbers = #tpu.dot_dimension_numbers<[1], [0], [0], [1], [0, 0, 1, 1], [], []>} : vector<80x128xbf16>, vector<128x128xbf16>, vector<80x128xf32> -> vector<80x128xf32>
    %49 = arith.addf %43, %48 : vector<80x128xf32>
    %c0_32 = arith.constant 0 : index
    %c10 = arith.constant 10 : index
    %c0_33 = arith.constant 0 : index
    %50 = vector.load %arg1[%c0_32, %c10, %c0_33] : memref<1x104x128xbf16, #tpu.memory_space<vmem>>, vector<1x80x128xbf16>
    %51 = vector.shape_cast %50 : vector<1x80x128xbf16> to vector<80x128xbf16>
    %c3 = arith.constant 3 : index
    %c0_34 = arith.constant 0 : index
    %c0_35 = arith.constant 0 : index
    %52 = vector.load %arg2[%c3, %c0_34, %c0_35] : memref<9x128x128xbf16, #tpu.memory_space<vmem>>, vector<1x128x128xbf16>
    %53 = vector.shape_cast %52 : vector<1x128x128xbf16> to vector<128x128xbf16>
    %cst_36 = arith.constant dense<0.000000e+00> : vector<80x128xf32>
    %54 = tpu.matmul %51, %53, %cst_36 {dimension_numbers = #tpu.dot_dimension_numbers<[1], [0], [0], [1], [0, 0, 1, 1], [], []>} : vector<80x128xbf16>, vector<128x128xbf16>, vector<80x128xf32> -> vector<80x128xf32>
    %55 = arith.addf %49, %54 : vector<80x128xf32>
    %c0_37 = arith.constant 0 : index
    %c11_38 = arith.constant 11 : index
    %c0_39 = arith.constant 0 : index
    %56 = vector.load %arg1[%c0_37, %c11_38, %c0_39] : memref<1x104x128xbf16, #tpu.memory_space<vmem>>, vector<1x80x128xbf16>
    %57 = vector.shape_cast %56 : vector<1x80x128xbf16> to vector<80x128xbf16>
    %c4 = arith.constant 4 : index
    %c0_40 = arith.constant 0 : index
    %c0_41 = arith.constant 0 : index
    %58 = vector.load %arg2[%c4, %c0_40, %c0_41] : memref<9x128x128xbf16, #tpu.memory_space<vmem>>, vector<1x128x128xbf16>
    %59 = vector.shape_cast %58 : vector<1x128x128xbf16> to vector<128x128xbf16>
    %cst_42 = arith.constant dense<0.000000e+00> : vector<80x128xf32>
    %60 = tpu.matmul %57, %59, %cst_42 {dimension_numbers = #tpu.dot_dimension_numbers<[1], [0], [0], [1], [0, 0, 1, 1], [], []>} : vector<80x128xbf16>, vector<128x128xbf16>, vector<80x128xf32> -> vector<80x128xf32>
    %61 = arith.addf %55, %60 : vector<80x128xf32>
    %c0_43 = arith.constant 0 : index
    %c12 = arith.constant 12 : index
    %c0_44 = arith.constant 0 : index
    %62 = vector.load %arg1[%c0_43, %c12, %c0_44] : memref<1x104x128xbf16, #tpu.memory_space<vmem>>, vector<1x80x128xbf16>
    %63 = vector.shape_cast %62 : vector<1x80x128xbf16> to vector<80x128xbf16>
    %c5 = arith.constant 5 : index
    %c0_45 = arith.constant 0 : index
    %c0_46 = arith.constant 0 : index
    %64 = vector.load %arg2[%c5, %c0_45, %c0_46] : memref<9x128x128xbf16, #tpu.memory_space<vmem>>, vector<1x128x128xbf16>
    %65 = vector.shape_cast %64 : vector<1x128x128xbf16> to vector<128x128xbf16>
    %cst_47 = arith.constant dense<0.000000e+00> : vector<80x128xf32>
    %66 = tpu.matmul %63, %65, %cst_47 {dimension_numbers = #tpu.dot_dimension_numbers<[1], [0], [0], [1], [0, 0, 1, 1], [], []>} : vector<80x128xbf16>, vector<128x128xbf16>, vector<80x128xf32> -> vector<80x128xf32>
    %67 = arith.addf %61, %66 : vector<80x128xf32>
    %c0_48 = arith.constant 0 : index
    %c20 = arith.constant 20 : index
    %c0_49 = arith.constant 0 : index
    %68 = vector.load %arg1[%c0_48, %c20, %c0_49] : memref<1x104x128xbf16, #tpu.memory_space<vmem>>, vector<1x80x128xbf16>
    %69 = vector.shape_cast %68 : vector<1x80x128xbf16> to vector<80x128xbf16>
    %c6 = arith.constant 6 : index
    %c0_50 = arith.constant 0 : index
    %c0_51 = arith.constant 0 : index
    %70 = vector.load %arg2[%c6, %c0_50, %c0_51] : memref<9x128x128xbf16, #tpu.memory_space<vmem>>, vector<1x128x128xbf16>
    %71 = vector.shape_cast %70 : vector<1x128x128xbf16> to vector<128x128xbf16>
    %cst_52 = arith.constant dense<0.000000e+00> : vector<80x128xf32>
    %72 = tpu.matmul %69, %71, %cst_52 {dimension_numbers = #tpu.dot_dimension_numbers<[1], [0], [0], [1], [0, 0, 1, 1], [], []>} : vector<80x128xbf16>, vector<128x128xbf16>, vector<80x128xf32> -> vector<80x128xf32>
    %73 = arith.addf %67, %72 : vector<80x128xf32>
    %c0_53 = arith.constant 0 : index
    %c21 = arith.constant 21 : index
    %c0_54 = arith.constant 0 : index
    %74 = vector.load %arg1[%c0_53, %c21, %c0_54] : memref<1x104x128xbf16, #tpu.memory_space<vmem>>, vector<1x80x128xbf16>
    %75 = vector.shape_cast %74 : vector<1x80x128xbf16> to vector<80x128xbf16>
    %c7 = arith.constant 7 : index
    %c0_55 = arith.constant 0 : index
    %c0_56 = arith.constant 0 : index
    %76 = vector.load %arg2[%c7, %c0_55, %c0_56] : memref<9x128x128xbf16, #tpu.memory_space<vmem>>, vector<1x128x128xbf16>
    %77 = vector.shape_cast %76 : vector<1x128x128xbf16> to vector<128x128xbf16>
    %cst_57 = arith.constant dense<0.000000e+00> : vector<80x128xf32>
    %78 = tpu.matmul %75, %77, %cst_57 {dimension_numbers = #tpu.dot_dimension_numbers<[1], [0], [0], [1], [0, 0, 1, 1], [], []>} : vector<80x128xbf16>, vector<128x128xbf16>, vector<80x128xf32> -> vector<80x128xf32>
    %79 = arith.addf %73, %78 : vector<80x128xf32>
    %c0_58 = arith.constant 0 : index
    %c22 = arith.constant 22 : index
    %c0_59 = arith.constant 0 : index
    %80 = vector.load %arg1[%c0_58, %c22, %c0_59] : memref<1x104x128xbf16, #tpu.memory_space<vmem>>, vector<1x80x128xbf16>
    %81 = vector.shape_cast %80 : vector<1x80x128xbf16> to vector<80x128xbf16>
    %c8 = arith.constant 8 : index
    %c0_60 = arith.constant 0 : index
    %c0_61 = arith.constant 0 : index
    %82 = vector.load %arg2[%c8, %c0_60, %c0_61] : memref<9x128x128xbf16, #tpu.memory_space<vmem>>, vector<1x128x128xbf16>
    %83 = vector.shape_cast %82 : vector<1x128x128xbf16> to vector<128x128xbf16>
    %cst_62 = arith.constant dense<0.000000e+00> : vector<80x128xf32>
    %84 = tpu.matmul %81, %83, %cst_62 {dimension_numbers = #tpu.dot_dimension_numbers<[1], [0], [0], [1], [0, 0, 1, 1], [], []>} : vector<80x128xbf16>, vector<128x128xbf16>, vector<80x128xf32> -> vector<80x128xf32>
    %85 = arith.addf %79, %84 : vector<80x128xf32>
    %c0_63 = arith.constant 0 : index
    %c0_64 = arith.constant 0 : index
    %86 = vector.load %arg3[%c0_63, %c0_64] : memref<1x128xf32, #tpu.memory_space<vmem>>, vector<1x128xf32>
    %87 = vector.broadcast %86 : vector<1x128xf32> to vector<80x128xf32>
    %88 = arith.addf %85, %87 : vector<80x128xf32>
    %cst_65 = arith.constant 0.000000e+00 : f32
    %89 = vector.broadcast %cst_65 : f32 to vector<80x128xf32>
    %90 = arith.maximumf %88, %89 : vector<80x128xf32>
    %91 = arith.truncf %90 : vector<80x128xf32> to vector<80x128xbf16>
    %c0_66 = arith.constant 0 : index
    %c0_67 = arith.constant 0 : index
    %92 = vector.load %arg7[%c0_66, %c0_67] : memref<128x128xbf16, #tpu.memory_space<vmem>>, vector<128x128xbf16>
    %cst_68 = arith.constant dense<0.000000e+00> : vector<80x128xf32>
    %93 = tpu.matmul %91, %92, %cst_68 {dimension_numbers = #tpu.dot_dimension_numbers<[1], [0], [0], [1], [0, 0, 1, 1], [], []>} : vector<80x128xbf16>, vector<128x128xbf16>, vector<80x128xf32> -> vector<80x128xf32>
    %94 = arith.addf %24, %93 : vector<80x128xf32>
    %95 = vector.broadcast %20 : vector<80x1xf32> to vector<80x128xf32>
    %96 = arith.mulf %90, %95 : vector<80x128xf32>
    %97 = arith.truncf %96 : vector<80x128xf32> to vector<80x128xbf16>
    %c0_69 = arith.constant 0 : index
    %c11_70 = arith.constant 11 : index
    %c0_71 = arith.constant 0 : index
    %98 = vector.load %arg13[%c0_69, %c11_70, %c0_71] : memref<1x104x128xbf16, #tpu.memory_space<vmem>>, vector<1x80x128xbf16>
    %99 = vector.shape_cast %98 : vector<1x80x128xbf16> to vector<80x128xbf16>
    %100 = vector.shape_cast %97 : vector<80x128xbf16> to vector<1x80x128xbf16>
    tpu.vector_store %arg13[%c0_69, %c11_70, %c0_71], %100 {strides = array<i32>} : memref<1x104x128xbf16, #tpu.memory_space<vmem>>, vector<1x80x128xbf16>,
    %c0_72 = arith.constant 0 : index
    %c0_73 = arith.constant 0 : index
    %c0_74 = arith.constant 0 : index
    %101 = vector.load %arg13[%c0_72, %c0_73, %c0_74] : memref<1x104x128xbf16, #tpu.memory_space<vmem>>, vector<1x80x128xbf16>
    %102 = vector.shape_cast %101 : vector<1x80x128xbf16> to vector<80x128xbf16>
    %c0_75 = arith.constant 0 : index
    %c0_76 = arith.constant 0 : index
    %c0_77 = arith.constant 0 : index
    %103 = vector.load %arg4[%c0_75, %c0_76, %c0_77] : memref<9x128x128xbf16, #tpu.memory_space<vmem>>, vector<1x128x128xbf16>
    %104 = vector.shape_cast %103 : vector<1x128x128xbf16> to vector<128x128xbf16>
    %cst_78 = arith.constant dense<0.000000e+00> : vector<80x128xf32>
    %105 = tpu.matmul %102, %104, %cst_78 {dimension_numbers = #tpu.dot_dimension_numbers<[1], [0], [0], [1], [0, 0, 1, 1], [], []>} : vector<80x128xbf16>, vector<128x128xbf16>, vector<80x128xf32> -> vector<80x128xf32>
    %c0_79 = arith.constant 0 : index
    %c1_80 = arith.constant 1 : index
    %c0_81 = arith.constant 0 : index
    %106 = vector.load %arg13[%c0_79, %c1_80, %c0_81] : memref<1x104x128xbf16, #tpu.memory_space<vmem>>, vector<1x80x128xbf16>
    %107 = vector.shape_cast %106 : vector<1x80x128xbf16> to vector<80x128xbf16>
    %c1_82 = arith.constant 1 : index
    %c0_83 = arith.constant 0 : index
    %c0_84 = arith.constant 0 : index
    %108 = vector.load %arg4[%c1_82, %c0_83, %c0_84] : memref<9x128x128xbf16, #tpu.memory_space<vmem>>, vector<1x128x128xbf16>
    %109 = vector.shape_cast %108 : vector<1x128x128xbf16> to vector<128x128xbf16>
    %cst_85 = arith.constant dense<0.000000e+00> : vector<80x128xf32>
    %110 = tpu.matmul %107, %109, %cst_85 {dimension_numbers = #tpu.dot_dimension_numbers<[1], [0], [0], [1], [0, 0, 1, 1], [], []>} : vector<80x128xbf16>, vector<128x128xbf16>, vector<80x128xf32> -> vector<80x128xf32>
    %111 = arith.addf %105, %110 : vector<80x128xf32>
    %c0_86 = arith.constant 0 : index
    %c2_87 = arith.constant 2 : index
    %c0_88 = arith.constant 0 : index
    %112 = vector.load %arg13[%c0_86, %c2_87, %c0_88] : memref<1x104x128xbf16, #tpu.memory_space<vmem>>, vector<1x80x128xbf16>
    %113 = vector.shape_cast %112 : vector<1x80x128xbf16> to vector<80x128xbf16>
    %c2_89 = arith.constant 2 : index
    %c0_90 = arith.constant 0 : index
    %c0_91 = arith.constant 0 : index
    %114 = vector.load %arg4[%c2_89, %c0_90, %c0_91] : memref<9x128x128xbf16, #tpu.memory_space<vmem>>, vector<1x128x128xbf16>
    %115 = vector.shape_cast %114 : vector<1x128x128xbf16> to vector<128x128xbf16>
    %cst_92 = arith.constant dense<0.000000e+00> : vector<80x128xf32>
    %116 = tpu.matmul %113, %115, %cst_92 {dimension_numbers = #tpu.dot_dimension_numbers<[1], [0], [0], [1], [0, 0, 1, 1], [], []>} : vector<80x128xbf16>, vector<128x128xbf16>, vector<80x128xf32> -> vector<80x128xf32>
    %117 = arith.addf %111, %116 : vector<80x128xf32>
    %c0_93 = arith.constant 0 : index
    %c10_94 = arith.constant 10 : index
    %c0_95 = arith.constant 0 : index
    %118 = vector.load %arg13[%c0_93, %c10_94, %c0_95] : memref<1x104x128xbf16, #tpu.memory_space<vmem>>, vector<1x80x128xbf16>
    %119 = vector.shape_cast %118 : vector<1x80x128xbf16> to vector<80x128xbf16>
    %c3_96 = arith.constant 3 : index
    %c0_97 = arith.constant 0 : index
    %c0_98 = arith.constant 0 : index
    %120 = vector.load %arg4[%c3_96, %c0_97, %c0_98] : memref<9x128x128xbf16, #tpu.memory_space<vmem>>, vector<1x128x128xbf16>
    %121 = vector.shape_cast %120 : vector<1x128x128xbf16> to vector<128x128xbf16>
    %cst_99 = arith.constant dense<0.000000e+00> : vector<80x128xf32>
    %122 = tpu.matmul %119, %121, %cst_99 {dimension_numbers = #tpu.dot_dimension_numbers<[1], [0], [0], [1], [0, 0, 1, 1], [], []>} : vector<80x128xbf16>, vector<128x128xbf16>, vector<80x128xf32> -> vector<80x128xf32>
    %123 = arith.addf %117, %122 : vector<80x128xf32>
    %c0_100 = arith.constant 0 : index
    %c11_101 = arith.constant 11 : index
    %c0_102 = arith.constant 0 : index
    %124 = vector.load %arg13[%c0_100, %c11_101, %c0_102] : memref<1x104x128xbf16, #tpu.memory_space<vmem>>, vector<1x80x128xbf16>
    %125 = vector.shape_cast %124 : vector<1x80x128xbf16> to vector<80x128xbf16>
    %c4_103 = arith.constant 4 : index
    %c0_104 = arith.constant 0 : index
    %c0_105 = arith.constant 0 : index
    %126 = vector.load %arg4[%c4_103, %c0_104, %c0_105] : memref<9x128x128xbf16, #tpu.memory_space<vmem>>, vector<1x128x128xbf16>
    %127 = vector.shape_cast %126 : vector<1x128x128xbf16> to vector<128x128xbf16>
    %cst_106 = arith.constant dense<0.000000e+00> : vector<80x128xf32>
    %128 = tpu.matmul %125, %127, %cst_106 {dimension_numbers = #tpu.dot_dimension_numbers<[1], [0], [0], [1], [0, 0, 1, 1], [], []>} : vector<80x128xbf16>, vector<128x128xbf16>, vector<80x128xf32> -> vector<80x128xf32>
    %129 = arith.addf %123, %128 : vector<80x128xf32>
    %c0_107 = arith.constant 0 : index
    %c12_108 = arith.constant 12 : index
    %c0_109 = arith.constant 0 : index
    %130 = vector.load %arg13[%c0_107, %c12_108, %c0_109] : memref<1x104x128xbf16, #tpu.memory_space<vmem>>, vector<1x80x128xbf16>
    %131 = vector.shape_cast %130 : vector<1x80x128xbf16> to vector<80x128xbf16>
    %c5_110 = arith.constant 5 : index
    %c0_111 = arith.constant 0 : index
    %c0_112 = arith.constant 0 : index
    %132 = vector.load %arg4[%c5_110, %c0_111, %c0_112] : memref<9x128x128xbf16, #tpu.memory_space<vmem>>, vector<1x128x128xbf16>
    %133 = vector.shape_cast %132 : vector<1x128x128xbf16> to vector<128x128xbf16>
    %cst_113 = arith.constant dense<0.000000e+00> : vector<80x128xf32>
    %134 = tpu.matmul %131, %133, %cst_113 {dimension_numbers = #tpu.dot_dimension_numbers<[1], [0], [0], [1], [0, 0, 1, 1], [], []>} : vector<80x128xbf16>, vector<128x128xbf16>, vector<80x128xf32> -> vector<80x128xf32>
    %135 = arith.addf %129, %134 : vector<80x128xf32>
    %c0_114 = arith.constant 0 : index
    %c20_115 = arith.constant 20 : index
    %c0_116 = arith.constant 0 : index
    %136 = vector.load %arg13[%c0_114, %c20_115, %c0_116] : memref<1x104x128xbf16, #tpu.memory_space<vmem>>, vector<1x80x128xbf16>
    %137 = vector.shape_cast %136 : vector<1x80x128xbf16> to vector<80x128xbf16>
    %c6_117 = arith.constant 6 : index
    %c0_118 = arith.constant 0 : index
    %c0_119 = arith.constant 0 : index
    %138 = vector.load %arg4[%c6_117, %c0_118, %c0_119] : memref<9x128x128xbf16, #tpu.memory_space<vmem>>, vector<1x128x128xbf16>
    %139 = vector.shape_cast %138 : vector<1x128x128xbf16> to vector<128x128xbf16>
    %cst_120 = arith.constant dense<0.000000e+00> : vector<80x128xf32>
    %140 = tpu.matmul %137, %139, %cst_120 {dimension_numbers = #tpu.dot_dimension_numbers<[1], [0], [0], [1], [0, 0, 1, 1], [], []>} : vector<80x128xbf16>, vector<128x128xbf16>, vector<80x128xf32> -> vector<80x128xf32>
    %141 = arith.addf %135, %140 : vector<80x128xf32>
    %c0_121 = arith.constant 0 : index
    %c21_122 = arith.constant 21 : index
    %c0_123 = arith.constant 0 : index
    %142 = vector.load %arg13[%c0_121, %c21_122, %c0_123] : memref<1x104x128xbf16, #tpu.memory_space<vmem>>, vector<1x80x128xbf16>
    %143 = vector.shape_cast %142 : vector<1x80x128xbf16> to vector<80x128xbf16>
    %c7_124 = arith.constant 7 : index
    %c0_125 = arith.constant 0 : index
    %c0_126 = arith.constant 0 : index
    %144 = vector.load %arg4[%c7_124, %c0_125, %c0_126] : memref<9x128x128xbf16, #tpu.memory_space<vmem>>, vector<1x128x128xbf16>
    %145 = vector.shape_cast %144 : vector<1x128x128xbf16> to vector<128x128xbf16>
    %cst_127 = arith.constant dense<0.000000e+00> : vector<80x128xf32>
    %146 = tpu.matmul %143, %145, %cst_127 {dimension_numbers = #tpu.dot_dimension_numbers<[1], [0], [0], [1], [0, 0, 1, 1], [], []>} : vector<80x128xbf16>, vector<128x128xbf16>, vector<80x128xf32> -> vector<80x128xf32>
    %147 = arith.addf %141, %146 : vector<80x128xf32>
    %c0_128 = arith.constant 0 : index
    %c22_129 = arith.constant 22 : index
    %c0_130 = arith.constant 0 : index
    %148 = vector.load %arg13[%c0_128, %c22_129, %c0_130] : memref<1x104x128xbf16, #tpu.memory_space<vmem>>, vector<1x80x128xbf16>
    %149 = vector.shape_cast %148 : vector<1x80x128xbf16> to vector<80x128xbf16>
    %c8_131 = arith.constant 8 : index
    %c0_132 = arith.constant 0 : index
    %c0_133 = arith.constant 0 : index
    %150 = vector.load %arg4[%c8_131, %c0_132, %c0_133] : memref<9x128x128xbf16, #tpu.memory_space<vmem>>, vector<1x128x128xbf16>
    %151 = vector.shape_cast %150 : vector<1x128x128xbf16> to vector<128x128xbf16>
    %cst_134 = arith.constant dense<0.000000e+00> : vector<80x128xf32>
    %152 = tpu.matmul %149, %151, %cst_134 {dimension_numbers = #tpu.dot_dimension_numbers<[1], [0], [0], [1], [0, 0, 1, 1], [], []>} : vector<80x128xbf16>, vector<128x128xbf16>, vector<80x128xf32> -> vector<80x128xf32>
    %153 = arith.addf %147, %152 : vector<80x128xf32>
    %c0_135 = arith.constant 0 : index
    %c0_136 = arith.constant 0 : index
    %154 = vector.load %arg5[%c0_135, %c0_136] : memref<1x128xf32, #tpu.memory_space<vmem>>, vector<1x128xf32>
    %155 = vector.broadcast %154 : vector<1x128xf32> to vector<80x128xf32>
    %156 = arith.addf %153, %155 : vector<80x128xf32>
    %cst_137 = arith.constant 0.000000e+00 : f32
    %157 = vector.broadcast %cst_137 : f32 to vector<80x128xf32>
    %158 = arith.maximumf %156, %157 : vector<80x128xf32>
    %159 = arith.truncf %158 : vector<80x128xf32> to vector<80x128xbf16>
    %c0_138 = arith.constant 0 : index
    %c0_139 = arith.constant 0 : index
    %160 = vector.load %arg8[%c0_138, %c0_139] : memref<128x128xbf16, #tpu.memory_space<vmem>>, vector<128x128xbf16>
    %cst_140 = arith.constant dense<0.000000e+00> : vector<80x128xf32>
    %161 = tpu.matmul %159, %160, %cst_140 {dimension_numbers = #tpu.dot_dimension_numbers<[1], [0], [0], [1], [0, 0, 1, 1], [], []>} : vector<80x128xbf16>, vector<128x128xbf16>, vector<80x128xf32> -> vector<80x128xf32>
    %162 = arith.addf %94, %161 : vector<80x128xf32>
    %c0_141 = arith.constant 0 : index
    %c0_142 = arith.constant 0 : index
    %163 = vector.load %arg9[%c0_141, %c0_142] : memref<1x128xf32, #tpu.memory_space<vmem>>, vector<1x128xf32>
    %164 = vector.broadcast %163 : vector<1x128xf32> to vector<80x128xf32>
    %165 = arith.addf %162, %164 : vector<80x128xf32>
    %cst_143 = arith.constant 0.000000e+00 : f32
    %166 = vector.broadcast %cst_143 : f32 to vector<80x128xf32>
    %167 = arith.maximumf %165, %166 : vector<80x128xf32>
    %168 = arith.truncf %167 : vector<80x128xf32> to vector<80x128xbf16>
    %c0_144 = arith.constant 0 : index
    %c0_145 = arith.constant 0 : index
    %169 = vector.load %arg10[%c0_144, %c0_145] : memref<128x128xbf16, #tpu.memory_space<vmem>>, vector<128x128xbf16>
    %cst_146 = arith.constant dense<0.000000e+00> : vector<80x128xf32>
    %170 = tpu.matmul %168, %169, %cst_146 {dimension_numbers = #tpu.dot_dimension_numbers<[1], [0], [0], [1], [0, 0, 1, 1], [], []>} : vector<80x128xbf16>, vector<128x128xbf16>, vector<80x128xf32> -> vector<80x128xf32>
    %c0_147 = arith.constant 0 : index
    %c0_148 = arith.constant 0 : index
    %171 = vector.load %arg11[%c0_147, %c0_148] : memref<1x128xf32, #tpu.memory_space<vmem>>, vector<1x128xf32>
    %172 = vector.broadcast %171 : vector<1x128xf32> to vector<80x128xf32>
    %173 = arith.addf %170, %172 : vector<80x128xf32>
    %cst_149 = arith.constant 0.000000e+00 : f32
    %174 = vector.broadcast %cst_149 : f32 to vector<80x128xf32>
    %175 = arith.maximumf %173, %174 : vector<80x128xf32>
    %c0_150 = arith.constant 0 : index
    %c11_151 = arith.constant 11 : index
    %c0_152 = arith.constant 0 : index
    %176 = vector.load %arg1[%c0_150, %c11_151, %c0_152] : memref<1x104x128xbf16, #tpu.memory_space<vmem>>, vector<1x80x128xbf16>
    %177 = vector.shape_cast %176 : vector<1x80x128xbf16> to vector<80x128xbf16>
    %178 = arith.extf %177 : vector<80x128xbf16> to vector<80x128xf32>
    %179 = arith.addf %175, %178 : vector<80x128xf32>
    %cst_153 = arith.constant 0.000000e+00 : bf16
    %180 = vector.broadcast %cst_153 : bf16 to vector<11x128xbf16>
    %c0_154 = arith.constant 0 : index
    %c0_155 = arith.constant 0 : index
    %c0_156 = arith.constant 0 : index
    %181 = vector.load %arg12[%c0_154, %c0_155, %c0_156] : memref<1x104x128xbf16, #tpu.memory_space<vmem>>, vector<1x11x128xbf16>
    %182 = vector.shape_cast %181 : vector<1x11x128xbf16> to vector<11x128xbf16>
    %183 = vector.shape_cast %180 : vector<11x128xbf16> to vector<1x11x128xbf16>
    tpu.vector_store %arg12[%c0_154, %c0_155, %c0_156], %183 {strides = array<i32>} : memref<1x104x128xbf16, #tpu.memory_space<vmem>>, vector<1x11x128xbf16>,
    %cst_157 = arith.constant 0.000000e+00 : bf16
    %184 = vector.broadcast %cst_157 : bf16 to vector<13x128xbf16>
    %c0_158 = arith.constant 0 : index
    %c91_159 = arith.constant 91 : index
    %c0_160 = arith.constant 0 : index
    %185 = vector.load %arg12[%c0_158, %c91_159, %c0_160] : memref<1x104x128xbf16, #tpu.memory_space<vmem>>, vector<1x13x128xbf16>
    %186 = vector.shape_cast %185 : vector<1x13x128xbf16> to vector<13x128xbf16>
    %187 = vector.shape_cast %184 : vector<13x128xbf16> to vector<1x13x128xbf16>
    tpu.vector_store %arg12[%c0_158, %c91_159, %c0_160], %187 {strides = array<i32>} : memref<1x104x128xbf16, #tpu.memory_space<vmem>>, vector<1x13x128xbf16>,
    %188 = vector.broadcast %20 : vector<80x1xf32> to vector<80x128xf32>
    %189 = arith.mulf %179, %188 : vector<80x128xf32>
    %190 = arith.truncf %189 : vector<80x128xf32> to vector<80x128xbf16>
    %c0_161 = arith.constant 0 : index
    %c11_162 = arith.constant 11 : index
    %c0_163 = arith.constant 0 : index
    %191 = vector.load %arg12[%c0_161, %c11_162, %c0_163] : memref<1x104x128xbf16, #tpu.memory_space<vmem>>, vector<1x80x128xbf16>
    %192 = vector.shape_cast %191 : vector<1x80x128xbf16> to vector<80x128xbf16>
    %193 = vector.shape_cast %190 : vector<80x128xbf16> to vector<1x80x128xbf16>
    tpu.vector_store %arg12[%c0_161, %c11_162, %c0_163], %193 {strides = array<i32>} : memref<1x104x128xbf16, #tpu.memory_space<vmem>>, vector<1x80x128xbf16>,
    return
  }
  func.func @transform_0(%arg0: i32) -> (i32, i32, i32) {
    %c0_i32 = arith.constant 0 : i32
    %c0_i32_0 = arith.constant 0 : i32
    %c0_i32_1 = arith.constant 0 : i32
    return %arg0, %c0_i32, %c0_i32_0 : i32, i32, i32
  }
  func.func @transform_1(%arg0: i32) -> (i32, i32, i32) {
    %c0_i32 = arith.constant 0 : i32
    %c0_i32_0 = arith.constant 0 : i32
    %c0_i32_1 = arith.constant 0 : i32
    %c0_i32_2 = arith.constant 0 : i32
    return %c0_i32, %c0_i32_0, %c0_i32_1 : i32, i32, i32
  }
  func.func @transform_2(%arg0: i32) -> (i32, i32) {
    %c0_i32 = arith.constant 0 : i32
    %c0_i32_0 = arith.constant 0 : i32
    %c0_i32_1 = arith.constant 0 : i32
    return %c0_i32, %c0_i32_0 : i32, i32
  }
  func.func @transform_3(%arg0: i32) -> (i32, i32, i32) {
    %c0_i32 = arith.constant 0 : i32
    %c0_i32_0 = arith.constant 0 : i32
    %c0_i32_1 = arith.constant 0 : i32
    %c0_i32_2 = arith.constant 0 : i32
    return %c0_i32, %c0_i32_0, %c0_i32_1 : i32, i32, i32
  }
  func.func @transform_4(%arg0: i32) -> (i32, i32) {
    %c0_i32 = arith.constant 0 : i32
    %c0_i32_0 = arith.constant 0 : i32
    %c0_i32_1 = arith.constant 0 : i32
    return %c0_i32, %c0_i32_0 : i32, i32
  }
  func.func @transform_5(%arg0: i32) -> (i32, i32) {
    %c0_i32 = arith.constant 0 : i32
    %c0_i32_0 = arith.constant 0 : i32
    %c0_i32_1 = arith.constant 0 : i32
    return %c0_i32, %c0_i32_0 : i32, i32
  }
  func.func @transform_6(%arg0: i32) -> (i32, i32) {
    %c0_i32 = arith.constant 0 : i32
    %c0_i32_0 = arith.constant 0 : i32
    %c0_i32_1 = arith.constant 0 : i32
    return %c0_i32, %c0_i32_0 : i32, i32
  }
  func.func @transform_7(%arg0: i32) -> (i32, i32) {
    %c0_i32 = arith.constant 0 : i32
    %c0_i32_0 = arith.constant 0 : i32
    %c0_i32_1 = arith.constant 0 : i32
    return %c0_i32, %c0_i32_0 : i32, i32
  }
  func.func @transform_8(%arg0: i32) -> (i32, i32) {
    %c0_i32 = arith.constant 0 : i32
    %c0_i32_0 = arith.constant 0 : i32
    %c0_i32_1 = arith.constant 0 : i32
    return %c0_i32, %c0_i32_0 : i32, i32
  }
  func.func @transform_9(%arg0: i32) -> (i32, i32) {
    %c0_i32 = arith.constant 0 : i32
    %c0_i32_0 = arith.constant 0 : i32
    %c0_i32_1 = arith.constant 0 : i32
    return %c0_i32, %c0_i32_0 : i32, i32
  }
  func.func @transform_10(%arg0: i32) -> (i32, i32) {
    %c0_i32 = arith.constant 0 : i32
    %c0_i32_0 = arith.constant 0 : i32
    %c0_i32_1 = arith.constant 0 : i32
    return %c0_i32, %c0_i32_0 : i32, i32
  }
  func.func @transform_11(%arg0: i32) -> (i32, i32, i32) {
    %c0_i32 = arith.constant 0 : i32
    %c0_i32_0 = arith.constant 0 : i32
    %c0_i32_1 = arith.constant 0 : i32
    return %arg0, %c0_i32, %c0_i32_0 : i32, i32, i32
  }
}

</mosaic_0001>

<llo_original>
// kernel: hg_stage_forward.3
$region0: #{hg_stage_forward.3}
  #allocation0 [shape = 'u32[]', space=smem, size = 0x4, offset = 0x4, fixed_abs, tag = 'smem constant byte address 0x4 - core index']
  #allocation1 [shape = 'u32[72,128]{1,0:T(1,128)}', space=vmem, size = 0x9000, scoped, tag = 'internal scratch']
  #allocation2 [shape = 'bf16[1,104,128]{2,1,0:T(8,128)(2,1)}', space=vmem, size = 0x6800, scoped, tag = 'scratch operand']
  %s0 = inlined_call_operand.vmem [shape: bf16[2,104,128], index: 0, kind: input, shape index: {}]
  %s1 = inlined_call_operand.vmem [shape: bf16[9,128,128], index: 1, kind: input, shape index: {}]
  %s2 = inlined_call_operand.vmem [shape: f32[1,128], index: 2, kind: input, shape index: {}]
  %s3 = inlined_call_operand.vmem [shape: bf16[9,128,128], index: 3, kind: input, shape index: {}]
  %s4 = inlined_call_operand.vmem [shape: f32[1,128], index: 4, kind: input, shape index: {}]
  %s5 = inlined_call_operand.vmem [shape: bf16[128,128], index: 5, kind: input, shape index: {}]
  %s6 = inlined_call_operand.vmem [shape: bf16[128,128], index: 6, kind: input, shape index: {}]
  %s7 = inlined_call_operand.vmem [shape: bf16[128,128], index: 7, kind: input, shape index: {}]
  %s8 = inlined_call_operand.vmem [shape: f32[1,128], index: 8, kind: input, shape index: {}]
  %s9 = inlined_call_operand.vmem [shape: bf16[128,128], index: 9, kind: input, shape index: {}]
  %s10 = inlined_call_operand.vmem [shape: f32[1,128], index: 10, kind: input, shape index: {}]
  %s11 = inlined_call_operand.vmem [shape: bf16[2,104,128], index: 11, kind: output, shape index: {}]
  %s12 = sld [smem:[#allocation0]]
  $region77: #{hg_stage_forward.3} parent=0
    _
  %s14 = ssub.s32 1, %s12
  %s15 = scalar_select 0, %s14, %s12
  loop: start=0, step=1, limit=4
  $region2: #{hg_stage_forward.3} parent=0 // loop_pre_header
    _
  $region3: #{hg_stage_forward.3} parent=0 // loop_header
    %s17 = sphi 0, %s21
    %p18 = scmp.ge.s32.totalorder %s17, 4
    %s27 = sphi 0, %s29
    %s30 = sphi 0, %s27
    %s31 = sphi 0, %s30
    %s47 = sphi 0, %s31
    %s51 = sphi 0, %s51
    %s53 = sphi 0, %s51
    %s54 = sphi 0, %s53
    %s68 = sphi 0, %s54
    %s72 = sphi 0, %s72
    %s74 = sphi 0, %s72
    %s75 = sphi 0, %s74
    %s89 = sphi 0, %s75
    %s93 = sphi 0, %s93
    %s95 = sphi 0, %s93
    %s96 = sphi 0, %s95
    %s110 = sphi 0, %s96
    %s114 = sphi 0, %s114
    %s116 = sphi 0, %s114
    %s117 = sphi 0, %s116
    %s131 = sphi 0, %s117
    %s135 = sphi 0, %s135
    %s137 = sphi 0, %s135
    %s138 = sphi 0, %s137
    %s152 = sphi 0, %s138
    %s156 = sphi 0, %s156
    %s158 = sphi 0, %s156
    %s159 = sphi 0, %s158
    %s173 = sphi 0, %s159
    %s177 = sphi 0, %s177
    %s179 = sphi 0, %s177
    %s180 = sphi 0, %s179
    %s194 = sphi 0, %s180
    %s198 = sphi 0, %s198
    %s200 = sphi 0, %s198
    %s201 = sphi 0, %s200
    %s215 = sphi 0, %s201
    %s219 = sphi 0, %s219
    %s221 = sphi 0, %s219
    %s222 = sphi 0, %s221
    %s236 = sphi 0, %s222
    %s240 = sphi 0, %s240
    %s242 = sphi 0, %s240
    %s243 = sphi 0, %s242
    %s257 = sphi 0, %s243
    %s263 = sphi 0, %s265
    %s266 = sphi 0, %s263
    %s267 = sphi 0, %s266
    %s283 = sphi 0, %s267
  $region4: #{hg_stage_forward.3} parent=0 // loop_header_branch
    %20 = sbr.rel (%p18) target = $region8
  $region5: #{hg_stage_forward.3} parent=0 // loop_body
    %s22 = ssub.s32 %s17, 1
    %s23 = ssub.s32 %s17, 2
    %s24 = sadd.s32 %s17, 1
    %s25 = ssub.s32 %s17, %s24
    %p26 = scmp.eq.s32.totalorder %s25, 0
    %s28 = sadd.s32 %s27, 1
    %s29 = scalar_select %p26, %s27, %s28
    %p32 = pneg %p26
    %p33 = scmp.eq.s32.totalorder %s17, 1
    %p34 = por %p32, %p33
    %p35 = scmp.ne.s32.totalorder %s27, %s30
    %p36 = scmp.eq.s32.totalorder %s17, 0
    %p37 = por %p35, %p36
    %p38 = scmp.ne.s32.totalorder %s27, %s30
    %p39 = scmp.eq.s32.totalorder %s22, 1
    %p40 = por %p38, %p39
    %p41 = scmp.ne.s32.totalorder %s30, %s31
    %p42 = scmp.eq.s32.totalorder %s22, 0
    %p43 = por %p41, %p42
    %p44 = scmp.ne.s32.totalorder %s30, %s31
    %p45 = scmp.eq.s32.totalorder %s23, 1
    %p46 = por %p44, %p45
    %p48 = scmp.ne.s32.totalorder %s31, %s47
    %p49 = scmp.eq.s32.totalorder %s23, 0
    %p50 = por %p48, %p49
    %s52 = sadd.s32 %s51, 1
    %p55 = scmp.eq.s32.totalorder %s17, 1
    %p56 = scmp.ne.s32.totalorder %s51, %s53
    %p57 = scmp.eq.s32.totalorder %s17, 0
    %p58 = por %p56, %p57
    %p59 = scmp.ne.s32.totalorder %s51, %s53
    %p60 = scmp.eq.s32.totalorder %s22, 1
    %p61 = por %p59, %p60
    %p62 = scmp.ne.s32.totalorder %s53, %s54
    %p63 = scmp.eq.s32.totalorder %s22, 0
    %p64 = por %p62, %p63
    %p65 = scmp.ne.s32.totalorder %s53, %s54
    %p66 = scmp.eq.s32.totalorder %s23, 1
    %p67 = por %p65, %p66
    %p69 = scmp.ne.s32.totalorder %s54, %s68
    %p70 = scmp.eq.s32.totalorder %s23, 0
    %p71 = por %p69, %p70
    %s73 = sadd.s32 %s72, 1
    %p76 = scmp.eq.s32.totalorder %s17, 1
    %p77 = scmp.ne.s32.totalorder %s72, %s74
    %p78 = scmp.eq.s32.totalorder %s17, 0
    %p79 = por %p77, %p78
    %p80 = scmp.ne.s32.totalorder %s72, %s74
    %p81 = scmp.eq.s32.totalorder %s22, 1
    %p82 = por %p80, %p81
    %p83 = scmp.ne.s32.totalorder %s74, %s75
    %p84 = scmp.eq.s32.totalorder %s22, 0
    %p85 = por %p83, %p84
    %p86 = scmp.ne.s32.totalorder %s74, %s75
    %p87 = scmp.eq.s32.totalorder %s23, 1
    %p88 = por %p86, %p87
    %p90 = scmp.ne.s32.totalorder %s75, %s89
    %p91 = scmp.eq.s32.totalorder %s23, 0
    %p92 = por %p90, %p91
    %s94 = sadd.s32 %s93, 1
    %p97 = scmp.eq.s32.totalorder %s17, 1
    %p98 = scmp.ne.s32.totalorder %s93, %s95
    %p99 = scmp.eq.s32.totalorder %s17, 0
    %p100 = por %p98, %p99
    %p101 = scmp.ne.s32.totalorder %s93, %s95
    %p102 = scmp.eq.s32.totalorder %s22, 1
    %p103 = por %p101, %p102
    %p104 = scmp.ne.s32.totalorder %s95, %s96
    %p105 = scmp.eq.s32.totalorder %s22, 0
    %p106 = por %p104, %p105
    %p107 = scmp.ne.s32.totalorder %s95, %s96
    %p108 = scmp.eq.s32.totalorder %s23, 1
    %p109 = por %p107, %p108
    %p111 = scmp.ne.s32.totalorder %s96, %s110
    %p112 = scmp.eq.s32.totalorder %s23, 0
    %p113 = por %p111, %p112
    %s115 = sadd.s32 %s114, 1
    %p118 = scmp.eq.s32.totalorder %s17, 1
    %p119 = scmp.ne.s32.totalorder %s114, %s116
    %p120 = scmp.eq.s32.totalorder %s17, 0
    %p121 = por %p119, %p120
    %p122 = scmp.ne.s32.totalorder %s114, %s116
    %p123 = scmp.eq.s32.totalorder %s22, 1
    %p124 = por %p122, %p123
    %p125 = scmp.ne.s32.totalorder %s116, %s117
    %p126 = scmp.eq.s32.totalorder %s22, 0
    %p127 = por %p125, %p126
    %p128 = scmp.ne.s32.totalorder %s116, %s117
    %p129 = scmp.eq.s32.totalorder %s23, 1
    %p130 = por %p128, %p129
    %p132 = scmp.ne.s32.totalorder %s117, %s131
    %p133 = scmp.eq.s32.totalorder %s23, 0
    %p134 = por %p132, %p133
    %s136 = sadd.s32 %s135, 1
    %p139 = scmp.eq.s32.totalorder %s17, 1
    %p140 = scmp.ne.s32.totalorder %s135, %s137
    %p141 = scmp.eq.s32.totalorder %s17, 0
    %p142 = por %p140, %p141
    %p143 = scmp.ne.s32.totalorder %s135, %s137
    %p144 = scmp.eq.s32.totalorder %s22, 1
    %p145 = por %p143, %p144
    %p146 = scmp.ne.s32.totalorder %s137, %s138
    %p147 = scmp.eq.s32.totalorder %s22, 0
    %p148 = por %p146, %p147
    %p149 = scmp.ne.s32.totalorder %s137, %s138
    %p150 = scmp.eq.s32.totalorder %s23, 1
    %p151 = por %p149, %p150
    %p153 = scmp.ne.s32.totalorder %s138, %s152
    %p154 = scmp.eq.s32.totalorder %s23, 0
    %p155 = por %p153, %p154
    %s157 = sadd.s32 %s156, 1
    %p160 = scmp.eq.s32.totalorder %s17, 1
    %p161 = scmp.ne.s32.totalorder %s156, %s158
    %p162 = scmp.eq.s32.totalorder %s17, 0
    %p163 = por %p161, %p162
    %p164 = scmp.ne.s32.totalorder %s156, %s158
    %p165 = scmp.eq.s32.totalorder %s22, 1
    %p166 = por %p164, %p165
    %p167 = scmp.ne.s32.totalorder %s158, %s159
    %p168 = scmp.eq.s32.totalorder %s22, 0
    %p169 = por %p167, %p168
    %p170 = scmp.ne.s32.totalorder %s158, %s159
    %p171 = scmp.eq.s32.totalorder %s23, 1
    %p172 = por %p170, %p171
    %p174 = scmp.ne.s32.totalorder %s159, %s173
    %p175 = scmp.eq.s32.totalorder %s23, 0
    %p176 = por %p174, %p175
    %s178 = sadd.s32 %s177, 1
    %p181 = scmp.eq.s32.totalorder %s17, 1
    %p182 = scmp.ne.s32.totalorder %s177, %s179
    %p183 = scmp.eq.s32.totalorder %s17, 0
    %p184 = por %p182, %p183
    %p185 = scmp.ne.s32.totalorder %s177, %s179
    %p186 = scmp.eq.s32.totalorder %s22, 1
    %p187 = por %p185, %p186
    %p188 = scmp.ne.s32.totalorder %s179, %s180
    %p189 = scmp.eq.s32.totalorder %s22, 0
    %p190 = por %p188, %p189
    %p191 = scmp.ne.s32.totalorder %s179, %s180
    %p192 = scmp.eq.s32.totalorder %s23, 1
    %p193 = por %p191, %p192
    %p195 = scmp.ne.s32.totalorder %s180, %s194
    %p196 = scmp.eq.s32.totalorder %s23, 0
    %p197 = por %p195, %p196
    %s199 = sadd.s32 %s198, 1
    %p202 = scmp.eq.s32.totalorder %s17, 1
    %p203 = scmp.ne.s32.totalorder %s198, %s200
    %p204 = scmp.eq.s32.totalorder %s17, 0
    %p205 = por %p203, %p204
    %p206 = scmp.ne.s32.totalorder %s198, %s200
    %p207 = scmp.eq.s32.totalorder %s22, 1
    %p208 = por %p206, %p207
    %p209 = scmp.ne.s32.totalorder %s200, %s201
    %p210 = scmp.eq.s32.totalorder %s22, 0
    %p211 = por %p209, %p210
    %p212 = scmp.ne.s32.totalorder %s200, %s201
    %p213 = scmp.eq.s32.totalorder %s23, 1
    %p214 = por %p212, %p213
    %p216 = scmp.ne.s32.totalorder %s201, %s215
    %p217 = scmp.eq.s32.totalorder %s23, 0
    %p218 = por %p216, %p217
    %s220 = sadd.s32 %s219, 1
    %p223 = scmp.eq.s32.totalorder %s17, 1
    %p224 = scmp.ne.s32.totalorder %s219, %s221
    %p225 = scmp.eq.s32.totalorder %s17, 0
    %p226 = por %p224, %p225
    %p227 = scmp.ne.s32.totalorder %s219, %s221
    %p228 = scmp.eq.s32.totalorder %s22, 1
    %p229 = por %p227, %p228
    %p230 = scmp.ne.s32.totalorder %s221, %s222
    %p231 = scmp.eq.s32.totalorder %s22, 0
    %p232 = por %p230, %p231
    %p233 = scmp.ne.s32.totalorder %s221, %s222
    %p234 = scmp.eq.s32.totalorder %s23, 1
    %p235 = por %p233, %p234
    %p237 = scmp.ne.s32.totalorder %s222, %s236
    %p238 = scmp.eq.s32.totalorder %s23, 0
    %p239 = por %p237, %p238
    %s241 = sadd.s32 %s240, 1
    %p244 = scmp.eq.s32.totalorder %s17, 1
    %p245 = scmp.ne.s32.totalorder %s240, %s242
    %p246 = scmp.eq.s32.totalorder %s17, 0
    %p247 = por %p245, %p246
    %p248 = scmp.ne.s32.totalorder %s240, %s242
    %p249 = scmp.eq.s32.totalorder %s22, 1
    %p250 = por %p248, %p249
    %p251 = scmp.ne.s32.totalorder %s242, %s243
    %p252 = scmp.eq.s32.totalorder %s22, 0
    %p253 = por %p251, %p252
    %p254 = scmp.ne.s32.totalorder %s242, %s243
    %p255 = scmp.eq.s32.totalorder %s23, 1
    %p256 = por %p254, %p255
    %p258 = scmp.ne.s32.totalorder %s243, %s257
    %p259 = scmp.eq.s32.totalorder %s23, 0
    %p260 = por %p258, %p259
    %s261 = ssub.s32 %s17, %s24
    %p262 = scmp.eq.s32.totalorder %s261, 0
    %s264 = sadd.s32 %s263, 1
    %s265 = scalar_select %p262, %s263, %s264
    %p268 = pneg %p262
    %p269 = scmp.eq.s32.totalorder %s17, 1
    %p270 = por %p268, %p269
    %p271 = scmp.ne.s32.totalorder %s263, %s266
    %p272 = scmp.eq.s32.totalorder %s17, 0
    %p273 = por %p271, %p272
    %p274 = scmp.ne.s32.totalorder %s263, %s266
    %p275 = scmp.eq.s32.totalorder %s22, 1
    %p276 = por %p274, %p275
    %p277 = scmp.ne.s32.totalorder %s266, %s267
    %p278 = scmp.eq.s32.totalorder %s22, 0
    %p279 = por %p277, %p278
    %p280 = scmp.ne.s32.totalorder %s266, %s267
    %p281 = scmp.eq.s32.totalorder %s23, 1
    %p282 = por %p280, %p281
    %p284 = scmp.ne.s32.totalorder %s267, %s283
    %p285 = scmp.eq.s32.totalorder %s23, 0
    %p286 = por %p284, %p285
    %p287 = scmp.le.s32.totalorder 1, %s17
    %p288 = scmp.lt.s32.totalorder %s17, 3
    %p289 = pnand %p287, %p288
    %p290 = pneg %p289
    // Predicated region
    $region9: #{hg_stage_forward.3} parent=5 // pred_check
      _
    $region10: #{hg_stage_forward.3} parent=5 // pred_check_branch
      %292 = sbr.rel (%p289) target = $region12
    $region11: #{hg_stage_forward.3} parent=5 // pred_region
      %s293 = ssub.s32 %s17, 1
      // Predicated region
      $region13: #{hg_stage_forward.3} parent=11 // pred_check
        %p294 = pneg %p64
      $region14: #{hg_stage_forward.3} parent=11 // pred_check_branch
        %296 = sbr.rel (%p294) target = $region16
      $region15: #{hg_stage_forward.3} parent=11 // pred_region
        _
      $region16: #{hg_stage_forward.3} parent=11 // pred_fallthru
        _
      // Predicated region
      $region17: #{hg_stage_forward.3} parent=11 // pred_check
        %p297 = pneg %p85
      $region18: #{hg_stage_forward.3} parent=11 // pred_check_branch
        %299 = sbr.rel (%p297) target = $region20
      $region19: #{hg_stage_forward.3} parent=11 // pred_region
        _
      $region20: #{hg_stage_forward.3} parent=11 // pred_fallthru
        _
      // Predicated region
      $region21: #{hg_stage_forward.3} parent=11 // pred_check
        %p300 = pneg %p106
      $region22: #{hg_stage_forward.3} parent=11 // pred_check_branch
        %302 = sbr.rel (%p300) target = $region24
      $region23: #{hg_stage_forward.3} parent=11 // pred_region
        _
      $region24: #{hg_stage_forward.3} parent=11 // pred_fallthru
        _
      // Predicated region
      $region25: #{hg_stage_forward.3} parent=11 // pred_check
        %p303 = pneg %p127
      $region26: #{hg_stage_forward.3} parent=11 // pred_check_branch
        %305 = sbr.rel (%p303) target = $region28
      $region27: #{hg_stage_forward.3} parent=11 // pred_region
        _
      $region28: #{hg_stage_forward.3} parent=11 // pred_fallthru
        _
      // Predicated region
      $region29: #{hg_stage_forward.3} parent=11 // pred_check
        %p306 = pneg %p148
      $region30: #{hg_stage_forward.3} parent=11 // pred_check_branch
        %308 = sbr.rel (%p306) target = $region32
      $region31: #{hg_stage_forward.3} parent=11 // pred_region
        _
      $region32: #{hg_stage_forward.3} parent=11 // pred_fallthru
        _
      // Predicated region
      $region33: #{hg_stage_forward.3} parent=11 // pred_check
        %p309 = pneg %p169
      $region34: #{hg_stage_forward.3} parent=11 // pred_check_branch
        %311 = sbr.rel (%p309) target = $region36
      $region35: #{hg_stage_forward.3} parent=11 // pred_region
        _
      $region36: #{hg_stage_forward.3} parent=11 // pred_fallthru
        _
      // Predicated region
      $region37: #{hg_stage_forward.3} parent=11 // pred_check
        %p312 = pneg %p190
      $region38: #{hg_stage_forward.3} parent=11 // pred_check_branch
        %314 = sbr.rel (%p312) target = $region40
      $region39: #{hg_stage_forward.3} parent=11 // pred_region
        _
      $region40: #{hg_stage_forward.3} parent=11 // pred_fallthru
        _
      // Predicated region
      $region41: #{hg_stage_forward.3} parent=11 // pred_check
        %p315 = pneg %p211
      $region42: #{hg_stage_forward.3} parent=11 // pred_check_branch
        %317 = sbr.rel (%p315) target = $region44
      $region43: #{hg_stage_forward.3} parent=11 // pred_region
        _
      $region44: #{hg_stage_forward.3} parent=11 // pred_fallthru
        _
      // Predicated region
      $region45: #{hg_stage_forward.3} parent=11 // pred_check
        %p318 = pneg %p232
      $region46: #{hg_stage_forward.3} parent=11 // pred_check_branch
        %320 = sbr.rel (%p318) target = $region48
      $region47: #{hg_stage_forward.3} parent=11 // pred_region
        _
      $region48: #{hg_stage_forward.3} parent=11 // pred_fallthru
        _
      // Predicated region
      $region49: #{hg_stage_forward.3} parent=11 // pred_check
        %p321 = pneg %p253
      $region50: #{hg_stage_forward.3} parent=11 // pred_check_branch
        %323 = sbr.rel (%p321) target = $region52
      $region51: #{hg_stage_forward.3} parent=11 // pred_region
        _
      $region52: #{hg_stage_forward.3} parent=11 // pred_fallthru
        _
    $region12: #{hg_stage_forward.3} parent=5 // pred_fallthru
      _
    %p324 = scmp.lt.s32.totalorder %s17, 2
    // Predicated region
    $region53: #{hg_stage_forward.3} parent=5 // pred_check
      %p325 = pneg %p324
    $region54: #{hg_stage_forward.3} parent=5 // pred_check_branch
      %327 = sbr.rel (%p325) target = $region56
    $region55: #{hg_stage_forward.3} parent=5 // pred_region
      // Predicated region
      $region57: #{hg_stage_forward.3} parent=55 // pred_check
        %p328 = pneg %p37
      $region58: #{hg_stage_forward.3} parent=55 // pred_check_branch
        %330 = sbr.rel (%p328) target = $region60
      $region59: #{hg_stage_forward.3} parent=55 // pred_region
        %p331 = scmp.lt.s32.totalorder %s17, 1
        %s332 = scalar_select %p331, %s17, 1
        %s333 = smul.addr %s332, 13
        %s334 = smul.addr %s333, 4
        %s335 = scalar_lea.vmem %s0, %s334
      $region60: #{hg_stage_forward.3} parent=55 // pred_fallthru
        _
    $region56: #{hg_stage_forward.3} parent=5 // pred_fallthru
      _
    %p336 = scmp.le.s32.totalorder 1, %s17
    %p337 = scmp.lt.s32.totalorder %s17, 3
    %p338 = pnand %p336, %p337
    %p339 = pneg %p338
    // Predicated region
    $region61: #{hg_stage_forward.3} parent=5 // pred_check
      _
    $region62: #{hg_stage_forward.3} parent=5 // pred_check_branch
      %341 = sbr.rel (%p338) target = $region64
    $region63: #{hg_stage_forward.3} parent=5 // pred_region
      %s342 = ssub.s32 %s17, 1
      %p343 = scmp.lt.s32.totalorder %s22, 1
      %s344 = scalar_select %p343, %s22, 1
      %s345 = smul.addr %s344, 13
      %s346 = smul.addr %s345, 4
      %s347 = scalar_lea.vmem %s0, %s346
      %p348 = pneg %p43
      %p349 = pneg %p40
      %p350 = pneg %p64
      %p351 = pneg %p61
      %p352 = pneg %p85
      %p353 = pneg %p82
      %p354 = pneg %p106
      %p355 = pneg %p103
      %p356 = pneg %p127
      %p357 = pneg %p124
      %p358 = pneg %p148
      %p359 = pneg %p145
      %p360 = pneg %p169
      %p361 = pneg %p166
      %p362 = pneg %p190
      %p363 = pneg %p187
      %p364 = pneg %p211
      %p365 = pneg %p208
      %p366 = pneg %p232
      %p367 = pneg %p229
      %p368 = pneg %p253
      %p369 = pneg %p250
      %p370 = pneg %p279
      %p371 = pneg %p276
      %p372 = scmp.lt.s32.totalorder %s22, 1
      %s373 = scalar_select %p372, %s22, 1
      %s374 = smul.addr %s373, 13
      %s375 = smul.addr %s374, 4
      %s376 = scalar_lea.vmem %s11, %s375
      %p377 = scmp.lt.s32.totalorder %s22, 1
      %s378 = scalar_select %p377, %s22, 1
      %s379 = smul.addr %s378, 13
      %s380 = smul.addr %s379, 4
      %s381 = scalar_lea.vmem %s0, %s380
      %p382 = scmp.lt.s32.totalorder %s22, 1
      %s383 = scalar_select %p382, %s22, 1
      %s384 = smul.addr %s383, 13
      %s385 = smul.addr %s384, 4
      %s386 = scalar_lea.vmem %s11, %s385
      %v388 = vlaneseq
      %v389 = vshrl.u32 %v388, 7
      %v390 = vadd.s32 %v389, 8
      %v391 = vadd.s32 %v389, 16
      %v392 = vadd.s32 %v389, 24
      %v393 = vadd.s32 %v389, 32
      %v394 = vadd.s32 %v389, 40
      %v395 = vadd.s32 %v389, 48
      %v396 = vadd.s32 %v389, 56
      %v397 = vadd.s32 %v389, 64
      %v398 = vadd.s32 %v389, 72
      %vm399 = vcmp.lt.s32.totalorder %v389, 0
      %v400 = vsub.s32 0, %v389
      %v401 = vsel %vm399, %v400, %v389
      %v402 = vand.u32 %v401, 65535
      %v403 = vshrl.u32 %v401, 16
      %v405 = vmul.u32 %v402, 52429
      %v406 = vmul.u32 %v402, 52428
      %v407 = vmul.u32 %v403, 52429
      %v408 = vmul.u32 %v403, 52428
      %v409 = vshll.u32 %v406, 16
      %v410 = vshrl.u32 %v406, 16
      %v411 = vshll.u32 %v407, 16
      %v412 = vshrl.u32 %v407, 16
      %vm413 = vc.u32 %v405, %v409
      %v414 = vsel %vm413, 1, 0
      %v415 = vadd.s32 %v405, %v409
      %v416 = vadd.s32 %v408, %v414
      %vm417 = vc.u32 %v415, %v411
      %v418 = vsel %vm417, 1, 0
      %v419 = vadd.s32 %v415, %v411
      %v420 = vadd.s32 %v416, %v418
      %v421 = vadd.s32 %v420, %v410
      %v422 = vadd.s32 %v421, %v412
      %v423 = vshrl.u32 %v422, 3
      %v424 = vmul.u32 %v423, 10
      %v425 = vsub.s32 %v401, %v424
      %v426 = vsub.s32 0, %v425
      %v427 = vsel %vm399, %v426, %v425
      %vm428 = vcmp.lt.s32.totalorder %v390, 0
      %v429 = vsub.s32 0, %v390
      %v430 = vsel %vm428, %v429, %v390
      %v431 = vand.u32 %v430, 65535
      %v432 = vshrl.u32 %v430, 16
      %v434 = vmul.u32 %v431, 52429
      %v435 = vmul.u32 %v431, 52428
      %v436 = vmul.u32 %v432, 52429
      %v437 = vmul.u32 %v432, 52428
      %v438 = vshll.u32 %v435, 16
      %v439 = vshrl.u32 %v435, 16
      %v440 = vshll.u32 %v436, 16
      %v441 = vshrl.u32 %v436, 16
      %vm442 = vc.u32 %v434, %v438
      %v443 = vsel %vm442, 1, 0
      %v444 = vadd.s32 %v434, %v438
      %v445 = vadd.s32 %v437, %v443
      %vm446 = vc.u32 %v444, %v440
      %v447 = vsel %vm446, 1, 0
      %v448 = vadd.s32 %v444, %v440
      %v449 = vadd.s32 %v445, %v447
      %v450 = vadd.s32 %v449, %v439
      %v451 = vadd.s32 %v450, %v441
      %v452 = vshrl.u32 %v451, 3
      %v453 = vmul.u32 %v452, 10
      %v454 = vsub.s32 %v430, %v453
      %v455 = vsub.s32 0, %v454
      %v456 = vsel %vm428, %v455, %v454
      %vm457 = vcmp.lt.s32.totalorder %v391, 0
      %v458 = vsub.s32 0, %v391
      %v459 = vsel %vm457, %v458, %v391
      %v460 = vand.u32 %v459, 65535
      %v461 = vshrl.u32 %v459, 16
      %v463 = vmul.u32 %v460, 52429
      %v464 = vmul.u32 %v460, 52428
      %v465 = vmul.u32 %v461, 52429
      %v466 = vmul.u32 %v461, 52428
      %v467 = vshll.u32 %v464, 16
      %v468 = vshrl.u32 %v464, 16
      %v469 = vshll.u32 %v465, 16
      %v470 = vshrl.u32 %v465, 16
      %vm471 = vc.u32 %v463, %v467
      %v472 = vsel %vm471, 1, 0
      %v473 = vadd.s32 %v463, %v467
      %v474 = vadd.s32 %v466, %v472
      %vm475 = vc.u32 %v473, %v469
      %v476 = vsel %vm475, 1, 0
      %v477 = vadd.s32 %v473, %v469
      %v478 = vadd.s32 %v474, %v476
      %v479 = vadd.s32 %v478, %v468
      %v480 = vadd.s32 %v479, %v470
      %v481 = vshrl.u32 %v480, 3
      %v482 = vmul.u32 %v481, 10
      %v483 = vsub.s32 %v459, %v482
      %v484 = vsub.s32 0, %v483
      %v485 = vsel %vm457, %v484, %v483
      %vm486 = vcmp.lt.s32.totalorder %v392, 0
      %v487 = vsub.s32 0, %v392
      %v488 = vsel %vm486, %v487, %v392
      %v489 = vand.u32 %v488, 65535
      %v490 = vshrl.u32 %v488, 16
      %v492 = vmul.u32 %v489, 52429
      %v493 = vmul.u32 %v489, 52428
      %v494 = vmul.u32 %v490, 52429
      %v495 = vmul.u32 %v490, 52428
      %v496 = vshll.u32 %v493, 16
      %v497 = vshrl.u32 %v493, 16
      %v498 = vshll.u32 %v494, 16
      %v499 = vshrl.u32 %v494, 16
      %vm500 = vc.u32 %v492, %v496
      %v501 = vsel %vm500, 1, 0
      %v502 = vadd.s32 %v492, %v496
      %v503 = vadd.s32 %v495, %v501
      %vm504 = vc.u32 %v502, %v498
      %v505 = vsel %vm504, 1, 0
      %v506 = vadd.s32 %v502, %v498
      %v507 = vadd.s32 %v503, %v505
      %v508 = vadd.s32 %v507, %v497
      %v509 = vadd.s32 %v508, %v499
      %v510 = vshrl.u32 %v509, 3
      %v511 = vmul.u32 %v510, 10
      %v512 = vsub.s32 %v488, %v511
      %v513 = vsub.s32 0, %v512
      %v514 = vsel %vm486, %v513, %v512
      %vm515 = vcmp.lt.s32.totalorder %v393, 0
      %v516 = vsub.s32 0, %v393
      %v517 = vsel %vm515, %v516, %v393
      %v518 = vand.u32 %v517, 65535
      %v519 = vshrl.u32 %v517, 16
      %v521 = vmul.u32 %v518, 52429
      %v522 = vmul.u32 %v518, 52428
      %v523 = vmul.u32 %v519, 52429
      %v524 = vmul.u32 %v519, 52428
      %v525 = vshll.u32 %v522, 16
      %v526 = vshrl.u32 %v522, 16
      %v527 = vshll.u32 %v523, 16
      %v528 = vshrl.u32 %v523, 16
      %vm529 = vc.u32 %v521, %v525
      %v530 = vsel %vm529, 1, 0
      %v531 = vadd.s32 %v521, %v525
      %v532 = vadd.s32 %v524, %v530
      %vm533 = vc.u32 %v531, %v527
      %v534 = vsel %vm533, 1, 0
      %v535 = vadd.s32 %v531, %v527
      %v536 = vadd.s32 %v532, %v534
      %v537 = vadd.s32 %v536, %v526
      %v538 = vadd.s32 %v537, %v528
      %v539 = vshrl.u32 %v538, 3
      %v540 = vmul.u32 %v539, 10
      %v541 = vsub.s32 %v517, %v540
      %v542 = vsub.s32 0, %v541
      %v543 = vsel %vm515, %v542, %v541
      %vm544 = vcmp.lt.s32.totalorder %v394, 0
      %v545 = vsub.s32 0, %v394
      %v546 = vsel %vm544, %v545, %v394
      %v547 = vand.u32 %v546, 65535
      %v548 = vshrl.u32 %v546, 16
      %v550 = vmul.u32 %v547, 52429
      %v551 = vmul.u32 %v547, 52428
      %v552 = vmul.u32 %v548, 52429
      %v553 = vmul.u32 %v548, 52428
      %v554 = vshll.u32 %v551, 16
      %v555 = vshrl.u32 %v551, 16
      %v556 = vshll.u32 %v552, 16
      %v557 = vshrl.u32 %v552, 16
      %vm558 = vc.u32 %v550, %v554
      %v559 = vsel %vm558, 1, 0
      %v560 = vadd.s32 %v550, %v554
      %v561 = vadd.s32 %v553, %v559
      %vm562 = vc.u32 %v560, %v556
      %v563 = vsel %vm562, 1, 0
      %v564 = vadd.s32 %v560, %v556
      %v565 = vadd.s32 %v561, %v563
      %v566 = vadd.s32 %v565, %v555
      %v567 = vadd.s32 %v566, %v557
      %v568 = vshrl.u32 %v567, 3
      %v569 = vmul.u32 %v568, 10
      %v570 = vsub.s32 %v546, %v569
      %v571 = vsub.s32 0, %v570
      %v572 = vsel %vm544, %v571, %v570
      %vm573 = vcmp.lt.s32.totalorder %v395, 0
      %v574 = vsub.s32 0, %v395
      %v575 = vsel %vm573, %v574, %v395
      %v576 = vand.u32 %v575, 65535
      %v577 = vshrl.u32 %v575, 16
      %v579 = vmul.u32 %v576, 52429
      %v580 = vmul.u32 %v576, 52428
      %v581 = vmul.u32 %v577, 52429
      %v582 = vmul.u32 %v577, 52428
      %v583 = vshll.u32 %v580, 16
      %v584 = vshrl.u32 %v580, 16
      %v585 = vshll.u32 %v581, 16
      %v586 = vshrl.u32 %v581, 16
      %vm587 = vc.u32 %v579, %v583
      %v588 = vsel %vm587, 1, 0
      %v589 = vadd.s32 %v579, %v583
      %v590 = vadd.s32 %v582, %v588
      %vm591 = vc.u32 %v589, %v585
      %v592 = vsel %vm591, 1, 0
      %v593 = vadd.s32 %v589, %v585
      %v594 = vadd.s32 %v590, %v592
      %v595 = vadd.s32 %v594, %v584
      %v596 = vadd.s32 %v595, %v586
      %v597 = vshrl.u32 %v596, 3
      %v598 = vmul.u32 %v597, 10
      %v599 = vsub.s32 %v575, %v598
      %v600 = vsub.s32 0, %v599
      %v601 = vsel %vm573, %v600, %v599
      %vm602 = vcmp.lt.s32.totalorder %v396, 0
      %v603 = vsub.s32 0, %v396
      %v604 = vsel %vm602, %v603, %v396
      %v605 = vand.u32 %v604, 65535
      %v606 = vshrl.u32 %v604, 16
      %v608 = vmul.u32 %v605, 52429
      %v609 = vmul.u32 %v605, 52428
      %v610 = vmul.u32 %v606, 52429
      %v611 = vmul.u32 %v606, 52428
      %v612 = vshll.u32 %v609, 16
      %v613 = vshrl.u32 %v609, 16
      %v614 = vshll.u32 %v610, 16
      %v615 = vshrl.u32 %v610, 16
      %vm616 = vc.u32 %v608, %v612
      %v617 = vsel %vm616, 1, 0
      %v618 = vadd.s32 %v608, %v612
      %v619 = vadd.s32 %v611, %v617
      %vm620 = vc.u32 %v618, %v614
      %v621 = vsel %vm620, 1, 0
      %v622 = vadd.s32 %v618, %v614
      %v623 = vadd.s32 %v619, %v621
      %v624 = vadd.s32 %v623, %v613
      %v625 = vadd.s32 %v624, %v615
      %v626 = vshrl.u32 %v625, 3
      %v627 = vmul.u32 %v626, 10
      %v628 = vsub.s32 %v604, %v627
      %v629 = vsub.s32 0, %v628
      %v630 = vsel %vm602, %v629, %v628
      %vm631 = vcmp.lt.s32.totalorder %v397, 0
      %v632 = vsub.s32 0, %v397
      %v633 = vsel %vm631, %v632, %v397
      %v634 = vand.u32 %v633, 65535
      %v635 = vshrl.u32 %v633, 16
      %v637 = vmul.u32 %v634, 52429
      %v638 = vmul.u32 %v634, 52428
      %v639 = vmul.u32 %v635, 52429
      %v640 = vmul.u32 %v635, 52428
      %v641 = vshll.u32 %v638, 16
      %v642 = vshrl.u32 %v638, 16
      %v643 = vshll.u32 %v639, 16
      %v644 = vshrl.u32 %v639, 16
      %vm645 = vc.u32 %v637, %v641
      %v646 = vsel %vm645, 1, 0
      %v647 = vadd.s32 %v637, %v641
      %v648 = vadd.s32 %v640, %v646
      %vm649 = vc.u32 %v647, %v643
      %v650 = vsel %vm649, 1, 0
      %v651 = vadd.s32 %v647, %v643
      %v652 = vadd.s32 %v648, %v650
      %v653 = vadd.s32 %v652, %v642
      %v654 = vadd.s32 %v653, %v644
      %v655 = vshrl.u32 %v654, 3
      %v656 = vmul.u32 %v655, 10
      %v657 = vsub.s32 %v633, %v656
      %v658 = vsub.s32 0, %v657
      %v659 = vsel %vm631, %v658, %v657
      %vm660 = vcmp.lt.s32.totalorder %v398, 0
      %v661 = vsub.s32 0, %v398
      %v662 = vsel %vm660, %v661, %v398
      %v663 = vand.u32 %v662, 65535
      %v664 = vshrl.u32 %v662, 16
      %v666 = vmul.u32 %v663, 52429
      %v667 = vmul.u32 %v663, 52428
      %v668 = vmul.u32 %v664, 52429
      %v669 = vmul.u32 %v664, 52428
      %v670 = vshll.u32 %v667, 16
      %v671 = vshrl.u32 %v667, 16
      %v672 = vshll.u32 %v668, 16
      %v673 = vshrl.u32 %v668, 16
      %vm674 = vc.u32 %v666, %v670
      %v675 = vsel %vm674, 1, 0
      %v676 = vadd.s32 %v666, %v670
      %v677 = vadd.s32 %v669, %v675
      %vm678 = vc.u32 %v676, %v672
      %v679 = vsel %vm678, 1, 0
      %v680 = vadd.s32 %v676, %v672
      %v681 = vadd.s32 %v677, %v679
      %v682 = vadd.s32 %v681, %v671
      %v683 = vadd.s32 %v682, %v673
      %v684 = vshrl.u32 %v683, 3
      %v685 = vmul.u32 %v684, 10
      %v686 = vsub.s32 %v662, %v685
      %v687 = vsub.s32 0, %v686
      %v688 = vsel %vm660, %v687, %v686
      %vm689 = vcmp.ne.s32.totalorder %v427, 0
      %vm690 = vcmp.ne.s32.totalorder %v456, 0
      %vm691 = vcmp.ne.s32.totalorder %v485, 0
      %vm692 = vcmp.ne.s32.totalorder %v514, 0
      %vm693 = vcmp.ne.s32.totalorder %v543, 0
      %vm694 = vcmp.ne.s32.totalorder %v572, 0
      %vm695 = vcmp.ne.s32.totalorder %v601, 0
      %vm696 = vcmp.ne.s32.totalorder %v630, 0
      %vm697 = vcmp.ne.s32.totalorder %v659, 0
      %vm698 = vcmp.ne.s32.totalorder %v688, 0
      %vm699 = vcmp.lt.s32.totalorder %v427, 0
      %vm700 = vcmp.lt.s32.totalorder %v456, 0
      %vm701 = vcmp.lt.s32.totalorder %v485, 0
      %vm702 = vcmp.lt.s32.totalorder %v514, 0
      %vm703 = vcmp.lt.s32.totalorder %v543, 0
      %vm704 = vcmp.lt.s32.totalorder %v572, 0
      %vm705 = vcmp.lt.s32.totalorder %v601, 0
      %vm706 = vcmp.lt.s32.totalorder %v630, 0
      %vm707 = vcmp.lt.s32.totalorder %v659, 0
      %vm708 = vcmp.lt.s32.totalorder %v688, 0
      %vm709 = vmand %vm699, %vm689
      %vm710 = vmand %vm700, %vm690
      %vm711 = vmand %vm701, %vm691
      %vm712 = vmand %vm702, %vm692
      %vm713 = vmand %vm703, %vm693
      %vm714 = vmand %vm704, %vm694
      %vm715 = vmand %vm705, %vm695
      %vm716 = vmand %vm706, %vm696
      %vm717 = vmand %vm707, %vm697
      %vm718 = vmand %vm708, %vm698
      %v719 = vadd.s32 %v427, 10
      %v720 = vadd.s32 %v456, 10
      %v721 = vadd.s32 %v485, 10
      %v722 = vadd.s32 %v514, 10
      %v723 = vadd.s32 %v543, 10
      %v724 = vadd.s32 %v572, 10
      %v725 = vadd.s32 %v601, 10
      %v726 = vadd.s32 %v630, 10
      %v727 = vadd.s32 %v659, 10
      %v728 = vadd.s32 %v688, 10
      %v729 = vsel %vm709, %v719, %v427
      %v730 = vsel %vm710, %v720, %v456
      %v731 = vsel %vm711, %v721, %v485
      %v732 = vsel %vm712, %v722, %v514
      %v733 = vsel %vm713, %v723, %v543
      %v734 = vsel %vm714, %v724, %v572
      %v735 = vsel %vm715, %v725, %v601
      %v736 = vsel %vm716, %v726, %v630
      %v737 = vsel %vm717, %v727, %v659
      %v738 = vsel %vm718, %v728, %v688
      %vm739 = vcmp.lt.s32.totalorder %v729, 8
      %vm740 = vcmp.lt.s32.totalorder %v730, 8
      %vm741 = vcmp.lt.s32.totalorder %v731, 8
      %vm742 = vcmp.lt.s32.totalorder %v732, 8
      %vm743 = vcmp.lt.s32.totalorder %v733, 8
      %vm744 = vcmp.lt.s32.totalorder %v734, 8
      %vm745 = vcmp.lt.s32.totalorder %v735, 8
      %vm746 = vcmp.lt.s32.totalorder %v736, 8
      %vm747 = vcmp.lt.s32.totalorder %v737, 8
      %vm748 = vcmp.lt.s32.totalorder %v738, 8
      %v749 = vsel %vm739, 1, 0
      %v750 = vsel %vm740, 1, 0
      %v751 = vsel %vm741, 1, 0
      %v752 = vsel %vm742, 1, 0
      %v753 = vsel %vm743, 1, 0
      %v754 = vsel %vm744, 1, 0
      %v755 = vsel %vm745, 1, 0
      %v756 = vsel %vm746, 1, 0
      %v757 = vsel %vm747, 1, 0
      %v758 = vsel %vm748, 1, 0
      %v759 = vcvt.s32.f32 %v749
      %v760 = vcvt.s32.f32 %v750
      %v761 = vcvt.s32.f32 %v751
      %v762 = vcvt.s32.f32 %v752
      %v763 = vcvt.s32.f32 %v753
      %v764 = vcvt.s32.f32 %v754
      %v765 = vcvt.s32.f32 %v755
      %v766 = vcvt.s32.f32 %v756
      %v767 = vcvt.s32.f32 %v757
      %v768 = vcvt.s32.f32 %v758
      %v769 = vld [vmem:[%s381 + $0x4] sm:$0xe]
      %v770 = vld [vmem:[%s381 + $0x8] sm:$0xf]
      %v771 = vld [vmem:[%s381 + $0xc] sm:$0xf]
      %v772 = vld [vmem:[%s381 + $0x10] sm:$0xf]
      %v773 = vld [vmem:[%s381 + $0x14] sm:$0xf]
      %v774 = vld [vmem:[%s381 + $0x18] sm:$0xf]
      %v775 = vld [vmem:[%s381 + $0x1c] sm:$0xf]
      %v776 = vld [vmem:[%s381 + $0x20] sm:$0xf]
      %v777 = vld [vmem:[%s381 + $0x24] sm:$0xf]
      %v778 = vld [vmem:[%s381 + $0x28] sm:$0xf]
      %v779 = vld [vmem:[%s381 + $0x2c] sm:$0x3]
      %v780 = vld [vmem:[%s5] sm:$0xf]
      %v781 = vld [vmem:[%s5 + $0x4] sm:$0xf]
      %v782 = vld [vmem:[%s5 + $0x8] sm:$0xf]
      %v783 = vld [vmem:[%s5 + $0xc] sm:$0xf]
      %v784 = vld [vmem:[%s5 + $0x10] sm:$0xf]
      %v785 = vld [vmem:[%s5 + $0x14] sm:$0xf]
      %v786 = vld [vmem:[%s5 + $0x18] sm:$0xf]
      %v787 = vld [vmem:[%s5 + $0x1c] sm:$0xf]
      %v788 = vld [vmem:[%s5 + $0x20] sm:$0xf]
      %v789 = vld [vmem:[%s5 + $0x24] sm:$0xf]
      %v790 = vld [vmem:[%s5 + $0x28] sm:$0xf]
      %v791 = vld [vmem:[%s5 + $0x2c] sm:$0xf]
      %v792 = vld [vmem:[%s5 + $0x30] sm:$0xf]
      %v793 = vld [vmem:[%s5 + $0x34] sm:$0xf]
      %v794 = vld [vmem:[%s5 + $0x38] sm:$0xf]
      %v795 = vld [vmem:[%s5 + $0x3c] sm:$0xf]
      %796 = vst [vmem:[#allocation2] sm:$0xf] 0
      %vm797 = vcmask 1041408
      %vm798 = vsmask.f32 1280
      %vm799 = vmand %vm797, %vm798
      %v800 = vld [vmem:[#allocation2 + $0x4] sm:$0x3]
      %v801 = vsel %vm799, 0, %v800
      %802 = vst [vmem:[#allocation2 + $0x4] sm:$0x3] %v801
      %vm803 = vcmask 1043457
      %vm804 = vsmask.f32 7942
      %vm805 = vmand %vm803, %vm804
      %v806 = vld [vmem:[#allocation2 + $0x2c] sm:$0xe]
      %v807 = vsel %vm805, 0, %v806
      %808 = vst [vmem:[#allocation2 + $0x2c] sm:$0xe] %v807
      %809 = vst [vmem:[#allocation2 + $0x30] sm:$0xf] 0
      %v810 = vld [vmem:[%s381] sm:$0xf]
      %v811 = vld [vmem:[%s381 + $0x4] sm:$0xf]
      %v812 = vld [vmem:[%s381 + $0x8] sm:$0xf]
      %v813 = vld [vmem:[%s381 + $0xc] sm:$0xf]
      %v814 = vld [vmem:[%s381 + $0x10] sm:$0xf]
      %v815 = vld [vmem:[%s381 + $0x14] sm:$0xf]
      %v816 = vld [vmem:[%s381 + $0x18] sm:$0xf]
      %v817 = vld [vmem:[%s381 + $0x1c] sm:$0xf]
      %v818 = vld [vmem:[%s381 + $0x20] sm:$0xf]
      %v819 = vld [vmem:[%s381 + $0x24] sm:$0xf]
      %v820 = vld [vmem:[%s1] sm:$0xf]
      %v821 = vld [vmem:[%s1 + $0x4] sm:$0xf]
      %v822 = vld [vmem:[%s1 + $0x8] sm:$0xf]
      %v823 = vld [vmem:[%s1 + $0xc] sm:$0xf]
      %v824 = vld [vmem:[%s1 + $0x10] sm:$0xf]
      %v825 = vld [vmem:[%s1 + $0x14] sm:$0xf]
      %v826 = vld [vmem:[%s1 + $0x18] sm:$0xf]
      %v827 = vld [vmem:[%s1 + $0x1c] sm:$0xf]
      %v828 = vld [vmem:[%s1 + $0x20] sm:$0xf]
      %v829 = vld [vmem:[%s1 + $0x24] sm:$0xf]
      %v830 = vld [vmem:[%s1 + $0x28] sm:$0xf]
      %v831 = vld [vmem:[%s1 + $0x2c] sm:$0xf]
      %v832 = vld [vmem:[%s1 + $0x30] sm:$0xf]
      %v833 = vld [vmem:[%s1 + $0x34] sm:$0xf]
      %v834 = vld [vmem:[%s1 + $0x38] sm:$0xf]
      %v835 = vld [vmem:[%s1 + $0x3c] sm:$0xf]
      %v836 = vld [vmem:[%s381 + $0x28] sm:$0x1]
      %s837 = scalar_lea.vmem %s1, 64
      %v838 = vld [vmem:[%s837] sm:$0xf]
      %v839 = vld [vmem:[%s837 + $0x4] sm:$0xf]
      %v840 = vld [vmem:[%s837 + $0x8] sm:$0xf]
      %v841 = vld [vmem:[%s837 + $0xc] sm:$0xf]
      %v842 = vld [vmem:[%s837 + $0x10] sm:$0xf]
      %v843 = vld [vmem:[%s837 + $0x14] sm:$0xf]
      %v844 = vld [vmem:[%s837 + $0x18] sm:$0xf]
      %v845 = vld [vmem:[%s837 + $0x1c] sm:$0xf]
      %v846 = vld [vmem:[%s837 + $0x20] sm:$0xf]
      %v847 = vld [vmem:[%s837 + $0x24] sm:$0xf]
      %v848 = vld [vmem:[%s837 + $0x28] sm:$0xf]
      %v849 = vld [vmem:[%s837 + $0x2c] sm:$0xf]
      %v850 = vld [vmem:[%s837 + $0x30] sm:$0xf]
      %v851 = vld [vmem:[%s837 + $0x34] sm:$0xf]
      %v852 = vld [vmem:[%s837 + $0x38] sm:$0xf]
      %v853 = vld [vmem:[%s837 + $0x3c] sm:$0xf]
      %v865 = vunpack.c.l.b16 %v810
      %v866 = vunpack.c.l.b16 %v811
      %v867 = vunpack.c.l.b16 %v812
      %v868 = vunpack.c.l.b16 %v813
      %v869 = vunpack.c.l.b16 %v814
      %v870 = vunpack.c.l.b16 %v815
      %v871 = vunpack.c.l.b16 %v816
      %v872 = vunpack.c.l.b16 %v817
      %v873 = vunpack.c.l.b16 %v818
      %v874 = vunpack.c.l.b16 %v819
      %v875 = vunpack.c.l.b16 %v836
      %v876 = vpack.c.b16 %v866, %v865
      %v877 = vpack.c.b16 %v868, %v867
      %v878 = vpack.c.b16 %v870, %v869
      %v879 = vpack.c.b16 %v872, %v871
      %v880 = vpack.c.b16 %v874, %v873
      %v881 = vpack.c.b16 %v875, %v875
      %vm882 = vsmask.f32 7424
      %v884 = vshrl.u32 %v876, 16
      %v886 = vshll.u32 %v876, 16
      %v888 = vrot.slane %v886, 1
      %v889 = vor.u32 %v884, %v888
      %v891 = vshll.u32 %v877, 16
      %v893 = vrot.slane %v891, 1
      %v894 = vsel %vm882, %v889, %v893
      %v895 = vshrl.u32 %v877, 16
      %v897 = vor.u32 %v895, %v893
      %v899 = vshll.u32 %v878, 16
      %v901 = vrot.slane %v899, 1
      %v902 = vsel %vm882, %v897, %v901
      %v903 = vshrl.u32 %v878, 16
      %v905 = vor.u32 %v903, %v901
      %v907 = vshll.u32 %v879, 16
      %v909 = vrot.slane %v907, 1
      %v910 = vsel %vm882, %v905, %v909
      %v911 = vshrl.u32 %v879, 16
      %v913 = vor.u32 %v911, %v909
      %v915 = vshll.u32 %v880, 16
      %v917 = vrot.slane %v915, 1
      %v918 = vsel %vm882, %v913, %v917
      %v919 = vshrl.u32 %v880, 16
      %v921 = vor.u32 %v919, %v917
      %v923 = vshll.u32 %v881, 16
      %v925 = vrot.slane %v923, 1
      %v926 = vsel %vm882, %v921, %v925
      %v948 = vunpack.c.l.b16 %v838
      %v949 = vunpack.c.l.b16 %v839
      %v950 = vunpack.c.l.b16 %v840
      %v951 = vunpack.c.l.b16 %v841
      %v952 = vunpack.c.l.b16 %v842
      %v953 = vunpack.c.l.b16 %v843
      %v954 = vunpack.c.l.b16 %v844
      %v955 = vunpack.c.l.b16 %v845
      %v956 = vunpack.c.l.b16 %v846
      %v957 = vunpack.c.l.b16 %v847
      %v958 = vunpack.c.l.b16 %v848
      %v959 = vunpack.c.l.b16 %v849
      %v960 = vunpack.c.l.b16 %v850
      %v961 = vunpack.c.l.b16 %v851
      %v962 = vunpack.c.l.b16 %v852
      %v963 = vunpack.c.l.b16 %v853
      %v964 = vpack.c.b16 %v949, %v948
      %v965 = vpack.c.b16 %v951, %v950
      %v966 = vpack.c.b16 %v953, %v952
      %v967 = vpack.c.b16 %v955, %v954
      %v968 = vpack.c.b16 %v957, %v956
      %v969 = vpack.c.b16 %v959, %v958
      %v970 = vpack.c.b16 %v961, %v960
      %v971 = vpack.c.b16 %v963, %v962
      %980 = vmatpush.bf16.msra.mxu0 %v971
      %981 = vmatpush.bf16.msra.mxu0 %v970
      %982 = vmatpush.bf16.msra.mxu0 %v969
      %983 = vmatpush.bf16.msra.mxu0 %v968
      %984 = vmatpush.bf16.msra.mxu0 %v967
      %985 = vmatpush.bf16.msra.mxu0 %v966
      %986 = vmatpush.bf16.msra.mxu0 %v965
      %987 = vmatpush.bf16.msra.mxu0 %v964
      %988 = vmatmul.bf16.gmra.mxu0 %v894
      %v989 = vpop.f32.mrf.mxu0
      %v990 = vadd.f32 0.0, %v989
      %v991 = vpop.f32.mrf.mxu0
      %v992 = vadd.f32 0.0, %v991
      %993 = vmatmul.bf16.gmra.mxu0 %v902
      %v994 = vpop.f32.mrf.mxu0
      %v995 = vadd.f32 0.0, %v994
      %v996 = vpop.f32.mrf.mxu0
      %v997 = vadd.f32 0.0, %v996
      %998 = vmatmul.bf16.gmra.mxu0 %v910
      %v999 = vpop.f32.mrf.mxu0
      %v1000 = vadd.f32 0.0, %v999
      %v1001 = vpop.f32.mrf.mxu0
      %v1002 = vadd.f32 0.0, %v1001
      %1003 = vmatmul.bf16.gmra.mxu0 %v918
      %v1004 = vpop.f32.mrf.mxu0
      %v1005 = vadd.f32 0.0, %v1004
      %v1006 = vpop.f32.mrf.mxu0
      %v1007 = vadd.f32 0.0, %v1006
      %1008 = vmatmul.bf16.gmra.mxu0 %v926
      %v1009 = vpop.f32.mrf.mxu0
      %v1010 = vadd.f32 0.0, %v1009
      %v1011 = vpop.f32.mrf.mxu0
      %v1012 = vadd.f32 0.0, %v1011
      %1013 = vdwg.mxu0
      %v1035 = vunpack.c.l.b16 %v820
      %v1036 = vunpack.c.l.b16 %v821
      %v1037 = vunpack.c.l.b16 %v822
      %v1038 = vunpack.c.l.b16 %v823
      %v1039 = vunpack.c.l.b16 %v824
      %v1040 = vunpack.c.l.b16 %v825
      %v1041 = vunpack.c.l.b16 %v826
      %v1042 = vunpack.c.l.b16 %v827
      %v1043 = vunpack.c.l.b16 %v828
      %v1044 = vunpack.c.l.b16 %v829
      %v1045 = vunpack.c.l.b16 %v830
      %v1046 = vunpack.c.l.b16 %v831
      %v1047 = vunpack.c.l.b16 %v832
      %v1048 = vunpack.c.l.b16 %v833
      %v1049 = vunpack.c.l.b16 %v834
      %v1050 = vunpack.c.l.b16 %v835
      %v1051 = vpack.c.b16 %v1036, %v1035
      %v1052 = vpack.c.b16 %v1038, %v1037
      %v1053 = vpack.c.b16 %v1040, %v1039
      %v1054 = vpack.c.b16 %v1042, %v1041
      %v1055 = vpack.c.b16 %v1044, %v1043
      %v1056 = vpack.c.b16 %v1046, %v1045
      %v1057 = vpack.c.b16 %v1048, %v1047
      %v1058 = vpack.c.b16 %v1050, %v1049
      %1067 = vmatpush.bf16.msra.mxu0 %v1058
      %1068 = vmatpush.bf16.msra.mxu0 %v1057
      %1069 = vmatpush.bf16.msra.mxu0 %v1056
      %1070 = vmatpush.bf16.msra.mxu0 %v1055
      %1071 = vmatpush.bf16.msra.mxu0 %v1054
      %1072 = vmatpush.bf16.msra.mxu0 %v1053
      %1073 = vmatpush.bf16.msra.mxu0 %v1052
      %1074 = vmatpush.bf16.msra.mxu0 %v1051
      %1075 = vmatmul.bf16.gmra.mxu0 %v876
      %v1076 = vpop.f32.mrf.mxu0
      %v1077 = vadd.f32 %v990, %v1076
      %v1078 = vpop.f32.mrf.mxu0
      %v1079 = vadd.f32 %v992, %v1078
      %1080 = vmatmul.bf16.gmra.mxu0 %v877
      %v1081 = vpop.f32.mrf.mxu0
      %v1082 = vadd.f32 %v995, %v1081
      %v1083 = vpop.f32.mrf.mxu0
      %v1084 = vadd.f32 %v997, %v1083
      %1085 = vmatmul.bf16.gmra.mxu0 %v878
      %v1086 = vpop.f32.mrf.mxu0
      %v1087 = vadd.f32 %v1000, %v1086
      %v1088 = vpop.f32.mrf.mxu0
      %v1089 = vadd.f32 %v1002, %v1088
      %1090 = vmatmul.bf16.gmra.mxu0 %v879
      %v1091 = vpop.f32.mrf.mxu0
      %v1092 = vadd.f32 %v1005, %v1091
      %v1093 = vpop.f32.mrf.mxu0
      %v1094 = vadd.f32 %v1007, %v1093
      %1095 = vmatmul.bf16.gmra.mxu0 %v880
      %v1096 = vpop.f32.mrf.mxu0
      %v1097 = vadd.f32 %v1010, %v1096
      %v1098 = vpop.f32.mrf.mxu0
      %v1099 = vadd.f32 %v1012, %v1098
      %1100 = vdwg.mxu0
      %v1101 = vld [vmem:[%s381] sm:$0xe]
      %s1102 = scalar_lea.vmem %s1, 128
      %v1103 = vld [vmem:[%s1102] sm:$0xf]
      %v1104 = vld [vmem:[%s1102 + $0x4] sm:$0xf]
      %v1105 = vld [vmem:[%s1102 + $0x8] sm:$0xf]
      %v1106 = vld [vmem:[%s1102 + $0xc] sm:$0xf]
      %v1107 = vld [vmem:[%s1102 + $0x10] sm:$0xf]
      %v1108 = vld [vmem:[%s1102 + $0x14] sm:$0xf]
      %v1109 = vld [vmem:[%s1102 + $0x18] sm:$0xf]
      %v1110 = vld [vmem:[%s1102 + $0x1c] sm:$0xf]
      %v1111 = vld [vmem:[%s1102 + $0x20] sm:$0xf]
      %v1112 = vld [vmem:[%s1102 + $0x24] sm:$0xf]
      %v1113 = vld [vmem:[%s1102 + $0x28] sm:$0xf]
      %v1114 = vld [vmem:[%s1102 + $0x2c] sm:$0xf]
      %v1115 = vld [vmem:[%s1102 + $0x30] sm:$0xf]
      %v1116 = vld [vmem:[%s1102 + $0x34] sm:$0xf]
      %v1117 = vld [vmem:[%s1102 + $0x38] sm:$0xf]
      %v1118 = vld [vmem:[%s1102 + $0x3c] sm:$0xf]
      %v1120 = vunpack.c.l.b16 %v1101
      %v1121 = vpack.c.b16 %v866, %v1120
      %vm1122 = vcmask 1046528
      %v1123 = vrot.slane %v1121, 1
      %v1124 = vrot.slane %v877, 1
      %v1125 = vsel %vm1122, %v1123, %v1124
      %v1126 = vrot.slane %v878, 1
      %v1127 = vsel %vm1122, %v1124, %v1126
      %v1128 = vrot.slane %v879, 1
      %v1129 = vsel %vm1122, %v1126, %v1128
      %v1130 = vrot.slane %v880, 1
      %v1131 = vsel %vm1122, %v1128, %v1130
      %v1132 = vrot.slane %v881, 1
      %v1133 = vsel %vm1122, %v1130, %v1132
      %v1155 = vunpack.c.l.b16 %v1103
      %v1156 = vunpack.c.l.b16 %v1104
      %v1157 = vunpack.c.l.b16 %v1105
      %v1158 = vunpack.c.l.b16 %v1106
      %v1159 = vunpack.c.l.b16 %v1107
      %v1160 = vunpack.c.l.b16 %v1108
      %v1161 = vunpack.c.l.b16 %v1109
      %v1162 = vunpack.c.l.b16 %v1110
      %v1163 = vunpack.c.l.b16 %v1111
      %v1164 = vunpack.c.l.b16 %v1112
      %v1165 = vunpack.c.l.b16 %v1113
      %v1166 = vunpack.c.l.b16 %v1114
      %v1167 = vunpack.c.l.b16 %v1115
      %v1168 = vunpack.c.l.b16 %v1116
      %v1169 = vunpack.c.l.b16 %v1117
      %v1170 = vunpack.c.l.b16 %v1118
      %v1171 = vpack.c.b16 %v1156, %v1155
      %v1172 = vpack.c.b16 %v1158, %v1157
      %v1173 = vpack.c.b16 %v1160, %v1159
      %v1174 = vpack.c.b16 %v1162, %v1161
      %v1175 = vpack.c.b16 %v1164, %v1163
      %v1176 = vpack.c.b16 %v1166, %v1165
      %v1177 = vpack.c.b16 %v1168, %v1167
      %v1178 = vpack.c.b16 %v1170, %v1169
      %1187 = vmatpush.bf16.msra.mxu0 %v1178
      %1188 = vmatpush.bf16.msra.mxu0 %v1177
      %1189 = vmatpush.bf16.msra.mxu0 %v1176
      %1190 = vmatpush.bf16.msra.mxu0 %v1175
      %1191 = vmatpush.bf16.msra.mxu0 %v1174
      %1192 = vmatpush.bf16.msra.mxu0 %v1173
      %1193 = vmatpush.bf16.msra.mxu0 %v1172
      %1194 = vmatpush.bf16.msra.mxu0 %v1171
      %1195 = vmatmul.bf16.gmra.mxu0 %v1125
      %v1196 = vpop.f32.mrf.mxu0
      %v1197 = vadd.f32 0.0, %v1196
      %v1198 = vpop.f32.mrf.mxu0
      %v1199 = vadd.f32 0.0, %v1198
      %1200 = vmatmul.bf16.gmra.mxu0 %v1127
      %v1201 = vpop.f32.mrf.mxu0
      %v1202 = vadd.f32 0.0, %v1201
      %v1203 = vpop.f32.mrf.mxu0
      %v1204 = vadd.f32 0.0, %v1203
      %1205 = vmatmul.bf16.gmra.mxu0 %v1129
      %v1206 = vpop.f32.mrf.mxu0
      %v1207 = vadd.f32 0.0, %v1206
      %v1208 = vpop.f32.mrf.mxu0
      %v1209 = vadd.f32 0.0, %v1208
      %1210 = vmatmul.bf16.gmra.mxu0 %v1131
      %v1211 = vpop.f32.mrf.mxu0
      %v1212 = vadd.f32 0.0, %v1211
      %v1213 = vpop.f32.mrf.mxu0
      %v1214 = vadd.f32 0.0, %v1213
      %1215 = vmatmul.bf16.gmra.mxu0 %v1133
      %v1216 = vpop.f32.mrf.mxu0
      %v1217 = vadd.f32 0.0, %v1216
      %v1218 = vpop.f32.mrf.mxu0
      %v1219 = vadd.f32 0.0, %v1218
      %1220 = vdwg.mxu0
      %v1221 = vadd.f32 %v1077, %v1197
      %v1222 = vadd.f32 %v1079, %v1199
      %v1223 = vadd.f32 %v1082, %v1202
      %v1224 = vadd.f32 %v1084, %v1204
      %v1225 = vadd.f32 %v1087, %v1207
      %v1226 = vadd.f32 %v1089, %v1209
      %v1227 = vadd.f32 %v1092, %v1212
      %v1228 = vadd.f32 %v1094, %v1214
      %v1229 = vadd.f32 %v1097, %v1217
      %v1230 = vadd.f32 %v1099, %v1219
      %v1231 = vld [vmem:[%s381 + $0x4] sm:$0xe]
      %v1232 = vld [vmem:[%s381 + $0x8] sm:$0xf]
      %v1233 = vld [vmem:[%s381 + $0xc] sm:$0xf]
      %v1234 = vld [vmem:[%s381 + $0x10] sm:$0xf]
      %v1235 = vld [vmem:[%s381 + $0x14] sm:$0xf]
      %v1236 = vld [vmem:[%s381 + $0x18] sm:$0xf]
      %v1237 = vld [vmem:[%s381 + $0x1c] sm:$0xf]
      %v1238 = vld [vmem:[%s381 + $0x20] sm:$0xf]
      %v1239 = vld [vmem:[%s381 + $0x24] sm:$0xf]
      %v1240 = vld [vmem:[%s381 + $0x28] sm:$0xf]
      %v1241 = vld [vmem:[%s381 + $0x2c] sm:$0x1]
      %s1242 = scalar_lea.vmem %s1, 192
      %v1243 = vld [vmem:[%s1242] sm:$0xf]
      %v1244 = vld [vmem:[%s1242 + $0x4] sm:$0xf]
      %v1245 = vld [vmem:[%s1242 + $0x8] sm:$0xf]
      %v1246 = vld [vmem:[%s1242 + $0xc] sm:$0xf]
      %v1247 = vld [vmem:[%s1242 + $0x10] sm:$0xf]
      %v1248 = vld [vmem:[%s1242 + $0x14] sm:$0xf]
      %v1249 = vld [vmem:[%s1242 + $0x18] sm:$0xf]
      %v1250 = vld [vmem:[%s1242 + $0x1c] sm:$0xf]
      %v1251 = vld [vmem:[%s1242 + $0x20] sm:$0xf]
      %v1252 = vld [vmem:[%s1242 + $0x24] sm:$0xf]
      %v1253 = vld [vmem:[%s1242 + $0x28] sm:$0xf]
      %v1254 = vld [vmem:[%s1242 + $0x2c] sm:$0xf]
      %v1255 = vld [vmem:[%s1242 + $0x30] sm:$0xf]
      %v1256 = vld [vmem:[%s1242 + $0x34] sm:$0xf]
      %v1257 = vld [vmem:[%s1242 + $0x38] sm:$0xf]
      %v1258 = vld [vmem:[%s1242 + $0x3c] sm:$0xf]
      %v1270 = vunpack.c.l.b16 %v1231
      %v1271 = vunpack.c.l.b16 %v1232
      %v1272 = vunpack.c.l.b16 %v1233
      %v1273 = vunpack.c.l.b16 %v1234
      %v1274 = vunpack.c.l.b16 %v1235
      %v1275 = vunpack.c.l.b16 %v1236
      %v1276 = vunpack.c.l.b16 %v1237
      %v1277 = vunpack.c.l.b16 %v1238
      %v1278 = vunpack.c.l.b16 %v1239
      %v1279 = vunpack.c.l.b16 %v1240
      %v1280 = vunpack.c.l.b16 %v1241
      %v1281 = vpack.c.b16 %v1271, %v1270
      %v1282 = vpack.c.b16 %v1273, %v1272
      %v1283 = vpack.c.b16 %v1275, %v1274
      %v1284 = vpack.c.b16 %v1277, %v1276
      %v1285 = vpack.c.b16 %v1279, %v1278
      %v1286 = vpack.c.b16 %v1280, %v1280
      %v1287 = vrot.slane %v1281, 1
      %v1288 = vrot.slane %v1282, 1
      %v1289 = vsel %vm1122, %v1287, %v1288
      %v1290 = vrot.slane %v1283, 1
      %v1291 = vsel %vm1122, %v1288, %v1290
      %v1292 = vrot.slane %v1284, 1
      %v1293 = vsel %vm1122, %v1290, %v1292
      %v1294 = vrot.slane %v1285, 1
      %v1295 = vsel %vm1122, %v1292, %v1294
      %v1296 = vrot.slane %v1286, 1
      %v1297 = vsel %vm1122, %v1294, %v1296
      %v1319 = vunpack.c.l.b16 %v1243
      %v1320 = vunpack.c.l.b16 %v1244
      %v1321 = vunpack.c.l.b16 %v1245
      %v1322 = vunpack.c.l.b16 %v1246
      %v1323 = vunpack.c.l.b16 %v1247
      %v1324 = vunpack.c.l.b16 %v1248
      %v1325 = vunpack.c.l.b16 %v1249
      %v1326 = vunpack.c.l.b16 %v1250
      %v1327 = vunpack.c.l.b16 %v1251
      %v1328 = vunpack.c.l.b16 %v1252
      %v1329 = vunpack.c.l.b16 %v1253
      %v1330 = vunpack.c.l.b16 %v1254
      %v1331 = vunpack.c.l.b16 %v1255
      %v1332 = vunpack.c.l.b16 %v1256
      %v1333 = vunpack.c.l.b16 %v1257
      %v1334 = vunpack.c.l.b16 %v1258
      %v1335 = vpack.c.b16 %v1320, %v1319
      %v1336 = vpack.c.b16 %v1322, %v1321
      %v1337 = vpack.c.b16 %v1324, %v1323
      %v1338 = vpack.c.b16 %v1326, %v1325
      %v1339 = vpack.c.b16 %v1328, %v1327
      %v1340 = vpack.c.b16 %v1330, %v1329
      %v1341 = vpack.c.b16 %v1332, %v1331
      %v1342 = vpack.c.b16 %v1334, %v1333
      %1351 = vmatpush.bf16.msra.mxu0 %v1342
      %1352 = vmatpush.bf16.msra.mxu0 %v1341
      %1353 = vmatpush.bf16.msra.mxu0 %v1340
      %1354 = vmatpush.bf16.msra.mxu0 %v1339
      %1355 = vmatpush.bf16.msra.mxu0 %v1338
      %1356 = vmatpush.bf16.msra.mxu0 %v1337
      %1357 = vmatpush.bf16.msra.mxu0 %v1336
      %1358 = vmatpush.bf16.msra.mxu0 %v1335
      %1359 = vmatmul.bf16.gmra.mxu0 %v1289
      %v1360 = vpop.f32.mrf.mxu0
      %v1361 = vadd.f32 0.0, %v1360
      %v1362 = vpop.f32.mrf.mxu0
      %v1363 = vadd.f32 0.0, %v1362
      %1364 = vmatmul.bf16.gmra.mxu0 %v1291
      %v1365 = vpop.f32.mrf.mxu0
      %v1366 = vadd.f32 0.0, %v1365
      %v1367 = vpop.f32.mrf.mxu0
      %v1368 = vadd.f32 0.0, %v1367
      %1369 = vmatmul.bf16.gmra.mxu0 %v1293
      %v1370 = vpop.f32.mrf.mxu0
      %v1371 = vadd.f32 0.0, %v1370
      %v1372 = vpop.f32.mrf.mxu0
      %v1373 = vadd.f32 0.0, %v1372
      %1374 = vmatmul.bf16.gmra.mxu0 %v1295
      %v1375 = vpop.f32.mrf.mxu0
      %v1376 = vadd.f32 0.0, %v1375
      %v1377 = vpop.f32.mrf.mxu0
      %v1378 = vadd.f32 0.0, %v1377
      %1379 = vmatmul.bf16.gmra.mxu0 %v1297
      %v1380 = vpop.f32.mrf.mxu0
      %v1381 = vadd.f32 0.0, %v1380
      %v1382 = vpop.f32.mrf.mxu0
      %v1383 = vadd.f32 0.0, %v1382
      %1384 = vdwg.mxu0
      %v1385 = vadd.f32 %v1221, %v1361
      %v1386 = vadd.f32 %v1222, %v1363
      %v1387 = vadd.f32 %v1223, %v1366
      %v1388 = vadd.f32 %v1224, %v1368
      %v1389 = vadd.f32 %v1225, %v1371
      %v1390 = vadd.f32 %v1226, %v1373
      %v1391 = vadd.f32 %v1227, %v1376
      %v1392 = vadd.f32 %v1228, %v1378
      %v1393 = vadd.f32 %v1229, %v1381
      %v1394 = vadd.f32 %v1230, %v1383
      %v1395 = vld [vmem:[%s381 + $0x2c] sm:$0x3]
      %s1396 = scalar_lea.vmem %s1, 256
      %v1397 = vld [vmem:[%s1396] sm:$0xf]
      %v1398 = vld [vmem:[%s1396 + $0x4] sm:$0xf]
      %v1399 = vld [vmem:[%s1396 + $0x8] sm:$0xf]
      %v1400 = vld [vmem:[%s1396 + $0xc] sm:$0xf]
      %v1401 = vld [vmem:[%s1396 + $0x10] sm:$0xf]
      %v1402 = vld [vmem:[%s1396 + $0x14] sm:$0xf]
      %v1403 = vld [vmem:[%s1396 + $0x18] sm:$0xf]
      %v1404 = vld [vmem:[%s1396 + $0x1c] sm:$0xf]
      %v1405 = vld [vmem:[%s1396 + $0x20] sm:$0xf]
      %v1406 = vld [vmem:[%s1396 + $0x24] sm:$0xf]
      %v1407 = vld [vmem:[%s1396 + $0x28] sm:$0xf]
      %v1408 = vld [vmem:[%s1396 + $0x2c] sm:$0xf]
      %v1409 = vld [vmem:[%s1396 + $0x30] sm:$0xf]
      %v1410 = vld [vmem:[%s1396 + $0x34] sm:$0xf]
      %v1411 = vld [vmem:[%s1396 + $0x38] sm:$0xf]
      %v1412 = vld [vmem:[%s1396 + $0x3c] sm:$0xf]
      %v1414 = vunpack.c.l.b16 %v1395
      %v1415 = vpack.c.b16 %v1414, %v1414
      %vm1416 = vsmask.f32 6400
      %v1418 = vshrl.u32 %v1281, 16
      %v1420 = vrot.slane %v1418, 1
      %v1421 = vshll.u32 %v1281, 16
      %v1423 = vrot.slane %v1421, 2
      %v1424 = vor.u32 %v1420, %v1423
      %v1426 = vshrl.u32 %v1282, 16
      %v1428 = vrot.slane %v1426, 1
      %v1429 = vshll.u32 %v1282, 16
      %v1431 = vrot.slane %v1429, 2
      %v1432 = vor.u32 %v1428, %v1431
      %v1433 = vsel %vm1416, %v1424, %v1432
      %v1435 = vshrl.u32 %v1283, 16
      %v1437 = vrot.slane %v1435, 1
      %v1438 = vshll.u32 %v1283, 16
      %v1440 = vrot.slane %v1438, 2
      %v1441 = vor.u32 %v1437, %v1440
      %v1442 = vsel %vm1416, %v1432, %v1441
      %v1444 = vshrl.u32 %v1284, 16
      %v1446 = vrot.slane %v1444, 1
      %v1447 = vshll.u32 %v1284, 16
      %v1449 = vrot.slane %v1447, 2
      %v1450 = vor.u32 %v1446, %v1449
      %v1451 = vsel %vm1416, %v1441, %v1450
      %v1453 = vshrl.u32 %v1285, 16
      %v1455 = vrot.slane %v1453, 1
      %v1456 = vshll.u32 %v1285, 16
      %v1458 = vrot.slane %v1456, 2
      %v1459 = vor.u32 %v1455, %v1458
      %v1460 = vsel %vm1416, %v1450, %v1459
      %v1462 = vshrl.u32 %v1415, 16
      %v1464 = vrot.slane %v1462, 1
      %v1465 = vshll.u32 %v1415, 16
      %v1467 = vrot.slane %v1465, 2
      %v1468 = vor.u32 %v1464, %v1467
      %v1469 = vsel %vm1416, %v1459, %v1468
      %v1491 = vunpack.c.l.b16 %v1397
      %v1492 = vunpack.c.l.b16 %v1398
      %v1493 = vunpack.c.l.b16 %v1399
      %v1494 = vunpack.c.l.b16 %v1400
      %v1495 = vunpack.c.l.b16 %v1401
      %v1496 = vunpack.c.l.b16 %v1402
      %v1497 = vunpack.c.l.b16 %v1403
      %v1498 = vunpack.c.l.b16 %v1404
      %v1499 = vunpack.c.l.b16 %v1405
      %v1500 = vunpack.c.l.b16 %v1406
      %v1501 = vunpack.c.l.b16 %v1407
      %v1502 = vunpack.c.l.b16 %v1408
      %v1503 = vunpack.c.l.b16 %v1409
      %v1504 = vunpack.c.l.b16 %v1410
      %v1505 = vunpack.c.l.b16 %v1411
      %v1506 = vunpack.c.l.b16 %v1412
      %v1507 = vpack.c.b16 %v1492, %v1491
      %v1508 = vpack.c.b16 %v1494, %v1493
      %v1509 = vpack.c.b16 %v1496, %v1495
      %v1510 = vpack.c.b16 %v1498, %v1497
      %v1511 = vpack.c.b16 %v1500, %v1499
      %v1512 = vpack.c.b16 %v1502, %v1501
      %v1513 = vpack.c.b16 %v1504, %v1503
      %v1514 = vpack.c.b16 %v1506, %v1505
      %1523 = vmatpush.bf16.msra.mxu0 %v1514
      %1524 = vmatpush.bf16.msra.mxu0 %v1513
      %1525 = vmatpush.bf16.msra.mxu0 %v1512
      %1526 = vmatpush.bf16.msra.mxu0 %v1511
      %1527 = vmatpush.bf16.msra.mxu0 %v1510
      %1528 = vmatpush.bf16.msra.mxu0 %v1509
      %1529 = vmatpush.bf16.msra.mxu0 %v1508
      %1530 = vmatpush.bf16.msra.mxu0 %v1507
      %1531 = vmatmul.bf16.gmra.mxu0 %v1433
      %v1532 = vpop.f32.mrf.mxu0
      %v1533 = vadd.f32 0.0, %v1532
      %v1534 = vpop.f32.mrf.mxu0
      %v1535 = vadd.f32 0.0, %v1534
      %1536 = vmatmul.bf16.gmra.mxu0 %v1442
      %v1537 = vpop.f32.mrf.mxu0
      %v1538 = vadd.f32 0.0, %v1537
      %v1539 = vpop.f32.mrf.mxu0
      %v1540 = vadd.f32 0.0, %v1539
      %1541 = vmatmul.bf16.gmra.mxu0 %v1451
      %v1542 = vpop.f32.mrf.mxu0
      %v1543 = vadd.f32 0.0, %v1542
      %v1544 = vpop.f32.mrf.mxu0
      %v1545 = vadd.f32 0.0, %v1544
      %1546 = vmatmul.bf16.gmra.mxu0 %v1460
      %v1547 = vpop.f32.mrf.mxu0
      %v1548 = vadd.f32 0.0, %v1547
      %v1549 = vpop.f32.mrf.mxu0
      %v1550 = vadd.f32 0.0, %v1549
      %1551 = vmatmul.bf16.gmra.mxu0 %v1469
      %v1552 = vpop.f32.mrf.mxu0
      %v1553 = vadd.f32 0.0, %v1552
      %v1554 = vpop.f32.mrf.mxu0
      %v1555 = vadd.f32 0.0, %v1554
      %1556 = vdwg.mxu0
      %v1557 = vadd.f32 %v1385, %v1533
      %v1558 = vadd.f32 %v1386, %v1535
      %v1559 = vadd.f32 %v1387, %v1538
      %v1560 = vadd.f32 %v1388, %v1540
      %v1561 = vadd.f32 %v1389, %v1543
      %v1562 = vadd.f32 %v1390, %v1545
      %v1563 = vadd.f32 %v1391, %v1548
      %v1564 = vadd.f32 %v1392, %v1550
      %v1565 = vadd.f32 %v1393, %v1553
      %v1566 = vadd.f32 %v1394, %v1555
      %v1567 = vld [vmem:[%s381 + $0x4] sm:$0xc]
      %s1568 = scalar_lea.vmem %s1, 320
      %v1569 = vld [vmem:[%s1568] sm:$0xf]
      %v1570 = vld [vmem:[%s1568 + $0x4] sm:$0xf]
      %v1571 = vld [vmem:[%s1568 + $0x8] sm:$0xf]
      %v1572 = vld [vmem:[%s1568 + $0xc] sm:$0xf]
      %v1573 = vld [vmem:[%s1568 + $0x10] sm:$0xf]
      %v1574 = vld [vmem:[%s1568 + $0x14] sm:$0xf]
      %v1575 = vld [vmem:[%s1568 + $0x18] sm:$0xf]
      %v1576 = vld [vmem:[%s1568 + $0x1c] sm:$0xf]
      %v1577 = vld [vmem:[%s1568 + $0x20] sm:$0xf]
      %v1578 = vld [vmem:[%s1568 + $0x24] sm:$0xf]
      %v1579 = vld [vmem:[%s1568 + $0x28] sm:$0xf]
      %v1580 = vld [vmem:[%s1568 + $0x2c] sm:$0xf]
      %v1581 = vld [vmem:[%s1568 + $0x30] sm:$0xf]
      %v1582 = vld [vmem:[%s1568 + $0x34] sm:$0xf]
      %v1583 = vld [vmem:[%s1568 + $0x38] sm:$0xf]
      %v1584 = vld [vmem:[%s1568 + $0x3c] sm:$0xf]
      %v1586 = vunpack.c.l.b16 %v1567
      %v1587 = vpack.c.b16 %v1271, %v1586
      %vm1588 = vcmask 1045504
      %v1589 = vrot.slane %v1587, 2
      %v1590 = vrot.slane %v1282, 2
      %v1591 = vsel %vm1588, %v1589, %v1590
      %v1592 = vrot.slane %v1283, 2
      %v1593 = vsel %vm1588, %v1590, %v1592
      %v1594 = vrot.slane %v1284, 2
      %v1595 = vsel %vm1588, %v1592, %v1594
      %v1596 = vrot.slane %v1285, 2
      %v1597 = vsel %vm1588, %v1594, %v1596
      %v1598 = vrot.slane %v1415, 2
      %v1599 = vsel %vm1588, %v1596, %v1598
      %v1621 = vunpack.c.l.b16 %v1569
      %v1622 = vunpack.c.l.b16 %v1570
      %v1623 = vunpack.c.l.b16 %v1571
      %v1624 = vunpack.c.l.b16 %v1572
      %v1625 = vunpack.c.l.b16 %v1573
      %v1626 = vunpack.c.l.b16 %v1574
      %v1627 = vunpack.c.l.b16 %v1575
      %v1628 = vunpack.c.l.b16 %v1576
      %v1629 = vunpack.c.l.b16 %v1577
      %v1630 = vunpack.c.l.b16 %v1578
      %v1631 = vunpack.c.l.b16 %v1579
      %v1632 = vunpack.c.l.b16 %v1580
      %v1633 = vunpack.c.l.b16 %v1581
      %v1634 = vunpack.c.l.b16 %v1582
      %v1635 = vunpack.c.l.b16 %v1583
      %v1636 = vunpack.c.l.b16 %v1584
      %v1637 = vpack.c.b16 %v1622, %v1621
      %v1638 = vpack.c.b16 %v1624, %v1623
      %v1639 = vpack.c.b16 %v1626, %v1625
      %v1640 = vpack.c.b16 %v1628, %v1627
      %v1641 = vpack.c.b16 %v1630, %v1629
      %v1642 = vpack.c.b16 %v1632, %v1631
      %v1643 = vpack.c.b16 %v1634, %v1633
      %v1644 = vpack.c.b16 %v1636, %v1635
      %1653 = vmatpush.bf16.msra.mxu0 %v1644
      %1654 = vmatpush.bf16.msra.mxu0 %v1643
      %1655 = vmatpush.bf16.msra.mxu0 %v1642
      %1656 = vmatpush.bf16.msra.mxu0 %v1641
      %1657 = vmatpush.bf16.msra.mxu0 %v1640
      %1658 = vmatpush.bf16.msra.mxu0 %v1639
      %1659 = vmatpush.bf16.msra.mxu0 %v1638
      %1660 = vmatpush.bf16.msra.mxu0 %v1637
      %1661 = vmatmul.bf16.gmra.mxu0 %v1591
      %v1662 = vpop.f32.mrf.mxu0
      %v1663 = vadd.f32 0.0, %v1662
      %v1664 = vpop.f32.mrf.mxu0
      %v1665 = vadd.f32 0.0, %v1664
      %1666 = vmatmul.bf16.gmra.mxu0 %v1593
      %v1667 = vpop.f32.mrf.mxu0
      %v1668 = vadd.f32 0.0, %v1667
      %v1669 = vpop.f32.mrf.mxu0
      %v1670 = vadd.f32 0.0, %v1669
      %1671 = vmatmul.bf16.gmra.mxu0 %v1595
      %v1672 = vpop.f32.mrf.mxu0
      %v1673 = vadd.f32 0.0, %v1672
      %v1674 = vpop.f32.mrf.mxu0
      %v1675 = vadd.f32 0.0, %v1674
      %1676 = vmatmul.bf16.gmra.mxu0 %v1597
      %v1677 = vpop.f32.mrf.mxu0
      %v1678 = vadd.f32 0.0, %v1677
      %v1679 = vpop.f32.mrf.mxu0
      %v1680 = vadd.f32 0.0, %v1679
      %1681 = vmatmul.bf16.gmra.mxu0 %v1599
      %v1682 = vpop.f32.mrf.mxu0
      %v1683 = vadd.f32 0.0, %v1682
      %v1684 = vpop.f32.mrf.mxu0
      %v1685 = vadd.f32 0.0, %v1684
      %1686 = vdwg.mxu0
      %v1687 = vadd.f32 %v1557, %v1663
      %v1688 = vadd.f32 %v1558, %v1665
      %v1689 = vadd.f32 %v1559, %v1668
      %v1690 = vadd.f32 %v1560, %v1670
      %v1691 = vadd.f32 %v1561, %v1673
      %v1692 = vadd.f32 %v1562, %v1675
      %v1693 = vadd.f32 %v1563, %v1678
      %v1694 = vadd.f32 %v1564, %v1680
      %v1695 = vadd.f32 %v1565, %v1683
      %v1696 = vadd.f32 %v1566, %v1685
      %v1697 = vld [vmem:[%s381 + $0x8] sm:$0xc]
      %v1698 = vld [vmem:[%s381 + $0xc] sm:$0xf]
      %v1699 = vld [vmem:[%s381 + $0x10] sm:$0xf]
      %v1700 = vld [vmem:[%s381 + $0x14] sm:$0xf]
      %v1701 = vld [vmem:[%s381 + $0x18] sm:$0xf]
      %v1702 = vld [vmem:[%s381 + $0x1c] sm:$0xf]
      %v1703 = vld [vmem:[%s381 + $0x20] sm:$0xf]
      %v1704 = vld [vmem:[%s381 + $0x24] sm:$0xf]
      %v1705 = vld [vmem:[%s381 + $0x28] sm:$0xf]
      %v1706 = vld [vmem:[%s381 + $0x2c] sm:$0xf]
      %v1707 = vld [vmem:[%s381 + $0x30] sm:$0x3]
      %s1708 = scalar_lea.vmem %s1, 384
      %v1709 = vld [vmem:[%s1708] sm:$0xf]
      %v1710 = vld [vmem:[%s1708 + $0x4] sm:$0xf]
      %v1711 = vld [vmem:[%s1708 + $0x8] sm:$0xf]
      %v1712 = vld [vmem:[%s1708 + $0xc] sm:$0xf]
      %v1713 = vld [vmem:[%s1708 + $0x10] sm:$0xf]
      %v1714 = vld [vmem:[%s1708 + $0x14] sm:$0xf]
      %v1715 = vld [vmem:[%s1708 + $0x18] sm:$0xf]
      %v1716 = vld [vmem:[%s1708 + $0x1c] sm:$0xf]
      %v1717 = vld [vmem:[%s1708 + $0x20] sm:$0xf]
      %v1718 = vld [vmem:[%s1708 + $0x24] sm:$0xf]
      %v1719 = vld [vmem:[%s1708 + $0x28] sm:$0xf]
      %v1720 = vld [vmem:[%s1708 + $0x2c] sm:$0xf]
      %v1721 = vld [vmem:[%s1708 + $0x30] sm:$0xf]
      %v1722 = vld [vmem:[%s1708 + $0x34] sm:$0xf]
      %v1723 = vld [vmem:[%s1708 + $0x38] sm:$0xf]
      %v1724 = vld [vmem:[%s1708 + $0x3c] sm:$0xf]
      %v1736 = vunpack.c.l.b16 %v1697
      %v1737 = vunpack.c.l.b16 %v1698
      %v1738 = vunpack.c.l.b16 %v1699
      %v1739 = vunpack.c.l.b16 %v1700
      %v1740 = vunpack.c.l.b16 %v1701
      %v1741 = vunpack.c.l.b16 %v1702
      %v1742 = vunpack.c.l.b16 %v1703
      %v1743 = vunpack.c.l.b16 %v1704
      %v1744 = vunpack.c.l.b16 %v1705
      %v1745 = vunpack.c.l.b16 %v1706
      %v1746 = vunpack.c.l.b16 %v1707
      %v1747 = vpack.c.b16 %v1737, %v1736
      %v1748 = vpack.c.b16 %v1739, %v1738
      %v1749 = vpack.c.b16 %v1741, %v1740
      %v1750 = vpack.c.b16 %v1743, %v1742
      %v1751 = vpack.c.b16 %v1745, %v1744
      %v1752 = vpack.c.b16 %v1746, %v1746
      %v1753 = vrot.slane %v1747, 2
      %v1754 = vrot.slane %v1748, 2
      %v1755 = vsel %vm1588, %v1753, %v1754
      %v1756 = vrot.slane %v1749, 2
      %v1757 = vsel %vm1588, %v1754, %v1756
      %v1758 = vrot.slane %v1750, 2
      %v1759 = vsel %vm1588, %v1756, %v1758
      %v1760 = vrot.slane %v1751, 2
      %v1761 = vsel %vm1588, %v1758, %v1760
      %v1762 = vrot.slane %v1752, 2
      %v1763 = vsel %vm1588, %v1760, %v1762
      %v1785 = vunpack.c.l.b16 %v1709
      %v1786 = vunpack.c.l.b16 %v1710
      %v1787 = vunpack.c.l.b16 %v1711
      %v1788 = vunpack.c.l.b16 %v1712
      %v1789 = vunpack.c.l.b16 %v1713
      %v1790 = vunpack.c.l.b16 %v1714
      %v1791 = vunpack.c.l.b16 %v1715
      %v1792 = vunpack.c.l.b16 %v1716
      %v1793 = vunpack.c.l.b16 %v1717
      %v1794 = vunpack.c.l.b16 %v1718
      %v1795 = vunpack.c.l.b16 %v1719
      %v1796 = vunpack.c.l.b16 %v1720
      %v1797 = vunpack.c.l.b16 %v1721
      %v1798 = vunpack.c.l.b16 %v1722
      %v1799 = vunpack.c.l.b16 %v1723
      %v1800 = vunpack.c.l.b16 %v1724
      %v1801 = vpack.c.b16 %v1786, %v1785
      %v1802 = vpack.c.b16 %v1788, %v1787
      %v1803 = vpack.c.b16 %v1790, %v1789
      %v1804 = vpack.c.b16 %v1792, %v1791
      %v1805 = vpack.c.b16 %v1794, %v1793
      %v1806 = vpack.c.b16 %v1796, %v1795
      %v1807 = vpack.c.b16 %v1798, %v1797
      %v1808 = vpack.c.b16 %v1800, %v1799
      %1817 = vmatpush.bf16.msra.mxu0 %v1808
      %1818 = vmatpush.bf16.msra.mxu0 %v1807
      %1819 = vmatpush.bf16.msra.mxu0 %v1806
      %1820 = vmatpush.bf16.msra.mxu0 %v1805
      %1821 = vmatpush.bf16.msra.mxu0 %v1804
      %1822 = vmatpush.bf16.msra.mxu0 %v1803
      %1823 = vmatpush.bf16.msra.mxu0 %v1802
      %1824 = vmatpush.bf16.msra.mxu0 %v1801
      %1825 = vmatmul.bf16.gmra.mxu0 %v1755
      %v1826 = vpop.f32.mrf.mxu0
      %v1827 = vadd.f32 0.0, %v1826
      %v1828 = vpop.f32.mrf.mxu0
      %v1829 = vadd.f32 0.0, %v1828
      %1830 = vmatmul.bf16.gmra.mxu0 %v1757
      %v1831 = vpop.f32.mrf.mxu0
      %v1832 = vadd.f32 0.0, %v1831
      %v1833 = vpop.f32.mrf.mxu0
      %v1834 = vadd.f32 0.0, %v1833
      %1835 = vmatmul.bf16.gmra.mxu0 %v1759
      %v1836 = vpop.f32.mrf.mxu0
      %v1837 = vadd.f32 0.0, %v1836
      %v1838 = vpop.f32.mrf.mxu0
      %v1839 = vadd.f32 0.0, %v1838
      %1840 = vmatmul.bf16.gmra.mxu0 %v1761
      %v1841 = vpop.f32.mrf.mxu0
      %v1842 = vadd.f32 0.0, %v1841
      %v1843 = vpop.f32.mrf.mxu0
      %v1844 = vadd.f32 0.0, %v1843
      %1845 = vmatmul.bf16.gmra.mxu0 %v1763
      %v1846 = vpop.f32.mrf.mxu0
      %v1847 = vadd.f32 0.0, %v1846
      %v1848 = vpop.f32.mrf.mxu0
      %v1849 = vadd.f32 0.0, %v1848
      %1850 = vdwg.mxu0
      %v1851 = vadd.f32 %v1687, %v1827
      %v1852 = vadd.f32 %v1688, %v1829
      %v1853 = vadd.f32 %v1689, %v1832
      %v1854 = vadd.f32 %v1690, %v1834
      %v1855 = vadd.f32 %v1691, %v1837
      %v1856 = vadd.f32 %v1692, %v1839
      %v1857 = vadd.f32 %v1693, %v1842
      %v1858 = vadd.f32 %v1694, %v1844
      %v1859 = vadd.f32 %v1695, %v1847
      %v1860 = vadd.f32 %v1696, %v1849
      %v1861 = vld [vmem:[%s381 + $0x30] sm:$0x7]
      %s1862 = scalar_lea.vmem %s1, 448
      %v1863 = vld [vmem:[%s1862] sm:$0xf]
      %v1864 = vld [vmem:[%s1862 + $0x4] sm:$0xf]
      %v1865 = vld [vmem:[%s1862 + $0x8] sm:$0xf]
      %v1866 = vld [vmem:[%s1862 + $0xc] sm:$0xf]
      %v1867 = vld [vmem:[%s1862 + $0x10] sm:$0xf]
      %v1868 = vld [vmem:[%s1862 + $0x14] sm:$0xf]
      %v1869 = vld [vmem:[%s1862 + $0x18] sm:$0xf]
      %v1870 = vld [vmem:[%s1862 + $0x1c] sm:$0xf]
      %v1871 = vld [vmem:[%s1862 + $0x20] sm:$0xf]
      %v1872 = vld [vmem:[%s1862 + $0x24] sm:$0xf]
      %v1873 = vld [vmem:[%s1862 + $0x28] sm:$0xf]
      %v1874 = vld [vmem:[%s1862 + $0x2c] sm:$0xf]
      %v1875 = vld [vmem:[%s1862 + $0x30] sm:$0xf]
      %v1876 = vld [vmem:[%s1862 + $0x34] sm:$0xf]
      %v1877 = vld [vmem:[%s1862 + $0x38] sm:$0xf]
      %v1878 = vld [vmem:[%s1862 + $0x3c] sm:$0xf]
      %v1880 = vunpack.c.l.b16 %v1861
      %v1881 = vpack.c.b16 %v1880, %v1880
      %vm1882 = vsmask.f32 5376
      %v1884 = vshrl.u32 %v1747, 16
      %v1886 = vrot.slane %v1884, 2
      %v1887 = vshll.u32 %v1747, 16
      %v1889 = vrot.slane %v1887, 3
      %v1890 = vor.u32 %v1886, %v1889
      %v1892 = vshrl.u32 %v1748, 16
      %v1894 = vrot.slane %v1892, 2
      %v1895 = vshll.u32 %v1748, 16
      %v1897 = vrot.slane %v1895, 3
      %v1898 = vor.u32 %v1894, %v1897
      %v1899 = vsel %vm1882, %v1890, %v1898
      %v1901 = vshrl.u32 %v1749, 16
      %v1903 = vrot.slane %v1901, 2
      %v1904 = vshll.u32 %v1749, 16
      %v1906 = vrot.slane %v1904, 3
      %v1907 = vor.u32 %v1903, %v1906
      %v1908 = vsel %vm1882, %v1898, %v1907
      %v1910 = vshrl.u32 %v1750, 16
      %v1912 = vrot.slane %v1910, 2
      %v1913 = vshll.u32 %v1750, 16
      %v1915 = vrot.slane %v1913, 3
      %v1916 = vor.u32 %v1912, %v1915
      %v1917 = vsel %vm1882, %v1907, %v1916
      %v1919 = vshrl.u32 %v1751, 16
      %v1921 = vrot.slane %v1919, 2
      %v1922 = vshll.u32 %v1751, 16
      %v1924 = vrot.slane %v1922, 3
      %v1925 = vor.u32 %v1921, %v1924
      %v1926 = vsel %vm1882, %v1916, %v1925
      %v1928 = vshrl.u32 %v1881, 16
      %v1930 = vrot.slane %v1928, 2
      %v1931 = vshll.u32 %v1881, 16
      %v1933 = vrot.slane %v1931, 3
      %v1934 = vor.u32 %v1930, %v1933
      %v1935 = vsel %vm1882, %v1925, %v1934
      %v1957 = vunpack.c.l.b16 %v1863
      %v1958 = vunpack.c.l.b16 %v1864
      %v1959 = vunpack.c.l.b16 %v1865
      %v1960 = vunpack.c.l.b16 %v1866
      %v1961 = vunpack.c.l.b16 %v1867
      %v1962 = vunpack.c.l.b16 %v1868
      %v1963 = vunpack.c.l.b16 %v1869
      %v1964 = vunpack.c.l.b16 %v1870
      %v1965 = vunpack.c.l.b16 %v1871
      %v1966 = vunpack.c.l.b16 %v1872
      %v1967 = vunpack.c.l.b16 %v1873
      %v1968 = vunpack.c.l.b16 %v1874
      %v1969 = vunpack.c.l.b16 %v1875
      %v1970 = vunpack.c.l.b16 %v1876
      %v1971 = vunpack.c.l.b16 %v1877
      %v1972 = vunpack.c.l.b16 %v1878
      %v1973 = vpack.c.b16 %v1958, %v1957
      %v1974 = vpack.c.b16 %v1960, %v1959
      %v1975 = vpack.c.b16 %v1962, %v1961
      %v1976 = vpack.c.b16 %v1964, %v1963
      %v1977 = vpack.c.b16 %v1966, %v1965
      %v1978 = vpack.c.b16 %v1968, %v1967
      %v1979 = vpack.c.b16 %v1970, %v1969
      %v1980 = vpack.c.b16 %v1972, %v1971
      %1989 = vmatpush.bf16.msra.mxu0 %v1980
      %1990 = vmatpush.bf16.msra.mxu0 %v1979
      %1991 = vmatpush.bf16.msra.mxu0 %v1978
      %1992 = vmatpush.bf16.msra.mxu0 %v1977
      %1993 = vmatpush.bf16.msra.mxu0 %v1976
      %1994 = vmatpush.bf16.msra.mxu0 %v1975
      %1995 = vmatpush.bf16.msra.mxu0 %v1974
      %1996 = vmatpush.bf16.msra.mxu0 %v1973
      %1997 = vmatmul.bf16.gmra.mxu0 %v1899
      %v1998 = vpop.f32.mrf.mxu0
      %v1999 = vadd.f32 0.0, %v1998
      %v2000 = vpop.f32.mrf.mxu0
      %v2001 = vadd.f32 0.0, %v2000
      %2002 = vmatmul.bf16.gmra.mxu0 %v1908
      %v2003 = vpop.f32.mrf.mxu0
      %v2004 = vadd.f32 0.0, %v2003
      %v2005 = vpop.f32.mrf.mxu0
      %v2006 = vadd.f32 0.0, %v2005
      %2007 = vmatmul.bf16.gmra.mxu0 %v1917
      %v2008 = vpop.f32.mrf.mxu0
      %v2009 = vadd.f32 0.0, %v2008
      %v2010 = vpop.f32.mrf.mxu0
      %v2011 = vadd.f32 0.0, %v2010
      %2012 = vmatmul.bf16.gmra.mxu0 %v1926
      %v2013 = vpop.f32.mrf.mxu0
      %v2014 = vadd.f32 0.0, %v2013
      %v2015 = vpop.f32.mrf.mxu0
      %v2016 = vadd.f32 0.0, %v2015
      %2017 = vmatmul.bf16.gmra.mxu0 %v1935
      %v2018 = vpop.f32.mrf.mxu0
      %v2019 = vadd.f32 0.0, %v2018
      %v2020 = vpop.f32.mrf.mxu0
      %v2021 = vadd.f32 0.0, %v2020
      %2022 = vdwg.mxu0
      %v2023 = vadd.f32 %v1851, %v1999
      %v2024 = vadd.f32 %v1852, %v2001
      %v2025 = vadd.f32 %v1853, %v2004
      %v2026 = vadd.f32 %v1854, %v2006
      %v2027 = vadd.f32 %v1855, %v2009
      %v2028 = vadd.f32 %v1856, %v2011
      %v2029 = vadd.f32 %v1857, %v2014
      %v2030 = vadd.f32 %v1858, %v2016
      %v2031 = vadd.f32 %v1859, %v2019
      %v2032 = vadd.f32 %v1860, %v2021
      %v2033 = vld [vmem:[%s381 + $0x8] sm:$0x8]
      %s2034 = scalar_lea.vmem %s1, 512
      %v2035 = vld [vmem:[%s2034] sm:$0xf]
      %v2036 = vld [vmem:[%s2034 + $0x4] sm:$0xf]
      %v2037 = vld [vmem:[%s2034 + $0x8] sm:$0xf]
      %v2038 = vld [vmem:[%s2034 + $0xc] sm:$0xf]
      %v2039 = vld [vmem:[%s2034 + $0x10] sm:$0xf]
      %v2040 = vld [vmem:[%s2034 + $0x14] sm:$0xf]
      %v2041 = vld [vmem:[%s2034 + $0x18] sm:$0xf]
      %v2042 = vld [vmem:[%s2034 + $0x1c] sm:$0xf]
      %v2043 = vld [vmem:[%s2034 + $0x20] sm:$0xf]
      %v2044 = vld [vmem:[%s2034 + $0x24] sm:$0xf]
      %v2045 = vld [vmem:[%s2034 + $0x28] sm:$0xf]
      %v2046 = vld [vmem:[%s2034 + $0x2c] sm:$0xf]
      %v2047 = vld [vmem:[%s2034 + $0x30] sm:$0xf]
      %v2048 = vld [vmem:[%s2034 + $0x34] sm:$0xf]
      %v2049 = vld [vmem:[%s2034 + $0x38] sm:$0xf]
      %v2050 = vld [vmem:[%s2034 + $0x3c] sm:$0xf]
      %v2052 = vunpack.c.l.b16 %v2033
      %v2053 = vpack.c.b16 %v1737, %v2052
      %vm2054 = vcmask 1044480
      %v2055 = vrot.slane %v2053, 3
      %v2056 = vrot.slane %v1748, 3
      %v2057 = vsel %vm2054, %v2055, %v2056
      %v2058 = vrot.slane %v1749, 3
      %v2059 = vsel %vm2054, %v2056, %v2058
      %v2060 = vrot.slane %v1750, 3
      %v2061 = vsel %vm2054, %v2058, %v2060
      %v2062 = vrot.slane %v1751, 3
      %v2063 = vsel %vm2054, %v2060, %v2062
      %v2064 = vrot.slane %v1881, 3
      %v2065 = vsel %vm2054, %v2062, %v2064
      %v2087 = vunpack.c.l.b16 %v2035
      %v2088 = vunpack.c.l.b16 %v2036
      %v2089 = vunpack.c.l.b16 %v2037
      %v2090 = vunpack.c.l.b16 %v2038
      %v2091 = vunpack.c.l.b16 %v2039
      %v2092 = vunpack.c.l.b16 %v2040
      %v2093 = vunpack.c.l.b16 %v2041
      %v2094 = vunpack.c.l.b16 %v2042
      %v2095 = vunpack.c.l.b16 %v2043
      %v2096 = vunpack.c.l.b16 %v2044
      %v2097 = vunpack.c.l.b16 %v2045
      %v2098 = vunpack.c.l.b16 %v2046
      %v2099 = vunpack.c.l.b16 %v2047
      %v2100 = vunpack.c.l.b16 %v2048
      %v2101 = vunpack.c.l.b16 %v2049
      %v2102 = vunpack.c.l.b16 %v2050
      %v2103 = vpack.c.b16 %v2088, %v2087
      %v2104 = vpack.c.b16 %v2090, %v2089
      %v2105 = vpack.c.b16 %v2092, %v2091
      %v2106 = vpack.c.b16 %v2094, %v2093
      %v2107 = vpack.c.b16 %v2096, %v2095
      %v2108 = vpack.c.b16 %v2098, %v2097
      %v2109 = vpack.c.b16 %v2100, %v2099
      %v2110 = vpack.c.b16 %v2102, %v2101
      %2119 = vmatpush.bf16.msra.mxu0 %v2110
      %2120 = vmatpush.bf16.msra.mxu0 %v2109
      %2121 = vmatpush.bf16.msra.mxu0 %v2108
      %2122 = vmatpush.bf16.msra.mxu0 %v2107
      %2123 = vmatpush.bf16.msra.mxu0 %v2106
      %2124 = vmatpush.bf16.msra.mxu0 %v2105
      %2125 = vmatpush.bf16.msra.mxu0 %v2104
      %2126 = vmatpush.bf16.msra.mxu0 %v2103
      %2127 = vmatmul.bf16.gmra.mxu0 %v2057
      %v2128 = vpop.f32.mrf.mxu0
      %v2129 = vadd.f32 0.0, %v2128
      %v2130 = vpop.f32.mrf.mxu0
      %v2131 = vadd.f32 0.0, %v2130
      %2132 = vmatmul.bf16.gmra.mxu0 %v2059
      %v2133 = vpop.f32.mrf.mxu0
      %v2134 = vadd.f32 0.0, %v2133
      %v2135 = vpop.f32.mrf.mxu0
      %v2136 = vadd.f32 0.0, %v2135
      %2137 = vmatmul.bf16.gmra.mxu0 %v2061
      %v2138 = vpop.f32.mrf.mxu0
      %v2139 = vadd.f32 0.0, %v2138
      %v2140 = vpop.f32.mrf.mxu0
      %v2141 = vadd.f32 0.0, %v2140
      %2142 = vmatmul.bf16.gmra.mxu0 %v2063
      %v2143 = vpop.f32.mrf.mxu0
      %v2144 = vadd.f32 0.0, %v2143
      %v2145 = vpop.f32.mrf.mxu0
      %v2146 = vadd.f32 0.0, %v2145
      %2147 = vmatmul.bf16.gmra.mxu0 %v2065
      %v2148 = vpop.f32.mrf.mxu0
      %v2149 = vadd.f32 0.0, %v2148
      %v2150 = vpop.f32.mrf.mxu0
      %v2151 = vadd.f32 0.0, %v2150
      %2152 = vdwg.mxu0
      %v2153 = vadd.f32 %v2023, %v2129
      %v2154 = vadd.f32 %v2024, %v2131
      %v2155 = vadd.f32 %v2025, %v2134
      %v2156 = vadd.f32 %v2026, %v2136
      %v2157 = vadd.f32 %v2027, %v2139
      %v2158 = vadd.f32 %v2028, %v2141
      %v2159 = vadd.f32 %v2029, %v2144
      %v2160 = vadd.f32 %v2030, %v2146
      %v2161 = vadd.f32 %v2031, %v2149
      %v2162 = vadd.f32 %v2032, %v2151
      %v2163 = vld [vmem:[%s2] sm:$0x1]
      %v2165 = vperm.slane %v2163, 0
      %v2167 = vadd.f32 %v2153, %v2165
      %v2168 = vadd.f32 %v2154, %v2165
      %v2169 = vadd.f32 %v2155, %v2165
      %v2170 = vadd.f32 %v2156, %v2165
      %v2171 = vadd.f32 %v2157, %v2165
      %v2172 = vadd.f32 %v2158, %v2165
      %v2173 = vadd.f32 %v2159, %v2165
      %v2174 = vadd.f32 %v2160, %v2165
      %v2175 = vadd.f32 %v2161, %v2165
      %v2176 = vadd.f32 %v2162, %v2165
      %v2177 = vmax.f32 %v2167, 0.0
      %v2178 = vmax.f32 %v2168, 0.0
      %v2179 = vmax.f32 %v2169, 0.0
      %v2180 = vmax.f32 %v2170, 0.0
      %v2181 = vmax.f32 %v2171, 0.0
      %v2182 = vmax.f32 %v2172, 0.0
      %v2183 = vmax.f32 %v2173, 0.0
      %v2184 = vmax.f32 %v2174, 0.0
      %v2185 = vmax.f32 %v2175, 0.0
      %v2186 = vmax.f32 %v2176, 0.0
      %v2187 = vpack.c.bf16 %v2178, %v2177
      %v2188 = vpack.c.bf16 %v2180, %v2179
      %v2189 = vpack.c.bf16 %v2182, %v2181
      %v2190 = vpack.c.bf16 %v2184, %v2183
      %v2191 = vpack.c.bf16 %v2186, %v2185
      %v2192 = vld [vmem:[%s6] sm:$0xf]
      %v2193 = vld [vmem:[%s6 + $0x4] sm:$0xf]
      %v2194 = vld [vmem:[%s6 + $0x8] sm:$0xf]
      %v2195 = vld [vmem:[%s6 + $0xc] sm:$0xf]
      %v2196 = vld [vmem:[%s6 + $0x10] sm:$0xf]
      %v2197 = vld [vmem:[%s6 + $0x14] sm:$0xf]
      %v2198 = vld [vmem:[%s6 + $0x18] sm:$0xf]
      %v2199 = vld [vmem:[%s6 + $0x1c] sm:$0xf]
      %v2200 = vld [vmem:[%s6 + $0x20] sm:$0xf]
      %v2201 = vld [vmem:[%s6 + $0x24] sm:$0xf]
      %v2202 = vld [vmem:[%s6 + $0x28] sm:$0xf]
      %v2203 = vld [vmem:[%s6 + $0x2c] sm:$0xf]
      %v2204 = vld [vmem:[%s6 + $0x30] sm:$0xf]
      %v2205 = vld [vmem:[%s6 + $0x34] sm:$0xf]
      %v2206 = vld [vmem:[%s6 + $0x38] sm:$0xf]
      %v2207 = vld [vmem:[%s6 + $0x3c] sm:$0xf]
      %v2224 = vunpack.c.l.b16 %v2192
      %v2225 = vunpack.c.l.b16 %v2193
      %v2226 = vunpack.c.l.b16 %v2194
      %v2227 = vunpack.c.l.b16 %v2195
      %v2228 = vunpack.c.l.b16 %v2196
      %v2229 = vunpack.c.l.b16 %v2197
      %v2230 = vunpack.c.l.b16 %v2198
      %v2231 = vunpack.c.l.b16 %v2199
      %v2232 = vunpack.c.l.b16 %v2200
      %v2233 = vunpack.c.l.b16 %v2201
      %v2234 = vunpack.c.l.b16 %v2202
      %v2235 = vunpack.c.l.b16 %v2203
      %v2236 = vunpack.c.l.b16 %v2204
      %v2237 = vunpack.c.l.b16 %v2205
      %v2238 = vunpack.c.l.b16 %v2206
      %v2239 = vunpack.c.l.b16 %v2207
      %v2240 = vpack.c.b16 %v2225, %v2224
      %v2241 = vpack.c.b16 %v2227, %v2226
      %v2242 = vpack.c.b16 %v2229, %v2228
      %v2243 = vpack.c.b16 %v2231, %v2230
      %v2244 = vpack.c.b16 %v2233, %v2232
      %v2245 = vpack.c.b16 %v2235, %v2234
      %v2246 = vpack.c.b16 %v2237, %v2236
      %v2247 = vpack.c.b16 %v2239, %v2238
      %2256 = vmatpush.bf16.msra.mxu0 %v2247
      %2257 = vmatpush.bf16.msra.mxu0 %v2246
      %2258 = vmatpush.bf16.msra.mxu0 %v2245
      %2259 = vmatpush.bf16.msra.mxu0 %v2244
      %2260 = vmatpush.bf16.msra.mxu0 %v2243
      %2261 = vmatpush.bf16.msra.mxu0 %v2242
      %2262 = vmatpush.bf16.msra.mxu0 %v2241
      %2263 = vmatpush.bf16.msra.mxu0 %v2240
      %2264 = vmatmul.bf16.gmra.mxu0 %v2187
      %v2265 = vpop.f32.mrf.mxu0
      %v2266 = vadd.f32 0.0, %v2265
      %v2267 = vpop.f32.mrf.mxu0
      %v2268 = vadd.f32 0.0, %v2267
      %2269 = vmatmul.bf16.gmra.mxu0 %v2188
      %v2270 = vpop.f32.mrf.mxu0
      %v2271 = vadd.f32 0.0, %v2270
      %v2272 = vpop.f32.mrf.mxu0
      %v2273 = vadd.f32 0.0, %v2272
      %2274 = vmatmul.bf16.gmra.mxu0 %v2189
      %v2275 = vpop.f32.mrf.mxu0
      %v2276 = vadd.f32 0.0, %v2275
      %v2277 = vpop.f32.mrf.mxu0
      %v2278 = vadd.f32 0.0, %v2277
      %2279 = vmatmul.bf16.gmra.mxu0 %v2190
      %v2280 = vpop.f32.mrf.mxu0
      %v2281 = vadd.f32 0.0, %v2280
      %v2282 = vpop.f32.mrf.mxu0
      %v2283 = vadd.f32 0.0, %v2282
      %2284 = vmatmul.bf16.gmra.mxu0 %v2191
      %v2285 = vpop.f32.mrf.mxu0
      %v2286 = vadd.f32 0.0, %v2285
      %v2287 = vpop.f32.mrf.mxu0
      %v2288 = vadd.f32 0.0, %v2287
      %2289 = vdwg.mxu0
      %v2301 = vunpack.c.l.b16 %v769
      %v2302 = vunpack.c.l.b16 %v770
      %v2303 = vunpack.c.l.b16 %v771
      %v2304 = vunpack.c.l.b16 %v772
      %v2305 = vunpack.c.l.b16 %v773
      %v2306 = vunpack.c.l.b16 %v774
      %v2307 = vunpack.c.l.b16 %v775
      %v2308 = vunpack.c.l.b16 %v776
      %v2309 = vunpack.c.l.b16 %v777
      %v2310 = vunpack.c.l.b16 %v778
      %v2311 = vunpack.c.l.b16 %v779
      %v2312 = vpack.c.b16 %v2302, %v2301
      %v2313 = vpack.c.b16 %v2304, %v2303
      %v2314 = vpack.c.b16 %v2306, %v2305
      %v2315 = vpack.c.b16 %v2308, %v2307
      %v2316 = vpack.c.b16 %v2310, %v2309
      %v2317 = vpack.c.b16 %v2311, %v2311
      %v2319 = vshrl.u32 %v2312, 16
      %v2321 = vrot.slane %v2319, 1
      %v2322 = vshll.u32 %v2312, 16
      %v2324 = vrot.slane %v2322, 2
      %v2325 = vor.u32 %v2321, %v2324
      %v2327 = vshrl.u32 %v2313, 16
      %v2329 = vrot.slane %v2327, 1
      %v2330 = vshll.u32 %v2313, 16
      %v2332 = vrot.slane %v2330, 2
      %v2333 = vor.u32 %v2329, %v2332
      %v2334 = vsel %vm1416, %v2325, %v2333
      %v2336 = vshrl.u32 %v2314, 16
      %v2338 = vrot.slane %v2336, 1
      %v2339 = vshll.u32 %v2314, 16
      %v2341 = vrot.slane %v2339, 2
      %v2342 = vor.u32 %v2338, %v2341
      %v2343 = vsel %vm1416, %v2333, %v2342
      %v2345 = vshrl.u32 %v2315, 16
      %v2347 = vrot.slane %v2345, 1
      %v2348 = vshll.u32 %v2315, 16
      %v2350 = vrot.slane %v2348, 2
      %v2351 = vor.u32 %v2347, %v2350
      %v2352 = vsel %vm1416, %v2342, %v2351
      %v2354 = vshrl.u32 %v2316, 16
      %v2356 = vrot.slane %v2354, 1
      %v2357 = vshll.u32 %v2316, 16
      %v2359 = vrot.slane %v2357, 2
      %v2360 = vor.u32 %v2356, %v2359
      %v2361 = vsel %vm1416, %v2351, %v2360
      %v2363 = vshrl.u32 %v2317, 16
      %v2365 = vrot.slane %v2363, 1
      %v2366 = vshll.u32 %v2317, 16
      %v2368 = vrot.slane %v2366, 2
      %v2369 = vor.u32 %v2365, %v2368
      %v2370 = vsel %vm1416, %v2360, %v2369
      %v2392 = vunpack.c.l.b16 %v780
      %v2393 = vunpack.c.l.b16 %v781
      %v2394 = vunpack.c.l.b16 %v782
      %v2395 = vunpack.c.l.b16 %v783
      %v2396 = vunpack.c.l.b16 %v784
      %v2397 = vunpack.c.l.b16 %v785
      %v2398 = vunpack.c.l.b16 %v786
      %v2399 = vunpack.c.l.b16 %v787
      %v2400 = vunpack.c.l.b16 %v788
      %v2401 = vunpack.c.l.b16 %v789
      %v2402 = vunpack.c.l.b16 %v790
      %v2403 = vunpack.c.l.b16 %v791
      %v2404 = vunpack.c.l.b16 %v792
      %v2405 = vunpack.c.l.b16 %v793
      %v2406 = vunpack.c.l.b16 %v794
      %v2407 = vunpack.c.l.b16 %v795
      %v2408 = vpack.c.b16 %v2393, %v2392
      %v2409 = vpack.c.b16 %v2395, %v2394
      %v2410 = vpack.c.b16 %v2397, %v2396
      %v2411 = vpack.c.b16 %v2399, %v2398
      %v2412 = vpack.c.b16 %v2401, %v2400
      %v2413 = vpack.c.b16 %v2403, %v2402
      %v2414 = vpack.c.b16 %v2405, %v2404
      %v2415 = vpack.c.b16 %v2407, %v2406
      %2424 = vmatpush.bf16.msra.mxu0 %v2415
      %2425 = vmatpush.bf16.msra.mxu0 %v2414
      %2426 = vmatpush.bf16.msra.mxu0 %v2413
      %2427 = vmatpush.bf16.msra.mxu0 %v2412
      %2428 = vmatpush.bf16.msra.mxu0 %v2411
      %2429 = vmatpush.bf16.msra.mxu0 %v2410
      %2430 = vmatpush.bf16.msra.mxu0 %v2409
      %2431 = vmatpush.bf16.msra.mxu0 %v2408
      %2432 = vmatmul.bf16.gmra.mxu0 %v2334
      %v2433 = vpop.f32.mrf.mxu0
      %v2434 = vadd.f32 %v2266, %v2433
      %v2435 = vpop.f32.mrf.mxu0
      %v2436 = vadd.f32 %v2268, %v2435
      %2437 = vmatmul.bf16.gmra.mxu0 %v2343
      %v2438 = vpop.f32.mrf.mxu0
      %v2439 = vadd.f32 %v2271, %v2438
      %v2440 = vpop.f32.mrf.mxu0
      %v2441 = vadd.f32 %v2273, %v2440
      %2442 = vmatmul.bf16.gmra.mxu0 %v2352
      %v2443 = vpop.f32.mrf.mxu0
      %v2444 = vadd.f32 %v2276, %v2443
      %v2445 = vpop.f32.mrf.mxu0
      %v2446 = vadd.f32 %v2278, %v2445
      %2447 = vmatmul.bf16.gmra.mxu0 %v2361
      %v2448 = vpop.f32.mrf.mxu0
      %v2449 = vadd.f32 %v2281, %v2448
      %v2450 = vpop.f32.mrf.mxu0
      %v2451 = vadd.f32 %v2283, %v2450
      %2452 = vmatmul.bf16.gmra.mxu0 %v2370
      %v2453 = vpop.f32.mrf.mxu0
      %v2454 = vadd.f32 %v2286, %v2453
      %v2455 = vpop.f32.mrf.mxu0
      %v2456 = vadd.f32 %v2288, %v2455
      %2457 = vdwg.mxu0
      %v2458 = vmul.f32 %v2177, %v759
      %v2459 = vmul.f32 %v2178, %v760
      %v2460 = vmul.f32 %v2179, %v761
      %v2461 = vmul.f32 %v2180, %v762
      %v2462 = vmul.f32 %v2181, %v763
      %v2463 = vmul.f32 %v2182, %v764
      %v2464 = vmul.f32 %v2183, %v765
      %v2465 = vmul.f32 %v2184, %v766
      %v2466 = vmul.f32 %v2185, %v767
      %v2467 = vmul.f32 %v2186, %v768
      %v2468 = vpack.c.bf16 %v2458, %v2458
      %v2469 = vpack.c.bf16 %v2459, %v2459
      %v2470 = vpack.c.bf16 %v2460, %v2460
      %v2471 = vpack.c.bf16 %v2461, %v2461
      %v2472 = vpack.c.bf16 %v2462, %v2462
      %v2473 = vpack.c.bf16 %v2463, %v2463
      %v2474 = vpack.c.bf16 %v2464, %v2464
      %v2475 = vpack.c.bf16 %v2465, %v2465
      %v2476 = vpack.c.bf16 %v2466, %v2466
      %v2477 = vpack.c.bf16 %v2467, %v2467
      %vm2478 = vsmask.f32 5392
      %vm2479 = vmor %vm798, %vm2478
      %v2481 = vshrl.u32 %v2468, 16
      %v2483 = vrot.slane %v2481, 6
      %v2484 = vshll.u32 %v2468, 16
      %v2486 = vrot.slane %v2484, 7
      %v2487 = vor.u32 %v2483, %v2486
      %v2488 = vrot.slane %v2487, 4
      %v2490 = vshrl.u32 %v2469, 16
      %v2492 = vrot.slane %v2490, 6
      %v2493 = vshll.u32 %v2469, 16
      %v2495 = vrot.slane %v2493, 7
      %v2496 = vor.u32 %v2492, %v2495
      %v2497 = vsel %vm2479, %v2488, %v2496
      %v2498 = vrot.slane %v2496, 4
      %v2500 = vshrl.u32 %v2470, 16
      %v2502 = vrot.slane %v2500, 6
      %v2503 = vshll.u32 %v2470, 16
      %v2505 = vrot.slane %v2503, 7
      %v2506 = vor.u32 %v2502, %v2505
      %v2507 = vsel %vm2479, %v2498, %v2506
      %v2508 = vrot.slane %v2506, 4
      %v2510 = vshrl.u32 %v2471, 16
      %v2512 = vrot.slane %v2510, 6
      %v2513 = vshll.u32 %v2471, 16
      %v2515 = vrot.slane %v2513, 7
      %v2516 = vor.u32 %v2512, %v2515
      %v2517 = vsel %vm2479, %v2508, %v2516
      %v2518 = vrot.slane %v2516, 4
      %v2520 = vshrl.u32 %v2472, 16
      %v2522 = vrot.slane %v2520, 6
      %v2523 = vshll.u32 %v2472, 16
      %v2525 = vrot.slane %v2523, 7
      %v2526 = vor.u32 %v2522, %v2525
      %v2527 = vsel %vm2479, %v2518, %v2526
      %v2528 = vrot.slane %v2526, 4
      %v2530 = vshrl.u32 %v2473, 16
      %v2532 = vrot.slane %v2530, 6
      %v2533 = vshll.u32 %v2473, 16
      %v2535 = vrot.slane %v2533, 7
      %v2536 = vor.u32 %v2532, %v2535
      %v2537 = vsel %vm2479, %v2528, %v2536
      %v2538 = vrot.slane %v2536, 4
      %v2540 = vshrl.u32 %v2474, 16
      %v2542 = vrot.slane %v2540, 6
      %v2543 = vshll.u32 %v2474, 16
      %v2545 = vrot.slane %v2543, 7
      %v2546 = vor.u32 %v2542, %v2545
      %v2547 = vsel %vm2479, %v2538, %v2546
      %v2548 = vrot.slane %v2546, 4
      %v2550 = vshrl.u32 %v2475, 16
      %v2552 = vrot.slane %v2550, 6
      %v2553 = vshll.u32 %v2475, 16
      %v2555 = vrot.slane %v2553, 7
      %v2556 = vor.u32 %v2552, %v2555
      %v2557 = vsel %vm2479, %v2548, %v2556
      %v2558 = vrot.slane %v2556, 4
      %v2560 = vshrl.u32 %v2476, 16
      %v2562 = vrot.slane %v2560, 6
      %v2563 = vshll.u32 %v2476, 16
      %v2565 = vrot.slane %v2563, 7
      %v2566 = vor.u32 %v2562, %v2565
      %v2567 = vsel %vm2479, %v2558, %v2566
      %v2568 = vrot.slane %v2566, 4
      %v2570 = vshrl.u32 %v2477, 16
      %v2572 = vrot.slane %v2570, 6
      %v2573 = vshll.u32 %v2477, 16
      %v2575 = vrot.slane %v2573, 7
      %v2576 = vor.u32 %v2572, %v2575
      %v2577 = vsel %vm2479, %v2568, %v2576
      %v2578 = vrot.slane %v2576, 4
      %v2590 = vld [vmem:[#allocation2 + $0x4] sm:$0xe]
      %v2591 = vsel %vm805, %v2487, %v2590
      %2592 = vst [vmem:[#allocation2 + $0x4] sm:$0xe] %v2591
      %2593 = vst [vmem:[#allocation2 + $0x8] sm:$0xf] %v2497
      %2594 = vst [vmem:[#allocation2 + $0xc] sm:$0xf] %v2507
      %2595 = vst [vmem:[#allocation2 + $0x10] sm:$0xf] %v2517
      %2596 = vst [vmem:[#allocation2 + $0x14] sm:$0xf] %v2527
      %2597 = vst [vmem:[#allocation2 + $0x18] sm:$0xf] %v2537
      %2598 = vst [vmem:[#allocation2 + $0x1c] sm:$0xf] %v2547
      %2599 = vst [vmem:[#allocation2 + $0x20] sm:$0xf] %v2557
      %2600 = vst [vmem:[#allocation2 + $0x24] sm:$0xf] %v2567
      %2601 = vst [vmem:[#allocation2 + $0x28] sm:$0xf] %v2577
      %v2602 = vld [vmem:[#allocation2 + $0x2c] sm:$0x3]
      %v2603 = vsel %vm799, %v2578, %v2602
      %2604 = vst [vmem:[#allocation2 + $0x2c] sm:$0x3] %v2603
      %v2605 = vld [vmem:[#allocation2] sm:$0xf]
      %v2606 = vld [vmem:[#allocation2 + $0x4] sm:$0xf]
      %v2607 = vld [vmem:[#allocation2 + $0x8] sm:$0xf]
      %v2608 = vld [vmem:[#allocation2 + $0xc] sm:$0xf]
      %v2609 = vld [vmem:[#allocation2 + $0x10] sm:$0xf]
      %v2610 = vld [vmem:[#allocation2 + $0x14] sm:$0xf]
      %v2611 = vld [vmem:[#allocation2 + $0x18] sm:$0xf]
      %v2612 = vld [vmem:[#allocation2 + $0x1c] sm:$0xf]
      %v2613 = vld [vmem:[#allocation2 + $0x20] sm:$0xf]
      %v2614 = vld [vmem:[#allocation2 + $0x24] sm:$0xf]
      %v2615 = vld [vmem:[%s3] sm:$0xf]
      %v2616 = vld [vmem:[%s3 + $0x4] sm:$0xf]
      %v2617 = vld [vmem:[%s3 + $0x8] sm:$0xf]
      %v2618 = vld [vmem:[%s3 + $0xc] sm:$0xf]
      %v2619 = vld [vmem:[%s3 + $0x10] sm:$0xf]
      %v2620 = vld [vmem:[%s3 + $0x14] sm:$0xf]
      %v2621 = vld [vmem:[%s3 + $0x18] sm:$0xf]
      %v2622 = vld [vmem:[%s3 + $0x1c] sm:$0xf]
      %v2623 = vld [vmem:[%s3 + $0x20] sm:$0xf]
      %v2624 = vld [vmem:[%s3 + $0x24] sm:$0xf]
      %v2625 = vld [vmem:[%s3 + $0x28] sm:$0xf]
      %v2626 = vld [vmem:[%s3 + $0x2c] sm:$0xf]
      %v2627 = vld [vmem:[%s3 + $0x30] sm:$0xf]
      %v2628 = vld [vmem:[%s3 + $0x34] sm:$0xf]
      %v2629 = vld [vmem:[%s3 + $0x38] sm:$0xf]
      %v2630 = vld [vmem:[%s3 + $0x3c] sm:$0xf]
      %v2631 = vld [vmem:[#allocation2 + $0x28] sm:$0x1]
      %s2632 = scalar_lea.vmem %s3, 64
      %v2633 = vld [vmem:[%s2632] sm:$0xf]
      %v2634 = vld [vmem:[%s2632 + $0x4] sm:$0xf]
      %v2635 = vld [vmem:[%s2632 + $0x8] sm:$0xf]
      %v2636 = vld [vmem:[%s2632 + $0xc] sm:$0xf]
      %v2637 = vld [vmem:[%s2632 + $0x10] sm:$0xf]
      %v2638 = vld [vmem:[%s2632 + $0x14] sm:$0xf]
      %v2639 = vld [vmem:[%s2632 + $0x18] sm:$0xf]
      %v2640 = vld [vmem:[%s2632 + $0x1c] sm:$0xf]
      %v2641 = vld [vmem:[%s2632 + $0x20] sm:$0xf]
      %v2642 = vld [vmem:[%s2632 + $0x24] sm:$0xf]
      %v2643 = vld [vmem:[%s2632 + $0x28] sm:$0xf]
      %v2644 = vld [vmem:[%s2632 + $0x2c] sm:$0xf]
      %v2645 = vld [vmem:[%s2632 + $0x30] sm:$0xf]
      %v2646 = vld [vmem:[%s2632 + $0x34] sm:$0xf]
      %v2647 = vld [vmem:[%s2632 + $0x38] sm:$0xf]
      %v2648 = vld [vmem:[%s2632 + $0x3c] sm:$0xf]
      %v2660 = vunpack.c.l.b16 %v2605
      %v2661 = vunpack.c.l.b16 %v2606
      %v2662 = vunpack.c.l.b16 %v2607
      %v2663 = vunpack.c.l.b16 %v2608
      %v2664 = vunpack.c.l.b16 %v2609
      %v2665 = vunpack.c.l.b16 %v2610
      %v2666 = vunpack.c.l.b16 %v2611
      %v2667 = vunpack.c.l.b16 %v2612
      %v2668 = vunpack.c.l.b16 %v2613
      %v2669 = vunpack.c.l.b16 %v2614
      %v2670 = vunpack.c.l.b16 %v2631
      %v2671 = vpack.c.b16 %v2661, %v2660
      %v2672 = vpack.c.b16 %v2663, %v2662
      %v2673 = vpack.c.b16 %v2665, %v2664
      %v2674 = vpack.c.b16 %v2667, %v2666
      %v2675 = vpack.c.b16 %v2669, %v2668
      %v2676 = vpack.c.b16 %v2670, %v2670
      %v2678 = vshrl.u32 %v2671, 16
      %v2680 = vshll.u32 %v2671, 16
      %v2682 = vrot.slane %v2680, 1
      %v2683 = vor.u32 %v2678, %v2682
      %v2685 = vshll.u32 %v2672, 16
      %v2687 = vrot.slane %v2685, 1
      %v2688 = vsel %vm882, %v2683, %v2687
      %v2689 = vshrl.u32 %v2672, 16
      %v2691 = vor.u32 %v2689, %v2687
      %v2693 = vshll.u32 %v2673, 16
      %v2695 = vrot.slane %v2693, 1
      %v2696 = vsel %vm882, %v2691, %v2695
      %v2697 = vshrl.u32 %v2673, 16
      %v2699 = vor.u32 %v2697, %v2695
      %v2701 = vshll.u32 %v2674, 16
      %v2703 = vrot.slane %v2701, 1
      %v2704 = vsel %vm882, %v2699, %v2703
      %v2705 = vshrl.u32 %v2674, 16
      %v2707 = vor.u32 %v2705, %v2703
      %v2709 = vshll.u32 %v2675, 16
      %v2711 = vrot.slane %v2709, 1
      %v2712 = vsel %vm882, %v2707, %v2711
      %v2713 = vshrl.u32 %v2675, 16
      %v2715 = vor.u32 %v2713, %v2711
      %v2717 = vshll.u32 %v2676, 16
      %v2719 = vrot.slane %v2717, 1
      %v2720 = vsel %vm882, %v2715, %v2719
      %v2742 = vunpack.c.l.b16 %v2633
      %v2743 = vunpack.c.l.b16 %v2634
      %v2744 = vunpack.c.l.b16 %v2635
      %v2745 = vunpack.c.l.b16 %v2636
      %v2746 = vunpack.c.l.b16 %v2637
      %v2747 = vunpack.c.l.b16 %v2638
      %v2748 = vunpack.c.l.b16 %v2639
      %v2749 = vunpack.c.l.b16 %v2640
      %v2750 = vunpack.c.l.b16 %v2641
      %v2751 = vunpack.c.l.b16 %v2642
      %v2752 = vunpack.c.l.b16 %v2643
      %v2753 = vunpack.c.l.b16 %v2644
      %v2754 = vunpack.c.l.b16 %v2645
      %v2755 = vunpack.c.l.b16 %v2646
      %v2756 = vunpack.c.l.b16 %v2647
      %v2757 = vunpack.c.l.b16 %v2648
      %v2758 = vpack.c.b16 %v2743, %v2742
      %v2759 = vpack.c.b16 %v2745, %v2744
      %v2760 = vpack.c.b16 %v2747, %v2746
      %v2761 = vpack.c.b16 %v2749, %v2748
      %v2762 = vpack.c.b16 %v2751, %v2750
      %v2763 = vpack.c.b16 %v2753, %v2752
      %v2764 = vpack.c.b16 %v2755, %v2754
      %v2765 = vpack.c.b16 %v2757, %v2756
      %2774 = vmatpush.bf16.msra.mxu0 %v2765
      %2775 = vmatpush.bf16.msra.mxu0 %v2764
      %2776 = vmatpush.bf16.msra.mxu0 %v2763
      %2777 = vmatpush.bf16.msra.mxu0 %v2762
      %2778 = vmatpush.bf16.msra.mxu0 %v2761
      %2779 = vmatpush.bf16.msra.mxu0 %v2760
      %2780 = vmatpush.bf16.msra.mxu0 %v2759
      %2781 = vmatpush.bf16.msra.mxu0 %v2758
      %2782 = vmatmul.bf16.gmra.mxu0 %v2688
      %v2783 = vpop.f32.mrf.mxu0
      %v2784 = vadd.f32 0.0, %v2783
      %v2785 = vpop.f32.mrf.mxu0
      %v2786 = vadd.f32 0.0, %v2785
      %2787 = vmatmul.bf16.gmra.mxu0 %v2696
      %v2788 = vpop.f32.mrf.mxu0
      %v2789 = vadd.f32 0.0, %v2788
      %v2790 = vpop.f32.mrf.mxu0
      %v2791 = vadd.f32 0.0, %v2790
      %2792 = vmatmul.bf16.gmra.mxu0 %v2704
      %v2793 = vpop.f32.mrf.mxu0
      %v2794 = vadd.f32 0.0, %v2793
      %v2795 = vpop.f32.mrf.mxu0
      %v2796 = vadd.f32 0.0, %v2795
      %2797 = vmatmul.bf16.gmra.mxu0 %v2712
      %v2798 = vpop.f32.mrf.mxu0
      %v2799 = vadd.f32 0.0, %v2798
      %v2800 = vpop.f32.mrf.mxu0
      %v2801 = vadd.f32 0.0, %v2800
      %2802 = vmatmul.bf16.gmra.mxu0 %v2720
      %v2803 = vpop.f32.mrf.mxu0
      %v2804 = vadd.f32 0.0, %v2803
      %v2805 = vpop.f32.mrf.mxu0
      %v2806 = vadd.f32 0.0, %v2805
      %2807 = vdwg.mxu0
      %v2829 = vunpack.c.l.b16 %v2615
      %v2830 = vunpack.c.l.b16 %v2616
      %v2831 = vunpack.c.l.b16 %v2617
      %v2832 = vunpack.c.l.b16 %v2618
      %v2833 = vunpack.c.l.b16 %v2619
      %v2834 = vunpack.c.l.b16 %v2620
      %v2835 = vunpack.c.l.b16 %v2621
      %v2836 = vunpack.c.l.b16 %v2622
      %v2837 = vunpack.c.l.b16 %v2623
      %v2838 = vunpack.c.l.b16 %v2624
      %v2839 = vunpack.c.l.b16 %v2625
      %v2840 = vunpack.c.l.b16 %v2626
      %v2841 = vunpack.c.l.b16 %v2627
      %v2842 = vunpack.c.l.b16 %v2628
      %v2843 = vunpack.c.l.b16 %v2629
      %v2844 = vunpack.c.l.b16 %v2630
      %v2845 = vpack.c.b16 %v2830, %v2829
      %v2846 = vpack.c.b16 %v2832, %v2831
      %v2847 = vpack.c.b16 %v2834, %v2833
      %v2848 = vpack.c.b16 %v2836, %v2835
      %v2849 = vpack.c.b16 %v2838, %v2837
      %v2850 = vpack.c.b16 %v2840, %v2839
      %v2851 = vpack.c.b16 %v2842, %v2841
      %v2852 = vpack.c.b16 %v2844, %v2843
      %2861 = vmatpush.bf16.msra.mxu0 %v2852
      %2862 = vmatpush.bf16.msra.mxu0 %v2851
      %2863 = vmatpush.bf16.msra.mxu0 %v2850
      %2864 = vmatpush.bf16.msra.mxu0 %v2849
      %2865 = vmatpush.bf16.msra.mxu0 %v2848
      %2866 = vmatpush.bf16.msra.mxu0 %v2847
      %2867 = vmatpush.bf16.msra.mxu0 %v2846
      %2868 = vmatpush.bf16.msra.mxu0 %v2845
      %2869 = vmatmul.bf16.gmra.mxu0 %v2671
      %v2870 = vpop.f32.mrf.mxu0
      %v2871 = vadd.f32 %v2784, %v2870
      %v2872 = vpop.f32.mrf.mxu0
      %v2873 = vadd.f32 %v2786, %v2872
      %2874 = vmatmul.bf16.gmra.mxu0 %v2672
      %v2875 = vpop.f32.mrf.mxu0
      %v2876 = vadd.f32 %v2789, %v2875
      %v2877 = vpop.f32.mrf.mxu0
      %v2878 = vadd.f32 %v2791, %v2877
      %2879 = vmatmul.bf16.gmra.mxu0 %v2673
      %v2880 = vpop.f32.mrf.mxu0
      %v2881 = vadd.f32 %v2794, %v2880
      %v2882 = vpop.f32.mrf.mxu0
      %v2883 = vadd.f32 %v2796, %v2882
      %2884 = vmatmul.bf16.gmra.mxu0 %v2674
      %v2885 = vpop.f32.mrf.mxu0
      %v2886 = vadd.f32 %v2799, %v2885
      %v2887 = vpop.f32.mrf.mxu0
      %v2888 = vadd.f32 %v2801, %v2887
      %2889 = vmatmul.bf16.gmra.mxu0 %v2675
      %v2890 = vpop.f32.mrf.mxu0
      %v2891 = vadd.f32 %v2804, %v2890
      %v2892 = vpop.f32.mrf.mxu0
      %v2893 = vadd.f32 %v2806, %v2892
      %2894 = vdwg.mxu0
      %v2895 = vld [vmem:[#allocation2] sm:$0xe]
      %s2896 = scalar_lea.vmem %s3, 128
      %v2897 = vld [vmem:[%s2896] sm:$0xf]
      %v2898 = vld [vmem:[%s2896 + $0x4] sm:$0xf]
      %v2899 = vld [vmem:[%s2896 + $0x8] sm:$0xf]
      %v2900 = vld [vmem:[%s2896 + $0xc] sm:$0xf]
      %v2901 = vld [vmem:[%s2896 + $0x10] sm:$0xf]
      %v2902 = vld [vmem:[%s2896 + $0x14] sm:$0xf]
      %v2903 = vld [vmem:[%s2896 + $0x18] sm:$0xf]
      %v2904 = vld [vmem:[%s2896 + $0x1c] sm:$0xf]
      %v2905 = vld [vmem:[%s2896 + $0x20] sm:$0xf]
      %v2906 = vld [vmem:[%s2896 + $0x24] sm:$0xf]
      %v2907 = vld [vmem:[%s2896 + $0x28] sm:$0xf]
      %v2908 = vld [vmem:[%s2896 + $0x2c] sm:$0xf]
      %v2909 = vld [vmem:[%s2896 + $0x30] sm:$0xf]
      %v2910 = vld [vmem:[%s2896 + $0x34] sm:$0xf]
      %v2911 = vld [vmem:[%s2896 + $0x38] sm:$0xf]
      %v2912 = vld [vmem:[%s2896 + $0x3c] sm:$0xf]
      %v2914 = vunpack.c.l.b16 %v2895
      %v2915 = vpack.c.b16 %v2661, %v2914
      %v2916 = vrot.slane %v2915, 1
      %v2917 = vrot.slane %v2672, 1
      %v2918 = vsel %vm1122, %v2916, %v2917
      %v2919 = vrot.slane %v2673, 1
      %v2920 = vsel %vm1122, %v2917, %v2919
      %v2921 = vrot.slane %v2674, 1
      %v2922 = vsel %vm1122, %v2919, %v2921
      %v2923 = vrot.slane %v2675, 1
      %v2924 = vsel %vm1122, %v2921, %v2923
      %v2925 = vrot.slane %v2676, 1
      %v2926 = vsel %vm1122, %v2923, %v2925
      %v2948 = vunpack.c.l.b16 %v2897
      %v2949 = vunpack.c.l.b16 %v2898
      %v2950 = vunpack.c.l.b16 %v2899
      %v2951 = vunpack.c.l.b16 %v2900
      %v2952 = vunpack.c.l.b16 %v2901
      %v2953 = vunpack.c.l.b16 %v2902
      %v2954 = vunpack.c.l.b16 %v2903
      %v2955 = vunpack.c.l.b16 %v2904
      %v2956 = vunpack.c.l.b16 %v2905
      %v2957 = vunpack.c.l.b16 %v2906
      %v2958 = vunpack.c.l.b16 %v2907
      %v2959 = vunpack.c.l.b16 %v2908
      %v2960 = vunpack.c.l.b16 %v2909
      %v2961 = vunpack.c.l.b16 %v2910
      %v2962 = vunpack.c.l.b16 %v2911
      %v2963 = vunpack.c.l.b16 %v2912
      %v2964 = vpack.c.b16 %v2949, %v2948
      %v2965 = vpack.c.b16 %v2951, %v2950
      %v2966 = vpack.c.b16 %v2953, %v2952
      %v2967 = vpack.c.b16 %v2955, %v2954
      %v2968 = vpack.c.b16 %v2957, %v2956
      %v2969 = vpack.c.b16 %v2959, %v2958
      %v2970 = vpack.c.b16 %v2961, %v2960
      %v2971 = vpack.c.b16 %v2963, %v2962
      %2980 = vmatpush.bf16.msra.mxu0 %v2971
      %2981 = vmatpush.bf16.msra.mxu0 %v2970
      %2982 = vmatpush.bf16.msra.mxu0 %v2969
      %2983 = vmatpush.bf16.msra.mxu0 %v2968
      %2984 = vmatpush.bf16.msra.mxu0 %v2967
      %2985 = vmatpush.bf16.msra.mxu0 %v2966
      %2986 = vmatpush.bf16.msra.mxu0 %v2965
      %2987 = vmatpush.bf16.msra.mxu0 %v2964
      %2988 = vmatmul.bf16.gmra.mxu0 %v2918
      %v2989 = vpop.f32.mrf.mxu0
      %v2990 = vadd.f32 0.0, %v2989
      %v2991 = vpop.f32.mrf.mxu0
      %v2992 = vadd.f32 0.0, %v2991
      %2993 = vmatmul.bf16.gmra.mxu0 %v2920
      %v2994 = vpop.f32.mrf.mxu0
      %v2995 = vadd.f32 0.0, %v2994
      %v2996 = vpop.f32.mrf.mxu0
      %v2997 = vadd.f32 0.0, %v2996
      %2998 = vmatmul.bf16.gmra.mxu0 %v2922
      %v2999 = vpop.f32.mrf.mxu0
      %v3000 = vadd.f32 0.0, %v2999
      %v3001 = vpop.f32.mrf.mxu0
      %v3002 = vadd.f32 0.0, %v3001
      %3003 = vmatmul.bf16.gmra.mxu0 %v2924
      %v3004 = vpop.f32.mrf.mxu0
      %v3005 = vadd.f32 0.0, %v3004
      %v3006 = vpop.f32.mrf.mxu0
      %v3007 = vadd.f32 0.0, %v3006
      %3008 = vmatmul.bf16.gmra.mxu0 %v2926
      %v3009 = vpop.f32.mrf.mxu0
      %v3010 = vadd.f32 0.0, %v3009
      %v3011 = vpop.f32.mrf.mxu0
      %v3012 = vadd.f32 0.0, %v3011
      %3013 = vdwg.mxu0
      %v3014 = vadd.f32 %v2871, %v2990
      %v3015 = vadd.f32 %v2873, %v2992
      %v3016 = vadd.f32 %v2876, %v2995
      %v3017 = vadd.f32 %v2878, %v2997
      %v3018 = vadd.f32 %v2881, %v3000
      %v3019 = vadd.f32 %v2883, %v3002
      %v3020 = vadd.f32 %v2886, %v3005
      %v3021 = vadd.f32 %v2888, %v3007
      %v3022 = vadd.f32 %v2891, %v3010
      %v3023 = vadd.f32 %v2893, %v3012
      %v3024 = vld [vmem:[#allocation2 + $0x4] sm:$0xe]
      %v3025 = vld [vmem:[#allocation2 + $0x8] sm:$0xf]
      %v3026 = vld [vmem:[#allocation2 + $0xc] sm:$0xf]
      %v3027 = vld [vmem:[#allocation2 + $0x10] sm:$0xf]
      %v3028 = vld [vmem:[#allocation2 + $0x14] sm:$0xf]
      %v3029 = vld [vmem:[#allocation2 + $0x18] sm:$0xf]
      %v3030 = vld [vmem:[#allocation2 + $0x1c] sm:$0xf]
      %v3031 = vld [vmem:[#allocation2 + $0x20] sm:$0xf]
      %v3032 = vld [vmem:[#allocation2 + $0x24] sm:$0xf]
      %v3033 = vld [vmem:[#allocation2 + $0x28] sm:$0xf]
      %v3034 = vld [vmem:[#allocation2 + $0x2c] sm:$0x1]
      %s3035 = scalar_lea.vmem %s3, 192
      %v3036 = vld [vmem:[%s3035] sm:$0xf]
      %v3037 = vld [vmem:[%s3035 + $0x4] sm:$0xf]
      %v3038 = vld [vmem:[%s3035 + $0x8] sm:$0xf]
      %v3039 = vld [vmem:[%s3035 + $0xc] sm:$0xf]
      %v3040 = vld [vmem:[%s3035 + $0x10] sm:$0xf]
      %v3041 = vld [vmem:[%s3035 + $0x14] sm:$0xf]
      %v3042 = vld [vmem:[%s3035 + $0x18] sm:$0xf]
      %v3043 = vld [vmem:[%s3035 + $0x1c] sm:$0xf]
      %v3044 = vld [vmem:[%s3035 + $0x20] sm:$0xf]
      %v3045 = vld [vmem:[%s3035 + $0x24] sm:$0xf]
      %v3046 = vld [vmem:[%s3035 + $0x28] sm:$0xf]
      %v3047 = vld [vmem:[%s3035 + $0x2c] sm:$0xf]
      %v3048 = vld [vmem:[%s3035 + $0x30] sm:$0xf]
      %v3049 = vld [vmem:[%s3035 + $0x34] sm:$0xf]
      %v3050 = vld [vmem:[%s3035 + $0x38] sm:$0xf]
      %v3051 = vld [vmem:[%s3035 + $0x3c] sm:$0xf]
      %v3063 = vunpack.c.l.b16 %v3024
      %v3064 = vunpack.c.l.b16 %v3025
      %v3065 = vunpack.c.l.b16 %v3026
      %v3066 = vunpack.c.l.b16 %v3027
      %v3067 = vunpack.c.l.b16 %v3028
      %v3068 = vunpack.c.l.b16 %v3029
      %v3069 = vunpack.c.l.b16 %v3030
      %v3070 = vunpack.c.l.b16 %v3031
      %v3071 = vunpack.c.l.b16 %v3032
      %v3072 = vunpack.c.l.b16 %v3033
      %v3073 = vunpack.c.l.b16 %v3034
      %v3074 = vpack.c.b16 %v3064, %v3063
      %v3075 = vpack.c.b16 %v3066, %v3065
      %v3076 = vpack.c.b16 %v3068, %v3067
      %v3077 = vpack.c.b16 %v3070, %v3069
      %v3078 = vpack.c.b16 %v3072, %v3071
      %v3079 = vpack.c.b16 %v3073, %v3073
      %v3080 = vrot.slane %v3074, 1
      %v3081 = vrot.slane %v3075, 1
      %v3082 = vsel %vm1122, %v3080, %v3081
      %v3083 = vrot.slane %v3076, 1
      %v3084 = vsel %vm1122, %v3081, %v3083
      %v3085 = vrot.slane %v3077, 1
      %v3086 = vsel %vm1122, %v3083, %v3085
      %v3087 = vrot.slane %v3078, 1
      %v3088 = vsel %vm1122, %v3085, %v3087
      %v3089 = vrot.slane %v3079, 1
      %v3090 = vsel %vm1122, %v3087, %v3089
      %v3112 = vunpack.c.l.b16 %v3036
      %v3113 = vunpack.c.l.b16 %v3037
      %v3114 = vunpack.c.l.b16 %v3038
      %v3115 = vunpack.c.l.b16 %v3039
      %v3116 = vunpack.c.l.b16 %v3040
      %v3117 = vunpack.c.l.b16 %v3041
      %v3118 = vunpack.c.l.b16 %v3042
      %v3119 = vunpack.c.l.b16 %v3043
      %v3120 = vunpack.c.l.b16 %v3044
      %v3121 = vunpack.c.l.b16 %v3045
      %v3122 = vunpack.c.l.b16 %v3046
      %v3123 = vunpack.c.l.b16 %v3047
      %v3124 = vunpack.c.l.b16 %v3048
      %v3125 = vunpack.c.l.b16 %v3049
      %v3126 = vunpack.c.l.b16 %v3050
      %v3127 = vunpack.c.l.b16 %v3051
      %v3128 = vpack.c.b16 %v3113, %v3112
      %v3129 = vpack.c.b16 %v3115, %v3114
      %v3130 = vpack.c.b16 %v3117, %v3116
      %v3131 = vpack.c.b16 %v3119, %v3118
      %v3132 = vpack.c.b16 %v3121, %v3120
      %v3133 = vpack.c.b16 %v3123, %v3122
      %v3134 = vpack.c.b16 %v3125, %v3124
      %v3135 = vpack.c.b16 %v3127, %v3126
      %3144 = vmatpush.bf16.msra.mxu0 %v3135
      %3145 = vmatpush.bf16.msra.mxu0 %v3134
      %3146 = vmatpush.bf16.msra.mxu0 %v3133
      %3147 = vmatpush.bf16.msra.mxu0 %v3132
      %3148 = vmatpush.bf16.msra.mxu0 %v3131
      %3149 = vmatpush.bf16.msra.mxu0 %v3130
      %3150 = vmatpush.bf16.msra.mxu0 %v3129
      %3151 = vmatpush.bf16.msra.mxu0 %v3128
      %3152 = vmatmul.bf16.gmra.mxu0 %v3082
      %v3153 = vpop.f32.mrf.mxu0
      %v3154 = vadd.f32 0.0, %v3153
      %v3155 = vpop.f32.mrf.mxu0
      %v3156 = vadd.f32 0.0, %v3155
      %3157 = vmatmul.bf16.gmra.mxu0 %v3084
      %v3158 = vpop.f32.mrf.mxu0
      %v3159 = vadd.f32 0.0, %v3158
      %v3160 = vpop.f32.mrf.mxu0
      %v3161 = vadd.f32 0.0, %v3160
      %3162 = vmatmul.bf16.gmra.mxu0 %v3086
      %v3163 = vpop.f32.mrf.mxu0
      %v3164 = vadd.f32 0.0, %v3163
      %v3165 = vpop.f32.mrf.mxu0
      %v3166 = vadd.f32 0.0, %v3165
      %3167 = vmatmul.bf16.gmra.mxu0 %v3088
      %v3168 = vpop.f32.mrf.mxu0
      %v3169 = vadd.f32 0.0, %v3168
      %v3170 = vpop.f32.mrf.mxu0
      %v3171 = vadd.f32 0.0, %v3170
      %3172 = vmatmul.bf16.gmra.mxu0 %v3090
      %v3173 = vpop.f32.mrf.mxu0
      %v3174 = vadd.f32 0.0, %v3173
      %v3175 = vpop.f32.mrf.mxu0
      %v3176 = vadd.f32 0.0, %v3175
      %3177 = vdwg.mxu0
      %v3178 = vadd.f32 %v3014, %v3154
      %v3179 = vadd.f32 %v3015, %v3156
      %v3180 = vadd.f32 %v3016, %v3159
      %v3181 = vadd.f32 %v3017, %v3161
      %v3182 = vadd.f32 %v3018, %v3164
      %v3183 = vadd.f32 %v3019, %v3166
      %v3184 = vadd.f32 %v3020, %v3169
      %v3185 = vadd.f32 %v3021, %v3171
      %v3186 = vadd.f32 %v3022, %v3174
      %v3187 = vadd.f32 %v3023, %v3176
      %v3188 = vld [vmem:[#allocation2 + $0x2c] sm:$0x3]
      %s3189 = scalar_lea.vmem %s3, 256
      %v3190 = vld [vmem:[%s3189] sm:$0xf]
      %v3191 = vld [vmem:[%s3189 + $0x4] sm:$0xf]
      %v3192 = vld [vmem:[%s3189 + $0x8] sm:$0xf]
      %v3193 = vld [vmem:[%s3189 + $0xc] sm:$0xf]
      %v3194 = vld [vmem:[%s3189 + $0x10] sm:$0xf]
      %v3195 = vld [vmem:[%s3189 + $0x14] sm:$0xf]
      %v3196 = vld [vmem:[%s3189 + $0x18] sm:$0xf]
      %v3197 = vld [vmem:[%s3189 + $0x1c] sm:$0xf]
      %v3198 = vld [vmem:[%s3189 + $0x20] sm:$0xf]
      %v3199 = vld [vmem:[%s3189 + $0x24] sm:$0xf]
      %v3200 = vld [vmem:[%s3189 + $0x28] sm:$0xf]
      %v3201 = vld [vmem:[%s3189 + $0x2c] sm:$0xf]
      %v3202 = vld [vmem:[%s3189 + $0x30] sm:$0xf]
      %v3203 = vld [vmem:[%s3189 + $0x34] sm:$0xf]
      %v3204 = vld [vmem:[%s3189 + $0x38] sm:$0xf]
      %v3205 = vld [vmem:[%s3189 + $0x3c] sm:$0xf]
      %v3207 = vunpack.c.l.b16 %v3188
      %v3208 = vpack.c.b16 %v3207, %v3207
      %v3210 = vshrl.u32 %v3074, 16
      %v3212 = vrot.slane %v3210, 1
      %v3213 = vshll.u32 %v3074, 16
      %v3215 = vrot.slane %v3213, 2
      %v3216 = vor.u32 %v3212, %v3215
      %v3218 = vshrl.u32 %v3075, 16
      %v3220 = vrot.slane %v3218, 1
      %v3221 = vshll.u32 %v3075, 16
      %v3223 = vrot.slane %v3221, 2
      %v3224 = vor.u32 %v3220, %v3223
      %v3225 = vsel %vm1416, %v3216, %v3224
      %v3227 = vshrl.u32 %v3076, 16
      %v3229 = vrot.slane %v3227, 1
      %v3230 = vshll.u32 %v3076, 16
      %v3232 = vrot.slane %v3230, 2
      %v3233 = vor.u32 %v3229, %v3232
      %v3234 = vsel %vm1416, %v3224, %v3233
      %v3236 = vshrl.u32 %v3077, 16
      %v3238 = vrot.slane %v3236, 1
      %v3239 = vshll.u32 %v3077, 16
      %v3241 = vrot.slane %v3239, 2
      %v3242 = vor.u32 %v3238, %v3241
      %v3243 = vsel %vm1416, %v3233, %v3242
      %v3245 = vshrl.u32 %v3078, 16
      %v3247 = vrot.slane %v3245, 1
      %v3248 = vshll.u32 %v3078, 16
      %v3250 = vrot.slane %v3248, 2
      %v3251 = vor.u32 %v3247, %v3250
      %v3252 = vsel %vm1416, %v3242, %v3251
      %v3254 = vshrl.u32 %v3208, 16
      %v3256 = vrot.slane %v3254, 1
      %v3257 = vshll.u32 %v3208, 16
      %v3259 = vrot.slane %v3257, 2
      %v3260 = vor.u32 %v3256, %v3259
      %v3261 = vsel %vm1416, %v3251, %v3260
      %v3283 = vunpack.c.l.b16 %v3190
      %v3284 = vunpack.c.l.b16 %v3191
      %v3285 = vunpack.c.l.b16 %v3192
      %v3286 = vunpack.c.l.b16 %v3193
      %v3287 = vunpack.c.l.b16 %v3194
      %v3288 = vunpack.c.l.b16 %v3195
      %v3289 = vunpack.c.l.b16 %v3196
      %v3290 = vunpack.c.l.b16 %v3197
      %v3291 = vunpack.c.l.b16 %v3198
      %v3292 = vunpack.c.l.b16 %v3199
      %v3293 = vunpack.c.l.b16 %v3200
      %v3294 = vunpack.c.l.b16 %v3201
      %v3295 = vunpack.c.l.b16 %v3202
      %v3296 = vunpack.c.l.b16 %v3203
      %v3297 = vunpack.c.l.b16 %v3204
      %v3298 = vunpack.c.l.b16 %v3205
      %v3299 = vpack.c.b16 %v3284, %v3283
      %v3300 = vpack.c.b16 %v3286, %v3285
      %v3301 = vpack.c.b16 %v3288, %v3287
      %v3302 = vpack.c.b16 %v3290, %v3289
      %v3303 = vpack.c.b16 %v3292, %v3291
      %v3304 = vpack.c.b16 %v3294, %v3293
      %v3305 = vpack.c.b16 %v3296, %v3295
      %v3306 = vpack.c.b16 %v3298, %v3297
      %3315 = vmatpush.bf16.msra.mxu0 %v3306
      %3316 = vmatpush.bf16.msra.mxu0 %v3305
      %3317 = vmatpush.bf16.msra.mxu0 %v3304
      %3318 = vmatpush.bf16.msra.mxu0 %v3303
      %3319 = vmatpush.bf16.msra.mxu0 %v3302
      %3320 = vmatpush.bf16.msra.mxu0 %v3301
      %3321 = vmatpush.bf16.msra.mxu0 %v3300
      %3322 = vmatpush.bf16.msra.mxu0 %v3299
      %3323 = vmatmul.bf16.gmra.mxu0 %v3225
      %v3324 = vpop.f32.mrf.mxu0
      %v3325 = vadd.f32 0.0, %v3324
      %v3326 = vpop.f32.mrf.mxu0
      %v3327 = vadd.f32 0.0, %v3326
      %3328 = vmatmul.bf16.gmra.mxu0 %v3234
      %v3329 = vpop.f32.mrf.mxu0
      %v3330 = vadd.f32 0.0, %v3329
      %v3331 = vpop.f32.mrf.mxu0
      %v3332 = vadd.f32 0.0, %v3331
      %3333 = vmatmul.bf16.gmra.mxu0 %v3243
      %v3334 = vpop.f32.mrf.mxu0
      %v3335 = vadd.f32 0.0, %v3334
      %v3336 = vpop.f32.mrf.mxu0
      %v3337 = vadd.f32 0.0, %v3336
      %3338 = vmatmul.bf16.gmra.mxu0 %v3252
      %v3339 = vpop.f32.mrf.mxu0
      %v3340 = vadd.f32 0.0, %v3339
      %v3341 = vpop.f32.mrf.mxu0
      %v3342 = vadd.f32 0.0, %v3341
      %3343 = vmatmul.bf16.gmra.mxu0 %v3261
      %v3344 = vpop.f32.mrf.mxu0
      %v3345 = vadd.f32 0.0, %v3344
      %v3346 = vpop.f32.mrf.mxu0
      %v3347 = vadd.f32 0.0, %v3346
      %3348 = vdwg.mxu0
      %v3349 = vadd.f32 %v3178, %v3325
      %v3350 = vadd.f32 %v3179, %v3327
      %v3351 = vadd.f32 %v3180, %v3330
      %v3352 = vadd.f32 %v3181, %v3332
      %v3353 = vadd.f32 %v3182, %v3335
      %v3354 = vadd.f32 %v3183, %v3337
      %v3355 = vadd.f32 %v3184, %v3340
      %v3356 = vadd.f32 %v3185, %v3342
      %v3357 = vadd.f32 %v3186, %v3345
      %v3358 = vadd.f32 %v3187, %v3347
      %v3359 = vld [vmem:[#allocation2 + $0x4] sm:$0xc]
      %s3360 = scalar_lea.vmem %s3, 320
      %v3361 = vld [vmem:[%s3360] sm:$0xf]
      %v3362 = vld [vmem:[%s3360 + $0x4] sm:$0xf]
      %v3363 = vld [vmem:[%s3360 + $0x8] sm:$0xf]
      %v3364 = vld [vmem:[%s3360 + $0xc] sm:$0xf]
      %v3365 = vld [vmem:[%s3360 + $0x10] sm:$0xf]
      %v3366 = vld [vmem:[%s3360 + $0x14] sm:$0xf]
      %v3367 = vld [vmem:[%s3360 + $0x18] sm:$0xf]
      %v3368 = vld [vmem:[%s3360 + $0x1c] sm:$0xf]
      %v3369 = vld [vmem:[%s3360 + $0x20] sm:$0xf]
      %v3370 = vld [vmem:[%s3360 + $0x24] sm:$0xf]
      %v3371 = vld [vmem:[%s3360 + $0x28] sm:$0xf]
      %v3372 = vld [vmem:[%s3360 + $0x2c] sm:$0xf]
      %v3373 = vld [vmem:[%s3360 + $0x30] sm:$0xf]
      %v3374 = vld [vmem:[%s3360 + $0x34] sm:$0xf]
      %v3375 = vld [vmem:[%s3360 + $0x38] sm:$0xf]
      %v3376 = vld [vmem:[%s3360 + $0x3c] sm:$0xf]
      %v3378 = vunpack.c.l.b16 %v3359
      %v3379 = vpack.c.b16 %v3064, %v3378
      %v3380 = vrot.slane %v3379, 2
      %v3381 = vrot.slane %v3075, 2
      %v3382 = vsel %vm1588, %v3380, %v3381
      %v3383 = vrot.slane %v3076, 2
      %v3384 = vsel %vm1588, %v3381, %v3383
      %v3385 = vrot.slane %v3077, 2
      %v3386 = vsel %vm1588, %v3383, %v3385
      %v3387 = vrot.slane %v3078, 2
      %v3388 = vsel %vm1588, %v3385, %v3387
      %v3389 = vrot.slane %v3208, 2
      %v3390 = vsel %vm1588, %v3387, %v3389
      %v3412 = vunpack.c.l.b16 %v3361
      %v3413 = vunpack.c.l.b16 %v3362
      %v3414 = vunpack.c.l.b16 %v3363
      %v3415 = vunpack.c.l.b16 %v3364
      %v3416 = vunpack.c.l.b16 %v3365
      %v3417 = vunpack.c.l.b16 %v3366
      %v3418 = vunpack.c.l.b16 %v3367
      %v3419 = vunpack.c.l.b16 %v3368
      %v3420 = vunpack.c.l.b16 %v3369
      %v3421 = vunpack.c.l.b16 %v3370
      %v3422 = vunpack.c.l.b16 %v3371
      %v3423 = vunpack.c.l.b16 %v3372
      %v3424 = vunpack.c.l.b16 %v3373
      %v3425 = vunpack.c.l.b16 %v3374
      %v3426 = vunpack.c.l.b16 %v3375
      %v3427 = vunpack.c.l.b16 %v3376
      %v3428 = vpack.c.b16 %v3413, %v3412
      %v3429 = vpack.c.b16 %v3415, %v3414
      %v3430 = vpack.c.b16 %v3417, %v3416
      %v3431 = vpack.c.b16 %v3419, %v3418
      %v3432 = vpack.c.b16 %v3421, %v3420
      %v3433 = vpack.c.b16 %v3423, %v3422
      %v3434 = vpack.c.b16 %v3425, %v3424
      %v3435 = vpack.c.b16 %v3427, %v3426
      %3444 = vmatpush.bf16.msra.mxu0 %v3435
      %3445 = vmatpush.bf16.msra.mxu0 %v3434
      %3446 = vmatpush.bf16.msra.mxu0 %v3433
      %3447 = vmatpush.bf16.msra.mxu0 %v3432
      %3448 = vmatpush.bf16.msra.mxu0 %v3431
      %3449 = vmatpush.bf16.msra.mxu0 %v3430
      %3450 = vmatpush.bf16.msra.mxu0 %v3429
      %3451 = vmatpush.bf16.msra.mxu0 %v3428
      %3452 = vmatmul.bf16.gmra.mxu0 %v3382
      %v3453 = vpop.f32.mrf.mxu0
      %v3454 = vadd.f32 0.0, %v3453
      %v3455 = vpop.f32.mrf.mxu0
      %v3456 = vadd.f32 0.0, %v3455
      %3457 = vmatmul.bf16.gmra.mxu0 %v3384
      %v3458 = vpop.f32.mrf.mxu0
      %v3459 = vadd.f32 0.0, %v3458
      %v3460 = vpop.f32.mrf.mxu0
      %v3461 = vadd.f32 0.0, %v3460
      %3462 = vmatmul.bf16.gmra.mxu0 %v3386
      %v3463 = vpop.f32.mrf.mxu0
      %v3464 = vadd.f32 0.0, %v3463
      %v3465 = vpop.f32.mrf.mxu0
      %v3466 = vadd.f32 0.0, %v3465
      %3467 = vmatmul.bf16.gmra.mxu0 %v3388
      %v3468 = vpop.f32.mrf.mxu0
      %v3469 = vadd.f32 0.0, %v3468
      %v3470 = vpop.f32.mrf.mxu0
      %v3471 = vadd.f32 0.0, %v3470
      %3472 = vmatmul.bf16.gmra.mxu0 %v3390
      %v3473 = vpop.f32.mrf.mxu0
      %v3474 = vadd.f32 0.0, %v3473
      %v3475 = vpop.f32.mrf.mxu0
      %v3476 = vadd.f32 0.0, %v3475
      %3477 = vdwg.mxu0
      %v3478 = vadd.f32 %v3349, %v3454
      %v3479 = vadd.f32 %v3350, %v3456
      %v3480 = vadd.f32 %v3351, %v3459
      %v3481 = vadd.f32 %v3352, %v3461
      %v3482 = vadd.f32 %v3353, %v3464
      %v3483 = vadd.f32 %v3354, %v3466
      %v3484 = vadd.f32 %v3355, %v3469
      %v3485 = vadd.f32 %v3356, %v3471
      %v3486 = vadd.f32 %v3357, %v3474
      %v3487 = vadd.f32 %v3358, %v3476
      %v3488 = vld [vmem:[#allocation2 + $0x8] sm:$0xc]
      %v3489 = vld [vmem:[#allocation2 + $0xc] sm:$0xf]
      %v3490 = vld [vmem:[#allocation2 + $0x10] sm:$0xf]
      %v3491 = vld [vmem:[#allocation2 + $0x14] sm:$0xf]
      %v3492 = vld [vmem:[#allocation2 + $0x18] sm:$0xf]
      %v3493 = vld [vmem:[#allocation2 + $0x1c] sm:$0xf]
      %v3494 = vld [vmem:[#allocation2 + $0x20] sm:$0xf]
      %v3495 = vld [vmem:[#allocation2 + $0x24] sm:$0xf]
      %v3496 = vld [vmem:[#allocation2 + $0x28] sm:$0xf]
      %v3497 = vld [vmem:[#allocation2 + $0x2c] sm:$0xf]
      %v3498 = vld [vmem:[#allocation2 + $0x30] sm:$0x3]
      %s3499 = scalar_lea.vmem %s3, 384
      %v3500 = vld [vmem:[%s3499] sm:$0xf]
      %v3501 = vld [vmem:[%s3499 + $0x4] sm:$0xf]
      %v3502 = vld [vmem:[%s3499 + $0x8] sm:$0xf]
      %v3503 = vld [vmem:[%s3499 + $0xc] sm:$0xf]
      %v3504 = vld [vmem:[%s3499 + $0x10] sm:$0xf]
      %v3505 = vld [vmem:[%s3499 + $0x14] sm:$0xf]
      %v3506 = vld [vmem:[%s3499 + $0x18] sm:$0xf]
      %v3507 = vld [vmem:[%s3499 + $0x1c] sm:$0xf]
      %v3508 = vld [vmem:[%s3499 + $0x20] sm:$0xf]
      %v3509 = vld [vmem:[%s3499 + $0x24] sm:$0xf]
      %v3510 = vld [vmem:[%s3499 + $0x28] sm:$0xf]
      %v3511 = vld [vmem:[%s3499 + $0x2c] sm:$0xf]
      %v3512 = vld [vmem:[%s3499 + $0x30] sm:$0xf]
      %v3513 = vld [vmem:[%s3499 + $0x34] sm:$0xf]
      %v3514 = vld [vmem:[%s3499 + $0x38] sm:$0xf]
      %v3515 = vld [vmem:[%s3499 + $0x3c] sm:$0xf]
      %v3527 = vunpack.c.l.b16 %v3488
      %v3528 = vunpack.c.l.b16 %v3489
      %v3529 = vunpack.c.l.b16 %v3490
      %v3530 = vunpack.c.l.b16 %v3491
      %v3531 = vunpack.c.l.b16 %v3492
      %v3532 = vunpack.c.l.b16 %v3493
      %v3533 = vunpack.c.l.b16 %v3494
      %v3534 = vunpack.c.l.b16 %v3495
      %v3535 = vunpack.c.l.b16 %v3496
      %v3536 = vunpack.c.l.b16 %v3497
      %v3537 = vunpack.c.l.b16 %v3498
      %v3538 = vpack.c.b16 %v3528, %v3527
      %v3539 = vpack.c.b16 %v3530, %v3529
      %v3540 = vpack.c.b16 %v3532, %v3531
      %v3541 = vpack.c.b16 %v3534, %v3533
      %v3542 = vpack.c.b16 %v3536, %v3535
      %v3543 = vpack.c.b16 %v3537, %v3537
      %v3544 = vrot.slane %v3538, 2
      %v3545 = vrot.slane %v3539, 2
      %v3546 = vsel %vm1588, %v3544, %v3545
      %v3547 = vrot.slane %v3540, 2
      %v3548 = vsel %vm1588, %v3545, %v3547
      %v3549 = vrot.slane %v3541, 2
      %v3550 = vsel %vm1588, %v3547, %v3549
      %v3551 = vrot.slane %v3542, 2
      %v3552 = vsel %vm1588, %v3549, %v3551
      %v3553 = vrot.slane %v3543, 2
      %v3554 = vsel %vm1588, %v3551, %v3553
      %v3576 = vunpack.c.l.b16 %v3500
      %v3577 = vunpack.c.l.b16 %v3501
      %v3578 = vunpack.c.l.b16 %v3502
      %v3579 = vunpack.c.l.b16 %v3503
      %v3580 = vunpack.c.l.b16 %v3504
      %v3581 = vunpack.c.l.b16 %v3505
      %v3582 = vunpack.c.l.b16 %v3506
      %v3583 = vunpack.c.l.b16 %v3507
      %v3584 = vunpack.c.l.b16 %v3508
      %v3585 = vunpack.c.l.b16 %v3509
      %v3586 = vunpack.c.l.b16 %v3510
      %v3587 = vunpack.c.l.b16 %v3511
      %v3588 = vunpack.c.l.b16 %v3512
      %v3589 = vunpack.c.l.b16 %v3513
      %v3590 = vunpack.c.l.b16 %v3514
      %v3591 = vunpack.c.l.b16 %v3515
      %v3592 = vpack.c.b16 %v3577, %v3576
      %v3593 = vpack.c.b16 %v3579, %v3578
      %v3594 = vpack.c.b16 %v3581, %v3580
      %v3595 = vpack.c.b16 %v3583, %v3582
      %v3596 = vpack.c.b16 %v3585, %v3584
      %v3597 = vpack.c.b16 %v3587, %v3586
      %v3598 = vpack.c.b16 %v3589, %v3588
      %v3599 = vpack.c.b16 %v3591, %v3590
      %3608 = vmatpush.bf16.msra.mxu0 %v3599
      %3609 = vmatpush.bf16.msra.mxu0 %v3598
      %3610 = vmatpush.bf16.msra.mxu0 %v3597
      %3611 = vmatpush.bf16.msra.mxu0 %v3596
      %3612 = vmatpush.bf16.msra.mxu0 %v3595
      %3613 = vmatpush.bf16.msra.mxu0 %v3594
      %3614 = vmatpush.bf16.msra.mxu0 %v3593
      %3615 = vmatpush.bf16.msra.mxu0 %v3592
      %3616 = vmatmul.bf16.gmra.mxu0 %v3546
      %v3617 = vpop.f32.mrf.mxu0
      %v3618 = vadd.f32 0.0, %v3617
      %v3619 = vpop.f32.mrf.mxu0
      %v3620 = vadd.f32 0.0, %v3619
      %3621 = vmatmul.bf16.gmra.mxu0 %v3548
      %v3622 = vpop.f32.mrf.mxu0
      %v3623 = vadd.f32 0.0, %v3622
      %v3624 = vpop.f32.mrf.mxu0
      %v3625 = vadd.f32 0.0, %v3624
      %3626 = vmatmul.bf16.gmra.mxu0 %v3550
      %v3627 = vpop.f32.mrf.mxu0
      %v3628 = vadd.f32 0.0, %v3627
      %v3629 = vpop.f32.mrf.mxu0
      %v3630 = vadd.f32 0.0, %v3629
      %3631 = vmatmul.bf16.gmra.mxu0 %v3552
      %v3632 = vpop.f32.mrf.mxu0
      %v3633 = vadd.f32 0.0, %v3632
      %v3634 = vpop.f32.mrf.mxu0
      %v3635 = vadd.f32 0.0, %v3634
      %3636 = vmatmul.bf16.gmra.mxu0 %v3554
      %v3637 = vpop.f32.mrf.mxu0
      %v3638 = vadd.f32 0.0, %v3637
      %v3639 = vpop.f32.mrf.mxu0
      %v3640 = vadd.f32 0.0, %v3639
      %3641 = vdwg.mxu0
      %v3642 = vadd.f32 %v3478, %v3618
      %v3643 = vadd.f32 %v3479, %v3620
      %v3644 = vadd.f32 %v3480, %v3623
      %v3645 = vadd.f32 %v3481, %v3625
      %v3646 = vadd.f32 %v3482, %v3628
      %v3647 = vadd.f32 %v3483, %v3630
      %v3648 = vadd.f32 %v3484, %v3633
      %v3649 = vadd.f32 %v3485, %v3635
      %v3650 = vadd.f32 %v3486, %v3638
      %v3651 = vadd.f32 %v3487, %v3640
      %v3652 = vld [vmem:[#allocation2 + $0x30] sm:$0x7]
      %s3653 = scalar_lea.vmem %s3, 448
      %v3654 = vld [vmem:[%s3653] sm:$0xf]
      %v3655 = vld [vmem:[%s3653 + $0x4] sm:$0xf]
      %v3656 = vld [vmem:[%s3653 + $0x8] sm:$0xf]
      %v3657 = vld [vmem:[%s3653 + $0xc] sm:$0xf]
      %v3658 = vld [vmem:[%s3653 + $0x10] sm:$0xf]
      %v3659 = vld [vmem:[%s3653 + $0x14] sm:$0xf]
      %v3660 = vld [vmem:[%s3653 + $0x18] sm:$0xf]
      %v3661 = vld [vmem:[%s3653 + $0x1c] sm:$0xf]
      %v3662 = vld [vmem:[%s3653 + $0x20] sm:$0xf]
      %v3663 = vld [vmem:[%s3653 + $0x24] sm:$0xf]
      %v3664 = vld [vmem:[%s3653 + $0x28] sm:$0xf]
      %v3665 = vld [vmem:[%s3653 + $0x2c] sm:$0xf]
      %v3666 = vld [vmem:[%s3653 + $0x30] sm:$0xf]
      %v3667 = vld [vmem:[%s3653 + $0x34] sm:$0xf]
      %v3668 = vld [vmem:[%s3653 + $0x38] sm:$0xf]
      %v3669 = vld [vmem:[%s3653 + $0x3c] sm:$0xf]
      %v3671 = vunpack.c.l.b16 %v3652
      %v3672 = vpack.c.b16 %v3671, %v3671
      %v3674 = vshrl.u32 %v3538, 16
      %v3676 = vrot.slane %v3674, 2
      %v3677 = vshll.u32 %v3538, 16
      %v3679 = vrot.slane %v3677, 3
      %v3680 = vor.u32 %v3676, %v3679
      %v3682 = vshrl.u32 %v3539, 16
      %v3684 = vrot.slane %v3682, 2
      %v3685 = vshll.u32 %v3539, 16
      %v3687 = vrot.slane %v3685, 3
      %v3688 = vor.u32 %v3684, %v3687
      %v3689 = vsel %vm1882, %v3680, %v3688
      %v3691 = vshrl.u32 %v3540, 16
      %v3693 = vrot.slane %v3691, 2
      %v3694 = vshll.u32 %v3540, 16
      %v3696 = vrot.slane %v3694, 3
      %v3697 = vor.u32 %v3693, %v3696
      %v3698 = vsel %vm1882, %v3688, %v3697
      %v3700 = vshrl.u32 %v3541, 16
      %v3702 = vrot.slane %v3700, 2
      %v3703 = vshll.u32 %v3541, 16
      %v3705 = vrot.slane %v3703, 3
      %v3706 = vor.u32 %v3702, %v3705
      %v3707 = vsel %vm1882, %v3697, %v3706
      %v3709 = vshrl.u32 %v3542, 16
      %v3711 = vrot.slane %v3709, 2
      %v3712 = vshll.u32 %v3542, 16
      %v3714 = vrot.slane %v3712, 3
      %v3715 = vor.u32 %v3711, %v3714
      %v3716 = vsel %vm1882, %v3706, %v3715
      %v3718 = vshrl.u32 %v3672, 16
      %v3720 = vrot.slane %v3718, 2
      %v3721 = vshll.u32 %v3672, 16
      %v3723 = vrot.slane %v3721, 3
      %v3724 = vor.u32 %v3720, %v3723
      %v3725 = vsel %vm1882, %v3715, %v3724
      %v3747 = vunpack.c.l.b16 %v3654
      %v3748 = vunpack.c.l.b16 %v3655
      %v3749 = vunpack.c.l.b16 %v3656
      %v3750 = vunpack.c.l.b16 %v3657
      %v3751 = vunpack.c.l.b16 %v3658
      %v3752 = vunpack.c.l.b16 %v3659
      %v3753 = vunpack.c.l.b16 %v3660
      %v3754 = vunpack.c.l.b16 %v3661
      %v3755 = vunpack.c.l.b16 %v3662
      %v3756 = vunpack.c.l.b16 %v3663
      %v3757 = vunpack.c.l.b16 %v3664
      %v3758 = vunpack.c.l.b16 %v3665
      %v3759 = vunpack.c.l.b16 %v3666
      %v3760 = vunpack.c.l.b16 %v3667
      %v3761 = vunpack.c.l.b16 %v3668
      %v3762 = vunpack.c.l.b16 %v3669
      %v3763 = vpack.c.b16 %v3748, %v3747
      %v3764 = vpack.c.b16 %v3750, %v3749
      %v3765 = vpack.c.b16 %v3752, %v3751
      %v3766 = vpack.c.b16 %v3754, %v3753
      %v3767 = vpack.c.b16 %v3756, %v3755
      %v3768 = vpack.c.b16 %v3758, %v3757
      %v3769 = vpack.c.b16 %v3760, %v3759
      %v3770 = vpack.c.b16 %v3762, %v3761
      %3779 = vmatpush.bf16.msra.mxu0 %v3770
      %3780 = vmatpush.bf16.msra.mxu0 %v3769
      %3781 = vmatpush.bf16.msra.mxu0 %v3768
      %3782 = vmatpush.bf16.msra.mxu0 %v3767
      %3783 = vmatpush.bf16.msra.mxu0 %v3766
      %3784 = vmatpush.bf16.msra.mxu0 %v3765
      %3785 = vmatpush.bf16.msra.mxu0 %v3764
      %3786 = vmatpush.bf16.msra.mxu0 %v3763
      %3787 = vmatmul.bf16.gmra.mxu0 %v3689
      %v3788 = vpop.f32.mrf.mxu0
      %v3789 = vadd.f32 0.0, %v3788
      %v3790 = vpop.f32.mrf.mxu0
      %v3791 = vadd.f32 0.0, %v3790
      %3792 = vmatmul.bf16.gmra.mxu0 %v3698
      %v3793 = vpop.f32.mrf.mxu0
      %v3794 = vadd.f32 0.0, %v3793
      %v3795 = vpop.f32.mrf.mxu0
      %v3796 = vadd.f32 0.0, %v3795
      %3797 = vmatmul.bf16.gmra.mxu0 %v3707
      %v3798 = vpop.f32.mrf.mxu0
      %v3799 = vadd.f32 0.0, %v3798
      %v3800 = vpop.f32.mrf.mxu0
      %v3801 = vadd.f32 0.0, %v3800
      %3802 = vmatmul.bf16.gmra.mxu0 %v3716
      %v3803 = vpop.f32.mrf.mxu0
      %v3804 = vadd.f32 0.0, %v3803
      %v3805 = vpop.f32.mrf.mxu0
      %v3806 = vadd.f32 0.0, %v3805
      %3807 = vmatmul.bf16.gmra.mxu0 %v3725
      %v3808 = vpop.f32.mrf.mxu0
      %v3809 = vadd.f32 0.0, %v3808
      %v3810 = vpop.f32.mrf.mxu0
      %v3811 = vadd.f32 0.0, %v3810
      %3812 = vdwg.mxu0
      %v3813 = vadd.f32 %v3642, %v3789
      %v3814 = vadd.f32 %v3643, %v3791
      %v3815 = vadd.f32 %v3644, %v3794
      %v3816 = vadd.f32 %v3645, %v3796
      %v3817 = vadd.f32 %v3646, %v3799
      %v3818 = vadd.f32 %v3647, %v3801
      %v3819 = vadd.f32 %v3648, %v3804
      %v3820 = vadd.f32 %v3649, %v3806
      %v3821 = vadd.f32 %v3650, %v3809
      %v3822 = vadd.f32 %v3651, %v3811
      %v3823 = vld [vmem:[#allocation2 + $0x8] sm:$0x8]
      %s3824 = scalar_lea.vmem %s3, 512
      %v3825 = vld [vmem:[%s3824] sm:$0xf]
      %v3826 = vld [vmem:[%s3824 + $0x4] sm:$0xf]
      %v3827 = vld [vmem:[%s3824 + $0x8] sm:$0xf]
      %v3828 = vld [vmem:[%s3824 + $0xc] sm:$0xf]
      %v3829 = vld [vmem:[%s3824 + $0x10] sm:$0xf]
      %v3830 = vld [vmem:[%s3824 + $0x14] sm:$0xf]
      %v3831 = vld [vmem:[%s3824 + $0x18] sm:$0xf]
      %v3832 = vld [vmem:[%s3824 + $0x1c] sm:$0xf]
      %v3833 = vld [vmem:[%s3824 + $0x20] sm:$0xf]
      %v3834 = vld [vmem:[%s3824 + $0x24] sm:$0xf]
      %v3835 = vld [vmem:[%s3824 + $0x28] sm:$0xf]
      %v3836 = vld [vmem:[%s3824 + $0x2c] sm:$0xf]
      %v3837 = vld [vmem:[%s3824 + $0x30] sm:$0xf]
      %v3838 = vld [vmem:[%s3824 + $0x34] sm:$0xf]
      %v3839 = vld [vmem:[%s3824 + $0x38] sm:$0xf]
      %v3840 = vld [vmem:[%s3824 + $0x3c] sm:$0xf]
      %v3842 = vunpack.c.l.b16 %v3823
      %v3843 = vpack.c.b16 %v3528, %v3842
      %v3844 = vrot.slane %v3843, 3
      %v3845 = vrot.slane %v3539, 3
      %v3846 = vsel %vm2054, %v3844, %v3845
      %v3847 = vrot.slane %v3540, 3
      %v3848 = vsel %vm2054, %v3845, %v3847
      %v3849 = vrot.slane %v3541, 3
      %v3850 = vsel %vm2054, %v3847, %v3849
      %v3851 = vrot.slane %v3542, 3
      %v3852 = vsel %vm2054, %v3849, %v3851
      %v3853 = vrot.slane %v3672, 3
      %v3854 = vsel %vm2054, %v3851, %v3853
      %v3876 = vunpack.c.l.b16 %v3825
      %v3877 = vunpack.c.l.b16 %v3826
      %v3878 = vunpack.c.l.b16 %v3827
      %v3879 = vunpack.c.l.b16 %v3828
      %v3880 = vunpack.c.l.b16 %v3829
      %v3881 = vunpack.c.l.b16 %v3830
      %v3882 = vunpack.c.l.b16 %v3831
      %v3883 = vunpack.c.l.b16 %v3832
      %v3884 = vunpack.c.l.b16 %v3833
      %v3885 = vunpack.c.l.b16 %v3834
      %v3886 = vunpack.c.l.b16 %v3835
      %v3887 = vunpack.c.l.b16 %v3836
      %v3888 = vunpack.c.l.b16 %v3837
      %v3889 = vunpack.c.l.b16 %v3838
      %v3890 = vunpack.c.l.b16 %v3839
      %v3891 = vunpack.c.l.b16 %v3840
      %v3892 = vpack.c.b16 %v3877, %v3876
      %v3893 = vpack.c.b16 %v3879, %v3878
      %v3894 = vpack.c.b16 %v3881, %v3880
      %v3895 = vpack.c.b16 %v3883, %v3882
      %v3896 = vpack.c.b16 %v3885, %v3884
      %v3897 = vpack.c.b16 %v3887, %v3886
      %v3898 = vpack.c.b16 %v3889, %v3888
      %v3899 = vpack.c.b16 %v3891, %v3890
      %3908 = vmatpush.bf16.msra.mxu0 %v3899
      %3909 = vmatpush.bf16.msra.mxu0 %v3898
      %3910 = vmatpush.bf16.msra.mxu0 %v3897
      %3911 = vmatpush.bf16.msra.mxu0 %v3896
      %3912 = vmatpush.bf16.msra.mxu0 %v3895
      %3913 = vmatpush.bf16.msra.mxu0 %v3894
      %3914 = vmatpush.bf16.msra.mxu0 %v3893
      %3915 = vmatpush.bf16.msra.mxu0 %v3892
      %3916 = vmatmul.bf16.gmra.mxu0 %v3846
      %v3917 = vpop.f32.mrf.mxu0
      %v3918 = vadd.f32 0.0, %v3917
      %v3919 = vpop.f32.mrf.mxu0
      %v3920 = vadd.f32 0.0, %v3919
      %3921 = vmatmul.bf16.gmra.mxu0 %v3848
      %v3922 = vpop.f32.mrf.mxu0
      %v3923 = vadd.f32 0.0, %v3922
      %v3924 = vpop.f32.mrf.mxu0
      %v3925 = vadd.f32 0.0, %v3924
      %3926 = vmatmul.bf16.gmra.mxu0 %v3850
      %v3927 = vpop.f32.mrf.mxu0
      %v3928 = vadd.f32 0.0, %v3927
      %v3929 = vpop.f32.mrf.mxu0
      %v3930 = vadd.f32 0.0, %v3929
      %3931 = vmatmul.bf16.gmra.mxu0 %v3852
      %v3932 = vpop.f32.mrf.mxu0
      %v3933 = vadd.f32 0.0, %v3932
      %v3934 = vpop.f32.mrf.mxu0
      %v3935 = vadd.f32 0.0, %v3934
      %3936 = vmatmul.bf16.gmra.mxu0 %v3854
      %v3937 = vpop.f32.mrf.mxu0
      %v3938 = vadd.f32 0.0, %v3937
      %v3939 = vpop.f32.mrf.mxu0
      %v3940 = vadd.f32 0.0, %v3939
      %3941 = vdwg.mxu0
      %v3942 = vadd.f32 %v3813, %v3918
      %v3943 = vadd.f32 %v3814, %v3920
      %v3944 = vadd.f32 %v3815, %v3923
      %v3945 = vadd.f32 %v3816, %v3925
      %v3946 = vadd.f32 %v3817, %v3928
      %v3947 = vadd.f32 %v3818, %v3930
      %v3948 = vadd.f32 %v3819, %v3933
      %v3949 = vadd.f32 %v3820, %v3935
      %v3950 = vadd.f32 %v3821, %v3938
      %v3951 = vadd.f32 %v3822, %v3940
      %v3952 = vld [vmem:[%s4] sm:$0x1]
      %v3954 = vperm.slane %v3952, 0
      %v3956 = vadd.f32 %v3942, %v3954
      %v3957 = vadd.f32 %v3943, %v3954
      %v3958 = vadd.f32 %v3944, %v3954
      %v3959 = vadd.f32 %v3945, %v3954
      %v3960 = vadd.f32 %v3946, %v3954
      %v3961 = vadd.f32 %v3947, %v3954
      %v3962 = vadd.f32 %v3948, %v3954
      %v3963 = vadd.f32 %v3949, %v3954
      %v3964 = vadd.f32 %v3950, %v3954
      %v3965 = vadd.f32 %v3951, %v3954
      %v3966 = vmax.f32 %v3956, 0.0
      %v3967 = vmax.f32 %v3957, 0.0
      %v3968 = vmax.f32 %v3958, 0.0
      %v3969 = vmax.f32 %v3959, 0.0
      %v3970 = vmax.f32 %v3960, 0.0
      %v3971 = vmax.f32 %v3961, 0.0
      %v3972 = vmax.f32 %v3962, 0.0
      %v3973 = vmax.f32 %v3963, 0.0
      %v3974 = vmax.f32 %v3964, 0.0
      %v3975 = vmax.f32 %v3965, 0.0
      %v3976 = vpack.c.bf16 %v3967, %v3966
      %v3977 = vpack.c.bf16 %v3969, %v3968
      %v3978 = vpack.c.bf16 %v3971, %v3970
      %v3979 = vpack.c.bf16 %v3973, %v3972
      %v3980 = vpack.c.bf16 %v3975, %v3974
      %v3981 = vld [vmem:[%s7] sm:$0xf]
      %v3982 = vld [vmem:[%s7 + $0x4] sm:$0xf]
      %v3983 = vld [vmem:[%s7 + $0x8] sm:$0xf]
      %v3984 = vld [vmem:[%s7 + $0xc] sm:$0xf]
      %v3985 = vld [vmem:[%s7 + $0x10] sm:$0xf]
      %v3986 = vld [vmem:[%s7 + $0x14] sm:$0xf]
      %v3987 = vld [vmem:[%s7 + $0x18] sm:$0xf]
      %v3988 = vld [vmem:[%s7 + $0x1c] sm:$0xf]
      %v3989 = vld [vmem:[%s7 + $0x20] sm:$0xf]
      %v3990 = vld [vmem:[%s7 + $0x24] sm:$0xf]
      %v3991 = vld [vmem:[%s7 + $0x28] sm:$0xf]
      %v3992 = vld [vmem:[%s7 + $0x2c] sm:$0xf]
      %v3993 = vld [vmem:[%s7 + $0x30] sm:$0xf]
      %v3994 = vld [vmem:[%s7 + $0x34] sm:$0xf]
      %v3995 = vld [vmem:[%s7 + $0x38] sm:$0xf]
      %v3996 = vld [vmem:[%s7 + $0x3c] sm:$0xf]
      %v4013 = vunpack.c.l.b16 %v3981
      %v4014 = vunpack.c.l.b16 %v3982
      %v4015 = vunpack.c.l.b16 %v3983
      %v4016 = vunpack.c.l.b16 %v3984
      %v4017 = vunpack.c.l.b16 %v3985
      %v4018 = vunpack.c.l.b16 %v3986
      %v4019 = vunpack.c.l.b16 %v3987
      %v4020 = vunpack.c.l.b16 %v3988
      %v4021 = vunpack.c.l.b16 %v3989
      %v4022 = vunpack.c.l.b16 %v3990
      %v4023 = vunpack.c.l.b16 %v3991
      %v4024 = vunpack.c.l.b16 %v3992
      %v4025 = vunpack.c.l.b16 %v3993
      %v4026 = vunpack.c.l.b16 %v3994
      %v4027 = vunpack.c.l.b16 %v3995
      %v4028 = vunpack.c.l.b16 %v3996
      %v4029 = vpack.c.b16 %v4014, %v4013
      %v4030 = vpack.c.b16 %v4016, %v4015
      %v4031 = vpack.c.b16 %v4018, %v4017
      %v4032 = vpack.c.b16 %v4020, %v4019
      %v4033 = vpack.c.b16 %v4022, %v4021
      %v4034 = vpack.c.b16 %v4024, %v4023
      %v4035 = vpack.c.b16 %v4026, %v4025
      %v4036 = vpack.c.b16 %v4028, %v4027
      %4045 = vmatpush.bf16.msra.mxu0 %v4036
      %4046 = vmatpush.bf16.msra.mxu0 %v4035
      %4047 = vmatpush.bf16.msra.mxu0 %v4034
      %4048 = vmatpush.bf16.msra.mxu0 %v4033
      %4049 = vmatpush.bf16.msra.mxu0 %v4032
      %4050 = vmatpush.bf16.msra.mxu0 %v4031
      %4051 = vmatpush.bf16.msra.mxu0 %v4030
      %4052 = vmatpush.bf16.msra.mxu0 %v4029
      %4053 = vmatmul.bf16.gmra.mxu0 %v3976
      %v4054 = vpop.f32.mrf.mxu0
      %v4055 = vadd.f32 0.0, %v4054
      %v4056 = vpop.f32.mrf.mxu0
      %v4057 = vadd.f32 0.0, %v4056
      %4058 = vmatmul.bf16.gmra.mxu0 %v3977
      %v4059 = vpop.f32.mrf.mxu0
      %v4060 = vadd.f32 0.0, %v4059
      %v4061 = vpop.f32.mrf.mxu0
      %v4062 = vadd.f32 0.0, %v4061
      %4063 = vmatmul.bf16.gmra.mxu0 %v3978
      %v4064 = vpop.f32.mrf.mxu0
      %v4065 = vadd.f32 0.0, %v4064
      %v4066 = vpop.f32.mrf.mxu0
      %v4067 = vadd.f32 0.0, %v4066
      %4068 = vmatmul.bf16.gmra.mxu0 %v3979
      %v4069 = vpop.f32.mrf.mxu0
      %v4070 = vadd.f32 0.0, %v4069
      %v4071 = vpop.f32.mrf.mxu0
      %v4072 = vadd.f32 0.0, %v4071
      %4073 = vmatmul.bf16.gmra.mxu0 %v3980
      %v4074 = vpop.f32.mrf.mxu0
      %v4075 = vadd.f32 0.0, %v4074
      %v4076 = vpop.f32.mrf.mxu0
      %v4077 = vadd.f32 0.0, %v4076
      %4078 = vdwg.mxu0
      %v4079 = vadd.f32 %v2434, %v4055
      %v4080 = vadd.f32 %v2436, %v4057
      %v4081 = vadd.f32 %v2439, %v4060
      %v4082 = vadd.f32 %v2441, %v4062
      %v4083 = vadd.f32 %v2444, %v4065
      %v4084 = vadd.f32 %v2446, %v4067
      %v4085 = vadd.f32 %v2449, %v4070
      %v4086 = vadd.f32 %v2451, %v4072
      %v4087 = vadd.f32 %v2454, %v4075
      %v4088 = vadd.f32 %v2456, %v4077
      %v4089 = vld [vmem:[%s8] sm:$0x1]
      %v4091 = vperm.slane %v4089, 0
      %v4093 = vadd.f32 %v4079, %v4091
      %v4094 = vadd.f32 %v4080, %v4091
      %v4095 = vadd.f32 %v4081, %v4091
      %v4096 = vadd.f32 %v4082, %v4091
      %v4097 = vadd.f32 %v4083, %v4091
      %v4098 = vadd.f32 %v4084, %v4091
      %v4099 = vadd.f32 %v4085, %v4091
      %v4100 = vadd.f32 %v4086, %v4091
      %v4101 = vadd.f32 %v4087, %v4091
      %v4102 = vadd.f32 %v4088, %v4091
      %v4103 = vmax.f32 %v4093, 0.0
      %v4104 = vmax.f32 %v4094, 0.0
      %v4105 = vmax.f32 %v4095, 0.0
      %v4106 = vmax.f32 %v4096, 0.0
      %v4107 = vmax.f32 %v4097, 0.0
      %v4108 = vmax.f32 %v4098, 0.0
      %v4109 = vmax.f32 %v4099, 0.0
      %v4110 = vmax.f32 %v4100, 0.0
      %v4111 = vmax.f32 %v4101, 0.0
      %v4112 = vmax.f32 %v4102, 0.0
      %v4113 = vpack.c.bf16 %v4104, %v4103
      %v4114 = vpack.c.bf16 %v4106, %v4105
      %v4115 = vpack.c.bf16 %v4108, %v4107
      %v4116 = vpack.c.bf16 %v4110, %v4109
      %v4117 = vpack.c.bf16 %v4112, %v4111
      %v4118 = vld [vmem:[%s9] sm:$0xf]
      %v4119 = vld [vmem:[%s9 + $0x4] sm:$0xf]
      %v4120 = vld [vmem:[%s9 + $0x8] sm:$0xf]
      %v4121 = vld [vmem:[%s9 + $0xc] sm:$0xf]
      %v4122 = vld [vmem:[%s9 + $0x10] sm:$0xf]
      %v4123 = vld [vmem:[%s9 + $0x14] sm:$0xf]
      %v4124 = vld [vmem:[%s9 + $0x18] sm:$0xf]
      %v4125 = vld [vmem:[%s9 + $0x1c] sm:$0xf]
      %v4126 = vld [vmem:[%s9 + $0x20] sm:$0xf]
      %v4127 = vld [vmem:[%s9 + $0x24] sm:$0xf]
      %v4128 = vld [vmem:[%s9 + $0x28] sm:$0xf]
      %v4129 = vld [vmem:[%s9 + $0x2c] sm:$0xf]
      %v4130 = vld [vmem:[%s9 + $0x30] sm:$0xf]
      %v4131 = vld [vmem:[%s9 + $0x34] sm:$0xf]
      %v4132 = vld [vmem:[%s9 + $0x38] sm:$0xf]
      %v4133 = vld [vmem:[%s9 + $0x3c] sm:$0xf]
      %v4134 = vld [vmem:[%s10] sm:$0x1]
      %v4136 = vperm.slane %v4134, 0
      %v4154 = vunpack.c.l.b16 %v4118
      %v4155 = vunpack.c.l.b16 %v4119
      %v4156 = vunpack.c.l.b16 %v4120
      %v4157 = vunpack.c.l.b16 %v4121
      %v4158 = vunpack.c.l.b16 %v4122
      %v4159 = vunpack.c.l.b16 %v4123
      %v4160 = vunpack.c.l.b16 %v4124
      %v4161 = vunpack.c.l.b16 %v4125
      %v4162 = vunpack.c.l.b16 %v4126
      %v4163 = vunpack.c.l.b16 %v4127
      %v4164 = vunpack.c.l.b16 %v4128
      %v4165 = vunpack.c.l.b16 %v4129
      %v4166 = vunpack.c.l.b16 %v4130
      %v4167 = vunpack.c.l.b16 %v4131
      %v4168 = vunpack.c.l.b16 %v4132
      %v4169 = vunpack.c.l.b16 %v4133
      %v4170 = vpack.c.b16 %v4155, %v4154
      %v4171 = vpack.c.b16 %v4157, %v4156
      %v4172 = vpack.c.b16 %v4159, %v4158
      %v4173 = vpack.c.b16 %v4161, %v4160
      %v4174 = vpack.c.b16 %v4163, %v4162
      %v4175 = vpack.c.b16 %v4165, %v4164
      %v4176 = vpack.c.b16 %v4167, %v4166
      %v4177 = vpack.c.b16 %v4169, %v4168
      %4186 = vmatpush.bf16.msra.mxu0 %v4177
      %4187 = vmatpush.bf16.msra.mxu0 %v4176
      %4188 = vmatpush.bf16.msra.mxu0 %v4175
      %4189 = vmatpush.bf16.msra.mxu0 %v4174
      %4190 = vmatpush.bf16.msra.mxu0 %v4173
      %4191 = vmatpush.bf16.msra.mxu0 %v4172
      %4192 = vmatpush.bf16.msra.mxu0 %v4171
      %4193 = vmatpush.bf16.msra.mxu0 %v4170
      %4194 = vmatmul.bf16.gmra.mxu0 %v4113
      %v4195 = vpop.f32.mrf.mxu0
      %v4196 = vadd.f32 %v4136, %v4195
      %v4197 = vpop.f32.mrf.mxu0
      %v4198 = vadd.f32 %v4136, %v4197
      %4199 = vmatmul.bf16.gmra.mxu0 %v4114
      %v4200 = vpop.f32.mrf.mxu0
      %v4201 = vadd.f32 %v4136, %v4200
      %v4202 = vpop.f32.mrf.mxu0
      %v4203 = vadd.f32 %v4136, %v4202
      %4204 = vmatmul.bf16.gmra.mxu0 %v4115
      %v4205 = vpop.f32.mrf.mxu0
      %v4206 = vadd.f32 %v4136, %v4205
      %v4207 = vpop.f32.mrf.mxu0
      %v4208 = vadd.f32 %v4136, %v4207
      %4209 = vmatmul.bf16.gmra.mxu0 %v4116
      %v4210 = vpop.f32.mrf.mxu0
      %v4211 = vadd.f32 %v4136, %v4210
      %v4212 = vpop.f32.mrf.mxu0
      %v4213 = vadd.f32 %v4136, %v4212
      %4214 = vmatmul.bf16.gmra.mxu0 %v4117
      %v4215 = vpop.f32.mrf.mxu0
      %v4216 = vadd.f32 %v4136, %v4215
      %v4217 = vpop.f32.mrf.mxu0
      %v4218 = vadd.f32 %v4136, %v4217
      %4219 = vdwg.mxu0
      %v4220 = vmax.f32 %v4196, 0.0
      %v4221 = vmax.f32 %v4198, 0.0
      %v4222 = vmax.f32 %v4201, 0.0
      %v4223 = vmax.f32 %v4203, 0.0
      %v4224 = vmax.f32 %v4206, 0.0
      %v4225 = vmax.f32 %v4208, 0.0
      %v4226 = vmax.f32 %v4211, 0.0
      %v4227 = vmax.f32 %v4213, 0.0
      %v4228 = vmax.f32 %v4216, 0.0
      %v4229 = vmax.f32 %v4218, 0.0
      %v4230 = vld [vmem:[%s381 + $0x4] sm:$0xe]
      %v4231 = vld [vmem:[%s381 + $0x8] sm:$0xf]
      %v4232 = vld [vmem:[%s381 + $0xc] sm:$0xf]
      %v4233 = vld [vmem:[%s381 + $0x10] sm:$0xf]
      %v4234 = vld [vmem:[%s381 + $0x14] sm:$0xf]
      %v4235 = vld [vmem:[%s381 + $0x18] sm:$0xf]
      %v4236 = vld [vmem:[%s381 + $0x1c] sm:$0xf]
      %v4237 = vld [vmem:[%s381 + $0x20] sm:$0xf]
      %v4238 = vld [vmem:[%s381 + $0x24] sm:$0xf]
      %v4239 = vld [vmem:[%s381 + $0x28] sm:$0xf]
      %v4240 = vld [vmem:[%s381 + $0x2c] sm:$0x3]
      %v4241 = vunpack.c.l.bf16 %v4230
      %v4242 = vunpack.c.l.bf16 %v4231
      %v4243 = vunpack.c.l.bf16 %v4232
      %v4244 = vunpack.c.l.bf16 %v4233
      %v4245 = vunpack.c.l.bf16 %v4234
      %v4246 = vunpack.c.l.bf16 %v4235
      %v4247 = vunpack.c.l.bf16 %v4236
      %v4248 = vunpack.c.l.bf16 %v4237
      %v4249 = vunpack.c.l.bf16 %v4238
      %v4250 = vunpack.c.l.bf16 %v4239
      %v4251 = vunpack.c.l.bf16 %v4240
      %vm4263 = vcmask 1044480
      %v4264 = vrot.slane %v4241, 3
      %v4265 = vrot.slane %v4242, 3
      %v4266 = vsel %vm4263, %v4264, %v4265
      %v4267 = vrot.slane %v4243, 3
      %v4268 = vsel %vm4263, %v4265, %v4267
      %v4269 = vrot.slane %v4244, 3
      %v4270 = vsel %vm4263, %v4267, %v4269
      %v4271 = vrot.slane %v4245, 3
      %v4272 = vsel %vm4263, %v4269, %v4271
      %v4273 = vrot.slane %v4246, 3
      %v4274 = vsel %vm4263, %v4271, %v4273
      %v4275 = vrot.slane %v4247, 3
      %v4276 = vsel %vm4263, %v4273, %v4275
      %v4277 = vrot.slane %v4248, 3
      %v4278 = vsel %vm4263, %v4275, %v4277
      %v4279 = vrot.slane %v4249, 3
      %v4280 = vsel %vm4263, %v4277, %v4279
      %v4281 = vrot.slane %v4250, 3
      %v4282 = vsel %vm4263, %v4279, %v4281
      %v4283 = vrot.slane %v4251, 3
      %v4284 = vsel %vm4263, %v4281, %v4283
      %v4295 = vadd.f32 %v4220, %v4266
      %v4296 = vadd.f32 %v4221, %v4268
      %v4297 = vadd.f32 %v4222, %v4270
      %v4298 = vadd.f32 %v4223, %v4272
      %v4299 = vadd.f32 %v4224, %v4274
      %v4300 = vadd.f32 %v4225, %v4276
      %v4301 = vadd.f32 %v4226, %v4278
      %v4302 = vadd.f32 %v4227, %v4280
      %v4303 = vadd.f32 %v4228, %v4282
      %v4304 = vadd.f32 %v4229, %v4284
      %4305 = vst [vmem:[%s386] sm:$0xf] 0
      %v4306 = vld [vmem:[%s386 + $0x4] sm:$0x3]
      %v4307 = vsel %vm799, 0, %v4306
      %4308 = vst [vmem:[%s386 + $0x4] sm:$0x3] %v4307
      %v4309 = vld [vmem:[%s386 + $0x2c] sm:$0xe]
      %v4310 = vsel %vm805, 0, %v4309
      %4311 = vst [vmem:[%s386 + $0x2c] sm:$0xe] %v4310
      %4312 = vst [vmem:[%s386 + $0x30] sm:$0xf] 0
      %v4313 = vmul.f32 %v4295, %v759
      %v4314 = vmul.f32 %v4296, %v760
      %v4315 = vmul.f32 %v4297, %v761
      %v4316 = vmul.f32 %v4298, %v762
      %v4317 = vmul.f32 %v4299, %v763
      %v4318 = vmul.f32 %v4300, %v764
      %v4319 = vmul.f32 %v4301, %v765
      %v4320 = vmul.f32 %v4302, %v766
      %v4321 = vmul.f32 %v4303, %v767
      %v4322 = vmul.f32 %v4304, %v768
      %v4323 = vpack.c.bf16 %v4313, %v4313
      %v4324 = vpack.c.bf16 %v4314, %v4314
      %v4325 = vpack.c.bf16 %v4315, %v4315
      %v4326 = vpack.c.bf16 %v4316, %v4316
      %v4327 = vpack.c.bf16 %v4317, %v4317
      %v4328 = vpack.c.bf16 %v4318, %v4318
      %v4329 = vpack.c.bf16 %v4319, %v4319
      %v4330 = vpack.c.bf16 %v4320, %v4320
      %v4331 = vpack.c.bf16 %v4321, %v4321
      %v4332 = vpack.c.bf16 %v4322, %v4322
      %v4334 = vshrl.u32 %v4323, 16
      %v4336 = vrot.slane %v4334, 6
      %v4337 = vshll.u32 %v4323, 16
      %v4339 = vrot.slane %v4337, 7
      %v4340 = vor.u32 %v4336, %v4339
      %v4341 = vrot.slane %v4340, 4
      %v4343 = vshrl.u32 %v4324, 16
      %v4345 = vrot.slane %v4343, 6
      %v4346 = vshll.u32 %v4324, 16
      %v4348 = vrot.slane %v4346, 7
      %v4349 = vor.u32 %v4345, %v4348
      %v4350 = vsel %vm2479, %v4341, %v4349
      %v4351 = vrot.slane %v4349, 4
      %v4353 = vshrl.u32 %v4325, 16
      %v4355 = vrot.slane %v4353, 6
      %v4356 = vshll.u32 %v4325, 16
      %v4358 = vrot.slane %v4356, 7
      %v4359 = vor.u32 %v4355, %v4358
      %v4360 = vsel %vm2479, %v4351, %v4359
      %v4361 = vrot.slane %v4359, 4
      %v4363 = vshrl.u32 %v4326, 16
      %v4365 = vrot.slane %v4363, 6
      %v4366 = vshll.u32 %v4326, 16
      %v4368 = vrot.slane %v4366, 7
      %v4369 = vor.u32 %v4365, %v4368
      %v4370 = vsel %vm2479, %v4361, %v4369
      %v4371 = vrot.slane %v4369, 4
      %v4373 = vshrl.u32 %v4327, 16
      %v4375 = vrot.slane %v4373, 6
      %v4376 = vshll.u32 %v4327, 16
      %v4378 = vrot.slane %v4376, 7
      %v4379 = vor.u32 %v4375, %v4378
      %v4380 = vsel %vm2479, %v4371, %v4379
      %v4381 = vrot.slane %v4379, 4
      %v4383 = vshrl.u32 %v4328, 16
      %v4385 = vrot.slane %v4383, 6
      %v4386 = vshll.u32 %v4328, 16
      %v4388 = vrot.slane %v4386, 7
      %v4389 = vor.u32 %v4385, %v4388
      %v4390 = vsel %vm2479, %v4381, %v4389
      %v4391 = vrot.slane %v4389, 4
      %v4393 = vshrl.u32 %v4329, 16
      %v4395 = vrot.slane %v4393, 6
      %v4396 = vshll.u32 %v4329, 16
      %v4398 = vrot.slane %v4396, 7
      %v4399 = vor.u32 %v4395, %v4398
      %v4400 = vsel %vm2479, %v4391, %v4399
      %v4401 = vrot.slane %v4399, 4
      %v4403 = vshrl.u32 %v4330, 16
      %v4405 = vrot.slane %v4403, 6
      %v4406 = vshll.u32 %v4330, 16
      %v4408 = vrot.slane %v4406, 7
      %v4409 = vor.u32 %v4405, %v4408
      %v4410 = vsel %vm2479, %v4401, %v4409
      %v4411 = vrot.slane %v4409, 4
      %v4413 = vshrl.u32 %v4331, 16
      %v4415 = vrot.slane %v4413, 6
      %v4416 = vshll.u32 %v4331, 16
      %v4418 = vrot.slane %v4416, 7
      %v4419 = vor.u32 %v4415, %v4418
      %v4420 = vsel %vm2479, %v4411, %v4419
      %v4421 = vrot.slane %v4419, 4
      %v4423 = vshrl.u32 %v4332, 16
      %v4425 = vrot.slane %v4423, 6
      %v4426 = vshll.u32 %v4332, 16
      %v4428 = vrot.slane %v4426, 7
      %v4429 = vor.u32 %v4425, %v4428
      %v4430 = vsel %vm2479, %v4421, %v4429
      %v4431 = vrot.slane %v4429, 4
      %v4443 = vld [vmem:[%s386 + $0x4] sm:$0xe]
      %v4444 = vsel %vm805, %v4340, %v4443
      %4445 = vst [vmem:[%s386 + $0x4] sm:$0xe] %v4444
      %4446 = vst [vmem:[%s386 + $0x8] sm:$0xf] %v4350
      %4447 = vst [vmem:[%s386 + $0xc] sm:$0xf] %v4360
      %4448 = vst [vmem:[%s386 + $0x10] sm:$0xf] %v4370
      %4449 = vst [vmem:[%s386 + $0x14] sm:$0xf] %v4380
      %4450 = vst [vmem:[%s386 + $0x18] sm:$0xf] %v4390
      %4451 = vst [vmem:[%s386 + $0x1c] sm:$0xf] %v4400
      %4452 = vst [vmem:[%s386 + $0x20] sm:$0xf] %v4410
      %4453 = vst [vmem:[%s386 + $0x24] sm:$0xf] %v4420
      %4454 = vst [vmem:[%s386 + $0x28] sm:$0xf] %v4430
      %v4455 = vld [vmem:[%s386 + $0x2c] sm:$0x3]
      %v4456 = vsel %vm799, %v4431, %v4455
      %4457 = vst [vmem:[%s386 + $0x2c] sm:$0x3] %v4456
      %p4458 = scmp.lt.s32.totalorder %s22, 1
      %s4459 = scalar_select %p4458, %s22, 1
      %s4460 = smul.addr %s4459, 13
      %s4461 = smul.addr %s4460, 4
      %s4462 = scalar_lea.vmem %s11, %s4461
      // Predicated region
      $region65: #{hg_stage_forward.3} parent=63 // pred_check
        %p4463 = pneg %p276
      $region66: #{hg_stage_forward.3} parent=63 // pred_check_branch
        %4465 = sbr.rel (%p4463) target = $region68
      $region67: #{hg_stage_forward.3} parent=63 // pred_region
        _
      $region68: #{hg_stage_forward.3} parent=63 // pred_fallthru
        _
    $region64: #{hg_stage_forward.3} parent=5 // pred_fallthru
      _
    %p4466 = scmp.le.s32.totalorder 2, %s17
    // Predicated region
    $region69: #{hg_stage_forward.3} parent=5 // pred_check
      %p4467 = pneg %p4466
    $region70: #{hg_stage_forward.3} parent=5 // pred_check_branch
      %4469 = sbr.rel (%p4467) target = $region72
    $region71: #{hg_stage_forward.3} parent=5 // pred_region
      %s4470 = ssub.s32 %s17, 2
      // Predicated region
      $region73: #{hg_stage_forward.3} parent=71 // pred_check
        %p4471 = pneg %p282
      $region74: #{hg_stage_forward.3} parent=71 // pred_check_branch
        %4473 = sbr.rel (%p4471) target = $region76
      $region75: #{hg_stage_forward.3} parent=71 // pred_region
        %p4474 = scmp.lt.s32.totalorder %s23, 1
        %s4475 = scalar_select %p4474, %s23, 1
        %s4476 = smul.addr %s4475, 13
        %s4477 = smul.addr %s4476, 4
        %s4478 = scalar_lea.vmem %s11, %s4477
      $region76: #{hg_stage_forward.3} parent=71 // pred_fallthru
        _
    $region72: #{hg_stage_forward.3} parent=5 // pred_fallthru
      _
  $region6: #{hg_stage_forward.3} parent=0 // loop_footer
    %s21 = sadd.s32 1, %s17
  $region7: #{hg_stage_forward.3} parent=0 // loop_footer_branch
    %16 = sbr.rel target = $region3
  $region8: #{hg_stage_forward.3} parent=0 // loop_exit
    _

// kernel: hg_stage_forward.2
$region0: #{hg_stage_forward.2}
  #allocation0 [shape = 'u32[]', space=smem, size = 0x4, offset = 0x4, fixed_abs, tag = 'smem constant byte address 0x4 - core index']
  #allocation1 [shape = 'u32[72,128]{1,0:T(1,128)}', space=vmem, size = 0x9000, scoped, tag = 'internal scratch']
  #allocation2 [shape = 'bf16[1,104,128]{2,1,0:T(8,128)(2,1)}', space=vmem, size = 0x6800, scoped, tag = 'scratch operand']
  #allocation3 [shape = 'bf16[1,104,128]{2,1,0:T(8,128)(2,1)}', space=vmem, size = 0x6800, scoped, tag = 'scratch operand']
  %s0 = inlined_call_operand.vmem [shape: f32[2,4,104,128], index: 0, kind: input, shape index: {}]
  %s1 = inlined_call_operand.vmem [shape: f32[9,128], index: 1, kind: input, shape index: {}]
  %s2 = inlined_call_operand.vmem [shape: f32[1,128], index: 2, kind: input, shape index: {}]
  %s3 = inlined_call_operand.vmem [shape: bf16[9,128,128], index: 3, kind: input, shape index: {}]
  %s4 = inlined_call_operand.vmem [shape: f32[1,128], index: 4, kind: input, shape index: {}]
  %s5 = inlined_call_operand.vmem [shape: bf16[9,128,128], index: 5, kind: input, shape index: {}]
  %s6 = inlined_call_operand.vmem [shape: f32[1,128], index: 6, kind: input, shape index: {}]
  %s7 = inlined_call_operand.vmem [shape: bf16[128,128], index: 7, kind: input, shape index: {}]
  %s8 = inlined_call_operand.vmem [shape: bf16[128,128], index: 8, kind: input, shape index: {}]
  %s9 = inlined_call_operand.vmem [shape: bf16[128,128], index: 9, kind: input, shape index: {}]
  %s10 = inlined_call_operand.vmem [shape: f32[1,128], index: 10, kind: input, shape index: {}]
  %s11 = inlined_call_operand.vmem [shape: bf16[128,128], index: 11, kind: input, shape index: {}]
  %s12 = inlined_call_operand.vmem [shape: f32[1,128], index: 12, kind: input, shape index: {}]
  %s13 = inlined_call_operand.vmem [shape: bf16[2,104,128], index: 13, kind: output, shape index: {}]
  %s14 = sld [smem:[#allocation0]]
  $region85: #{hg_stage_forward.2} parent=0
    _
  %s16 = ssub.s32 1, %s14
  %s17 = scalar_select 0, %s16, %s14
  loop: start=0, step=1, limit=4
  $region2: #{hg_stage_forward.2} parent=0 // loop_pre_header
    _
  $region3: #{hg_stage_forward.2} parent=0 // loop_header
    %s19 = sphi 0, %s23
    %p20 = scmp.ge.s32.totalorder %s19, 4
    %s29 = sphi 0, %s31
    %s32 = sphi 0, %s29
    %s33 = sphi 0, %s32
    %s49 = sphi 0, %s33
    %s53 = sphi 0, %s53
    %s55 = sphi 0, %s53
    %s56 = sphi 0, %s55
    %s70 = sphi 0, %s56
    %s74 = sphi 0, %s74
    %s76 = sphi 0, %s74
    %s77 = sphi 0, %s76
    %s91 = sphi 0, %s77
    %s95 = sphi 0, %s95
    %s97 = sphi 0, %s95
    %s98 = sphi 0, %s97
    %s112 = sphi 0, %s98
    %s116 = sphi 0, %s116
    %s118 = sphi 0, %s116
    %s119 = sphi 0, %s118
    %s133 = sphi 0, %s119
    %s137 = sphi 0, %s137
    %s139 = sphi 0, %s137
    %s140 = sphi 0, %s139
    %s154 = sphi 0, %s140
    %s158 = sphi 0, %s158
    %s160 = sphi 0, %s158
    %s161 = sphi 0, %s160
    %s175 = sphi 0, %s161
    %s179 = sphi 0, %s179
    %s181 = sphi 0, %s179
    %s182 = sphi 0, %s181
    %s196 = sphi 0, %s182
    %s200 = sphi 0, %s200
    %s202 = sphi 0, %s200
    %s203 = sphi 0, %s202
    %s217 = sphi 0, %s203
    %s221 = sphi 0, %s221
    %s223 = sphi 0, %s221
    %s224 = sphi 0, %s223
    %s238 = sphi 0, %s224
    %s242 = sphi 0, %s242
    %s244 = sphi 0, %s242
    %s245 = sphi 0, %s244
    %s259 = sphi 0, %s245
    %s263 = sphi 0, %s263
    %s265 = sphi 0, %s263
    %s266 = sphi 0, %s265
    %s280 = sphi 0, %s266
    %s284 = sphi 0, %s284
    %s286 = sphi 0, %s284
    %s287 = sphi 0, %s286
    %s301 = sphi 0, %s287
    %s307 = sphi 0, %s309
    %s310 = sphi 0, %s307
    %s311 = sphi 0, %s310
    %s327 = sphi 0, %s311
  $region4: #{hg_stage_forward.2} parent=0 // loop_header_branch
    %22 = sbr.rel (%p20) target = $region8
  $region5: #{hg_stage_forward.2} parent=0 // loop_body
    %s24 = ssub.s32 %s19, 1
    %s25 = ssub.s32 %s19, 2
    %s26 = sadd.s32 %s19, 1
    %s27 = ssub.s32 %s19, %s26
    %p28 = scmp.eq.s32.totalorder %s27, 0
    %s30 = sadd.s32 %s29, 1
    %s31 = scalar_select %p28, %s29, %s30
    %p34 = pneg %p28
    %p35 = scmp.eq.s32.totalorder %s19, 1
    %p36 = por %p34, %p35
    %p37 = scmp.ne.s32.totalorder %s29, %s32
    %p38 = scmp.eq.s32.totalorder %s19, 0
    %p39 = por %p37, %p38
    %p40 = scmp.ne.s32.totalorder %s29, %s32
    %p41 = scmp.eq.s32.totalorder %s24, 1
    %p42 = por %p40, %p41
    %p43 = scmp.ne.s32.totalorder %s32, %s33
    %p44 = scmp.eq.s32.totalorder %s24, 0
    %p45 = por %p43, %p44
    %p46 = scmp.ne.s32.totalorder %s32, %s33
    %p47 = scmp.eq.s32.totalorder %s25, 1
    %p48 = por %p46, %p47
    %p50 = scmp.ne.s32.totalorder %s33, %s49
    %p51 = scmp.eq.s32.totalorder %s25, 0
    %p52 = por %p50, %p51
    %s54 = sadd.s32 %s53, 1
    %p57 = scmp.eq.s32.totalorder %s19, 1
    %p58 = scmp.ne.s32.totalorder %s53, %s55
    %p59 = scmp.eq.s32.totalorder %s19, 0
    %p60 = por %p58, %p59
    %p61 = scmp.ne.s32.totalorder %s53, %s55
    %p62 = scmp.eq.s32.totalorder %s24, 1
    %p63 = por %p61, %p62
    %p64 = scmp.ne.s32.totalorder %s55, %s56
    %p65 = scmp.eq.s32.totalorder %s24, 0
    %p66 = por %p64, %p65
    %p67 = scmp.ne.s32.totalorder %s55, %s56
    %p68 = scmp.eq.s32.totalorder %s25, 1
    %p69 = por %p67, %p68
    %p71 = scmp.ne.s32.totalorder %s56, %s70
    %p72 = scmp.eq.s32.totalorder %s25, 0
    %p73 = por %p71, %p72
    %s75 = sadd.s32 %s74, 1
    %p78 = scmp.eq.s32.totalorder %s19, 1
    %p79 = scmp.ne.s32.totalorder %s74, %s76
    %p80 = scmp.eq.s32.totalorder %s19, 0
    %p81 = por %p79, %p80
    %p82 = scmp.ne.s32.totalorder %s74, %s76
    %p83 = scmp.eq.s32.totalorder %s24, 1
    %p84 = por %p82, %p83
    %p85 = scmp.ne.s32.totalorder %s76, %s77
    %p86 = scmp.eq.s32.totalorder %s24, 0
    %p87 = por %p85, %p86
    %p88 = scmp.ne.s32.totalorder %s76, %s77
    %p89 = scmp.eq.s32.totalorder %s25, 1
    %p90 = por %p88, %p89
    %p92 = scmp.ne.s32.totalorder %s77, %s91
    %p93 = scmp.eq.s32.totalorder %s25, 0
    %p94 = por %p92, %p93
    %s96 = sadd.s32 %s95, 1
    %p99 = scmp.eq.s32.totalorder %s19, 1
    %p100 = scmp.ne.s32.totalorder %s95, %s97
    %p101 = scmp.eq.s32.totalorder %s19, 0
    %p102 = por %p100, %p101
    %p103 = scmp.ne.s32.totalorder %s95, %s97
    %p104 = scmp.eq.s32.totalorder %s24, 1
    %p105 = por %p103, %p104
    %p106 = scmp.ne.s32.totalorder %s97, %s98
    %p107 = scmp.eq.s32.totalorder %s24, 0
    %p108 = por %p106, %p107
    %p109 = scmp.ne.s32.totalorder %s97, %s98
    %p110 = scmp.eq.s32.totalorder %s25, 1
    %p111 = por %p109, %p110
    %p113 = scmp.ne.s32.totalorder %s98, %s112
    %p114 = scmp.eq.s32.totalorder %s25, 0
    %p115 = por %p113, %p114
    %s117 = sadd.s32 %s116, 1
    %p120 = scmp.eq.s32.totalorder %s19, 1
    %p121 = scmp.ne.s32.totalorder %s116, %s118
    %p122 = scmp.eq.s32.totalorder %s19, 0
    %p123 = por %p121, %p122
    %p124 = scmp.ne.s32.totalorder %s116, %s118
    %p125 = scmp.eq.s32.totalorder %s24, 1
    %p126 = por %p124, %p125
    %p127 = scmp.ne.s32.totalorder %s118, %s119
    %p128 = scmp.eq.s32.totalorder %s24, 0
    %p129 = por %p127, %p128
    %p130 = scmp.ne.s32.totalorder %s118, %s119
    %p131 = scmp.eq.s32.totalorder %s25, 1
    %p132 = por %p130, %p131
    %p134 = scmp.ne.s32.totalorder %s119, %s133
    %p135 = scmp.eq.s32.totalorder %s25, 0
    %p136 = por %p134, %p135
    %s138 = sadd.s32 %s137, 1
    %p141 = scmp.eq.s32.totalorder %s19, 1
    %p142 = scmp.ne.s32.totalorder %s137, %s139
    %p143 = scmp.eq.s32.totalorder %s19, 0
    %p144 = por %p142, %p143
    %p145 = scmp.ne.s32.totalorder %s137, %s139
    %p146 = scmp.eq.s32.totalorder %s24, 1
    %p147 = por %p145, %p146
    %p148 = scmp.ne.s32.totalorder %s139, %s140
    %p149 = scmp.eq.s32.totalorder %s24, 0
    %p150 = por %p148, %p149
    %p151 = scmp.ne.s32.totalorder %s139, %s140
    %p152 = scmp.eq.s32.totalorder %s25, 1
    %p153 = por %p151, %p152
    %p155 = scmp.ne.s32.totalorder %s140, %s154
    %p156 = scmp.eq.s32.totalorder %s25, 0
    %p157 = por %p155, %p156
    %s159 = sadd.s32 %s158, 1
    %p162 = scmp.eq.s32.totalorder %s19, 1
    %p163 = scmp.ne.s32.totalorder %s158, %s160
    %p164 = scmp.eq.s32.totalorder %s19, 0
    %p165 = por %p163, %p164
    %p166 = scmp.ne.s32.totalorder %s158, %s160
    %p167 = scmp.eq.s32.totalorder %s24, 1
    %p168 = por %p166, %p167
    %p169 = scmp.ne.s32.totalorder %s160, %s161
    %p170 = scmp.eq.s32.totalorder %s24, 0
    %p171 = por %p169, %p170
    %p172 = scmp.ne.s32.totalorder %s160, %s161
    %p173 = scmp.eq.s32.totalorder %s25, 1
    %p174 = por %p172, %p173
    %p176 = scmp.ne.s32.totalorder %s161, %s175
    %p177 = scmp.eq.s32.totalorder %s25, 0
    %p178 = por %p176, %p177
    %s180 = sadd.s32 %s179, 1
    %p183 = scmp.eq.s32.totalorder %s19, 1
    %p184 = scmp.ne.s32.totalorder %s179, %s181
    %p185 = scmp.eq.s32.totalorder %s19, 0
    %p186 = por %p184, %p185
    %p187 = scmp.ne.s32.totalorder %s179, %s181
    %p188 = scmp.eq.s32.totalorder %s24, 1
    %p189 = por %p187, %p188
    %p190 = scmp.ne.s32.totalorder %s181, %s182
    %p191 = scmp.eq.s32.totalorder %s24, 0
    %p192 = por %p190, %p191
    %p193 = scmp.ne.s32.totalorder %s181, %s182
    %p194 = scmp.eq.s32.totalorder %s25, 1
    %p195 = por %p193, %p194
    %p197 = scmp.ne.s32.totalorder %s182, %s196
    %p198 = scmp.eq.s32.totalorder %s25, 0
    %p199 = por %p197, %p198
    %s201 = sadd.s32 %s200, 1
    %p204 = scmp.eq.s32.totalorder %s19, 1
    %p205 = scmp.ne.s32.totalorder %s200, %s202
    %p206 = scmp.eq.s32.totalorder %s19, 0
    %p207 = por %p205, %p206
    %p208 = scmp.ne.s32.totalorder %s200, %s202
    %p209 = scmp.eq.s32.totalorder %s24, 1
    %p210 = por %p208, %p209
    %p211 = scmp.ne.s32.totalorder %s202, %s203
    %p212 = scmp.eq.s32.totalorder %s24, 0
    %p213 = por %p211, %p212
    %p214 = scmp.ne.s32.totalorder %s202, %s203
    %p215 = scmp.eq.s32.totalorder %s25, 1
    %p216 = por %p214, %p215
    %p218 = scmp.ne.s32.totalorder %s203, %s217
    %p219 = scmp.eq.s32.totalorder %s25, 0
    %p220 = por %p218, %p219
    %s222 = sadd.s32 %s221, 1
    %p225 = scmp.eq.s32.totalorder %s19, 1
    %p226 = scmp.ne.s32.totalorder %s221, %s223
    %p227 = scmp.eq.s32.totalorder %s19, 0
    %p228 = por %p226, %p227
    %p229 = scmp.ne.s32.totalorder %s221, %s223
    %p230 = scmp.eq.s32.totalorder %s24, 1
    %p231 = por %p229, %p230
    %p232 = scmp.ne.s32.totalorder %s223, %s224
    %p233 = scmp.eq.s32.totalorder %s24, 0
    %p234 = por %p232, %p233
    %p235 = scmp.ne.s32.totalorder %s223, %s224
    %p236 = scmp.eq.s32.totalorder %s25, 1
    %p237 = por %p235, %p236
    %p239 = scmp.ne.s32.totalorder %s224, %s238
    %p240 = scmp.eq.s32.totalorder %s25, 0
    %p241 = por %p239, %p240
    %s243 = sadd.s32 %s242, 1
    %p246 = scmp.eq.s32.totalorder %s19, 1
    %p247 = scmp.ne.s32.totalorder %s242, %s244
    %p248 = scmp.eq.s32.totalorder %s19, 0
    %p249 = por %p247, %p248
    %p250 = scmp.ne.s32.totalorder %s242, %s244
    %p251 = scmp.eq.s32.totalorder %s24, 1
    %p252 = por %p250, %p251
    %p253 = scmp.ne.s32.totalorder %s244, %s245
    %p254 = scmp.eq.s32.totalorder %s24, 0
    %p255 = por %p253, %p254
    %p256 = scmp.ne.s32.totalorder %s244, %s245
    %p257 = scmp.eq.s32.totalorder %s25, 1
    %p258 = por %p256, %p257
    %p260 = scmp.ne.s32.totalorder %s245, %s259
    %p261 = scmp.eq.s32.totalorder %s25, 0
    %p262 = por %p260, %p261
    %s264 = sadd.s32 %s263, 1
    %p267 = scmp.eq.s32.totalorder %s19, 1
    %p268 = scmp.ne.s32.totalorder %s263, %s265
    %p269 = scmp.eq.s32.totalorder %s19, 0
    %p270 = por %p268, %p269
    %p271 = scmp.ne.s32.totalorder %s263, %s265
    %p272 = scmp.eq.s32.totalorder %s24, 1
    %p273 = por %p271, %p272
    %p274 = scmp.ne.s32.totalorder %s265, %s266
    %p275 = scmp.eq.s32.totalorder %s24, 0
    %p276 = por %p274, %p275
    %p277 = scmp.ne.s32.totalorder %s265, %s266
    %p278 = scmp.eq.s32.totalorder %s25, 1
    %p279 = por %p277, %p278
    %p281 = scmp.ne.s32.totalorder %s266, %s280
    %p282 = scmp.eq.s32.totalorder %s25, 0
    %p283 = por %p281, %p282
    %s285 = sadd.s32 %s284, 1
    %p288 = scmp.eq.s32.totalorder %s19, 1
    %p289 = scmp.ne.s32.totalorder %s284, %s286
    %p290 = scmp.eq.s32.totalorder %s19, 0
    %p291 = por %p289, %p290
    %p292 = scmp.ne.s32.totalorder %s284, %s286
    %p293 = scmp.eq.s32.totalorder %s24, 1
    %p294 = por %p292, %p293
    %p295 = scmp.ne.s32.totalorder %s286, %s287
    %p296 = scmp.eq.s32.totalorder %s24, 0
    %p297 = por %p295, %p296
    %p298 = scmp.ne.s32.totalorder %s286, %s287
    %p299 = scmp.eq.s32.totalorder %s25, 1
    %p300 = por %p298, %p299
    %p302 = scmp.ne.s32.totalorder %s287, %s301
    %p303 = scmp.eq.s32.totalorder %s25, 0
    %p304 = por %p302, %p303
    %s305 = ssub.s32 %s19, %s26
    %p306 = scmp.eq.s32.totalorder %s305, 0
    %s308 = sadd.s32 %s307, 1
    %s309 = scalar_select %p306, %s307, %s308
    %p312 = pneg %p306
    %p313 = scmp.eq.s32.totalorder %s19, 1
    %p314 = por %p312, %p313
    %p315 = scmp.ne.s32.totalorder %s307, %s310
    %p316 = scmp.eq.s32.totalorder %s19, 0
    %p317 = por %p315, %p316
    %p318 = scmp.ne.s32.totalorder %s307, %s310
    %p319 = scmp.eq.s32.totalorder %s24, 1
    %p320 = por %p318, %p319
    %p321 = scmp.ne.s32.totalorder %s310, %s311
    %p322 = scmp.eq.s32.totalorder %s24, 0
    %p323 = por %p321, %p322
    %p324 = scmp.ne.s32.totalorder %s310, %s311
    %p325 = scmp.eq.s32.totalorder %s25, 1
    %p326 = por %p324, %p325
    %p328 = scmp.ne.s32.totalorder %s311, %s327
    %p329 = scmp.eq.s32.totalorder %s25, 0
    %p330 = por %p328, %p329
    %p331 = scmp.le.s32.totalorder 1, %s19
    %p332 = scmp.lt.s32.totalorder %s19, 3
    %p333 = pnand %p331, %p332
    %p334 = pneg %p333
    // Predicated region
    $region9: #{hg_stage_forward.2} parent=5 // pred_check
      _
    $region10: #{hg_stage_forward.2} parent=5 // pred_check_branch
      %336 = sbr.rel (%p333) target = $region12
    $region11: #{hg_stage_forward.2} parent=5 // pred_region
      %s337 = ssub.s32 %s19, 1
      // Predicated region
      $region13: #{hg_stage_forward.2} parent=11 // pred_check
        %p338 = pneg %p66
      $region14: #{hg_stage_forward.2} parent=11 // pred_check_branch
        %340 = sbr.rel (%p338) target = $region16
      $region15: #{hg_stage_forward.2} parent=11 // pred_region
        _
      $region16: #{hg_stage_forward.2} parent=11 // pred_fallthru
        _
      // Predicated region
      $region17: #{hg_stage_forward.2} parent=11 // pred_check
        %p341 = pneg %p87
      $region18: #{hg_stage_forward.2} parent=11 // pred_check_branch
        %343 = sbr.rel (%p341) target = $region20
      $region19: #{hg_stage_forward.2} parent=11 // pred_region
        _
      $region20: #{hg_stage_forward.2} parent=11 // pred_fallthru
        _
      // Predicated region
      $region21: #{hg_stage_forward.2} parent=11 // pred_check
        %p344 = pneg %p108
      $region22: #{hg_stage_forward.2} parent=11 // pred_check_branch
        %346 = sbr.rel (%p344) target = $region24
      $region23: #{hg_stage_forward.2} parent=11 // pred_region
        _
      $region24: #{hg_stage_forward.2} parent=11 // pred_fallthru
        _
      // Predicated region
      $region25: #{hg_stage_forward.2} parent=11 // pred_check
        %p347 = pneg %p129
      $region26: #{hg_stage_forward.2} parent=11 // pred_check_branch
        %349 = sbr.rel (%p347) target = $region28
      $region27: #{hg_stage_forward.2} parent=11 // pred_region
        _
      $region28: #{hg_stage_forward.2} parent=11 // pred_fallthru
        _
      // Predicated region
      $region29: #{hg_stage_forward.2} parent=11 // pred_check
        %p350 = pneg %p150
      $region30: #{hg_stage_forward.2} parent=11 // pred_check_branch
        %352 = sbr.rel (%p350) target = $region32
      $region31: #{hg_stage_forward.2} parent=11 // pred_region
        _
      $region32: #{hg_stage_forward.2} parent=11 // pred_fallthru
        _
      // Predicated region
      $region33: #{hg_stage_forward.2} parent=11 // pred_check
        %p353 = pneg %p171
      $region34: #{hg_stage_forward.2} parent=11 // pred_check_branch
        %355 = sbr.rel (%p353) target = $region36
      $region35: #{hg_stage_forward.2} parent=11 // pred_region
        _
      $region36: #{hg_stage_forward.2} parent=11 // pred_fallthru
        _
      // Predicated region
      $region37: #{hg_stage_forward.2} parent=11 // pred_check
        %p356 = pneg %p192
      $region38: #{hg_stage_forward.2} parent=11 // pred_check_branch
        %358 = sbr.rel (%p356) target = $region40
      $region39: #{hg_stage_forward.2} parent=11 // pred_region
        _
      $region40: #{hg_stage_forward.2} parent=11 // pred_fallthru
        _
      // Predicated region
      $region41: #{hg_stage_forward.2} parent=11 // pred_check
        %p359 = pneg %p213
      $region42: #{hg_stage_forward.2} parent=11 // pred_check_branch
        %361 = sbr.rel (%p359) target = $region44
      $region43: #{hg_stage_forward.2} parent=11 // pred_region
        _
      $region44: #{hg_stage_forward.2} parent=11 // pred_fallthru
        _
      // Predicated region
      $region45: #{hg_stage_forward.2} parent=11 // pred_check
        %p362 = pneg %p234
      $region46: #{hg_stage_forward.2} parent=11 // pred_check_branch
        %364 = sbr.rel (%p362) target = $region48
      $region47: #{hg_stage_forward.2} parent=11 // pred_region
        _
      $region48: #{hg_stage_forward.2} parent=11 // pred_fallthru
        _
      // Predicated region
      $region49: #{hg_stage_forward.2} parent=11 // pred_check
        %p365 = pneg %p255
      $region50: #{hg_stage_forward.2} parent=11 // pred_check_branch
        %367 = sbr.rel (%p365) target = $region52
      $region51: #{hg_stage_forward.2} parent=11 // pred_region
        _
      $region52: #{hg_stage_forward.2} parent=11 // pred_fallthru
        _
      // Predicated region
      $region53: #{hg_stage_forward.2} parent=11 // pred_check
        %p368 = pneg %p276
      $region54: #{hg_stage_forward.2} parent=11 // pred_check_branch
        %370 = sbr.rel (%p368) target = $region56
      $region55: #{hg_stage_forward.2} parent=11 // pred_region
        _
      $region56: #{hg_stage_forward.2} parent=11 // pred_fallthru
        _
      // Predicated region
      $region57: #{hg_stage_forward.2} parent=11 // pred_check
        %p371 = pneg %p297
      $region58: #{hg_stage_forward.2} parent=11 // pred_check_branch
        %373 = sbr.rel (%p371) target = $region60
      $region59: #{hg_stage_forward.2} parent=11 // pred_region
        _
      $region60: #{hg_stage_forward.2} parent=11 // pred_fallthru
        _
    $region12: #{hg_stage_forward.2} parent=5 // pred_fallthru
      _
    %p374 = scmp.lt.s32.totalorder %s19, 2
    // Predicated region
    $region61: #{hg_stage_forward.2} parent=5 // pred_check
      %p375 = pneg %p374
    $region62: #{hg_stage_forward.2} parent=5 // pred_check_branch
      %377 = sbr.rel (%p375) target = $region64
    $region63: #{hg_stage_forward.2} parent=5 // pred_region
      // Predicated region
      $region65: #{hg_stage_forward.2} parent=63 // pred_check
        %p378 = pneg %p39
      $region66: #{hg_stage_forward.2} parent=63 // pred_check_branch
        %380 = sbr.rel (%p378) target = $region68
      $region67: #{hg_stage_forward.2} parent=63 // pred_region
        %p381 = scmp.lt.s32.totalorder %s19, 1
        %s382 = scalar_select %p381, %s19, 1
        %s383 = smul.addr %s382, 52
        %s384 = smul.addr %s383, 8
        %s385 = scalar_lea.vmem %s0, %s384
      $region68: #{hg_stage_forward.2} parent=63 // pred_fallthru
        _
    $region64: #{hg_stage_forward.2} parent=5 // pred_fallthru
      _
    %p386 = scmp.le.s32.totalorder 1, %s19
    %p387 = scmp.lt.s32.totalorder %s19, 3
    %p388 = pnand %p386, %p387
    %p389 = pneg %p388
    // Predicated region
    $region69: #{hg_stage_forward.2} parent=5 // pred_check
      _
    $region70: #{hg_stage_forward.2} parent=5 // pred_check_branch
      %391 = sbr.rel (%p388) target = $region72
    $region71: #{hg_stage_forward.2} parent=5 // pred_region
      %s392 = ssub.s32 %s19, 1
      %p393 = scmp.lt.s32.totalorder %s24, 1
      %s394 = scalar_select %p393, %s24, 1
      %s395 = smul.addr %s394, 52
      %s396 = smul.addr %s395, 8
      %s397 = scalar_lea.vmem %s0, %s396
      %p398 = pneg %p45
      %p399 = pneg %p42
      %p400 = pneg %p66
      %p401 = pneg %p63
      %p402 = pneg %p87
      %p403 = pneg %p84
      %p404 = pneg %p108
      %p405 = pneg %p105
      %p406 = pneg %p129
      %p407 = pneg %p126
      %p408 = pneg %p150
      %p409 = pneg %p147
      %p410 = pneg %p171
      %p411 = pneg %p168
      %p412 = pneg %p192
      %p413 = pneg %p189
      %p414 = pneg %p213
      %p415 = pneg %p210
      %p416 = pneg %p234
      %p417 = pneg %p231
      %p418 = pneg %p255
      %p419 = pneg %p252
      %p420 = pneg %p276
      %p421 = pneg %p273
      %p422 = pneg %p297
      %p423 = pneg %p294
      %p424 = pneg %p323
      %p425 = pneg %p320
      %p426 = scmp.lt.s32.totalorder %s24, 1
      %s427 = scalar_select %p426, %s24, 1
      %s428 = smul.addr %s427, 13
      %s429 = smul.addr %s428, 4
      %s430 = scalar_lea.vmem %s13, %s429
      %p431 = scmp.lt.s32.totalorder %s24, 1
      %s432 = scalar_select %p431, %s24, 1
      %s433 = smul.addr %s432, 52
      %s434 = smul.addr %s433, 8
      %s435 = scalar_lea.vmem %s0, %s434
      %p436 = scmp.lt.s32.totalorder %s24, 1
      %s437 = scalar_select %p436, %s24, 1
      %s438 = smul.addr %s437, 13
      %s439 = smul.addr %s438, 4
      %s440 = scalar_lea.vmem %s13, %s439
      %v442 = vlaneseq
      %v443 = vshrl.u32 %v442, 7
      %v444 = vadd.s32 %v443, 8
      %v445 = vadd.s32 %v443, 16
      %v446 = vadd.s32 %v443, 24
      %v447 = vadd.s32 %v443, 32
      %v448 = vadd.s32 %v443, 40
      %v449 = vadd.s32 %v443, 48
      %v450 = vadd.s32 %v443, 56
      %v451 = vadd.s32 %v443, 64
      %v452 = vadd.s32 %v443, 72
      %vm453 = vcmp.lt.s32.totalorder %v443, 0
      %v454 = vsub.s32 0, %v443
      %v455 = vsel %vm453, %v454, %v443
      %v456 = vand.u32 %v455, 65535
      %v457 = vshrl.u32 %v455, 16
      %v459 = vmul.u32 %v456, 52429
      %v460 = vmul.u32 %v456, 52428
      %v461 = vmul.u32 %v457, 52429
      %v462 = vmul.u32 %v457, 52428
      %v463 = vshll.u32 %v460, 16
      %v464 = vshrl.u32 %v460, 16
      %v465 = vshll.u32 %v461, 16
      %v466 = vshrl.u32 %v461, 16
      %vm467 = vc.u32 %v459, %v463
      %v468 = vsel %vm467, 1, 0
      %v469 = vadd.s32 %v459, %v463
      %v470 = vadd.s32 %v462, %v468
      %vm471 = vc.u32 %v469, %v465
      %v472 = vsel %vm471, 1, 0
      %v473 = vadd.s32 %v469, %v465
      %v474 = vadd.s32 %v470, %v472
      %v475 = vadd.s32 %v474, %v464
      %v476 = vadd.s32 %v475, %v466
      %v477 = vshrl.u32 %v476, 3
      %v478 = vmul.u32 %v477, 10
      %v479 = vsub.s32 %v455, %v478
      %v480 = vsub.s32 0, %v479
      %v481 = vsel %vm453, %v480, %v479
      %vm482 = vcmp.lt.s32.totalorder %v444, 0
      %v483 = vsub.s32 0, %v444
      %v484 = vsel %vm482, %v483, %v444
      %v485 = vand.u32 %v484, 65535
      %v486 = vshrl.u32 %v484, 16
      %v488 = vmul.u32 %v485, 52429
      %v489 = vmul.u32 %v485, 52428
      %v490 = vmul.u32 %v486, 52429
      %v491 = vmul.u32 %v486, 52428
      %v492 = vshll.u32 %v489, 16
      %v493 = vshrl.u32 %v489, 16
      %v494 = vshll.u32 %v490, 16
      %v495 = vshrl.u32 %v490, 16
      %vm496 = vc.u32 %v488, %v492
      %v497 = vsel %vm496, 1, 0
      %v498 = vadd.s32 %v488, %v492
      %v499 = vadd.s32 %v491, %v497
      %vm500 = vc.u32 %v498, %v494
      %v501 = vsel %vm500, 1, 0
      %v502 = vadd.s32 %v498, %v494
      %v503 = vadd.s32 %v499, %v501
      %v504 = vadd.s32 %v503, %v493
      %v505 = vadd.s32 %v504, %v495
      %v506 = vshrl.u32 %v505, 3
      %v507 = vmul.u32 %v506, 10
      %v508 = vsub.s32 %v484, %v507
      %v509 = vsub.s32 0, %v508
      %v510 = vsel %vm482, %v509, %v508
      %vm511 = vcmp.lt.s32.totalorder %v445, 0
      %v512 = vsub.s32 0, %v445
      %v513 = vsel %vm511, %v512, %v445
      %v514 = vand.u32 %v513, 65535
      %v515 = vshrl.u32 %v513, 16
      %v517 = vmul.u32 %v514, 52429
      %v518 = vmul.u32 %v514, 52428
      %v519 = vmul.u32 %v515, 52429
      %v520 = vmul.u32 %v515, 52428
      %v521 = vshll.u32 %v518, 16
      %v522 = vshrl.u32 %v518, 16
      %v523 = vshll.u32 %v519, 16
      %v524 = vshrl.u32 %v519, 16
      %vm525 = vc.u32 %v517, %v521
      %v526 = vsel %vm525, 1, 0
      %v527 = vadd.s32 %v517, %v521
      %v528 = vadd.s32 %v520, %v526
      %vm529 = vc.u32 %v527, %v523
      %v530 = vsel %vm529, 1, 0
      %v531 = vadd.s32 %v527, %v523
      %v532 = vadd.s32 %v528, %v530
      %v533 = vadd.s32 %v532, %v522
      %v534 = vadd.s32 %v533, %v524
      %v535 = vshrl.u32 %v534, 3
      %v536 = vmul.u32 %v535, 10
      %v537 = vsub.s32 %v513, %v536
      %v538 = vsub.s32 0, %v537
      %v539 = vsel %vm511, %v538, %v537
      %vm540 = vcmp.lt.s32.totalorder %v446, 0
      %v541 = vsub.s32 0, %v446
      %v542 = vsel %vm540, %v541, %v446
      %v543 = vand.u32 %v542, 65535
      %v544 = vshrl.u32 %v542, 16
      %v546 = vmul.u32 %v543, 52429
      %v547 = vmul.u32 %v543, 52428
      %v548 = vmul.u32 %v544, 52429
      %v549 = vmul.u32 %v544, 52428
      %v550 = vshll.u32 %v547, 16
      %v551 = vshrl.u32 %v547, 16
      %v552 = vshll.u32 %v548, 16
      %v553 = vshrl.u32 %v548, 16
      %vm554 = vc.u32 %v546, %v550
      %v555 = vsel %vm554, 1, 0
      %v556 = vadd.s32 %v546, %v550
      %v557 = vadd.s32 %v549, %v555
      %vm558 = vc.u32 %v556, %v552
      %v559 = vsel %vm558, 1, 0
      %v560 = vadd.s32 %v556, %v552
      %v561 = vadd.s32 %v557, %v559
      %v562 = vadd.s32 %v561, %v551
      %v563 = vadd.s32 %v562, %v553
      %v564 = vshrl.u32 %v563, 3
      %v565 = vmul.u32 %v564, 10
      %v566 = vsub.s32 %v542, %v565
      %v567 = vsub.s32 0, %v566
      %v568 = vsel %vm540, %v567, %v566
      %vm569 = vcmp.lt.s32.totalorder %v447, 0
      %v570 = vsub.s32 0, %v447
      %v571 = vsel %vm569, %v570, %v447
      %v572 = vand.u32 %v571, 65535
      %v573 = vshrl.u32 %v571, 16
      %v575 = vmul.u32 %v572, 52429
      %v576 = vmul.u32 %v572, 52428
      %v577 = vmul.u32 %v573, 52429
      %v578 = vmul.u32 %v573, 52428
      %v579 = vshll.u32 %v576, 16
      %v580 = vshrl.u32 %v576, 16
      %v581 = vshll.u32 %v577, 16
      %v582 = vshrl.u32 %v577, 16
      %vm583 = vc.u32 %v575, %v579
      %v584 = vsel %vm583, 1, 0
      %v585 = vadd.s32 %v575, %v579
      %v586 = vadd.s32 %v578, %v584
      %vm587 = vc.u32 %v585, %v581
      %v588 = vsel %vm587, 1, 0
      %v589 = vadd.s32 %v585, %v581
      %v590 = vadd.s32 %v586, %v588
      %v591 = vadd.s32 %v590, %v580
      %v592 = vadd.s32 %v591, %v582
      %v593 = vshrl.u32 %v592, 3
      %v594 = vmul.u32 %v593, 10
      %v595 = vsub.s32 %v571, %v594
      %v596 = vsub.s32 0, %v595
      %v597 = vsel %vm569, %v596, %v595
      %vm598 = vcmp.lt.s32.totalorder %v448, 0
      %v599 = vsub.s32 0, %v448
      %v600 = vsel %vm598, %v599, %v448
      %v601 = vand.u32 %v600, 65535
      %v602 = vshrl.u32 %v600, 16
      %v604 = vmul.u32 %v601, 52429
      %v605 = vmul.u32 %v601, 52428
      %v606 = vmul.u32 %v602, 52429
      %v607 = vmul.u32 %v602, 52428
      %v608 = vshll.u32 %v605, 16
      %v609 = vshrl.u32 %v605, 16
      %v610 = vshll.u32 %v606, 16
      %v611 = vshrl.u32 %v606, 16
      %vm612 = vc.u32 %v604, %v608
      %v613 = vsel %vm612, 1, 0
      %v614 = vadd.s32 %v604, %v608
      %v615 = vadd.s32 %v607, %v613
      %vm616 = vc.u32 %v614, %v610
      %v617 = vsel %vm616, 1, 0
      %v618 = vadd.s32 %v614, %v610
      %v619 = vadd.s32 %v615, %v617
      %v620 = vadd.s32 %v619, %v609
      %v621 = vadd.s32 %v620, %v611
      %v622 = vshrl.u32 %v621, 3
      %v623 = vmul.u32 %v622, 10
      %v624 = vsub.s32 %v600, %v623
      %v625 = vsub.s32 0, %v624
      %v626 = vsel %vm598, %v625, %v624
      %vm627 = vcmp.lt.s32.totalorder %v449, 0
      %v628 = vsub.s32 0, %v449
      %v629 = vsel %vm627, %v628, %v449
      %v630 = vand.u32 %v629, 65535
      %v631 = vshrl.u32 %v629, 16
      %v633 = vmul.u32 %v630, 52429
      %v634 = vmul.u32 %v630, 52428
      %v635 = vmul.u32 %v631, 52429
      %v636 = vmul.u32 %v631, 52428
      %v637 = vshll.u32 %v634, 16
      %v638 = vshrl.u32 %v634, 16
      %v639 = vshll.u32 %v635, 16
      %v640 = vshrl.u32 %v635, 16
      %vm641 = vc.u32 %v633, %v637
      %v642 = vsel %vm641, 1, 0
      %v643 = vadd.s32 %v633, %v637
      %v644 = vadd.s32 %v636, %v642
      %vm645 = vc.u32 %v643, %v639
      %v646 = vsel %vm645, 1, 0
      %v647 = vadd.s32 %v643, %v639
      %v648 = vadd.s32 %v644, %v646
      %v649 = vadd.s32 %v648, %v638
      %v650 = vadd.s32 %v649, %v640
      %v651 = vshrl.u32 %v650, 3
      %v652 = vmul.u32 %v651, 10
      %v653 = vsub.s32 %v629, %v652
      %v654 = vsub.s32 0, %v653
      %v655 = vsel %vm627, %v654, %v653
      %vm656 = vcmp.lt.s32.totalorder %v450, 0
      %v657 = vsub.s32 0, %v450
      %v658 = vsel %vm656, %v657, %v450
      %v659 = vand.u32 %v658, 65535
      %v660 = vshrl.u32 %v658, 16
      %v662 = vmul.u32 %v659, 52429
      %v663 = vmul.u32 %v659, 52428
      %v664 = vmul.u32 %v660, 52429
      %v665 = vmul.u32 %v660, 52428
      %v666 = vshll.u32 %v663, 16
      %v667 = vshrl.u32 %v663, 16
      %v668 = vshll.u32 %v664, 16
      %v669 = vshrl.u32 %v664, 16
      %vm670 = vc.u32 %v662, %v666
      %v671 = vsel %vm670, 1, 0
      %v672 = vadd.s32 %v662, %v666
      %v673 = vadd.s32 %v665, %v671
      %vm674 = vc.u32 %v672, %v668
      %v675 = vsel %vm674, 1, 0
      %v676 = vadd.s32 %v672, %v668
      %v677 = vadd.s32 %v673, %v675
      %v678 = vadd.s32 %v677, %v667
      %v679 = vadd.s32 %v678, %v669
      %v680 = vshrl.u32 %v679, 3
      %v681 = vmul.u32 %v680, 10
      %v682 = vsub.s32 %v658, %v681
      %v683 = vsub.s32 0, %v682
      %v684 = vsel %vm656, %v683, %v682
      %vm685 = vcmp.lt.s32.totalorder %v451, 0
      %v686 = vsub.s32 0, %v451
      %v687 = vsel %vm685, %v686, %v451
      %v688 = vand.u32 %v687, 65535
      %v689 = vshrl.u32 %v687, 16
      %v691 = vmul.u32 %v688, 52429
      %v692 = vmul.u32 %v688, 52428
      %v693 = vmul.u32 %v689, 52429
      %v694 = vmul.u32 %v689, 52428
      %v695 = vshll.u32 %v692, 16
      %v696 = vshrl.u32 %v692, 16
      %v697 = vshll.u32 %v693, 16
      %v698 = vshrl.u32 %v693, 16
      %vm699 = vc.u32 %v691, %v695
      %v700 = vsel %vm699, 1, 0
      %v701 = vadd.s32 %v691, %v695
      %v702 = vadd.s32 %v694, %v700
      %vm703 = vc.u32 %v701, %v697
      %v704 = vsel %vm703, 1, 0
      %v705 = vadd.s32 %v701, %v697
      %v706 = vadd.s32 %v702, %v704
      %v707 = vadd.s32 %v706, %v696
      %v708 = vadd.s32 %v707, %v698
      %v709 = vshrl.u32 %v708, 3
      %v710 = vmul.u32 %v709, 10
      %v711 = vsub.s32 %v687, %v710
      %v712 = vsub.s32 0, %v711
      %v713 = vsel %vm685, %v712, %v711
      %vm714 = vcmp.lt.s32.totalorder %v452, 0
      %v715 = vsub.s32 0, %v452
      %v716 = vsel %vm714, %v715, %v452
      %v717 = vand.u32 %v716, 65535
      %v718 = vshrl.u32 %v716, 16
      %v720 = vmul.u32 %v717, 52429
      %v721 = vmul.u32 %v717, 52428
      %v722 = vmul.u32 %v718, 52429
      %v723 = vmul.u32 %v718, 52428
      %v724 = vshll.u32 %v721, 16
      %v725 = vshrl.u32 %v721, 16
      %v726 = vshll.u32 %v722, 16
      %v727 = vshrl.u32 %v722, 16
      %vm728 = vc.u32 %v720, %v724
      %v729 = vsel %vm728, 1, 0
      %v730 = vadd.s32 %v720, %v724
      %v731 = vadd.s32 %v723, %v729
      %vm732 = vc.u32 %v730, %v726
      %v733 = vsel %vm732, 1, 0
      %v734 = vadd.s32 %v730, %v726
      %v735 = vadd.s32 %v731, %v733
      %v736 = vadd.s32 %v735, %v725
      %v737 = vadd.s32 %v736, %v727
      %v738 = vshrl.u32 %v737, 3
      %v739 = vmul.u32 %v738, 10
      %v740 = vsub.s32 %v716, %v739
      %v741 = vsub.s32 0, %v740
      %v742 = vsel %vm714, %v741, %v740
      %vm743 = vcmp.ne.s32.totalorder %v481, 0
      %vm744 = vcmp.ne.s32.totalorder %v510, 0
      %vm745 = vcmp.ne.s32.totalorder %v539, 0
      %vm746 = vcmp.ne.s32.totalorder %v568, 0
      %vm747 = vcmp.ne.s32.totalorder %v597, 0
      %vm748 = vcmp.ne.s32.totalorder %v626, 0
      %vm749 = vcmp.ne.s32.totalorder %v655, 0
      %vm750 = vcmp.ne.s32.totalorder %v684, 0
      %vm751 = vcmp.ne.s32.totalorder %v713, 0
      %vm752 = vcmp.ne.s32.totalorder %v742, 0
      %vm753 = vcmp.lt.s32.totalorder %v481, 0
      %vm754 = vcmp.lt.s32.totalorder %v510, 0
      %vm755 = vcmp.lt.s32.totalorder %v539, 0
      %vm756 = vcmp.lt.s32.totalorder %v568, 0
      %vm757 = vcmp.lt.s32.totalorder %v597, 0
      %vm758 = vcmp.lt.s32.totalorder %v626, 0
      %vm759 = vcmp.lt.s32.totalorder %v655, 0
      %vm760 = vcmp.lt.s32.totalorder %v684, 0
      %vm761 = vcmp.lt.s32.totalorder %v713, 0
      %vm762 = vcmp.lt.s32.totalorder %v742, 0
      %vm763 = vmand %vm753, %vm743
      %vm764 = vmand %vm754, %vm744
      %vm765 = vmand %vm755, %vm745
      %vm766 = vmand %vm756, %vm746
      %vm767 = vmand %vm757, %vm747
      %vm768 = vmand %vm758, %vm748
      %vm769 = vmand %vm759, %vm749
      %vm770 = vmand %vm760, %vm750
      %vm771 = vmand %vm761, %vm751
      %vm772 = vmand %vm762, %vm752
      %v773 = vadd.s32 %v481, 10
      %v774 = vadd.s32 %v510, 10
      %v775 = vadd.s32 %v539, 10
      %v776 = vadd.s32 %v568, 10
      %v777 = vadd.s32 %v597, 10
      %v778 = vadd.s32 %v626, 10
      %v779 = vadd.s32 %v655, 10
      %v780 = vadd.s32 %v684, 10
      %v781 = vadd.s32 %v713, 10
      %v782 = vadd.s32 %v742, 10
      %v783 = vsel %vm763, %v773, %v481
      %v784 = vsel %vm764, %v774, %v510
      %v785 = vsel %vm765, %v775, %v539
      %v786 = vsel %vm766, %v776, %v568
      %v787 = vsel %vm767, %v777, %v597
      %v788 = vsel %vm768, %v778, %v626
      %v789 = vsel %vm769, %v779, %v655
      %v790 = vsel %vm770, %v780, %v684
      %v791 = vsel %vm771, %v781, %v713
      %v792 = vsel %vm772, %v782, %v742
      %vm793 = vcmp.lt.s32.totalorder %v783, 8
      %vm794 = vcmp.lt.s32.totalorder %v784, 8
      %vm795 = vcmp.lt.s32.totalorder %v785, 8
      %vm796 = vcmp.lt.s32.totalorder %v786, 8
      %vm797 = vcmp.lt.s32.totalorder %v787, 8
      %vm798 = vcmp.lt.s32.totalorder %v788, 8
      %vm799 = vcmp.lt.s32.totalorder %v789, 8
      %vm800 = vcmp.lt.s32.totalorder %v790, 8
      %vm801 = vcmp.lt.s32.totalorder %v791, 8
      %vm802 = vcmp.lt.s32.totalorder %v792, 8
      %v803 = vsel %vm793, 1, 0
      %v804 = vsel %vm794, 1, 0
      %v805 = vsel %vm795, 1, 0
      %v806 = vsel %vm796, 1, 0
      %v807 = vsel %vm797, 1, 0
      %v808 = vsel %vm798, 1, 0
      %v809 = vsel %vm799, 1, 0
      %v810 = vsel %vm800, 1, 0
      %v811 = vsel %vm801, 1, 0
      %v812 = vsel %vm802, 1, 0
      %v813 = vcvt.s32.f32 %v803
      %v814 = vcvt.s32.f32 %v804
      %v815 = vcvt.s32.f32 %v805
      %v816 = vcvt.s32.f32 %v806
      %v817 = vcvt.s32.f32 %v807
      %v818 = vcvt.s32.f32 %v808
      %v819 = vcvt.s32.f32 %v809
      %v820 = vcvt.s32.f32 %v810
      %v821 = vcvt.s32.f32 %v811
      %v822 = vcvt.s32.f32 %v812
      %v823 = vld [vmem:[%s1] sm:$0xff]
      %v824 = vld [vmem:[%s1 + $0x8] sm:$0x1]
      %v825 = vld [vmem:[%s435] sm:$0xff]
      %v826 = vld [vmem:[%s435 + $0x8] sm:$0xff]
      %v827 = vld [vmem:[%s435 + $0x10] sm:$0xff]
      %v828 = vld [vmem:[%s435 + $0x18] sm:$0xff]
      %v829 = vld [vmem:[%s435 + $0x20] sm:$0xff]
      %v830 = vld [vmem:[%s435 + $0x28] sm:$0xff]
      %v831 = vld [vmem:[%s435 + $0x30] sm:$0xff]
      %v832 = vld [vmem:[%s435 + $0x38] sm:$0xff]
      %v833 = vld [vmem:[%s435 + $0x40] sm:$0xff]
      %v834 = vld [vmem:[%s435 + $0x48] sm:$0xff]
      %v835 = vperm.slane %v823, 0
      %v836 = vmul.f32 %v825, %v835
      %v837 = vmul.f32 %v826, %v835
      %v838 = vmul.f32 %v827, %v835
      %v839 = vmul.f32 %v828, %v835
      %v840 = vmul.f32 %v829, %v835
      %v841 = vmul.f32 %v830, %v835
      %v842 = vmul.f32 %v831, %v835
      %v843 = vmul.f32 %v832, %v835
      %v844 = vmul.f32 %v833, %v835
      %v845 = vmul.f32 %v834, %v835
      %s846 = scalar_lea.vmem %s435, 104
      %v847 = vld [vmem:[%s846] sm:$0xff]
      %v848 = vld [vmem:[%s846 + $0x8] sm:$0xff]
      %v849 = vld [vmem:[%s846 + $0x10] sm:$0xff]
      %v850 = vld [vmem:[%s846 + $0x18] sm:$0xff]
      %v851 = vld [vmem:[%s846 + $0x20] sm:$0xff]
      %v852 = vld [vmem:[%s846 + $0x28] sm:$0xff]
      %v853 = vld [vmem:[%s846 + $0x30] sm:$0xff]
      %v854 = vld [vmem:[%s846 + $0x38] sm:$0xff]
      %v855 = vld [vmem:[%s846 + $0x40] sm:$0xff]
      %v856 = vld [vmem:[%s846 + $0x48] sm:$0xff]
      %v857 = vperm.slane %v823, 1
      %v858 = vmul.f32 %v847, %v857
      %v859 = vmul.f32 %v848, %v857
      %v860 = vmul.f32 %v849, %v857
      %v861 = vmul.f32 %v850, %v857
      %v862 = vmul.f32 %v851, %v857
      %v863 = vmul.f32 %v852, %v857
      %v864 = vmul.f32 %v853, %v857
      %v865 = vmul.f32 %v854, %v857
      %v866 = vmul.f32 %v855, %v857
      %v867 = vmul.f32 %v856, %v857
      %v868 = vadd.f32 %v836, %v858
      %v869 = vadd.f32 %v837, %v859
      %v870 = vadd.f32 %v838, %v860
      %v871 = vadd.f32 %v839, %v861
      %v872 = vadd.f32 %v840, %v862
      %v873 = vadd.f32 %v841, %v863
      %v874 = vadd.f32 %v842, %v864
      %v875 = vadd.f32 %v843, %v865
      %v876 = vadd.f32 %v844, %v866
      %v877 = vadd.f32 %v845, %v867
      %v878 = vld [vmem:[%s435 + $0x1] sm:$0xff]
      %v879 = vld [vmem:[%s435 + $0x9] sm:$0xff]
      %v880 = vld [vmem:[%s435 + $0x11] sm:$0xff]
      %v881 = vld [vmem:[%s435 + $0x19] sm:$0xff]
      %v882 = vld [vmem:[%s435 + $0x21] sm:$0xff]
      %v883 = vld [vmem:[%s435 + $0x29] sm:$0xff]
      %v884 = vld [vmem:[%s435 + $0x31] sm:$0xff]
      %v885 = vld [vmem:[%s435 + $0x39] sm:$0xff]
      %v886 = vld [vmem:[%s435 + $0x41] sm:$0xff]
      %v887 = vld [vmem:[%s435 + $0x49] sm:$0xff]
      %v888 = vperm.slane %v823, 2
      %v889 = vmul.f32 %v878, %v888
      %v890 = vmul.f32 %v879, %v888
      %v891 = vmul.f32 %v880, %v888
      %v892 = vmul.f32 %v881, %v888
      %v893 = vmul.f32 %v882, %v888
      %v894 = vmul.f32 %v883, %v888
      %v895 = vmul.f32 %v884, %v888
      %v896 = vmul.f32 %v885, %v888
      %v897 = vmul.f32 %v886, %v888
      %v898 = vmul.f32 %v887, %v888
      %v899 = vadd.f32 %v868, %v889
      %v900 = vadd.f32 %v869, %v890
      %v901 = vadd.f32 %v870, %v891
      %v902 = vadd.f32 %v871, %v892
      %v903 = vadd.f32 %v872, %v893
      %v904 = vadd.f32 %v873, %v894
      %v905 = vadd.f32 %v874, %v895
      %v906 = vadd.f32 %v875, %v896
      %v907 = vadd.f32 %v876, %v897
      %v908 = vadd.f32 %v877, %v898
      %s909 = scalar_lea.vmem %s435, 208
      %v910 = vld [vmem:[%s909] sm:$0xff]
      %v911 = vld [vmem:[%s909 + $0x8] sm:$0xff]
      %v912 = vld [vmem:[%s909 + $0x10] sm:$0xff]
      %v913 = vld [vmem:[%s909 + $0x18] sm:$0xff]
      %v914 = vld [vmem:[%s909 + $0x20] sm:$0xff]
      %v915 = vld [vmem:[%s909 + $0x28] sm:$0xff]
      %v916 = vld [vmem:[%s909 + $0x30] sm:$0xff]
      %v917 = vld [vmem:[%s909 + $0x38] sm:$0xff]
      %v918 = vld [vmem:[%s909 + $0x40] sm:$0xff]
      %v919 = vld [vmem:[%s909 + $0x48] sm:$0xff]
      %v920 = vperm.slane %v823, 3
      %v921 = vmul.f32 %v910, %v920
      %v922 = vmul.f32 %v911, %v920
      %v923 = vmul.f32 %v912, %v920
      %v924 = vmul.f32 %v913, %v920
      %v925 = vmul.f32 %v914, %v920
      %v926 = vmul.f32 %v915, %v920
      %v927 = vmul.f32 %v916, %v920
      %v928 = vmul.f32 %v917, %v920
      %v929 = vmul.f32 %v918, %v920
      %v930 = vmul.f32 %v919, %v920
      %v931 = vadd.f32 %v899, %v921
      %v932 = vadd.f32 %v900, %v922
      %v933 = vadd.f32 %v901, %v923
      %v934 = vadd.f32 %v902, %v924
      %v935 = vadd.f32 %v903, %v925
      %v936 = vadd.f32 %v904, %v926
      %v937 = vadd.f32 %v905, %v927
      %v938 = vadd.f32 %v906, %v928
      %v939 = vadd.f32 %v907, %v929
      %v940 = vadd.f32 %v908, %v930
      %s941 = scalar_lea.vmem %s435, 312
      %v942 = vld [vmem:[%s941] sm:$0xff]
      %v943 = vld [vmem:[%s941 + $0x8] sm:$0xff]
      %v944 = vld [vmem:[%s941 + $0x10] sm:$0xff]
      %v945 = vld [vmem:[%s941 + $0x18] sm:$0xff]
      %v946 = vld [vmem:[%s941 + $0x20] sm:$0xff]
      %v947 = vld [vmem:[%s941 + $0x28] sm:$0xff]
      %v948 = vld [vmem:[%s941 + $0x30] sm:$0xff]
      %v949 = vld [vmem:[%s941 + $0x38] sm:$0xff]
      %v950 = vld [vmem:[%s941 + $0x40] sm:$0xff]
      %v951 = vld [vmem:[%s941 + $0x48] sm:$0xff]
      %v952 = vperm.slane %v823, 4
      %v953 = vmul.f32 %v942, %v952
      %v954 = vmul.f32 %v943, %v952
      %v955 = vmul.f32 %v944, %v952
      %v956 = vmul.f32 %v945, %v952
      %v957 = vmul.f32 %v946, %v952
      %v958 = vmul.f32 %v947, %v952
      %v959 = vmul.f32 %v948, %v952
      %v960 = vmul.f32 %v949, %v952
      %v961 = vmul.f32 %v950, %v952
      %v962 = vmul.f32 %v951, %v952
      %v963 = vadd.f32 %v931, %v953
      %v964 = vadd.f32 %v932, %v954
      %v965 = vadd.f32 %v933, %v955
      %v966 = vadd.f32 %v934, %v956
      %v967 = vadd.f32 %v935, %v957
      %v968 = vadd.f32 %v936, %v958
      %v969 = vadd.f32 %v937, %v959
      %v970 = vadd.f32 %v938, %v960
      %v971 = vadd.f32 %v939, %v961
      %v972 = vadd.f32 %v940, %v962
      %v973 = vld [vmem:[%s909 + $0x1] sm:$0xff]
      %v974 = vld [vmem:[%s909 + $0x9] sm:$0xff]
      %v975 = vld [vmem:[%s909 + $0x11] sm:$0xff]
      %v976 = vld [vmem:[%s909 + $0x19] sm:$0xff]
      %v977 = vld [vmem:[%s909 + $0x21] sm:$0xff]
      %v978 = vld [vmem:[%s909 + $0x29] sm:$0xff]
      %v979 = vld [vmem:[%s909 + $0x31] sm:$0xff]
      %v980 = vld [vmem:[%s909 + $0x39] sm:$0xff]
      %v981 = vld [vmem:[%s909 + $0x41] sm:$0xff]
      %v982 = vld [vmem:[%s909 + $0x49] sm:$0xff]
      %v983 = vperm.slane %v823, 5
      %v984 = vmul.f32 %v973, %v983
      %v985 = vmul.f32 %v974, %v983
      %v986 = vmul.f32 %v975, %v983
      %v987 = vmul.f32 %v976, %v983
      %v988 = vmul.f32 %v977, %v983
      %v989 = vmul.f32 %v978, %v983
      %v990 = vmul.f32 %v979, %v983
      %v991 = vmul.f32 %v980, %v983
      %v992 = vmul.f32 %v981, %v983
      %v993 = vmul.f32 %v982, %v983
      %v994 = vadd.f32 %v963, %v984
      %v995 = vadd.f32 %v964, %v985
      %v996 = vadd.f32 %v965, %v986
      %v997 = vadd.f32 %v966, %v987
      %v998 = vadd.f32 %v967, %v988
      %v999 = vadd.f32 %v968, %v989
      %v1000 = vadd.f32 %v969, %v990
      %v1001 = vadd.f32 %v970, %v991
      %v1002 = vadd.f32 %v971, %v992
      %v1003 = vadd.f32 %v972, %v993
      %v1004 = vld [vmem:[%s435 + $0xa] sm:$0xff]
      %v1005 = vld [vmem:[%s435 + $0x12] sm:$0xff]
      %v1006 = vld [vmem:[%s435 + $0x1a] sm:$0xff]
      %v1007 = vld [vmem:[%s435 + $0x22] sm:$0xff]
      %v1008 = vld [vmem:[%s435 + $0x2a] sm:$0xff]
      %v1009 = vld [vmem:[%s435 + $0x32] sm:$0xff]
      %v1010 = vld [vmem:[%s435 + $0x3a] sm:$0xff]
      %v1011 = vld [vmem:[%s435 + $0x42] sm:$0xff]
      %v1012 = vld [vmem:[%s435 + $0x4a] sm:$0xff]
      %v1013 = vld [vmem:[%s435 + $0x52] sm:$0xff]
      %v1014 = vperm.slane %v823, 6
      %v1015 = vmul.f32 %v1004, %v1014
      %v1016 = vmul.f32 %v1005, %v1014
      %v1017 = vmul.f32 %v1006, %v1014
      %v1018 = vmul.f32 %v1007, %v1014
      %v1019 = vmul.f32 %v1008, %v1014
      %v1020 = vmul.f32 %v1009, %v1014
      %v1021 = vmul.f32 %v1010, %v1014
      %v1022 = vmul.f32 %v1011, %v1014
      %v1023 = vmul.f32 %v1012, %v1014
      %v1024 = vmul.f32 %v1013, %v1014
      %v1025 = vadd.f32 %v994, %v1015
      %v1026 = vadd.f32 %v995, %v1016
      %v1027 = vadd.f32 %v996, %v1017
      %v1028 = vadd.f32 %v997, %v1018
      %v1029 = vadd.f32 %v998, %v1019
      %v1030 = vadd.f32 %v999, %v1020
      %v1031 = vadd.f32 %v1000, %v1021
      %v1032 = vadd.f32 %v1001, %v1022
      %v1033 = vadd.f32 %v1002, %v1023
      %v1034 = vadd.f32 %v1003, %v1024
      %v1035 = vld [vmem:[%s846 + $0xa] sm:$0xff]
      %v1036 = vld [vmem:[%s846 + $0x12] sm:$0xff]
      %v1037 = vld [vmem:[%s846 + $0x1a] sm:$0xff]
      %v1038 = vld [vmem:[%s846 + $0x22] sm:$0xff]
      %v1039 = vld [vmem:[%s846 + $0x2a] sm:$0xff]
      %v1040 = vld [vmem:[%s846 + $0x32] sm:$0xff]
      %v1041 = vld [vmem:[%s846 + $0x3a] sm:$0xff]
      %v1042 = vld [vmem:[%s846 + $0x42] sm:$0xff]
      %v1043 = vld [vmem:[%s846 + $0x4a] sm:$0xff]
      %v1044 = vld [vmem:[%s846 + $0x52] sm:$0xff]
      %v1045 = vperm.slane %v823, 7
      %v1046 = vmul.f32 %v1035, %v1045
      %v1047 = vmul.f32 %v1036, %v1045
      %v1048 = vmul.f32 %v1037, %v1045
      %v1049 = vmul.f32 %v1038, %v1045
      %v1050 = vmul.f32 %v1039, %v1045
      %v1051 = vmul.f32 %v1040, %v1045
      %v1052 = vmul.f32 %v1041, %v1045
      %v1053 = vmul.f32 %v1042, %v1045
      %v1054 = vmul.f32 %v1043, %v1045
      %v1055 = vmul.f32 %v1044, %v1045
      %v1056 = vadd.f32 %v1025, %v1046
      %v1057 = vadd.f32 %v1026, %v1047
      %v1058 = vadd.f32 %v1027, %v1048
      %v1059 = vadd.f32 %v1028, %v1049
      %v1060 = vadd.f32 %v1029, %v1050
      %v1061 = vadd.f32 %v1030, %v1051
      %v1062 = vadd.f32 %v1031, %v1052
      %v1063 = vadd.f32 %v1032, %v1053
      %v1064 = vadd.f32 %v1033, %v1054
      %v1065 = vadd.f32 %v1034, %v1055
      %v1066 = vld [vmem:[%s435 + $0xb] sm:$0xff]
      %v1067 = vld [vmem:[%s435 + $0x13] sm:$0xff]
      %v1068 = vld [vmem:[%s435 + $0x1b] sm:$0xff]
      %v1069 = vld [vmem:[%s435 + $0x23] sm:$0xff]
      %v1070 = vld [vmem:[%s435 + $0x2b] sm:$0xff]
      %v1071 = vld [vmem:[%s435 + $0x33] sm:$0xff]
      %v1072 = vld [vmem:[%s435 + $0x3b] sm:$0xff]
      %v1073 = vld [vmem:[%s435 + $0x43] sm:$0xff]
      %v1074 = vld [vmem:[%s435 + $0x4b] sm:$0xff]
      %v1075 = vld [vmem:[%s435 + $0x53] sm:$0xff]
      %v1076 = vperm.slane %v824, 0
      %v1077 = vmul.f32 %v1066, %v1076
      %v1078 = vmul.f32 %v1067, %v1076
      %v1079 = vmul.f32 %v1068, %v1076
      %v1080 = vmul.f32 %v1069, %v1076
      %v1081 = vmul.f32 %v1070, %v1076
      %v1082 = vmul.f32 %v1071, %v1076
      %v1083 = vmul.f32 %v1072, %v1076
      %v1084 = vmul.f32 %v1073, %v1076
      %v1085 = vmul.f32 %v1074, %v1076
      %v1086 = vmul.f32 %v1075, %v1076
      %v1087 = vadd.f32 %v1056, %v1077
      %v1088 = vadd.f32 %v1057, %v1078
      %v1089 = vadd.f32 %v1058, %v1079
      %v1090 = vadd.f32 %v1059, %v1080
      %v1091 = vadd.f32 %v1060, %v1081
      %v1092 = vadd.f32 %v1061, %v1082
      %v1093 = vadd.f32 %v1062, %v1083
      %v1094 = vadd.f32 %v1063, %v1084
      %v1095 = vadd.f32 %v1064, %v1085
      %v1096 = vadd.f32 %v1065, %v1086
      %1097 = vst [vmem:[#allocation3] sm:$0xf] 0
      %vm1098 = vcmask 1041408
      %vm1099 = vsmask.f32 1280
      %vm1100 = vmand %vm1098, %vm1099
      %v1101 = vld [vmem:[#allocation3 + $0x4] sm:$0x3]
      %v1102 = vsel %vm1100, 0, %v1101
      %1103 = vst [vmem:[#allocation3 + $0x4] sm:$0x3] %v1102
      %vm1104 = vcmask 1043457
      %vm1105 = vsmask.f32 7942
      %vm1106 = vmand %vm1104, %vm1105
      %v1107 = vld [vmem:[#allocation3 + $0x2c] sm:$0xe]
      %v1108 = vsel %vm1106, 0, %v1107
      %1109 = vst [vmem:[#allocation3 + $0x2c] sm:$0xe] %v1108
      %1110 = vst [vmem:[#allocation3 + $0x30] sm:$0xf] 0
      %v1111 = vld [vmem:[%s2] sm:$0x1]
      %v1113 = vperm.slane %v1111, 0
      %v1115 = vadd.f32 %v1087, %v1113
      %v1116 = vadd.f32 %v1088, %v1113
      %v1117 = vadd.f32 %v1089, %v1113
      %v1118 = vadd.f32 %v1090, %v1113
      %v1119 = vadd.f32 %v1091, %v1113
      %v1120 = vadd.f32 %v1092, %v1113
      %v1121 = vadd.f32 %v1093, %v1113
      %v1122 = vadd.f32 %v1094, %v1113
      %v1123 = vadd.f32 %v1095, %v1113
      %v1124 = vadd.f32 %v1096, %v1113
      %v1125 = vmul.f32 %v1115, %v813
      %v1126 = vmul.f32 %v1116, %v814
      %v1127 = vmul.f32 %v1117, %v815
      %v1128 = vmul.f32 %v1118, %v816
      %v1129 = vmul.f32 %v1119, %v817
      %v1130 = vmul.f32 %v1120, %v818
      %v1131 = vmul.f32 %v1121, %v819
      %v1132 = vmul.f32 %v1122, %v820
      %v1133 = vmul.f32 %v1123, %v821
      %v1134 = vmul.f32 %v1124, %v822
      %v1135 = vpack.c.bf16 %v1125, %v1125
      %v1136 = vpack.c.bf16 %v1126, %v1126
      %v1137 = vpack.c.bf16 %v1127, %v1127
      %v1138 = vpack.c.bf16 %v1128, %v1128
      %v1139 = vpack.c.bf16 %v1129, %v1129
      %v1140 = vpack.c.bf16 %v1130, %v1130
      %v1141 = vpack.c.bf16 %v1131, %v1131
      %v1142 = vpack.c.bf16 %v1132, %v1132
      %v1143 = vpack.c.bf16 %v1133, %v1133
      %v1144 = vpack.c.bf16 %v1134, %v1134
      %vm1145 = vsmask.f32 5392
      %vm1146 = vmor %vm1099, %vm1145
      %v1148 = vshrl.u32 %v1135, 16
      %v1150 = vrot.slane %v1148, 6
      %v1151 = vshll.u32 %v1135, 16
      %v1153 = vrot.slane %v1151, 7
      %v1154 = vor.u32 %v1150, %v1153
      %v1155 = vrot.slane %v1154, 4
      %v1157 = vshrl.u32 %v1136, 16
      %v1159 = vrot.slane %v1157, 6
      %v1160 = vshll.u32 %v1136, 16
      %v1162 = vrot.slane %v1160, 7
      %v1163 = vor.u32 %v1159, %v1162
      %v1164 = vsel %vm1146, %v1155, %v1163
      %v1165 = vrot.slane %v1163, 4
      %v1167 = vshrl.u32 %v1137, 16
      %v1169 = vrot.slane %v1167, 6
      %v1170 = vshll.u32 %v1137, 16
      %v1172 = vrot.slane %v1170, 7
      %v1173 = vor.u32 %v1169, %v1172
      %v1174 = vsel %vm1146, %v1165, %v1173
      %v1175 = vrot.slane %v1173, 4
      %v1177 = vshrl.u32 %v1138, 16
      %v1179 = vrot.slane %v1177, 6
      %v1180 = vshll.u32 %v1138, 16
      %v1182 = vrot.slane %v1180, 7
      %v1183 = vor.u32 %v1179, %v1182
      %v1184 = vsel %vm1146, %v1175, %v1183
      %v1185 = vrot.slane %v1183, 4
      %v1187 = vshrl.u32 %v1139, 16
      %v1189 = vrot.slane %v1187, 6
      %v1190 = vshll.u32 %v1139, 16
      %v1192 = vrot.slane %v1190, 7
      %v1193 = vor.u32 %v1189, %v1192
      %v1194 = vsel %vm1146, %v1185, %v1193
      %v1195 = vrot.slane %v1193, 4
      %v1197 = vshrl.u32 %v1140, 16
      %v1199 = vrot.slane %v1197, 6
      %v1200 = vshll.u32 %v1140, 16
      %v1202 = vrot.slane %v1200, 7
      %v1203 = vor.u32 %v1199, %v1202
      %v1204 = vsel %vm1146, %v1195, %v1203
      %v1205 = vrot.slane %v1203, 4
      %v1207 = vshrl.u32 %v1141, 16
      %v1209 = vrot.slane %v1207, 6
      %v1210 = vshll.u32 %v1141, 16
      %v1212 = vrot.slane %v1210, 7
      %v1213 = vor.u32 %v1209, %v1212
      %v1214 = vsel %vm1146, %v1205, %v1213
      %v1215 = vrot.slane %v1213, 4
      %v1217 = vshrl.u32 %v1142, 16
      %v1219 = vrot.slane %v1217, 6
      %v1220 = vshll.u32 %v1142, 16
      %v1222 = vrot.slane %v1220, 7
      %v1223 = vor.u32 %v1219, %v1222
      %v1224 = vsel %vm1146, %v1215, %v1223
      %v1225 = vrot.slane %v1223, 4
      %v1227 = vshrl.u32 %v1143, 16
      %v1229 = vrot.slane %v1227, 6
      %v1230 = vshll.u32 %v1143, 16
      %v1232 = vrot.slane %v1230, 7
      %v1233 = vor.u32 %v1229, %v1232
      %v1234 = vsel %vm1146, %v1225, %v1233
      %v1235 = vrot.slane %v1233, 4
      %v1237 = vshrl.u32 %v1144, 16
      %v1239 = vrot.slane %v1237, 6
      %v1240 = vshll.u32 %v1144, 16
      %v1242 = vrot.slane %v1240, 7
      %v1243 = vor.u32 %v1239, %v1242
      %v1244 = vsel %vm1146, %v1235, %v1243
      %v1245 = vrot.slane %v1243, 4
      %v1257 = vld [vmem:[#allocation3 + $0x4] sm:$0xe]
      %v1258 = vsel %vm1106, %v1154, %v1257
      %1259 = vst [vmem:[#allocation3 + $0x4] sm:$0xe] %v1258
      %1260 = vst [vmem:[#allocation3 + $0x8] sm:$0xf] %v1164
      %1261 = vst [vmem:[#allocation3 + $0xc] sm:$0xf] %v1174
      %1262 = vst [vmem:[#allocation3 + $0x10] sm:$0xf] %v1184
      %1263 = vst [vmem:[#allocation3 + $0x14] sm:$0xf] %v1194
      %1264 = vst [vmem:[#allocation3 + $0x18] sm:$0xf] %v1204
      %1265 = vst [vmem:[#allocation3 + $0x1c] sm:$0xf] %v1214
      %1266 = vst [vmem:[#allocation3 + $0x20] sm:$0xf] %v1224
      %1267 = vst [vmem:[#allocation3 + $0x24] sm:$0xf] %v1234
      %1268 = vst [vmem:[#allocation3 + $0x28] sm:$0xf] %v1244
      %v1269 = vld [vmem:[#allocation3 + $0x2c] sm:$0x3]
      %v1270 = vsel %vm1100, %v1245, %v1269
      %1271 = vst [vmem:[#allocation3 + $0x2c] sm:$0x3] %v1270
      %v1272 = vld [vmem:[#allocation3 + $0x4] sm:$0xe]
      %v1273 = vld [vmem:[#allocation3 + $0x8] sm:$0xf]
      %v1274 = vld [vmem:[#allocation3 + $0xc] sm:$0xf]
      %v1275 = vld [vmem:[#allocation3 + $0x10] sm:$0xf]
      %v1276 = vld [vmem:[#allocation3 + $0x14] sm:$0xf]
      %v1277 = vld [vmem:[#allocation3 + $0x18] sm:$0xf]
      %v1278 = vld [vmem:[#allocation3 + $0x1c] sm:$0xf]
      %v1279 = vld [vmem:[#allocation3 + $0x20] sm:$0xf]
      %v1280 = vld [vmem:[#allocation3 + $0x24] sm:$0xf]
      %v1281 = vld [vmem:[#allocation3 + $0x28] sm:$0xf]
      %v1282 = vld [vmem:[#allocation3 + $0x2c] sm:$0x3]
      %v1283 = vld [vmem:[%s7] sm:$0xf]
      %v1284 = vld [vmem:[%s7 + $0x4] sm:$0xf]
      %v1285 = vld [vmem:[%s7 + $0x8] sm:$0xf]
      %v1286 = vld [vmem:[%s7 + $0xc] sm:$0xf]
      %v1287 = vld [vmem:[%s7 + $0x10] sm:$0xf]
      %v1288 = vld [vmem:[%s7 + $0x14] sm:$0xf]
      %v1289 = vld [vmem:[%s7 + $0x18] sm:$0xf]
      %v1290 = vld [vmem:[%s7 + $0x1c] sm:$0xf]
      %v1291 = vld [vmem:[%s7 + $0x20] sm:$0xf]
      %v1292 = vld [vmem:[%s7 + $0x24] sm:$0xf]
      %v1293 = vld [vmem:[%s7 + $0x28] sm:$0xf]
      %v1294 = vld [vmem:[%s7 + $0x2c] sm:$0xf]
      %v1295 = vld [vmem:[%s7 + $0x30] sm:$0xf]
      %v1296 = vld [vmem:[%s7 + $0x34] sm:$0xf]
      %v1297 = vld [vmem:[%s7 + $0x38] sm:$0xf]
      %v1298 = vld [vmem:[%s7 + $0x3c] sm:$0xf]
      %1299 = vst [vmem:[#allocation2] sm:$0xf] 0
      %v1300 = vld [vmem:[#allocation2 + $0x4] sm:$0x3]
      %v1301 = vsel %vm1100, 0, %v1300
      %1302 = vst [vmem:[#allocation2 + $0x4] sm:$0x3] %v1301
      %v1303 = vld [vmem:[#allocation2 + $0x2c] sm:$0xe]
      %v1304 = vsel %vm1106, 0, %v1303
      %1305 = vst [vmem:[#allocation2 + $0x2c] sm:$0xe] %v1304
      %1306 = vst [vmem:[#allocation2 + $0x30] sm:$0xf] 0
      %v1307 = vld [vmem:[#allocation3] sm:$0xf]
      %v1308 = vld [vmem:[#allocation3 + $0x4] sm:$0xf]
      %v1309 = vld [vmem:[#allocation3 + $0x8] sm:$0xf]
      %v1310 = vld [vmem:[#allocation3 + $0xc] sm:$0xf]
      %v1311 = vld [vmem:[#allocation3 + $0x10] sm:$0xf]
      %v1312 = vld [vmem:[#allocation3 + $0x14] sm:$0xf]
      %v1313 = vld [vmem:[#allocation3 + $0x18] sm:$0xf]
      %v1314 = vld [vmem:[#allocation3 + $0x1c] sm:$0xf]
      %v1315 = vld [vmem:[#allocation3 + $0x20] sm:$0xf]
      %v1316 = vld [vmem:[#allocation3 + $0x24] sm:$0xf]
      %v1317 = vld [vmem:[%s3] sm:$0xf]
      %v1318 = vld [vmem:[%s3 + $0x4] sm:$0xf]
      %v1319 = vld [vmem:[%s3 + $0x8] sm:$0xf]
      %v1320 = vld [vmem:[%s3 + $0xc] sm:$0xf]
      %v1321 = vld [vmem:[%s3 + $0x10] sm:$0xf]
      %v1322 = vld [vmem:[%s3 + $0x14] sm:$0xf]
      %v1323 = vld [vmem:[%s3 + $0x18] sm:$0xf]
      %v1324 = vld [vmem:[%s3 + $0x1c] sm:$0xf]
      %v1325 = vld [vmem:[%s3 + $0x20] sm:$0xf]
      %v1326 = vld [vmem:[%s3 + $0x24] sm:$0xf]
      %v1327 = vld [vmem:[%s3 + $0x28] sm:$0xf]
      %v1328 = vld [vmem:[%s3 + $0x2c] sm:$0xf]
      %v1329 = vld [vmem:[%s3 + $0x30] sm:$0xf]
      %v1330 = vld [vmem:[%s3 + $0x34] sm:$0xf]
      %v1331 = vld [vmem:[%s3 + $0x38] sm:$0xf]
      %v1332 = vld [vmem:[%s3 + $0x3c] sm:$0xf]
      %v1333 = vld [vmem:[#allocation3 + $0x28] sm:$0x1]
      %s1334 = scalar_lea.vmem %s3, 64
      %v1335 = vld [vmem:[%s1334] sm:$0xf]
      %v1336 = vld [vmem:[%s1334 + $0x4] sm:$0xf]
      %v1337 = vld [vmem:[%s1334 + $0x8] sm:$0xf]
      %v1338 = vld [vmem:[%s1334 + $0xc] sm:$0xf]
      %v1339 = vld [vmem:[%s1334 + $0x10] sm:$0xf]
      %v1340 = vld [vmem:[%s1334 + $0x14] sm:$0xf]
      %v1341 = vld [vmem:[%s1334 + $0x18] sm:$0xf]
      %v1342 = vld [vmem:[%s1334 + $0x1c] sm:$0xf]
      %v1343 = vld [vmem:[%s1334 + $0x20] sm:$0xf]
      %v1344 = vld [vmem:[%s1334 + $0x24] sm:$0xf]
      %v1345 = vld [vmem:[%s1334 + $0x28] sm:$0xf]
      %v1346 = vld [vmem:[%s1334 + $0x2c] sm:$0xf]
      %v1347 = vld [vmem:[%s1334 + $0x30] sm:$0xf]
      %v1348 = vld [vmem:[%s1334 + $0x34] sm:$0xf]
      %v1349 = vld [vmem:[%s1334 + $0x38] sm:$0xf]
      %v1350 = vld [vmem:[%s1334 + $0x3c] sm:$0xf]
      %v1362 = vunpack.c.l.b16 %v1307
      %v1363 = vunpack.c.l.b16 %v1308
      %v1364 = vunpack.c.l.b16 %v1309
      %v1365 = vunpack.c.l.b16 %v1310
      %v1366 = vunpack.c.l.b16 %v1311
      %v1367 = vunpack.c.l.b16 %v1312
      %v1368 = vunpack.c.l.b16 %v1313
      %v1369 = vunpack.c.l.b16 %v1314
      %v1370 = vunpack.c.l.b16 %v1315
      %v1371 = vunpack.c.l.b16 %v1316
      %v1372 = vunpack.c.l.b16 %v1333
      %v1373 = vpack.c.b16 %v1363, %v1362
      %v1374 = vpack.c.b16 %v1365, %v1364
      %v1375 = vpack.c.b16 %v1367, %v1366
      %v1376 = vpack.c.b16 %v1369, %v1368
      %v1377 = vpack.c.b16 %v1371, %v1370
      %v1378 = vpack.c.b16 %v1372, %v1372
      %vm1379 = vsmask.f32 7424
      %v1381 = vshrl.u32 %v1373, 16
      %v1383 = vshll.u32 %v1373, 16
      %v1385 = vrot.slane %v1383, 1
      %v1386 = vor.u32 %v1381, %v1385
      %v1388 = vshll.u32 %v1374, 16
      %v1390 = vrot.slane %v1388, 1
      %v1391 = vsel %vm1379, %v1386, %v1390
      %v1392 = vshrl.u32 %v1374, 16
      %v1394 = vor.u32 %v1392, %v1390
      %v1396 = vshll.u32 %v1375, 16
      %v1398 = vrot.slane %v1396, 1
      %v1399 = vsel %vm1379, %v1394, %v1398
      %v1400 = vshrl.u32 %v1375, 16
      %v1402 = vor.u32 %v1400, %v1398
      %v1404 = vshll.u32 %v1376, 16
      %v1406 = vrot.slane %v1404, 1
      %v1407 = vsel %vm1379, %v1402, %v1406
      %v1408 = vshrl.u32 %v1376, 16
      %v1410 = vor.u32 %v1408, %v1406
      %v1412 = vshll.u32 %v1377, 16
      %v1414 = vrot.slane %v1412, 1
      %v1415 = vsel %vm1379, %v1410, %v1414
      %v1416 = vshrl.u32 %v1377, 16
      %v1418 = vor.u32 %v1416, %v1414
      %v1420 = vshll.u32 %v1378, 16
      %v1422 = vrot.slane %v1420, 1
      %v1423 = vsel %vm1379, %v1418, %v1422
      %v1445 = vunpack.c.l.b16 %v1335
      %v1446 = vunpack.c.l.b16 %v1336
      %v1447 = vunpack.c.l.b16 %v1337
      %v1448 = vunpack.c.l.b16 %v1338
      %v1449 = vunpack.c.l.b16 %v1339
      %v1450 = vunpack.c.l.b16 %v1340
      %v1451 = vunpack.c.l.b16 %v1341
      %v1452 = vunpack.c.l.b16 %v1342
      %v1453 = vunpack.c.l.b16 %v1343
      %v1454 = vunpack.c.l.b16 %v1344
      %v1455 = vunpack.c.l.b16 %v1345
      %v1456 = vunpack.c.l.b16 %v1346
      %v1457 = vunpack.c.l.b16 %v1347
      %v1458 = vunpack.c.l.b16 %v1348
      %v1459 = vunpack.c.l.b16 %v1349
      %v1460 = vunpack.c.l.b16 %v1350
      %v1461 = vpack.c.b16 %v1446, %v1445
      %v1462 = vpack.c.b16 %v1448, %v1447
      %v1463 = vpack.c.b16 %v1450, %v1449
      %v1464 = vpack.c.b16 %v1452, %v1451
      %v1465 = vpack.c.b16 %v1454, %v1453
      %v1466 = vpack.c.b16 %v1456, %v1455
      %v1467 = vpack.c.b16 %v1458, %v1457
      %v1468 = vpack.c.b16 %v1460, %v1459
      %1477 = vmatpush.bf16.msra.mxu0 %v1468
      %1478 = vmatpush.bf16.msra.mxu0 %v1467
      %1479 = vmatpush.bf16.msra.mxu0 %v1466
      %1480 = vmatpush.bf16.msra.mxu0 %v1465
      %1481 = vmatpush.bf16.msra.mxu0 %v1464
      %1482 = vmatpush.bf16.msra.mxu0 %v1463
      %1483 = vmatpush.bf16.msra.mxu0 %v1462
      %1484 = vmatpush.bf16.msra.mxu0 %v1461
      %1485 = vmatmul.bf16.gmra.mxu0 %v1391
      %v1486 = vpop.f32.mrf.mxu0
      %v1487 = vadd.f32 0.0, %v1486
      %v1488 = vpop.f32.mrf.mxu0
      %v1489 = vadd.f32 0.0, %v1488
      %1490 = vmatmul.bf16.gmra.mxu0 %v1399
      %v1491 = vpop.f32.mrf.mxu0
      %v1492 = vadd.f32 0.0, %v1491
      %v1493 = vpop.f32.mrf.mxu0
      %v1494 = vadd.f32 0.0, %v1493
      %1495 = vmatmul.bf16.gmra.mxu0 %v1407
      %v1496 = vpop.f32.mrf.mxu0
      %v1497 = vadd.f32 0.0, %v1496
      %v1498 = vpop.f32.mrf.mxu0
      %v1499 = vadd.f32 0.0, %v1498
      %1500 = vmatmul.bf16.gmra.mxu0 %v1415
      %v1501 = vpop.f32.mrf.mxu0
      %v1502 = vadd.f32 0.0, %v1501
      %v1503 = vpop.f32.mrf.mxu0
      %v1504 = vadd.f32 0.0, %v1503
      %1505 = vmatmul.bf16.gmra.mxu0 %v1423
      %v1506 = vpop.f32.mrf.mxu0
      %v1507 = vadd.f32 0.0, %v1506
      %v1508 = vpop.f32.mrf.mxu0
      %v1509 = vadd.f32 0.0, %v1508
      %1510 = vdwg.mxu0
      %v1532 = vunpack.c.l.b16 %v1317
      %v1533 = vunpack.c.l.b16 %v1318
      %v1534 = vunpack.c.l.b16 %v1319
      %v1535 = vunpack.c.l.b16 %v1320
      %v1536 = vunpack.c.l.b16 %v1321
      %v1537 = vunpack.c.l.b16 %v1322
      %v1538 = vunpack.c.l.b16 %v1323
      %v1539 = vunpack.c.l.b16 %v1324
      %v1540 = vunpack.c.l.b16 %v1325
      %v1541 = vunpack.c.l.b16 %v1326
      %v1542 = vunpack.c.l.b16 %v1327
      %v1543 = vunpack.c.l.b16 %v1328
      %v1544 = vunpack.c.l.b16 %v1329
      %v1545 = vunpack.c.l.b16 %v1330
      %v1546 = vunpack.c.l.b16 %v1331
      %v1547 = vunpack.c.l.b16 %v1332
      %v1548 = vpack.c.b16 %v1533, %v1532
      %v1549 = vpack.c.b16 %v1535, %v1534
      %v1550 = vpack.c.b16 %v1537, %v1536
      %v1551 = vpack.c.b16 %v1539, %v1538
      %v1552 = vpack.c.b16 %v1541, %v1540
      %v1553 = vpack.c.b16 %v1543, %v1542
      %v1554 = vpack.c.b16 %v1545, %v1544
      %v1555 = vpack.c.b16 %v1547, %v1546
      %1564 = vmatpush.bf16.msra.mxu0 %v1555
      %1565 = vmatpush.bf16.msra.mxu0 %v1554
      %1566 = vmatpush.bf16.msra.mxu0 %v1553
      %1567 = vmatpush.bf16.msra.mxu0 %v1552
      %1568 = vmatpush.bf16.msra.mxu0 %v1551
      %1569 = vmatpush.bf16.msra.mxu0 %v1550
      %1570 = vmatpush.bf16.msra.mxu0 %v1549
      %1571 = vmatpush.bf16.msra.mxu0 %v1548
      %1572 = vmatmul.bf16.gmra.mxu0 %v1373
      %v1573 = vpop.f32.mrf.mxu0
      %v1574 = vadd.f32 %v1487, %v1573
      %v1575 = vpop.f32.mrf.mxu0
      %v1576 = vadd.f32 %v1489, %v1575
      %1577 = vmatmul.bf16.gmra.mxu0 %v1374
      %v1578 = vpop.f32.mrf.mxu0
      %v1579 = vadd.f32 %v1492, %v1578
      %v1580 = vpop.f32.mrf.mxu0
      %v1581 = vadd.f32 %v1494, %v1580
      %1582 = vmatmul.bf16.gmra.mxu0 %v1375
      %v1583 = vpop.f32.mrf.mxu0
      %v1584 = vadd.f32 %v1497, %v1583
      %v1585 = vpop.f32.mrf.mxu0
      %v1586 = vadd.f32 %v1499, %v1585
      %1587 = vmatmul.bf16.gmra.mxu0 %v1376
      %v1588 = vpop.f32.mrf.mxu0
      %v1589 = vadd.f32 %v1502, %v1588
      %v1590 = vpop.f32.mrf.mxu0
      %v1591 = vadd.f32 %v1504, %v1590
      %1592 = vmatmul.bf16.gmra.mxu0 %v1377
      %v1593 = vpop.f32.mrf.mxu0
      %v1594 = vadd.f32 %v1507, %v1593
      %v1595 = vpop.f32.mrf.mxu0
      %v1596 = vadd.f32 %v1509, %v1595
      %1597 = vdwg.mxu0
      %v1598 = vld [vmem:[#allocation3] sm:$0xe]
      %s1599 = scalar_lea.vmem %s3, 128
      %v1600 = vld [vmem:[%s1599] sm:$0xf]
      %v1601 = vld [vmem:[%s1599 + $0x4] sm:$0xf]
      %v1602 = vld [vmem:[%s1599 + $0x8] sm:$0xf]
      %v1603 = vld [vmem:[%s1599 + $0xc] sm:$0xf]
      %v1604 = vld [vmem:[%s1599 + $0x10] sm:$0xf]
      %v1605 = vld [vmem:[%s1599 + $0x14] sm:$0xf]
      %v1606 = vld [vmem:[%s1599 + $0x18] sm:$0xf]
      %v1607 = vld [vmem:[%s1599 + $0x1c] sm:$0xf]
      %v1608 = vld [vmem:[%s1599 + $0x20] sm:$0xf]
      %v1609 = vld [vmem:[%s1599 + $0x24] sm:$0xf]
      %v1610 = vld [vmem:[%s1599 + $0x28] sm:$0xf]
      %v1611 = vld [vmem:[%s1599 + $0x2c] sm:$0xf]
      %v1612 = vld [vmem:[%s1599 + $0x30] sm:$0xf]
      %v1613 = vld [vmem:[%s1599 + $0x34] sm:$0xf]
      %v1614 = vld [vmem:[%s1599 + $0x38] sm:$0xf]
      %v1615 = vld [vmem:[%s1599 + $0x3c] sm:$0xf]
      %v1617 = vunpack.c.l.b16 %v1598
      %v1618 = vpack.c.b16 %v1363, %v1617
      %vm1619 = vcmask 1046528
      %v1620 = vrot.slane %v1618, 1
      %v1621 = vrot.slane %v1374, 1
      %v1622 = vsel %vm1619, %v1620, %v1621
      %v1623 = vrot.slane %v1375, 1
      %v1624 = vsel %vm1619, %v1621, %v1623
      %v1625 = vrot.slane %v1376, 1
      %v1626 = vsel %vm1619, %v1623, %v1625
      %v1627 = vrot.slane %v1377, 1
      %v1628 = vsel %vm1619, %v1625, %v1627
      %v1629 = vrot.slane %v1378, 1
      %v1630 = vsel %vm1619, %v1627, %v1629
      %v1652 = vunpack.c.l.b16 %v1600
      %v1653 = vunpack.c.l.b16 %v1601
      %v1654 = vunpack.c.l.b16 %v1602
      %v1655 = vunpack.c.l.b16 %v1603
      %v1656 = vunpack.c.l.b16 %v1604
      %v1657 = vunpack.c.l.b16 %v1605
      %v1658 = vunpack.c.l.b16 %v1606
      %v1659 = vunpack.c.l.b16 %v1607
      %v1660 = vunpack.c.l.b16 %v1608
      %v1661 = vunpack.c.l.b16 %v1609
      %v1662 = vunpack.c.l.b16 %v1610
      %v1663 = vunpack.c.l.b16 %v1611
      %v1664 = vunpack.c.l.b16 %v1612
      %v1665 = vunpack.c.l.b16 %v1613
      %v1666 = vunpack.c.l.b16 %v1614
      %v1667 = vunpack.c.l.b16 %v1615
      %v1668 = vpack.c.b16 %v1653, %v1652
      %v1669 = vpack.c.b16 %v1655, %v1654
      %v1670 = vpack.c.b16 %v1657, %v1656
      %v1671 = vpack.c.b16 %v1659, %v1658
      %v1672 = vpack.c.b16 %v1661, %v1660
      %v1673 = vpack.c.b16 %v1663, %v1662
      %v1674 = vpack.c.b16 %v1665, %v1664
      %v1675 = vpack.c.b16 %v1667, %v1666
      %1684 = vmatpush.bf16.msra.mxu0 %v1675
      %1685 = vmatpush.bf16.msra.mxu0 %v1674
      %1686 = vmatpush.bf16.msra.mxu0 %v1673
      %1687 = vmatpush.bf16.msra.mxu0 %v1672
      %1688 = vmatpush.bf16.msra.mxu0 %v1671
      %1689 = vmatpush.bf16.msra.mxu0 %v1670
      %1690 = vmatpush.bf16.msra.mxu0 %v1669
      %1691 = vmatpush.bf16.msra.mxu0 %v1668
      %1692 = vmatmul.bf16.gmra.mxu0 %v1622
      %v1693 = vpop.f32.mrf.mxu0
      %v1694 = vadd.f32 0.0, %v1693
      %v1695 = vpop.f32.mrf.mxu0
      %v1696 = vadd.f32 0.0, %v1695
      %1697 = vmatmul.bf16.gmra.mxu0 %v1624
      %v1698 = vpop.f32.mrf.mxu0
      %v1699 = vadd.f32 0.0, %v1698
      %v1700 = vpop.f32.mrf.mxu0
      %v1701 = vadd.f32 0.0, %v1700
      %1702 = vmatmul.bf16.gmra.mxu0 %v1626
      %v1703 = vpop.f32.mrf.mxu0
      %v1704 = vadd.f32 0.0, %v1703
      %v1705 = vpop.f32.mrf.mxu0
      %v1706 = vadd.f32 0.0, %v1705
      %1707 = vmatmul.bf16.gmra.mxu0 %v1628
      %v1708 = vpop.f32.mrf.mxu0
      %v1709 = vadd.f32 0.0, %v1708
      %v1710 = vpop.f32.mrf.mxu0
      %v1711 = vadd.f32 0.0, %v1710
      %1712 = vmatmul.bf16.gmra.mxu0 %v1630
      %v1713 = vpop.f32.mrf.mxu0
      %v1714 = vadd.f32 0.0, %v1713
      %v1715 = vpop.f32.mrf.mxu0
      %v1716 = vadd.f32 0.0, %v1715
      %1717 = vdwg.mxu0
      %v1718 = vadd.f32 %v1574, %v1694
      %v1719 = vadd.f32 %v1576, %v1696
      %v1720 = vadd.f32 %v1579, %v1699
      %v1721 = vadd.f32 %v1581, %v1701
      %v1722 = vadd.f32 %v1584, %v1704
      %v1723 = vadd.f32 %v1586, %v1706
      %v1724 = vadd.f32 %v1589, %v1709
      %v1725 = vadd.f32 %v1591, %v1711
      %v1726 = vadd.f32 %v1594, %v1714
      %v1727 = vadd.f32 %v1596, %v1716
      %v1728 = vld [vmem:[#allocation3 + $0x4] sm:$0xe]
      %v1729 = vld [vmem:[#allocation3 + $0x8] sm:$0xf]
      %v1730 = vld [vmem:[#allocation3 + $0xc] sm:$0xf]
      %v1731 = vld [vmem:[#allocation3 + $0x10] sm:$0xf]
      %v1732 = vld [vmem:[#allocation3 + $0x14] sm:$0xf]
      %v1733 = vld [vmem:[#allocation3 + $0x18] sm:$0xf]
      %v1734 = vld [vmem:[#allocation3 + $0x1c] sm:$0xf]
      %v1735 = vld [vmem:[#allocation3 + $0x20] sm:$0xf]
      %v1736 = vld [vmem:[#allocation3 + $0x24] sm:$0xf]
      %v1737 = vld [vmem:[#allocation3 + $0x28] sm:$0xf]
      %v1738 = vld [vmem:[#allocation3 + $0x2c] sm:$0x1]
      %s1739 = scalar_lea.vmem %s3, 192
      %v1740 = vld [vmem:[%s1739] sm:$0xf]
      %v1741 = vld [vmem:[%s1739 + $0x4] sm:$0xf]
      %v1742 = vld [vmem:[%s1739 + $0x8] sm:$0xf]
      %v1743 = vld [vmem:[%s1739 + $0xc] sm:$0xf]
      %v1744 = vld [vmem:[%s1739 + $0x10] sm:$0xf]
      %v1745 = vld [vmem:[%s1739 + $0x14] sm:$0xf]
      %v1746 = vld [vmem:[%s1739 + $0x18] sm:$0xf]
      %v1747 = vld [vmem:[%s1739 + $0x1c] sm:$0xf]
      %v1748 = vld [vmem:[%s1739 + $0x20] sm:$0xf]
      %v1749 = vld [vmem:[%s1739 + $0x24] sm:$0xf]
      %v1750 = vld [vmem:[%s1739 + $0x28] sm:$0xf]
      %v1751 = vld [vmem:[%s1739 + $0x2c] sm:$0xf]
      %v1752 = vld [vmem:[%s1739 + $0x30] sm:$0xf]
      %v1753 = vld [vmem:[%s1739 + $0x34] sm:$0xf]
      %v1754 = vld [vmem:[%s1739 + $0x38] sm:$0xf]
      %v1755 = vld [vmem:[%s1739 + $0x3c] sm:$0xf]
      %v1767 = vunpack.c.l.b16 %v1728
      %v1768 = vunpack.c.l.b16 %v1729
      %v1769 = vunpack.c.l.b16 %v1730
      %v1770 = vunpack.c.l.b16 %v1731
      %v1771 = vunpack.c.l.b16 %v1732
      %v1772 = vunpack.c.l.b16 %v1733
      %v1773 = vunpack.c.l.b16 %v1734
      %v1774 = vunpack.c.l.b16 %v1735
      %v1775 = vunpack.c.l.b16 %v1736
      %v1776 = vunpack.c.l.b16 %v1737
      %v1777 = vunpack.c.l.b16 %v1738
      %v1778 = vpack.c.b16 %v1768, %v1767
      %v1779 = vpack.c.b16 %v1770, %v1769
      %v1780 = vpack.c.b16 %v1772, %v1771
      %v1781 = vpack.c.b16 %v1774, %v1773
      %v1782 = vpack.c.b16 %v1776, %v1775
      %v1783 = vpack.c.b16 %v1777, %v1777
      %v1784 = vrot.slane %v1778, 1
      %v1785 = vrot.slane %v1779, 1
      %v1786 = vsel %vm1619, %v1784, %v1785
      %v1787 = vrot.slane %v1780, 1
      %v1788 = vsel %vm1619, %v1785, %v1787
      %v1789 = vrot.slane %v1781, 1
      %v1790 = vsel %vm1619, %v1787, %v1789
      %v1791 = vrot.slane %v1782, 1
      %v1792 = vsel %vm1619, %v1789, %v1791
      %v1793 = vrot.slane %v1783, 1
      %v1794 = vsel %vm1619, %v1791, %v1793
      %v1816 = vunpack.c.l.b16 %v1740
      %v1817 = vunpack.c.l.b16 %v1741
      %v1818 = vunpack.c.l.b16 %v1742
      %v1819 = vunpack.c.l.b16 %v1743
      %v1820 = vunpack.c.l.b16 %v1744
      %v1821 = vunpack.c.l.b16 %v1745
      %v1822 = vunpack.c.l.b16 %v1746
      %v1823 = vunpack.c.l.b16 %v1747
      %v1824 = vunpack.c.l.b16 %v1748
      %v1825 = vunpack.c.l.b16 %v1749
      %v1826 = vunpack.c.l.b16 %v1750
      %v1827 = vunpack.c.l.b16 %v1751
      %v1828 = vunpack.c.l.b16 %v1752
      %v1829 = vunpack.c.l.b16 %v1753
      %v1830 = vunpack.c.l.b16 %v1754
      %v1831 = vunpack.c.l.b16 %v1755
      %v1832 = vpack.c.b16 %v1817, %v1816
      %v1833 = vpack.c.b16 %v1819, %v1818
      %v1834 = vpack.c.b16 %v1821, %v1820
      %v1835 = vpack.c.b16 %v1823, %v1822
      %v1836 = vpack.c.b16 %v1825, %v1824
      %v1837 = vpack.c.b16 %v1827, %v1826
      %v1838 = vpack.c.b16 %v1829, %v1828
      %v1839 = vpack.c.b16 %v1831, %v1830
      %1848 = vmatpush.bf16.msra.mxu0 %v1839
      %1849 = vmatpush.bf16.msra.mxu0 %v1838
      %1850 = vmatpush.bf16.msra.mxu0 %v1837
      %1851 = vmatpush.bf16.msra.mxu0 %v1836
      %1852 = vmatpush.bf16.msra.mxu0 %v1835
      %1853 = vmatpush.bf16.msra.mxu0 %v1834
      %1854 = vmatpush.bf16.msra.mxu0 %v1833
      %1855 = vmatpush.bf16.msra.mxu0 %v1832
      %1856 = vmatmul.bf16.gmra.mxu0 %v1786
      %v1857 = vpop.f32.mrf.mxu0
      %v1858 = vadd.f32 0.0, %v1857
      %v1859 = vpop.f32.mrf.mxu0
      %v1860 = vadd.f32 0.0, %v1859
      %1861 = vmatmul.bf16.gmra.mxu0 %v1788
      %v1862 = vpop.f32.mrf.mxu0
      %v1863 = vadd.f32 0.0, %v1862
      %v1864 = vpop.f32.mrf.mxu0
      %v1865 = vadd.f32 0.0, %v1864
      %1866 = vmatmul.bf16.gmra.mxu0 %v1790
      %v1867 = vpop.f32.mrf.mxu0
      %v1868 = vadd.f32 0.0, %v1867
      %v1869 = vpop.f32.mrf.mxu0
      %v1870 = vadd.f32 0.0, %v1869
      %1871 = vmatmul.bf16.gmra.mxu0 %v1792
      %v1872 = vpop.f32.mrf.mxu0
      %v1873 = vadd.f32 0.0, %v1872
      %v1874 = vpop.f32.mrf.mxu0
      %v1875 = vadd.f32 0.0, %v1874
      %1876 = vmatmul.bf16.gmra.mxu0 %v1794
      %v1877 = vpop.f32.mrf.mxu0
      %v1878 = vadd.f32 0.0, %v1877
      %v1879 = vpop.f32.mrf.mxu0
      %v1880 = vadd.f32 0.0, %v1879
      %1881 = vdwg.mxu0
      %v1882 = vadd.f32 %v1718, %v1858
      %v1883 = vadd.f32 %v1719, %v1860
      %v1884 = vadd.f32 %v1720, %v1863
      %v1885 = vadd.f32 %v1721, %v1865
      %v1886 = vadd.f32 %v1722, %v1868
      %v1887 = vadd.f32 %v1723, %v1870
      %v1888 = vadd.f32 %v1724, %v1873
      %v1889 = vadd.f32 %v1725, %v1875
      %v1890 = vadd.f32 %v1726, %v1878
      %v1891 = vadd.f32 %v1727, %v1880
      %v1892 = vld [vmem:[#allocation3 + $0x2c] sm:$0x3]
      %s1893 = scalar_lea.vmem %s3, 256
      %v1894 = vld [vmem:[%s1893] sm:$0xf]
      %v1895 = vld [vmem:[%s1893 + $0x4] sm:$0xf]
      %v1896 = vld [vmem:[%s1893 + $0x8] sm:$0xf]
      %v1897 = vld [vmem:[%s1893 + $0xc] sm:$0xf]
      %v1898 = vld [vmem:[%s1893 + $0x10] sm:$0xf]
      %v1899 = vld [vmem:[%s1893 + $0x14] sm:$0xf]
      %v1900 = vld [vmem:[%s1893 + $0x18] sm:$0xf]
      %v1901 = vld [vmem:[%s1893 + $0x1c] sm:$0xf]
      %v1902 = vld [vmem:[%s1893 + $0x20] sm:$0xf]
      %v1903 = vld [vmem:[%s1893 + $0x24] sm:$0xf]
      %v1904 = vld [vmem:[%s1893 + $0x28] sm:$0xf]
      %v1905 = vld [vmem:[%s1893 + $0x2c] sm:$0xf]
      %v1906 = vld [vmem:[%s1893 + $0x30] sm:$0xf]
      %v1907 = vld [vmem:[%s1893 + $0x34] sm:$0xf]
      %v1908 = vld [vmem:[%s1893 + $0x38] sm:$0xf]
      %v1909 = vld [vmem:[%s1893 + $0x3c] sm:$0xf]
      %v1911 = vunpack.c.l.b16 %v1892
      %v1912 = vpack.c.b16 %v1911, %v1911
      %vm1913 = vsmask.f32 6400
      %v1915 = vshrl.u32 %v1778, 16
      %v1917 = vrot.slane %v1915, 1
      %v1918 = vshll.u32 %v1778, 16
      %v1920 = vrot.slane %v1918, 2
      %v1921 = vor.u32 %v1917, %v1920
      %v1923 = vshrl.u32 %v1779, 16
      %v1925 = vrot.slane %v1923, 1
      %v1926 = vshll.u32 %v1779, 16
      %v1928 = vrot.slane %v1926, 2
      %v1929 = vor.u32 %v1925, %v1928
      %v1930 = vsel %vm1913, %v1921, %v1929
      %v1932 = vshrl.u32 %v1780, 16
      %v1934 = vrot.slane %v1932, 1
      %v1935 = vshll.u32 %v1780, 16
      %v1937 = vrot.slane %v1935, 2
      %v1938 = vor.u32 %v1934, %v1937
      %v1939 = vsel %vm1913, %v1929, %v1938
      %v1941 = vshrl.u32 %v1781, 16
      %v1943 = vrot.slane %v1941, 1
      %v1944 = vshll.u32 %v1781, 16
      %v1946 = vrot.slane %v1944, 2
      %v1947 = vor.u32 %v1943, %v1946
      %v1948 = vsel %vm1913, %v1938, %v1947
      %v1950 = vshrl.u32 %v1782, 16
      %v1952 = vrot.slane %v1950, 1
      %v1953 = vshll.u32 %v1782, 16
      %v1955 = vrot.slane %v1953, 2
      %v1956 = vor.u32 %v1952, %v1955
      %v1957 = vsel %vm1913, %v1947, %v1956
      %v1959 = vshrl.u32 %v1912, 16
      %v1961 = vrot.slane %v1959, 1
      %v1962 = vshll.u32 %v1912, 16
      %v1964 = vrot.slane %v1962, 2
      %v1965 = vor.u32 %v1961, %v1964
      %v1966 = vsel %vm1913, %v1956, %v1965
      %v1988 = vunpack.c.l.b16 %v1894
      %v1989 = vunpack.c.l.b16 %v1895
      %v1990 = vunpack.c.l.b16 %v1896
      %v1991 = vunpack.c.l.b16 %v1897
      %v1992 = vunpack.c.l.b16 %v1898
      %v1993 = vunpack.c.l.b16 %v1899
      %v1994 = vunpack.c.l.b16 %v1900
      %v1995 = vunpack.c.l.b16 %v1901
      %v1996 = vunpack.c.l.b16 %v1902
      %v1997 = vunpack.c.l.b16 %v1903
      %v1998 = vunpack.c.l.b16 %v1904
      %v1999 = vunpack.c.l.b16 %v1905
      %v2000 = vunpack.c.l.b16 %v1906
      %v2001 = vunpack.c.l.b16 %v1907
      %v2002 = vunpack.c.l.b16 %v1908
      %v2003 = vunpack.c.l.b16 %v1909
      %v2004 = vpack.c.b16 %v1989, %v1988
      %v2005 = vpack.c.b16 %v1991, %v1990
      %v2006 = vpack.c.b16 %v1993, %v1992
      %v2007 = vpack.c.b16 %v1995, %v1994
      %v2008 = vpack.c.b16 %v1997, %v1996
      %v2009 = vpack.c.b16 %v1999, %v1998
      %v2010 = vpack.c.b16 %v2001, %v2000
      %v2011 = vpack.c.b16 %v2003, %v2002
      %2020 = vmatpush.bf16.msra.mxu0 %v2011
      %2021 = vmatpush.bf16.msra.mxu0 %v2010
      %2022 = vmatpush.bf16.msra.mxu0 %v2009
      %2023 = vmatpush.bf16.msra.mxu0 %v2008
      %2024 = vmatpush.bf16.msra.mxu0 %v2007
      %2025 = vmatpush.bf16.msra.mxu0 %v2006
      %2026 = vmatpush.bf16.msra.mxu0 %v2005
      %2027 = vmatpush.bf16.msra.mxu0 %v2004
      %2028 = vmatmul.bf16.gmra.mxu0 %v1930
      %v2029 = vpop.f32.mrf.mxu0
      %v2030 = vadd.f32 0.0, %v2029
      %v2031 = vpop.f32.mrf.mxu0
      %v2032 = vadd.f32 0.0, %v2031
      %2033 = vmatmul.bf16.gmra.mxu0 %v1939
      %v2034 = vpop.f32.mrf.mxu0
      %v2035 = vadd.f32 0.0, %v2034
      %v2036 = vpop.f32.mrf.mxu0
      %v2037 = vadd.f32 0.0, %v2036
      %2038 = vmatmul.bf16.gmra.mxu0 %v1948
      %v2039 = vpop.f32.mrf.mxu0
      %v2040 = vadd.f32 0.0, %v2039
      %v2041 = vpop.f32.mrf.mxu0
      %v2042 = vadd.f32 0.0, %v2041
      %2043 = vmatmul.bf16.gmra.mxu0 %v1957
      %v2044 = vpop.f32.mrf.mxu0
      %v2045 = vadd.f32 0.0, %v2044
      %v2046 = vpop.f32.mrf.mxu0
      %v2047 = vadd.f32 0.0, %v2046
      %2048 = vmatmul.bf16.gmra.mxu0 %v1966
      %v2049 = vpop.f32.mrf.mxu0
      %v2050 = vadd.f32 0.0, %v2049
      %v2051 = vpop.f32.mrf.mxu0
      %v2052 = vadd.f32 0.0, %v2051
      %2053 = vdwg.mxu0
      %v2054 = vadd.f32 %v1882, %v2030
      %v2055 = vadd.f32 %v1883, %v2032
      %v2056 = vadd.f32 %v1884, %v2035
      %v2057 = vadd.f32 %v1885, %v2037
      %v2058 = vadd.f32 %v1886, %v2040
      %v2059 = vadd.f32 %v1887, %v2042
      %v2060 = vadd.f32 %v1888, %v2045
      %v2061 = vadd.f32 %v1889, %v2047
      %v2062 = vadd.f32 %v1890, %v2050
      %v2063 = vadd.f32 %v1891, %v2052
      %v2064 = vld [vmem:[#allocation3 + $0x4] sm:$0xc]
      %s2065 = scalar_lea.vmem %s3, 320
      %v2066 = vld [vmem:[%s2065] sm:$0xf]
      %v2067 = vld [vmem:[%s2065 + $0x4] sm:$0xf]
      %v2068 = vld [vmem:[%s2065 + $0x8] sm:$0xf]
      %v2069 = vld [vmem:[%s2065 + $0xc] sm:$0xf]
      %v2070 = vld [vmem:[%s2065 + $0x10] sm:$0xf]
      %v2071 = vld [vmem:[%s2065 + $0x14] sm:$0xf]
      %v2072 = vld [vmem:[%s2065 + $0x18] sm:$0xf]
      %v2073 = vld [vmem:[%s2065 + $0x1c] sm:$0xf]
      %v2074 = vld [vmem:[%s2065 + $0x20] sm:$0xf]
      %v2075 = vld [vmem:[%s2065 + $0x24] sm:$0xf]
      %v2076 = vld [vmem:[%s2065 + $0x28] sm:$0xf]
      %v2077 = vld [vmem:[%s2065 + $0x2c] sm:$0xf]
      %v2078 = vld [vmem:[%s2065 + $0x30] sm:$0xf]
      %v2079 = vld [vmem:[%s2065 + $0x34] sm:$0xf]
      %v2080 = vld [vmem:[%s2065 + $0x38] sm:$0xf]
      %v2081 = vld [vmem:[%s2065 + $0x3c] sm:$0xf]
      %v2083 = vunpack.c.l.b16 %v2064
      %v2084 = vpack.c.b16 %v1768, %v2083
      %vm2085 = vcmask 1045504
      %v2086 = vrot.slane %v2084, 2
      %v2087 = vrot.slane %v1779, 2
      %v2088 = vsel %vm2085, %v2086, %v2087
      %v2089 = vrot.slane %v1780, 2
      %v2090 = vsel %vm2085, %v2087, %v2089
      %v2091 = vrot.slane %v1781, 2
      %v2092 = vsel %vm2085, %v2089, %v2091
      %v2093 = vrot.slane %v1782, 2
      %v2094 = vsel %vm2085, %v2091, %v2093
      %v2095 = vrot.slane %v1912, 2
      %v2096 = vsel %vm2085, %v2093, %v2095
      %v2118 = vunpack.c.l.b16 %v2066
      %v2119 = vunpack.c.l.b16 %v2067
      %v2120 = vunpack.c.l.b16 %v2068
      %v2121 = vunpack.c.l.b16 %v2069
      %v2122 = vunpack.c.l.b16 %v2070
      %v2123 = vunpack.c.l.b16 %v2071
      %v2124 = vunpack.c.l.b16 %v2072
      %v2125 = vunpack.c.l.b16 %v2073
      %v2126 = vunpack.c.l.b16 %v2074
      %v2127 = vunpack.c.l.b16 %v2075
      %v2128 = vunpack.c.l.b16 %v2076
      %v2129 = vunpack.c.l.b16 %v2077
      %v2130 = vunpack.c.l.b16 %v2078
      %v2131 = vunpack.c.l.b16 %v2079
      %v2132 = vunpack.c.l.b16 %v2080
      %v2133 = vunpack.c.l.b16 %v2081
      %v2134 = vpack.c.b16 %v2119, %v2118
      %v2135 = vpack.c.b16 %v2121, %v2120
      %v2136 = vpack.c.b16 %v2123, %v2122
      %v2137 = vpack.c.b16 %v2125, %v2124
      %v2138 = vpack.c.b16 %v2127, %v2126
      %v2139 = vpack.c.b16 %v2129, %v2128
      %v2140 = vpack.c.b16 %v2131, %v2130
      %v2141 = vpack.c.b16 %v2133, %v2132
      %2150 = vmatpush.bf16.msra.mxu0 %v2141
      %2151 = vmatpush.bf16.msra.mxu0 %v2140
      %2152 = vmatpush.bf16.msra.mxu0 %v2139
      %2153 = vmatpush.bf16.msra.mxu0 %v2138
      %2154 = vmatpush.bf16.msra.mxu0 %v2137
      %2155 = vmatpush.bf16.msra.mxu0 %v2136
      %2156 = vmatpush.bf16.msra.mxu0 %v2135
      %2157 = vmatpush.bf16.msra.mxu0 %v2134
      %2158 = vmatmul.bf16.gmra.mxu0 %v2088
      %v2159 = vpop.f32.mrf.mxu0
      %v2160 = vadd.f32 0.0, %v2159
      %v2161 = vpop.f32.mrf.mxu0
      %v2162 = vadd.f32 0.0, %v2161
      %2163 = vmatmul.bf16.gmra.mxu0 %v2090
      %v2164 = vpop.f32.mrf.mxu0
      %v2165 = vadd.f32 0.0, %v2164
      %v2166 = vpop.f32.mrf.mxu0
      %v2167 = vadd.f32 0.0, %v2166
      %2168 = vmatmul.bf16.gmra.mxu0 %v2092
      %v2169 = vpop.f32.mrf.mxu0
      %v2170 = vadd.f32 0.0, %v2169
      %v2171 = vpop.f32.mrf.mxu0
      %v2172 = vadd.f32 0.0, %v2171
      %2173 = vmatmul.bf16.gmra.mxu0 %v2094
      %v2174 = vpop.f32.mrf.mxu0
      %v2175 = vadd.f32 0.0, %v2174
      %v2176 = vpop.f32.mrf.mxu0
      %v2177 = vadd.f32 0.0, %v2176
      %2178 = vmatmul.bf16.gmra.mxu0 %v2096
      %v2179 = vpop.f32.mrf.mxu0
      %v2180 = vadd.f32 0.0, %v2179
      %v2181 = vpop.f32.mrf.mxu0
      %v2182 = vadd.f32 0.0, %v2181
      %2183 = vdwg.mxu0
      %v2184 = vadd.f32 %v2054, %v2160
      %v2185 = vadd.f32 %v2055, %v2162
      %v2186 = vadd.f32 %v2056, %v2165
      %v2187 = vadd.f32 %v2057, %v2167
      %v2188 = vadd.f32 %v2058, %v2170
      %v2189 = vadd.f32 %v2059, %v2172
      %v2190 = vadd.f32 %v2060, %v2175
      %v2191 = vadd.f32 %v2061, %v2177
      %v2192 = vadd.f32 %v2062, %v2180
      %v2193 = vadd.f32 %v2063, %v2182
      %v2194 = vld [vmem:[#allocation3 + $0x8] sm:$0xc]
      %v2195 = vld [vmem:[#allocation3 + $0xc] sm:$0xf]
      %v2196 = vld [vmem:[#allocation3 + $0x10] sm:$0xf]
      %v2197 = vld [vmem:[#allocation3 + $0x14] sm:$0xf]
      %v2198 = vld [vmem:[#allocation3 + $0x18] sm:$0xf]
      %v2199 = vld [vmem:[#allocation3 + $0x1c] sm:$0xf]
      %v2200 = vld [vmem:[#allocation3 + $0x20] sm:$0xf]
      %v2201 = vld [vmem:[#allocation3 + $0x24] sm:$0xf]
      %v2202 = vld [vmem:[#allocation3 + $0x28] sm:$0xf]
      %v2203 = vld [vmem:[#allocation3 + $0x2c] sm:$0xf]
      %v2204 = vld [vmem:[#allocation3 + $0x30] sm:$0x3]
      %s2205 = scalar_lea.vmem %s3, 384
      %v2206 = vld [vmem:[%s2205] sm:$0xf]
      %v2207 = vld [vmem:[%s2205 + $0x4] sm:$0xf]
      %v2208 = vld [vmem:[%s2205 + $0x8] sm:$0xf]
      %v2209 = vld [vmem:[%s2205 + $0xc] sm:$0xf]
      %v2210 = vld [vmem:[%s2205 + $0x10] sm:$0xf]
      %v2211 = vld [vmem:[%s2205 + $0x14] sm:$0xf]
      %v2212 = vld [vmem:[%s2205 + $0x18] sm:$0xf]
      %v2213 = vld [vmem:[%s2205 + $0x1c] sm:$0xf]
      %v2214 = vld [vmem:[%s2205 + $0x20] sm:$0xf]
      %v2215 = vld [vmem:[%s2205 + $0x24] sm:$0xf]
      %v2216 = vld [vmem:[%s2205 + $0x28] sm:$0xf]
      %v2217 = vld [vmem:[%s2205 + $0x2c] sm:$0xf]
      %v2218 = vld [vmem:[%s2205 + $0x30] sm:$0xf]
      %v2219 = vld [vmem:[%s2205 + $0x34] sm:$0xf]
      %v2220 = vld [vmem:[%s2205 + $0x38] sm:$0xf]
      %v2221 = vld [vmem:[%s2205 + $0x3c] sm:$0xf]
      %v2233 = vunpack.c.l.b16 %v2194
      %v2234 = vunpack.c.l.b16 %v2195
      %v2235 = vunpack.c.l.b16 %v2196
      %v2236 = vunpack.c.l.b16 %v2197
      %v2237 = vunpack.c.l.b16 %v2198
      %v2238 = vunpack.c.l.b16 %v2199
      %v2239 = vunpack.c.l.b16 %v2200
      %v2240 = vunpack.c.l.b16 %v2201
      %v2241 = vunpack.c.l.b16 %v2202
      %v2242 = vunpack.c.l.b16 %v2203
      %v2243 = vunpack.c.l.b16 %v2204
      %v2244 = vpack.c.b16 %v2234, %v2233
      %v2245 = vpack.c.b16 %v2236, %v2235
      %v2246 = vpack.c.b16 %v2238, %v2237
      %v2247 = vpack.c.b16 %v2240, %v2239
      %v2248 = vpack.c.b16 %v2242, %v2241
      %v2249 = vpack.c.b16 %v2243, %v2243
      %v2250 = vrot.slane %v2244, 2
      %v2251 = vrot.slane %v2245, 2
      %v2252 = vsel %vm2085, %v2250, %v2251
      %v2253 = vrot.slane %v2246, 2
      %v2254 = vsel %vm2085, %v2251, %v2253
      %v2255 = vrot.slane %v2247, 2
      %v2256 = vsel %vm2085, %v2253, %v2255
      %v2257 = vrot.slane %v2248, 2
      %v2258 = vsel %vm2085, %v2255, %v2257
      %v2259 = vrot.slane %v2249, 2
      %v2260 = vsel %vm2085, %v2257, %v2259
      %v2282 = vunpack.c.l.b16 %v2206
      %v2283 = vunpack.c.l.b16 %v2207
      %v2284 = vunpack.c.l.b16 %v2208
      %v2285 = vunpack.c.l.b16 %v2209
      %v2286 = vunpack.c.l.b16 %v2210
      %v2287 = vunpack.c.l.b16 %v2211
      %v2288 = vunpack.c.l.b16 %v2212
      %v2289 = vunpack.c.l.b16 %v2213
      %v2290 = vunpack.c.l.b16 %v2214
      %v2291 = vunpack.c.l.b16 %v2215
      %v2292 = vunpack.c.l.b16 %v2216
      %v2293 = vunpack.c.l.b16 %v2217
      %v2294 = vunpack.c.l.b16 %v2218
      %v2295 = vunpack.c.l.b16 %v2219
      %v2296 = vunpack.c.l.b16 %v2220
      %v2297 = vunpack.c.l.b16 %v2221
      %v2298 = vpack.c.b16 %v2283, %v2282
      %v2299 = vpack.c.b16 %v2285, %v2284
      %v2300 = vpack.c.b16 %v2287, %v2286
      %v2301 = vpack.c.b16 %v2289, %v2288
      %v2302 = vpack.c.b16 %v2291, %v2290
      %v2303 = vpack.c.b16 %v2293, %v2292
      %v2304 = vpack.c.b16 %v2295, %v2294
      %v2305 = vpack.c.b16 %v2297, %v2296
      %2314 = vmatpush.bf16.msra.mxu0 %v2305
      %2315 = vmatpush.bf16.msra.mxu0 %v2304
      %2316 = vmatpush.bf16.msra.mxu0 %v2303
      %2317 = vmatpush.bf16.msra.mxu0 %v2302
      %2318 = vmatpush.bf16.msra.mxu0 %v2301
      %2319 = vmatpush.bf16.msra.mxu0 %v2300
      %2320 = vmatpush.bf16.msra.mxu0 %v2299
      %2321 = vmatpush.bf16.msra.mxu0 %v2298
      %2322 = vmatmul.bf16.gmra.mxu0 %v2252
      %v2323 = vpop.f32.mrf.mxu0
      %v2324 = vadd.f32 0.0, %v2323
      %v2325 = vpop.f32.mrf.mxu0
      %v2326 = vadd.f32 0.0, %v2325
      %2327 = vmatmul.bf16.gmra.mxu0 %v2254
      %v2328 = vpop.f32.mrf.mxu0
      %v2329 = vadd.f32 0.0, %v2328
      %v2330 = vpop.f32.mrf.mxu0
      %v2331 = vadd.f32 0.0, %v2330
      %2332 = vmatmul.bf16.gmra.mxu0 %v2256
      %v2333 = vpop.f32.mrf.mxu0
      %v2334 = vadd.f32 0.0, %v2333
      %v2335 = vpop.f32.mrf.mxu0
      %v2336 = vadd.f32 0.0, %v2335
      %2337 = vmatmul.bf16.gmra.mxu0 %v2258
      %v2338 = vpop.f32.mrf.mxu0
      %v2339 = vadd.f32 0.0, %v2338
      %v2340 = vpop.f32.mrf.mxu0
      %v2341 = vadd.f32 0.0, %v2340
      %2342 = vmatmul.bf16.gmra.mxu0 %v2260
      %v2343 = vpop.f32.mrf.mxu0
      %v2344 = vadd.f32 0.0, %v2343
      %v2345 = vpop.f32.mrf.mxu0
      %v2346 = vadd.f32 0.0, %v2345
      %2347 = vdwg.mxu0
      %v2348 = vadd.f32 %v2184, %v2324
      %v2349 = vadd.f32 %v2185, %v2326
      %v2350 = vadd.f32 %v2186, %v2329
      %v2351 = vadd.f32 %v2187, %v2331
      %v2352 = vadd.f32 %v2188, %v2334
      %v2353 = vadd.f32 %v2189, %v2336
      %v2354 = vadd.f32 %v2190, %v2339
      %v2355 = vadd.f32 %v2191, %v2341
      %v2356 = vadd.f32 %v2192, %v2344
      %v2357 = vadd.f32 %v2193, %v2346
      %v2358 = vld [vmem:[#allocation3 + $0x30] sm:$0x7]
      %s2359 = scalar_lea.vmem %s3, 448
      %v2360 = vld [vmem:[%s2359] sm:$0xf]
      %v2361 = vld [vmem:[%s2359 + $0x4] sm:$0xf]
      %v2362 = vld [vmem:[%s2359 + $0x8] sm:$0xf]
      %v2363 = vld [vmem:[%s2359 + $0xc] sm:$0xf]
      %v2364 = vld [vmem:[%s2359 + $0x10] sm:$0xf]
      %v2365 = vld [vmem:[%s2359 + $0x14] sm:$0xf]
      %v2366 = vld [vmem:[%s2359 + $0x18] sm:$0xf]
      %v2367 = vld [vmem:[%s2359 + $0x1c] sm:$0xf]
      %v2368 = vld [vmem:[%s2359 + $0x20] sm:$0xf]
      %v2369 = vld [vmem:[%s2359 + $0x24] sm:$0xf]
      %v2370 = vld [vmem:[%s2359 + $0x28] sm:$0xf]
      %v2371 = vld [vmem:[%s2359 + $0x2c] sm:$0xf]
      %v2372 = vld [vmem:[%s2359 + $0x30] sm:$0xf]
      %v2373 = vld [vmem:[%s2359 + $0x34] sm:$0xf]
      %v2374 = vld [vmem:[%s2359 + $0x38] sm:$0xf]
      %v2375 = vld [vmem:[%s2359 + $0x3c] sm:$0xf]
      %v2377 = vunpack.c.l.b16 %v2358
      %v2378 = vpack.c.b16 %v2377, %v2377
      %vm2379 = vsmask.f32 5376
      %v2381 = vshrl.u32 %v2244, 16
      %v2383 = vrot.slane %v2381, 2
      %v2384 = vshll.u32 %v2244, 16
      %v2386 = vrot.slane %v2384, 3
      %v2387 = vor.u32 %v2383, %v2386
      %v2389 = vshrl.u32 %v2245, 16
      %v2391 = vrot.slane %v2389, 2
      %v2392 = vshll.u32 %v2245, 16
      %v2394 = vrot.slane %v2392, 3
      %v2395 = vor.u32 %v2391, %v2394
      %v2396 = vsel %vm2379, %v2387, %v2395
      %v2398 = vshrl.u32 %v2246, 16
      %v2400 = vrot.slane %v2398, 2
      %v2401 = vshll.u32 %v2246, 16
      %v2403 = vrot.slane %v2401, 3
      %v2404 = vor.u32 %v2400, %v2403
      %v2405 = vsel %vm2379, %v2395, %v2404
      %v2407 = vshrl.u32 %v2247, 16
      %v2409 = vrot.slane %v2407, 2
      %v2410 = vshll.u32 %v2247, 16
      %v2412 = vrot.slane %v2410, 3
      %v2413 = vor.u32 %v2409, %v2412
      %v2414 = vsel %vm2379, %v2404, %v2413
      %v2416 = vshrl.u32 %v2248, 16
      %v2418 = vrot.slane %v2416, 2
      %v2419 = vshll.u32 %v2248, 16
      %v2421 = vrot.slane %v2419, 3
      %v2422 = vor.u32 %v2418, %v2421
      %v2423 = vsel %vm2379, %v2413, %v2422
      %v2425 = vshrl.u32 %v2378, 16
      %v2427 = vrot.slane %v2425, 2
      %v2428 = vshll.u32 %v2378, 16
      %v2430 = vrot.slane %v2428, 3
      %v2431 = vor.u32 %v2427, %v2430
      %v2432 = vsel %vm2379, %v2422, %v2431
      %v2454 = vunpack.c.l.b16 %v2360
      %v2455 = vunpack.c.l.b16 %v2361
      %v2456 = vunpack.c.l.b16 %v2362
      %v2457 = vunpack.c.l.b16 %v2363
      %v2458 = vunpack.c.l.b16 %v2364
      %v2459 = vunpack.c.l.b16 %v2365
      %v2460 = vunpack.c.l.b16 %v2366
      %v2461 = vunpack.c.l.b16 %v2367
      %v2462 = vunpack.c.l.b16 %v2368
      %v2463 = vunpack.c.l.b16 %v2369
      %v2464 = vunpack.c.l.b16 %v2370
      %v2465 = vunpack.c.l.b16 %v2371
      %v2466 = vunpack.c.l.b16 %v2372
      %v2467 = vunpack.c.l.b16 %v2373
      %v2468 = vunpack.c.l.b16 %v2374
      %v2469 = vunpack.c.l.b16 %v2375
      %v2470 = vpack.c.b16 %v2455, %v2454
      %v2471 = vpack.c.b16 %v2457, %v2456
      %v2472 = vpack.c.b16 %v2459, %v2458
      %v2473 = vpack.c.b16 %v2461, %v2460
      %v2474 = vpack.c.b16 %v2463, %v2462
      %v2475 = vpack.c.b16 %v2465, %v2464
      %v2476 = vpack.c.b16 %v2467, %v2466
      %v2477 = vpack.c.b16 %v2469, %v2468
      %2486 = vmatpush.bf16.msra.mxu0 %v2477
      %2487 = vmatpush.bf16.msra.mxu0 %v2476
      %2488 = vmatpush.bf16.msra.mxu0 %v2475
      %2489 = vmatpush.bf16.msra.mxu0 %v2474
      %2490 = vmatpush.bf16.msra.mxu0 %v2473
      %2491 = vmatpush.bf16.msra.mxu0 %v2472
      %2492 = vmatpush.bf16.msra.mxu0 %v2471
      %2493 = vmatpush.bf16.msra.mxu0 %v2470
      %2494 = vmatmul.bf16.gmra.mxu0 %v2396
      %v2495 = vpop.f32.mrf.mxu0
      %v2496 = vadd.f32 0.0, %v2495
      %v2497 = vpop.f32.mrf.mxu0
      %v2498 = vadd.f32 0.0, %v2497
      %2499 = vmatmul.bf16.gmra.mxu0 %v2405
      %v2500 = vpop.f32.mrf.mxu0
      %v2501 = vadd.f32 0.0, %v2500
      %v2502 = vpop.f32.mrf.mxu0
      %v2503 = vadd.f32 0.0, %v2502
      %2504 = vmatmul.bf16.gmra.mxu0 %v2414
      %v2505 = vpop.f32.mrf.mxu0
      %v2506 = vadd.f32 0.0, %v2505
      %v2507 = vpop.f32.mrf.mxu0
      %v2508 = vadd.f32 0.0, %v2507
      %2509 = vmatmul.bf16.gmra.mxu0 %v2423
      %v2510 = vpop.f32.mrf.mxu0
      %v2511 = vadd.f32 0.0, %v2510
      %v2512 = vpop.f32.mrf.mxu0
      %v2513 = vadd.f32 0.0, %v2512
      %2514 = vmatmul.bf16.gmra.mxu0 %v2432
      %v2515 = vpop.f32.mrf.mxu0
      %v2516 = vadd.f32 0.0, %v2515
      %v2517 = vpop.f32.mrf.mxu0
      %v2518 = vadd.f32 0.0, %v2517
      %2519 = vdwg.mxu0
      %v2520 = vadd.f32 %v2348, %v2496
      %v2521 = vadd.f32 %v2349, %v2498
      %v2522 = vadd.f32 %v2350, %v2501
      %v2523 = vadd.f32 %v2351, %v2503
      %v2524 = vadd.f32 %v2352, %v2506
      %v2525 = vadd.f32 %v2353, %v2508
      %v2526 = vadd.f32 %v2354, %v2511
      %v2527 = vadd.f32 %v2355, %v2513
      %v2528 = vadd.f32 %v2356, %v2516
      %v2529 = vadd.f32 %v2357, %v2518
      %v2530 = vld [vmem:[#allocation3 + $0x8] sm:$0x8]
      %s2531 = scalar_lea.vmem %s3, 512
      %v2532 = vld [vmem:[%s2531] sm:$0xf]
      %v2533 = vld [vmem:[%s2531 + $0x4] sm:$0xf]
      %v2534 = vld [vmem:[%s2531 + $0x8] sm:$0xf]
      %v2535 = vld [vmem:[%s2531 + $0xc] sm:$0xf]
      %v2536 = vld [vmem:[%s2531 + $0x10] sm:$0xf]
      %v2537 = vld [vmem:[%s2531 + $0x14] sm:$0xf]
      %v2538 = vld [vmem:[%s2531 + $0x18] sm:$0xf]
      %v2539 = vld [vmem:[%s2531 + $0x1c] sm:$0xf]
      %v2540 = vld [vmem:[%s2531 + $0x20] sm:$0xf]
      %v2541 = vld [vmem:[%s2531 + $0x24] sm:$0xf]
      %v2542 = vld [vmem:[%s2531 + $0x28] sm:$0xf]
      %v2543 = vld [vmem:[%s2531 + $0x2c] sm:$0xf]
      %v2544 = vld [vmem:[%s2531 + $0x30] sm:$0xf]
      %v2545 = vld [vmem:[%s2531 + $0x34] sm:$0xf]
      %v2546 = vld [vmem:[%s2531 + $0x38] sm:$0xf]
      %v2547 = vld [vmem:[%s2531 + $0x3c] sm:$0xf]
      %v2549 = vunpack.c.l.b16 %v2530
      %v2550 = vpack.c.b16 %v2234, %v2549
      %vm2551 = vcmask 1044480
      %v2552 = vrot.slane %v2550, 3
      %v2553 = vrot.slane %v2245, 3
      %v2554 = vsel %vm2551, %v2552, %v2553
      %v2555 = vrot.slane %v2246, 3
      %v2556 = vsel %vm2551, %v2553, %v2555
      %v2557 = vrot.slane %v2247, 3
      %v2558 = vsel %vm2551, %v2555, %v2557
      %v2559 = vrot.slane %v2248, 3
      %v2560 = vsel %vm2551, %v2557, %v2559
      %v2561 = vrot.slane %v2378, 3
      %v2562 = vsel %vm2551, %v2559, %v2561
      %v2584 = vunpack.c.l.b16 %v2532
      %v2585 = vunpack.c.l.b16 %v2533
      %v2586 = vunpack.c.l.b16 %v2534
      %v2587 = vunpack.c.l.b16 %v2535
      %v2588 = vunpack.c.l.b16 %v2536
      %v2589 = vunpack.c.l.b16 %v2537
      %v2590 = vunpack.c.l.b16 %v2538
      %v2591 = vunpack.c.l.b16 %v2539
      %v2592 = vunpack.c.l.b16 %v2540
      %v2593 = vunpack.c.l.b16 %v2541
      %v2594 = vunpack.c.l.b16 %v2542
      %v2595 = vunpack.c.l.b16 %v2543
      %v2596 = vunpack.c.l.b16 %v2544
      %v2597 = vunpack.c.l.b16 %v2545
      %v2598 = vunpack.c.l.b16 %v2546
      %v2599 = vunpack.c.l.b16 %v2547
      %v2600 = vpack.c.b16 %v2585, %v2584
      %v2601 = vpack.c.b16 %v2587, %v2586
      %v2602 = vpack.c.b16 %v2589, %v2588
      %v2603 = vpack.c.b16 %v2591, %v2590
      %v2604 = vpack.c.b16 %v2593, %v2592
      %v2605 = vpack.c.b16 %v2595, %v2594
      %v2606 = vpack.c.b16 %v2597, %v2596
      %v2607 = vpack.c.b16 %v2599, %v2598
      %2616 = vmatpush.bf16.msra.mxu0 %v2607
      %2617 = vmatpush.bf16.msra.mxu0 %v2606
      %2618 = vmatpush.bf16.msra.mxu0 %v2605
      %2619 = vmatpush.bf16.msra.mxu0 %v2604
      %2620 = vmatpush.bf16.msra.mxu0 %v2603
      %2621 = vmatpush.bf16.msra.mxu0 %v2602
      %2622 = vmatpush.bf16.msra.mxu0 %v2601
      %2623 = vmatpush.bf16.msra.mxu0 %v2600
      %2624 = vmatmul.bf16.gmra.mxu0 %v2554
      %v2625 = vpop.f32.mrf.mxu0
      %v2626 = vadd.f32 0.0, %v2625
      %v2627 = vpop.f32.mrf.mxu0
      %v2628 = vadd.f32 0.0, %v2627
      %2629 = vmatmul.bf16.gmra.mxu0 %v2556
      %v2630 = vpop.f32.mrf.mxu0
      %v2631 = vadd.f32 0.0, %v2630
      %v2632 = vpop.f32.mrf.mxu0
      %v2633 = vadd.f32 0.0, %v2632
      %2634 = vmatmul.bf16.gmra.mxu0 %v2558
      %v2635 = vpop.f32.mrf.mxu0
      %v2636 = vadd.f32 0.0, %v2635
      %v2637 = vpop.f32.mrf.mxu0
      %v2638 = vadd.f32 0.0, %v2637
      %2639 = vmatmul.bf16.gmra.mxu0 %v2560
      %v2640 = vpop.f32.mrf.mxu0
      %v2641 = vadd.f32 0.0, %v2640
      %v2642 = vpop.f32.mrf.mxu0
      %v2643 = vadd.f32 0.0, %v2642
      %2644 = vmatmul.bf16.gmra.mxu0 %v2562
      %v2645 = vpop.f32.mrf.mxu0
      %v2646 = vadd.f32 0.0, %v2645
      %v2647 = vpop.f32.mrf.mxu0
      %v2648 = vadd.f32 0.0, %v2647
      %2649 = vdwg.mxu0
      %v2650 = vadd.f32 %v2520, %v2626
      %v2651 = vadd.f32 %v2521, %v2628
      %v2652 = vadd.f32 %v2522, %v2631
      %v2653 = vadd.f32 %v2523, %v2633
      %v2654 = vadd.f32 %v2524, %v2636
      %v2655 = vadd.f32 %v2525, %v2638
      %v2656 = vadd.f32 %v2526, %v2641
      %v2657 = vadd.f32 %v2527, %v2643
      %v2658 = vadd.f32 %v2528, %v2646
      %v2659 = vadd.f32 %v2529, %v2648
      %v2660 = vld [vmem:[%s4] sm:$0x1]
      %v2662 = vperm.slane %v2660, 0
      %v2664 = vadd.f32 %v2650, %v2662
      %v2665 = vadd.f32 %v2651, %v2662
      %v2666 = vadd.f32 %v2652, %v2662
      %v2667 = vadd.f32 %v2653, %v2662
      %v2668 = vadd.f32 %v2654, %v2662
      %v2669 = vadd.f32 %v2655, %v2662
      %v2670 = vadd.f32 %v2656, %v2662
      %v2671 = vadd.f32 %v2657, %v2662
      %v2672 = vadd.f32 %v2658, %v2662
      %v2673 = vadd.f32 %v2659, %v2662
      %v2674 = vmax.f32 %v2664, 0.0
      %v2675 = vmax.f32 %v2665, 0.0
      %v2676 = vmax.f32 %v2666, 0.0
      %v2677 = vmax.f32 %v2667, 0.0
      %v2678 = vmax.f32 %v2668, 0.0
      %v2679 = vmax.f32 %v2669, 0.0
      %v2680 = vmax.f32 %v2670, 0.0
      %v2681 = vmax.f32 %v2671, 0.0
      %v2682 = vmax.f32 %v2672, 0.0
      %v2683 = vmax.f32 %v2673, 0.0
      %v2684 = vpack.c.bf16 %v2675, %v2674
      %v2685 = vpack.c.bf16 %v2677, %v2676
      %v2686 = vpack.c.bf16 %v2679, %v2678
      %v2687 = vpack.c.bf16 %v2681, %v2680
      %v2688 = vpack.c.bf16 %v2683, %v2682
      %v2689 = vld [vmem:[%s8] sm:$0xf]
      %v2690 = vld [vmem:[%s8 + $0x4] sm:$0xf]
      %v2691 = vld [vmem:[%s8 + $0x8] sm:$0xf]
      %v2692 = vld [vmem:[%s8 + $0xc] sm:$0xf]
      %v2693 = vld [vmem:[%s8 + $0x10] sm:$0xf]
      %v2694 = vld [vmem:[%s8 + $0x14] sm:$0xf]
      %v2695 = vld [vmem:[%s8 + $0x18] sm:$0xf]
      %v2696 = vld [vmem:[%s8 + $0x1c] sm:$0xf]
      %v2697 = vld [vmem:[%s8 + $0x20] sm:$0xf]
      %v2698 = vld [vmem:[%s8 + $0x24] sm:$0xf]
      %v2699 = vld [vmem:[%s8 + $0x28] sm:$0xf]
      %v2700 = vld [vmem:[%s8 + $0x2c] sm:$0xf]
      %v2701 = vld [vmem:[%s8 + $0x30] sm:$0xf]
      %v2702 = vld [vmem:[%s8 + $0x34] sm:$0xf]
      %v2703 = vld [vmem:[%s8 + $0x38] sm:$0xf]
      %v2704 = vld [vmem:[%s8 + $0x3c] sm:$0xf]
      %v2721 = vunpack.c.l.b16 %v2689
      %v2722 = vunpack.c.l.b16 %v2690
      %v2723 = vunpack.c.l.b16 %v2691
      %v2724 = vunpack.c.l.b16 %v2692
      %v2725 = vunpack.c.l.b16 %v2693
      %v2726 = vunpack.c.l.b16 %v2694
      %v2727 = vunpack.c.l.b16 %v2695
      %v2728 = vunpack.c.l.b16 %v2696
      %v2729 = vunpack.c.l.b16 %v2697
      %v2730 = vunpack.c.l.b16 %v2698
      %v2731 = vunpack.c.l.b16 %v2699
      %v2732 = vunpack.c.l.b16 %v2700
      %v2733 = vunpack.c.l.b16 %v2701
      %v2734 = vunpack.c.l.b16 %v2702
      %v2735 = vunpack.c.l.b16 %v2703
      %v2736 = vunpack.c.l.b16 %v2704
      %v2737 = vpack.c.b16 %v2722, %v2721
      %v2738 = vpack.c.b16 %v2724, %v2723
      %v2739 = vpack.c.b16 %v2726, %v2725
      %v2740 = vpack.c.b16 %v2728, %v2727
      %v2741 = vpack.c.b16 %v2730, %v2729
      %v2742 = vpack.c.b16 %v2732, %v2731
      %v2743 = vpack.c.b16 %v2734, %v2733
      %v2744 = vpack.c.b16 %v2736, %v2735
      %2753 = vmatpush.bf16.msra.mxu0 %v2744
      %2754 = vmatpush.bf16.msra.mxu0 %v2743
      %2755 = vmatpush.bf16.msra.mxu0 %v2742
      %2756 = vmatpush.bf16.msra.mxu0 %v2741
      %2757 = vmatpush.bf16.msra.mxu0 %v2740
      %2758 = vmatpush.bf16.msra.mxu0 %v2739
      %2759 = vmatpush.bf16.msra.mxu0 %v2738
      %2760 = vmatpush.bf16.msra.mxu0 %v2737
      %2761 = vmatmul.bf16.gmra.mxu0 %v2684
      %v2762 = vpop.f32.mrf.mxu0
      %v2763 = vadd.f32 0.0, %v2762
      %v2764 = vpop.f32.mrf.mxu0
      %v2765 = vadd.f32 0.0, %v2764
      %2766 = vmatmul.bf16.gmra.mxu0 %v2685
      %v2767 = vpop.f32.mrf.mxu0
      %v2768 = vadd.f32 0.0, %v2767
      %v2769 = vpop.f32.mrf.mxu0
      %v2770 = vadd.f32 0.0, %v2769
      %2771 = vmatmul.bf16.gmra.mxu0 %v2686
      %v2772 = vpop.f32.mrf.mxu0
      %v2773 = vadd.f32 0.0, %v2772
      %v2774 = vpop.f32.mrf.mxu0
      %v2775 = vadd.f32 0.0, %v2774
      %2776 = vmatmul.bf16.gmra.mxu0 %v2687
      %v2777 = vpop.f32.mrf.mxu0
      %v2778 = vadd.f32 0.0, %v2777
      %v2779 = vpop.f32.mrf.mxu0
      %v2780 = vadd.f32 0.0, %v2779
      %2781 = vmatmul.bf16.gmra.mxu0 %v2688
      %v2782 = vpop.f32.mrf.mxu0
      %v2783 = vadd.f32 0.0, %v2782
      %v2784 = vpop.f32.mrf.mxu0
      %v2785 = vadd.f32 0.0, %v2784
      %2786 = vdwg.mxu0
      %v2798 = vunpack.c.l.b16 %v1272
      %v2799 = vunpack.c.l.b16 %v1273
      %v2800 = vunpack.c.l.b16 %v1274
      %v2801 = vunpack.c.l.b16 %v1275
      %v2802 = vunpack.c.l.b16 %v1276
      %v2803 = vunpack.c.l.b16 %v1277
      %v2804 = vunpack.c.l.b16 %v1278
      %v2805 = vunpack.c.l.b16 %v1279
      %v2806 = vunpack.c.l.b16 %v1280
      %v2807 = vunpack.c.l.b16 %v1281
      %v2808 = vunpack.c.l.b16 %v1282
      %v2809 = vpack.c.b16 %v2799, %v2798
      %v2810 = vpack.c.b16 %v2801, %v2800
      %v2811 = vpack.c.b16 %v2803, %v2802
      %v2812 = vpack.c.b16 %v2805, %v2804
      %v2813 = vpack.c.b16 %v2807, %v2806
      %v2814 = vpack.c.b16 %v2808, %v2808
      %v2816 = vshrl.u32 %v2809, 16
      %v2818 = vrot.slane %v2816, 1
      %v2819 = vshll.u32 %v2809, 16
      %v2821 = vrot.slane %v2819, 2
      %v2822 = vor.u32 %v2818, %v2821
      %v2824 = vshrl.u32 %v2810, 16
      %v2826 = vrot.slane %v2824, 1
      %v2827 = vshll.u32 %v2810, 16
      %v2829 = vrot.slane %v2827, 2
      %v2830 = vor.u32 %v2826, %v2829
      %v2831 = vsel %vm1913, %v2822, %v2830
      %v2833 = vshrl.u32 %v2811, 16
      %v2835 = vrot.slane %v2833, 1
      %v2836 = vshll.u32 %v2811, 16
      %v2838 = vrot.slane %v2836, 2
      %v2839 = vor.u32 %v2835, %v2838
      %v2840 = vsel %vm1913, %v2830, %v2839
      %v2842 = vshrl.u32 %v2812, 16
      %v2844 = vrot.slane %v2842, 1
      %v2845 = vshll.u32 %v2812, 16
      %v2847 = vrot.slane %v2845, 2
      %v2848 = vor.u32 %v2844, %v2847
      %v2849 = vsel %vm1913, %v2839, %v2848
      %v2851 = vshrl.u32 %v2813, 16
      %v2853 = vrot.slane %v2851, 1
      %v2854 = vshll.u32 %v2813, 16
      %v2856 = vrot.slane %v2854, 2
      %v2857 = vor.u32 %v2853, %v2856
      %v2858 = vsel %vm1913, %v2848, %v2857
      %v2860 = vshrl.u32 %v2814, 16
      %v2862 = vrot.slane %v2860, 1
      %v2863 = vshll.u32 %v2814, 16
      %v2865 = vrot.slane %v2863, 2
      %v2866 = vor.u32 %v2862, %v2865
      %v2867 = vsel %vm1913, %v2857, %v2866
      %v2889 = vunpack.c.l.b16 %v1283
      %v2890 = vunpack.c.l.b16 %v1284
      %v2891 = vunpack.c.l.b16 %v1285
      %v2892 = vunpack.c.l.b16 %v1286
      %v2893 = vunpack.c.l.b16 %v1287
      %v2894 = vunpack.c.l.b16 %v1288
      %v2895 = vunpack.c.l.b16 %v1289
      %v2896 = vunpack.c.l.b16 %v1290
      %v2897 = vunpack.c.l.b16 %v1291
      %v2898 = vunpack.c.l.b16 %v1292
      %v2899 = vunpack.c.l.b16 %v1293
      %v2900 = vunpack.c.l.b16 %v1294
      %v2901 = vunpack.c.l.b16 %v1295
      %v2902 = vunpack.c.l.b16 %v1296
      %v2903 = vunpack.c.l.b16 %v1297
      %v2904 = vunpack.c.l.b16 %v1298
      %v2905 = vpack.c.b16 %v2890, %v2889
      %v2906 = vpack.c.b16 %v2892, %v2891
      %v2907 = vpack.c.b16 %v2894, %v2893
      %v2908 = vpack.c.b16 %v2896, %v2895
      %v2909 = vpack.c.b16 %v2898, %v2897
      %v2910 = vpack.c.b16 %v2900, %v2899
      %v2911 = vpack.c.b16 %v2902, %v2901
      %v2912 = vpack.c.b16 %v2904, %v2903
      %2921 = vmatpush.bf16.msra.mxu0 %v2912
      %2922 = vmatpush.bf16.msra.mxu0 %v2911
      %2923 = vmatpush.bf16.msra.mxu0 %v2910
      %2924 = vmatpush.bf16.msra.mxu0 %v2909
      %2925 = vmatpush.bf16.msra.mxu0 %v2908
      %2926 = vmatpush.bf16.msra.mxu0 %v2907
      %2927 = vmatpush.bf16.msra.mxu0 %v2906
      %2928 = vmatpush.bf16.msra.mxu0 %v2905
      %2929 = vmatmul.bf16.gmra.mxu0 %v2831
      %v2930 = vpop.f32.mrf.mxu0
      %v2931 = vadd.f32 %v2763, %v2930
      %v2932 = vpop.f32.mrf.mxu0
      %v2933 = vadd.f32 %v2765, %v2932
      %2934 = vmatmul.bf16.gmra.mxu0 %v2840
      %v2935 = vpop.f32.mrf.mxu0
      %v2936 = vadd.f32 %v2768, %v2935
      %v2937 = vpop.f32.mrf.mxu0
      %v2938 = vadd.f32 %v2770, %v2937
      %2939 = vmatmul.bf16.gmra.mxu0 %v2849
      %v2940 = vpop.f32.mrf.mxu0
      %v2941 = vadd.f32 %v2773, %v2940
      %v2942 = vpop.f32.mrf.mxu0
      %v2943 = vadd.f32 %v2775, %v2942
      %2944 = vmatmul.bf16.gmra.mxu0 %v2858
      %v2945 = vpop.f32.mrf.mxu0
      %v2946 = vadd.f32 %v2778, %v2945
      %v2947 = vpop.f32.mrf.mxu0
      %v2948 = vadd.f32 %v2780, %v2947
      %2949 = vmatmul.bf16.gmra.mxu0 %v2867
      %v2950 = vpop.f32.mrf.mxu0
      %v2951 = vadd.f32 %v2783, %v2950
      %v2952 = vpop.f32.mrf.mxu0
      %v2953 = vadd.f32 %v2785, %v2952
      %2954 = vdwg.mxu0
      %v2955 = vmul.f32 %v2674, %v813
      %v2956 = vmul.f32 %v2675, %v814
      %v2957 = vmul.f32 %v2676, %v815
      %v2958 = vmul.f32 %v2677, %v816
      %v2959 = vmul.f32 %v2678, %v817
      %v2960 = vmul.f32 %v2679, %v818
      %v2961 = vmul.f32 %v2680, %v819
      %v2962 = vmul.f32 %v2681, %v820
      %v2963 = vmul.f32 %v2682, %v821
      %v2964 = vmul.f32 %v2683, %v822
      %v2965 = vpack.c.bf16 %v2955, %v2955
      %v2966 = vpack.c.bf16 %v2956, %v2956
      %v2967 = vpack.c.bf16 %v2957, %v2957
      %v2968 = vpack.c.bf16 %v2958, %v2958
      %v2969 = vpack.c.bf16 %v2959, %v2959
      %v2970 = vpack.c.bf16 %v2960, %v2960
      %v2971 = vpack.c.bf16 %v2961, %v2961
      %v2972 = vpack.c.bf16 %v2962, %v2962
      %v2973 = vpack.c.bf16 %v2963, %v2963
      %v2974 = vpack.c.bf16 %v2964, %v2964
      %v2976 = vshrl.u32 %v2965, 16
      %v2978 = vrot.slane %v2976, 6
      %v2979 = vshll.u32 %v2965, 16
      %v2981 = vrot.slane %v2979, 7
      %v2982 = vor.u32 %v2978, %v2981
      %v2983 = vrot.slane %v2982, 4
      %v2985 = vshrl.u32 %v2966, 16
      %v2987 = vrot.slane %v2985, 6
      %v2988 = vshll.u32 %v2966, 16
      %v2990 = vrot.slane %v2988, 7
      %v2991 = vor.u32 %v2987, %v2990
      %v2992 = vsel %vm1146, %v2983, %v2991
      %v2993 = vrot.slane %v2991, 4
      %v2995 = vshrl.u32 %v2967, 16
      %v2997 = vrot.slane %v2995, 6
      %v2998 = vshll.u32 %v2967, 16
      %v3000 = vrot.slane %v2998, 7
      %v3001 = vor.u32 %v2997, %v3000
      %v3002 = vsel %vm1146, %v2993, %v3001
      %v3003 = vrot.slane %v3001, 4
      %v3005 = vshrl.u32 %v2968, 16
      %v3007 = vrot.slane %v3005, 6
      %v3008 = vshll.u32 %v2968, 16
      %v3010 = vrot.slane %v3008, 7
      %v3011 = vor.u32 %v3007, %v3010
      %v3012 = vsel %vm1146, %v3003, %v3011
      %v3013 = vrot.slane %v3011, 4
      %v3015 = vshrl.u32 %v2969, 16
      %v3017 = vrot.slane %v3015, 6
      %v3018 = vshll.u32 %v2969, 16
      %v3020 = vrot.slane %v3018, 7
      %v3021 = vor.u32 %v3017, %v3020
      %v3022 = vsel %vm1146, %v3013, %v3021
      %v3023 = vrot.slane %v3021, 4
      %v3025 = vshrl.u32 %v2970, 16
      %v3027 = vrot.slane %v3025, 6
      %v3028 = vshll.u32 %v2970, 16
      %v3030 = vrot.slane %v3028, 7
      %v3031 = vor.u32 %v3027, %v3030
      %v3032 = vsel %vm1146, %v3023, %v3031
      %v3033 = vrot.slane %v3031, 4
      %v3035 = vshrl.u32 %v2971, 16
      %v3037 = vrot.slane %v3035, 6
      %v3038 = vshll.u32 %v2971, 16
      %v3040 = vrot.slane %v3038, 7
      %v3041 = vor.u32 %v3037, %v3040
      %v3042 = vsel %vm1146, %v3033, %v3041
      %v3043 = vrot.slane %v3041, 4
      %v3045 = vshrl.u32 %v2972, 16
      %v3047 = vrot.slane %v3045, 6
      %v3048 = vshll.u32 %v2972, 16
      %v3050 = vrot.slane %v3048, 7
      %v3051 = vor.u32 %v3047, %v3050
      %v3052 = vsel %vm1146, %v3043, %v3051
      %v3053 = vrot.slane %v3051, 4
      %v3055 = vshrl.u32 %v2973, 16
      %v3057 = vrot.slane %v3055, 6
      %v3058 = vshll.u32 %v2973, 16
      %v3060 = vrot.slane %v3058, 7
      %v3061 = vor.u32 %v3057, %v3060
      %v3062 = vsel %vm1146, %v3053, %v3061
      %v3063 = vrot.slane %v3061, 4
      %v3065 = vshrl.u32 %v2974, 16
      %v3067 = vrot.slane %v3065, 6
      %v3068 = vshll.u32 %v2974, 16
      %v3070 = vrot.slane %v3068, 7
      %v3071 = vor.u32 %v3067, %v3070
      %v3072 = vsel %vm1146, %v3063, %v3071
      %v3073 = vrot.slane %v3071, 4
      %v3085 = vld [vmem:[#allocation2 + $0x4] sm:$0xe]
      %v3086 = vsel %vm1106, %v2982, %v3085
      %3087 = vst [vmem:[#allocation2 + $0x4] sm:$0xe] %v3086
      %3088 = vst [vmem:[#allocation2 + $0x8] sm:$0xf] %v2992
      %3089 = vst [vmem:[#allocation2 + $0xc] sm:$0xf] %v3002
      %3090 = vst [vmem:[#allocation2 + $0x10] sm:$0xf] %v3012
      %3091 = vst [vmem:[#allocation2 + $0x14] sm:$0xf] %v3022
      %3092 = vst [vmem:[#allocation2 + $0x18] sm:$0xf] %v3032
      %3093 = vst [vmem:[#allocation2 + $0x1c] sm:$0xf] %v3042
      %3094 = vst [vmem:[#allocation2 + $0x20] sm:$0xf] %v3052
      %3095 = vst [vmem:[#allocation2 + $0x24] sm:$0xf] %v3062
      %3096 = vst [vmem:[#allocation2 + $0x28] sm:$0xf] %v3072
      %v3097 = vld [vmem:[#allocation2 + $0x2c] sm:$0x3]
      %v3098 = vsel %vm1100, %v3073, %v3097
      %3099 = vst [vmem:[#allocation2 + $0x2c] sm:$0x3] %v3098
      %v3100 = vld [vmem:[#allocation2] sm:$0xf]
      %v3101 = vld [vmem:[#allocation2 + $0x4] sm:$0xf]
      %v3102 = vld [vmem:[#allocation2 + $0x8] sm:$0xf]
      %v3103 = vld [vmem:[#allocation2 + $0xc] sm:$0xf]
      %v3104 = vld [vmem:[#allocation2 + $0x10] sm:$0xf]
      %v3105 = vld [vmem:[#allocation2 + $0x14] sm:$0xf]
      %v3106 = vld [vmem:[#allocation2 + $0x18] sm:$0xf]
      %v3107 = vld [vmem:[#allocation2 + $0x1c] sm:$0xf]
      %v3108 = vld [vmem:[#allocation2 + $0x20] sm:$0xf]
      %v3109 = vld [vmem:[#allocation2 + $0x24] sm:$0xf]
      %v3110 = vld [vmem:[%s5] sm:$0xf]
      %v3111 = vld [vmem:[%s5 + $0x4] sm:$0xf]
      %v3112 = vld [vmem:[%s5 + $0x8] sm:$0xf]
      %v3113 = vld [vmem:[%s5 + $0xc] sm:$0xf]
      %v3114 = vld [vmem:[%s5 + $0x10] sm:$0xf]
      %v3115 = vld [vmem:[%s5 + $0x14] sm:$0xf]
      %v3116 = vld [vmem:[%s5 + $0x18] sm:$0xf]
      %v3117 = vld [vmem:[%s5 + $0x1c] sm:$0xf]
      %v3118 = vld [vmem:[%s5 + $0x20] sm:$0xf]
      %v3119 = vld [vmem:[%s5 + $0x24] sm:$0xf]
      %v3120 = vld [vmem:[%s5 + $0x28] sm:$0xf]
      %v3121 = vld [vmem:[%s5 + $0x2c] sm:$0xf]
      %v3122 = vld [vmem:[%s5 + $0x30] sm:$0xf]
      %v3123 = vld [vmem:[%s5 + $0x34] sm:$0xf]
      %v3124 = vld [vmem:[%s5 + $0x38] sm:$0xf]
      %v3125 = vld [vmem:[%s5 + $0x3c] sm:$0xf]
      %v3126 = vld [vmem:[#allocation2 + $0x28] sm:$0x1]
      %s3127 = scalar_lea.vmem %s5, 64
      %v3128 = vld [vmem:[%s3127] sm:$0xf]
      %v3129 = vld [vmem:[%s3127 + $0x4] sm:$0xf]
      %v3130 = vld [vmem:[%s3127 + $0x8] sm:$0xf]
      %v3131 = vld [vmem:[%s3127 + $0xc] sm:$0xf]
      %v3132 = vld [vmem:[%s3127 + $0x10] sm:$0xf]
      %v3133 = vld [vmem:[%s3127 + $0x14] sm:$0xf]
      %v3134 = vld [vmem:[%s3127 + $0x18] sm:$0xf]
      %v3135 = vld [vmem:[%s3127 + $0x1c] sm:$0xf]
      %v3136 = vld [vmem:[%s3127 + $0x20] sm:$0xf]
      %v3137 = vld [vmem:[%s3127 + $0x24] sm:$0xf]
      %v3138 = vld [vmem:[%s3127 + $0x28] sm:$0xf]
      %v3139 = vld [vmem:[%s3127 + $0x2c] sm:$0xf]
      %v3140 = vld [vmem:[%s3127 + $0x30] sm:$0xf]
      %v3141 = vld [vmem:[%s3127 + $0x34] sm:$0xf]
      %v3142 = vld [vmem:[%s3127 + $0x38] sm:$0xf]
      %v3143 = vld [vmem:[%s3127 + $0x3c] sm:$0xf]
      %v3155 = vunpack.c.l.b16 %v3100
      %v3156 = vunpack.c.l.b16 %v3101
      %v3157 = vunpack.c.l.b16 %v3102
      %v3158 = vunpack.c.l.b16 %v3103
      %v3159 = vunpack.c.l.b16 %v3104
      %v3160 = vunpack.c.l.b16 %v3105
      %v3161 = vunpack.c.l.b16 %v3106
      %v3162 = vunpack.c.l.b16 %v3107
      %v3163 = vunpack.c.l.b16 %v3108
      %v3164 = vunpack.c.l.b16 %v3109
      %v3165 = vunpack.c.l.b16 %v3126
      %v3166 = vpack.c.b16 %v3156, %v3155
      %v3167 = vpack.c.b16 %v3158, %v3157
      %v3168 = vpack.c.b16 %v3160, %v3159
      %v3169 = vpack.c.b16 %v3162, %v3161
      %v3170 = vpack.c.b16 %v3164, %v3163
      %v3171 = vpack.c.b16 %v3165, %v3165
      %v3173 = vshrl.u32 %v3166, 16
      %v3175 = vshll.u32 %v3166, 16
      %v3177 = vrot.slane %v3175, 1
      %v3178 = vor.u32 %v3173, %v3177
      %v3180 = vshll.u32 %v3167, 16
      %v3182 = vrot.slane %v3180, 1
      %v3183 = vsel %vm1379, %v3178, %v3182
      %v3184 = vshrl.u32 %v3167, 16
      %v3186 = vor.u32 %v3184, %v3182
      %v3188 = vshll.u32 %v3168, 16
      %v3190 = vrot.slane %v3188, 1
      %v3191 = vsel %vm1379, %v3186, %v3190
      %v3192 = vshrl.u32 %v3168, 16
      %v3194 = vor.u32 %v3192, %v3190
      %v3196 = vshll.u32 %v3169, 16
      %v3198 = vrot.slane %v3196, 1
      %v3199 = vsel %vm1379, %v3194, %v3198
      %v3200 = vshrl.u32 %v3169, 16
      %v3202 = vor.u32 %v3200, %v3198
      %v3204 = vshll.u32 %v3170, 16
      %v3206 = vrot.slane %v3204, 1
      %v3207 = vsel %vm1379, %v3202, %v3206
      %v3208 = vshrl.u32 %v3170, 16
      %v3210 = vor.u32 %v3208, %v3206
      %v3212 = vshll.u32 %v3171, 16
      %v3214 = vrot.slane %v3212, 1
      %v3215 = vsel %vm1379, %v3210, %v3214
      %v3237 = vunpack.c.l.b16 %v3128
      %v3238 = vunpack.c.l.b16 %v3129
      %v3239 = vunpack.c.l.b16 %v3130
      %v3240 = vunpack.c.l.b16 %v3131
      %v3241 = vunpack.c.l.b16 %v3132
      %v3242 = vunpack.c.l.b16 %v3133
      %v3243 = vunpack.c.l.b16 %v3134
      %v3244 = vunpack.c.l.b16 %v3135
      %v3245 = vunpack.c.l.b16 %v3136
      %v3246 = vunpack.c.l.b16 %v3137
      %v3247 = vunpack.c.l.b16 %v3138
      %v3248 = vunpack.c.l.b16 %v3139
      %v3249 = vunpack.c.l.b16 %v3140
      %v3250 = vunpack.c.l.b16 %v3141
      %v3251 = vunpack.c.l.b16 %v3142
      %v3252 = vunpack.c.l.b16 %v3143
      %v3253 = vpack.c.b16 %v3238, %v3237
      %v3254 = vpack.c.b16 %v3240, %v3239
      %v3255 = vpack.c.b16 %v3242, %v3241
      %v3256 = vpack.c.b16 %v3244, %v3243
      %v3257 = vpack.c.b16 %v3246, %v3245
      %v3258 = vpack.c.b16 %v3248, %v3247
      %v3259 = vpack.c.b16 %v3250, %v3249
      %v3260 = vpack.c.b16 %v3252, %v3251
      %3269 = vmatpush.bf16.msra.mxu0 %v3260
      %3270 = vmatpush.bf16.msra.mxu0 %v3259
      %3271 = vmatpush.bf16.msra.mxu0 %v3258
      %3272 = vmatpush.bf16.msra.mxu0 %v3257
      %3273 = vmatpush.bf16.msra.mxu0 %v3256
      %3274 = vmatpush.bf16.msra.mxu0 %v3255
      %3275 = vmatpush.bf16.msra.mxu0 %v3254
      %3276 = vmatpush.bf16.msra.mxu0 %v3253
      %3277 = vmatmul.bf16.gmra.mxu0 %v3183
      %v3278 = vpop.f32.mrf.mxu0
      %v3279 = vadd.f32 0.0, %v3278
      %v3280 = vpop.f32.mrf.mxu0
      %v3281 = vadd.f32 0.0, %v3280
      %3282 = vmatmul.bf16.gmra.mxu0 %v3191
      %v3283 = vpop.f32.mrf.mxu0
      %v3284 = vadd.f32 0.0, %v3283
      %v3285 = vpop.f32.mrf.mxu0
      %v3286 = vadd.f32 0.0, %v3285
      %3287 = vmatmul.bf16.gmra.mxu0 %v3199
      %v3288 = vpop.f32.mrf.mxu0
      %v3289 = vadd.f32 0.0, %v3288
      %v3290 = vpop.f32.mrf.mxu0
      %v3291 = vadd.f32 0.0, %v3290
      %3292 = vmatmul.bf16.gmra.mxu0 %v3207
      %v3293 = vpop.f32.mrf.mxu0
      %v3294 = vadd.f32 0.0, %v3293
      %v3295 = vpop.f32.mrf.mxu0
      %v3296 = vadd.f32 0.0, %v3295
      %3297 = vmatmul.bf16.gmra.mxu0 %v3215
      %v3298 = vpop.f32.mrf.mxu0
      %v3299 = vadd.f32 0.0, %v3298
      %v3300 = vpop.f32.mrf.mxu0
      %v3301 = vadd.f32 0.0, %v3300
      %3302 = vdwg.mxu0
      %v3324 = vunpack.c.l.b16 %v3110
      %v3325 = vunpack.c.l.b16 %v3111
      %v3326 = vunpack.c.l.b16 %v3112
      %v3327 = vunpack.c.l.b16 %v3113
      %v3328 = vunpack.c.l.b16 %v3114
      %v3329 = vunpack.c.l.b16 %v3115
      %v3330 = vunpack.c.l.b16 %v3116
      %v3331 = vunpack.c.l.b16 %v3117
      %v3332 = vunpack.c.l.b16 %v3118
      %v3333 = vunpack.c.l.b16 %v3119
      %v3334 = vunpack.c.l.b16 %v3120
      %v3335 = vunpack.c.l.b16 %v3121
      %v3336 = vunpack.c.l.b16 %v3122
      %v3337 = vunpack.c.l.b16 %v3123
      %v3338 = vunpack.c.l.b16 %v3124
      %v3339 = vunpack.c.l.b16 %v3125
      %v3340 = vpack.c.b16 %v3325, %v3324
      %v3341 = vpack.c.b16 %v3327, %v3326
      %v3342 = vpack.c.b16 %v3329, %v3328
      %v3343 = vpack.c.b16 %v3331, %v3330
      %v3344 = vpack.c.b16 %v3333, %v3332
      %v3345 = vpack.c.b16 %v3335, %v3334
      %v3346 = vpack.c.b16 %v3337, %v3336
      %v3347 = vpack.c.b16 %v3339, %v3338
      %3356 = vmatpush.bf16.msra.mxu0 %v3347
      %3357 = vmatpush.bf16.msra.mxu0 %v3346
      %3358 = vmatpush.bf16.msra.mxu0 %v3345
      %3359 = vmatpush.bf16.msra.mxu0 %v3344
      %3360 = vmatpush.bf16.msra.mxu0 %v3343
      %3361 = vmatpush.bf16.msra.mxu0 %v3342
      %3362 = vmatpush.bf16.msra.mxu0 %v3341
      %3363 = vmatpush.bf16.msra.mxu0 %v3340
      %3364 = vmatmul.bf16.gmra.mxu0 %v3166
      %v3365 = vpop.f32.mrf.mxu0
      %v3366 = vadd.f32 %v3279, %v3365
      %v3367 = vpop.f32.mrf.mxu0
      %v3368 = vadd.f32 %v3281, %v3367
      %3369 = vmatmul.bf16.gmra.mxu0 %v3167
      %v3370 = vpop.f32.mrf.mxu0
      %v3371 = vadd.f32 %v3284, %v3370
      %v3372 = vpop.f32.mrf.mxu0
      %v3373 = vadd.f32 %v3286, %v3372
      %3374 = vmatmul.bf16.gmra.mxu0 %v3168
      %v3375 = vpop.f32.mrf.mxu0
      %v3376 = vadd.f32 %v3289, %v3375
      %v3377 = vpop.f32.mrf.mxu0
      %v3378 = vadd.f32 %v3291, %v3377
      %3379 = vmatmul.bf16.gmra.mxu0 %v3169
      %v3380 = vpop.f32.mrf.mxu0
      %v3381 = vadd.f32 %v3294, %v3380
      %v3382 = vpop.f32.mrf.mxu0
      %v3383 = vadd.f32 %v3296, %v3382
      %3384 = vmatmul.bf16.gmra.mxu0 %v3170
      %v3385 = vpop.f32.mrf.mxu0
      %v3386 = vadd.f32 %v3299, %v3385
      %v3387 = vpop.f32.mrf.mxu0
      %v3388 = vadd.f32 %v3301, %v3387
      %3389 = vdwg.mxu0
      %v3390 = vld [vmem:[#allocation2] sm:$0xe]
      %s3391 = scalar_lea.vmem %s5, 128
      %v3392 = vld [vmem:[%s3391] sm:$0xf]
      %v3393 = vld [vmem:[%s3391 + $0x4] sm:$0xf]
      %v3394 = vld [vmem:[%s3391 + $0x8] sm:$0xf]
      %v3395 = vld [vmem:[%s3391 + $0xc] sm:$0xf]
      %v3396 = vld [vmem:[%s3391 + $0x10] sm:$0xf]
      %v3397 = vld [vmem:[%s3391 + $0x14] sm:$0xf]
      %v3398 = vld [vmem:[%s3391 + $0x18] sm:$0xf]
      %v3399 = vld [vmem:[%s3391 + $0x1c] sm:$0xf]
      %v3400 = vld [vmem:[%s3391 + $0x20] sm:$0xf]
      %v3401 = vld [vmem:[%s3391 + $0x24] sm:$0xf]
      %v3402 = vld [vmem:[%s3391 + $0x28] sm:$0xf]
      %v3403 = vld [vmem:[%s3391 + $0x2c] sm:$0xf]
      %v3404 = vld [vmem:[%s3391 + $0x30] sm:$0xf]
      %v3405 = vld [vmem:[%s3391 + $0x34] sm:$0xf]
      %v3406 = vld [vmem:[%s3391 + $0x38] sm:$0xf]
      %v3407 = vld [vmem:[%s3391 + $0x3c] sm:$0xf]
      %v3409 = vunpack.c.l.b16 %v3390
      %v3410 = vpack.c.b16 %v3156, %v3409
      %v3411 = vrot.slane %v3410, 1
      %v3412 = vrot.slane %v3167, 1
      %v3413 = vsel %vm1619, %v3411, %v3412
      %v3414 = vrot.slane %v3168, 1
      %v3415 = vsel %vm1619, %v3412, %v3414
      %v3416 = vrot.slane %v3169, 1
      %v3417 = vsel %vm1619, %v3414, %v3416
      %v3418 = vrot.slane %v3170, 1
      %v3419 = vsel %vm1619, %v3416, %v3418
      %v3420 = vrot.slane %v3171, 1
      %v3421 = vsel %vm1619, %v3418, %v3420
      %v3443 = vunpack.c.l.b16 %v3392
      %v3444 = vunpack.c.l.b16 %v3393
      %v3445 = vunpack.c.l.b16 %v3394
      %v3446 = vunpack.c.l.b16 %v3395
      %v3447 = vunpack.c.l.b16 %v3396
      %v3448 = vunpack.c.l.b16 %v3397
      %v3449 = vunpack.c.l.b16 %v3398
      %v3450 = vunpack.c.l.b16 %v3399
      %v3451 = vunpack.c.l.b16 %v3400
      %v3452 = vunpack.c.l.b16 %v3401
      %v3453 = vunpack.c.l.b16 %v3402
      %v3454 = vunpack.c.l.b16 %v3403
      %v3455 = vunpack.c.l.b16 %v3404
      %v3456 = vunpack.c.l.b16 %v3405
      %v3457 = vunpack.c.l.b16 %v3406
      %v3458 = vunpack.c.l.b16 %v3407
      %v3459 = vpack.c.b16 %v3444, %v3443
      %v3460 = vpack.c.b16 %v3446, %v3445
      %v3461 = vpack.c.b16 %v3448, %v3447
      %v3462 = vpack.c.b16 %v3450, %v3449
      %v3463 = vpack.c.b16 %v3452, %v3451
      %v3464 = vpack.c.b16 %v3454, %v3453
      %v3465 = vpack.c.b16 %v3456, %v3455
      %v3466 = vpack.c.b16 %v3458, %v3457
      %3475 = vmatpush.bf16.msra.mxu0 %v3466
      %3476 = vmatpush.bf16.msra.mxu0 %v3465
      %3477 = vmatpush.bf16.msra.mxu0 %v3464
      %3478 = vmatpush.bf16.msra.mxu0 %v3463
      %3479 = vmatpush.bf16.msra.mxu0 %v3462
      %3480 = vmatpush.bf16.msra.mxu0 %v3461
      %3481 = vmatpush.bf16.msra.mxu0 %v3460
      %3482 = vmatpush.bf16.msra.mxu0 %v3459
      %3483 = vmatmul.bf16.gmra.mxu0 %v3413
      %v3484 = vpop.f32.mrf.mxu0
      %v3485 = vadd.f32 0.0, %v3484
      %v3486 = vpop.f32.mrf.mxu0
      %v3487 = vadd.f32 0.0, %v3486
      %3488 = vmatmul.bf16.gmra.mxu0 %v3415
      %v3489 = vpop.f32.mrf.mxu0
      %v3490 = vadd.f32 0.0, %v3489
      %v3491 = vpop.f32.mrf.mxu0
      %v3492 = vadd.f32 0.0, %v3491
      %3493 = vmatmul.bf16.gmra.mxu0 %v3417
      %v3494 = vpop.f32.mrf.mxu0
      %v3495 = vadd.f32 0.0, %v3494
      %v3496 = vpop.f32.mrf.mxu0
      %v3497 = vadd.f32 0.0, %v3496
      %3498 = vmatmul.bf16.gmra.mxu0 %v3419
      %v3499 = vpop.f32.mrf.mxu0
      %v3500 = vadd.f32 0.0, %v3499
      %v3501 = vpop.f32.mrf.mxu0
      %v3502 = vadd.f32 0.0, %v3501
      %3503 = vmatmul.bf16.gmra.mxu0 %v3421
      %v3504 = vpop.f32.mrf.mxu0
      %v3505 = vadd.f32 0.0, %v3504
      %v3506 = vpop.f32.mrf.mxu0
      %v3507 = vadd.f32 0.0, %v3506
      %3508 = vdwg.mxu0
      %v3509 = vadd.f32 %v3366, %v3485
      %v3510 = vadd.f32 %v3368, %v3487
      %v3511 = vadd.f32 %v3371, %v3490
      %v3512 = vadd.f32 %v3373, %v3492
      %v3513 = vadd.f32 %v3376, %v3495
      %v3514 = vadd.f32 %v3378, %v3497
      %v3515 = vadd.f32 %v3381, %v3500
      %v3516 = vadd.f32 %v3383, %v3502
      %v3517 = vadd.f32 %v3386, %v3505
      %v3518 = vadd.f32 %v3388, %v3507
      %v3519 = vld [vmem:[#allocation2 + $0x4] sm:$0xe]
      %v3520 = vld [vmem:[#allocation2 + $0x8] sm:$0xf]
      %v3521 = vld [vmem:[#allocation2 + $0xc] sm:$0xf]
      %v3522 = vld [vmem:[#allocation2 + $0x10] sm:$0xf]
      %v3523 = vld [vmem:[#allocation2 + $0x14] sm:$0xf]
      %v3524 = vld [vmem:[#allocation2 + $0x18] sm:$0xf]
      %v3525 = vld [vmem:[#allocation2 + $0x1c] sm:$0xf]
      %v3526 = vld [vmem:[#allocation2 + $0x20] sm:$0xf]
      %v3527 = vld [vmem:[#allocation2 + $0x24] sm:$0xf]
      %v3528 = vld [vmem:[#allocation2 + $0x28] sm:$0xf]
      %v3529 = vld [vmem:[#allocation2 + $0x2c] sm:$0x1]
      %s3530 = scalar_lea.vmem %s5, 192
      %v3531 = vld [vmem:[%s3530] sm:$0xf]
      %v3532 = vld [vmem:[%s3530 + $0x4] sm:$0xf]
      %v3533 = vld [vmem:[%s3530 + $0x8] sm:$0xf]
      %v3534 = vld [vmem:[%s3530 + $0xc] sm:$0xf]
      %v3535 = vld [vmem:[%s3530 + $0x10] sm:$0xf]
      %v3536 = vld [vmem:[%s3530 + $0x14] sm:$0xf]
      %v3537 = vld [vmem:[%s3530 + $0x18] sm:$0xf]
      %v3538 = vld [vmem:[%s3530 + $0x1c] sm:$0xf]
      %v3539 = vld [vmem:[%s3530 + $0x20] sm:$0xf]
      %v3540 = vld [vmem:[%s3530 + $0x24] sm:$0xf]
      %v3541 = vld [vmem:[%s3530 + $0x28] sm:$0xf]
      %v3542 = vld [vmem:[%s3530 + $0x2c] sm:$0xf]
      %v3543 = vld [vmem:[%s3530 + $0x30] sm:$0xf]
      %v3544 = vld [vmem:[%s3530 + $0x34] sm:$0xf]
      %v3545 = vld [vmem:[%s3530 + $0x38] sm:$0xf]
      %v3546 = vld [vmem:[%s3530 + $0x3c] sm:$0xf]
      %v3558 = vunpack.c.l.b16 %v3519
      %v3559 = vunpack.c.l.b16 %v3520
      %v3560 = vunpack.c.l.b16 %v3521
      %v3561 = vunpack.c.l.b16 %v3522
      %v3562 = vunpack.c.l.b16 %v3523
      %v3563 = vunpack.c.l.b16 %v3524
      %v3564 = vunpack.c.l.b16 %v3525
      %v3565 = vunpack.c.l.b16 %v3526
      %v3566 = vunpack.c.l.b16 %v3527
      %v3567 = vunpack.c.l.b16 %v3528
      %v3568 = vunpack.c.l.b16 %v3529
      %v3569 = vpack.c.b16 %v3559, %v3558
      %v3570 = vpack.c.b16 %v3561, %v3560
      %v3571 = vpack.c.b16 %v3563, %v3562
      %v3572 = vpack.c.b16 %v3565, %v3564
      %v3573 = vpack.c.b16 %v3567, %v3566
      %v3574 = vpack.c.b16 %v3568, %v3568
      %v3575 = vrot.slane %v3569, 1
      %v3576 = vrot.slane %v3570, 1
      %v3577 = vsel %vm1619, %v3575, %v3576
      %v3578 = vrot.slane %v3571, 1
      %v3579 = vsel %vm1619, %v3576, %v3578
      %v3580 = vrot.slane %v3572, 1
      %v3581 = vsel %vm1619, %v3578, %v3580
      %v3582 = vrot.slane %v3573, 1
      %v3583 = vsel %vm1619, %v3580, %v3582
      %v3584 = vrot.slane %v3574, 1
      %v3585 = vsel %vm1619, %v3582, %v3584
      %v3607 = vunpack.c.l.b16 %v3531
      %v3608 = vunpack.c.l.b16 %v3532
      %v3609 = vunpack.c.l.b16 %v3533
      %v3610 = vunpack.c.l.b16 %v3534
      %v3611 = vunpack.c.l.b16 %v3535
      %v3612 = vunpack.c.l.b16 %v3536
      %v3613 = vunpack.c.l.b16 %v3537
      %v3614 = vunpack.c.l.b16 %v3538
      %v3615 = vunpack.c.l.b16 %v3539
      %v3616 = vunpack.c.l.b16 %v3540
      %v3617 = vunpack.c.l.b16 %v3541
      %v3618 = vunpack.c.l.b16 %v3542
      %v3619 = vunpack.c.l.b16 %v3543
      %v3620 = vunpack.c.l.b16 %v3544
      %v3621 = vunpack.c.l.b16 %v3545
      %v3622 = vunpack.c.l.b16 %v3546
      %v3623 = vpack.c.b16 %v3608, %v3607
      %v3624 = vpack.c.b16 %v3610, %v3609
      %v3625 = vpack.c.b16 %v3612, %v3611
      %v3626 = vpack.c.b16 %v3614, %v3613
      %v3627 = vpack.c.b16 %v3616, %v3615
      %v3628 = vpack.c.b16 %v3618, %v3617
      %v3629 = vpack.c.b16 %v3620, %v3619
      %v3630 = vpack.c.b16 %v3622, %v3621
      %3639 = vmatpush.bf16.msra.mxu0 %v3630
      %3640 = vmatpush.bf16.msra.mxu0 %v3629
      %3641 = vmatpush.bf16.msra.mxu0 %v3628
      %3642 = vmatpush.bf16.msra.mxu0 %v3627
      %3643 = vmatpush.bf16.msra.mxu0 %v3626
      %3644 = vmatpush.bf16.msra.mxu0 %v3625
      %3645 = vmatpush.bf16.msra.mxu0 %v3624
      %3646 = vmatpush.bf16.msra.mxu0 %v3623
      %3647 = vmatmul.bf16.gmra.mxu0 %v3577
      %v3648 = vpop.f32.mrf.mxu0
      %v3649 = vadd.f32 0.0, %v3648
      %v3650 = vpop.f32.mrf.mxu0
      %v3651 = vadd.f32 0.0, %v3650
      %3652 = vmatmul.bf16.gmra.mxu0 %v3579
      %v3653 = vpop.f32.mrf.mxu0
      %v3654 = vadd.f32 0.0, %v3653
      %v3655 = vpop.f32.mrf.mxu0
      %v3656 = vadd.f32 0.0, %v3655
      %3657 = vmatmul.bf16.gmra.mxu0 %v3581
      %v3658 = vpop.f32.mrf.mxu0
      %v3659 = vadd.f32 0.0, %v3658
      %v3660 = vpop.f32.mrf.mxu0
      %v3661 = vadd.f32 0.0, %v3660
      %3662 = vmatmul.bf16.gmra.mxu0 %v3583
      %v3663 = vpop.f32.mrf.mxu0
      %v3664 = vadd.f32 0.0, %v3663
      %v3665 = vpop.f32.mrf.mxu0
      %v3666 = vadd.f32 0.0, %v3665
      %3667 = vmatmul.bf16.gmra.mxu0 %v3585
      %v3668 = vpop.f32.mrf.mxu0
      %v3669 = vadd.f32 0.0, %v3668
      %v3670 = vpop.f32.mrf.mxu0
      %v3671 = vadd.f32 0.0, %v3670
      %3672 = vdwg.mxu0
      %v3673 = vadd.f32 %v3509, %v3649
      %v3674 = vadd.f32 %v3510, %v3651
      %v3675 = vadd.f32 %v3511, %v3654
      %v3676 = vadd.f32 %v3512, %v3656
      %v3677 = vadd.f32 %v3513, %v3659
      %v3678 = vadd.f32 %v3514, %v3661
      %v3679 = vadd.f32 %v3515, %v3664
      %v3680 = vadd.f32 %v3516, %v3666
      %v3681 = vadd.f32 %v3517, %v3669
      %v3682 = vadd.f32 %v3518, %v3671
      %v3683 = vld [vmem:[#allocation2 + $0x2c] sm:$0x3]
      %s3684 = scalar_lea.vmem %s5, 256
      %v3685 = vld [vmem:[%s3684] sm:$0xf]
      %v3686 = vld [vmem:[%s3684 + $0x4] sm:$0xf]
      %v3687 = vld [vmem:[%s3684 + $0x8] sm:$0xf]
      %v3688 = vld [vmem:[%s3684 + $0xc] sm:$0xf]
      %v3689 = vld [vmem:[%s3684 + $0x10] sm:$0xf]
      %v3690 = vld [vmem:[%s3684 + $0x14] sm:$0xf]
      %v3691 = vld [vmem:[%s3684 + $0x18] sm:$0xf]
      %v3692 = vld [vmem:[%s3684 + $0x1c] sm:$0xf]
      %v3693 = vld [vmem:[%s3684 + $0x20] sm:$0xf]
      %v3694 = vld [vmem:[%s3684 + $0x24] sm:$0xf]
      %v3695 = vld [vmem:[%s3684 + $0x28] sm:$0xf]
      %v3696 = vld [vmem:[%s3684 + $0x2c] sm:$0xf]
      %v3697 = vld [vmem:[%s3684 + $0x30] sm:$0xf]
      %v3698 = vld [vmem:[%s3684 + $0x34] sm:$0xf]
      %v3699 = vld [vmem:[%s3684 + $0x38] sm:$0xf]
      %v3700 = vld [vmem:[%s3684 + $0x3c] sm:$0xf]
      %v3702 = vunpack.c.l.b16 %v3683
      %v3703 = vpack.c.b16 %v3702, %v3702
      %v3705 = vshrl.u32 %v3569, 16
      %v3707 = vrot.slane %v3705, 1
      %v3708 = vshll.u32 %v3569, 16
      %v3710 = vrot.slane %v3708, 2
      %v3711 = vor.u32 %v3707, %v3710
      %v3713 = vshrl.u32 %v3570, 16
      %v3715 = vrot.slane %v3713, 1
      %v3716 = vshll.u32 %v3570, 16
      %v3718 = vrot.slane %v3716, 2
      %v3719 = vor.u32 %v3715, %v3718
      %v3720 = vsel %vm1913, %v3711, %v3719
      %v3722 = vshrl.u32 %v3571, 16
      %v3724 = vrot.slane %v3722, 1
      %v3725 = vshll.u32 %v3571, 16
      %v3727 = vrot.slane %v3725, 2
      %v3728 = vor.u32 %v3724, %v3727
      %v3729 = vsel %vm1913, %v3719, %v3728
      %v3731 = vshrl.u32 %v3572, 16
      %v3733 = vrot.slane %v3731, 1
      %v3734 = vshll.u32 %v3572, 16
      %v3736 = vrot.slane %v3734, 2
      %v3737 = vor.u32 %v3733, %v3736
      %v3738 = vsel %vm1913, %v3728, %v3737
      %v3740 = vshrl.u32 %v3573, 16
      %v3742 = vrot.slane %v3740, 1
      %v3743 = vshll.u32 %v3573, 16
      %v3745 = vrot.slane %v3743, 2
      %v3746 = vor.u32 %v3742, %v3745
      %v3747 = vsel %vm1913, %v3737, %v3746
      %v3749 = vshrl.u32 %v3703, 16
      %v3751 = vrot.slane %v3749, 1
      %v3752 = vshll.u32 %v3703, 16
      %v3754 = vrot.slane %v3752, 2
      %v3755 = vor.u32 %v3751, %v3754
      %v3756 = vsel %vm1913, %v3746, %v3755
      %v3778 = vunpack.c.l.b16 %v3685
      %v3779 = vunpack.c.l.b16 %v3686
      %v3780 = vunpack.c.l.b16 %v3687
      %v3781 = vunpack.c.l.b16 %v3688
      %v3782 = vunpack.c.l.b16 %v3689
      %v3783 = vunpack.c.l.b16 %v3690
      %v3784 = vunpack.c.l.b16 %v3691
      %v3785 = vunpack.c.l.b16 %v3692
      %v3786 = vunpack.c.l.b16 %v3693
      %v3787 = vunpack.c.l.b16 %v3694
      %v3788 = vunpack.c.l.b16 %v3695
      %v3789 = vunpack.c.l.b16 %v3696
      %v3790 = vunpack.c.l.b16 %v3697
      %v3791 = vunpack.c.l.b16 %v3698
      %v3792 = vunpack.c.l.b16 %v3699
      %v3793 = vunpack.c.l.b16 %v3700
      %v3794 = vpack.c.b16 %v3779, %v3778
      %v3795 = vpack.c.b16 %v3781, %v3780
      %v3796 = vpack.c.b16 %v3783, %v3782
      %v3797 = vpack.c.b16 %v3785, %v3784
      %v3798 = vpack.c.b16 %v3787, %v3786
      %v3799 = vpack.c.b16 %v3789, %v3788
      %v3800 = vpack.c.b16 %v3791, %v3790
      %v3801 = vpack.c.b16 %v3793, %v3792
      %3810 = vmatpush.bf16.msra.mxu0 %v3801
      %3811 = vmatpush.bf16.msra.mxu0 %v3800
      %3812 = vmatpush.bf16.msra.mxu0 %v3799
      %3813 = vmatpush.bf16.msra.mxu0 %v3798
      %3814 = vmatpush.bf16.msra.mxu0 %v3797
      %3815 = vmatpush.bf16.msra.mxu0 %v3796
      %3816 = vmatpush.bf16.msra.mxu0 %v3795
      %3817 = vmatpush.bf16.msra.mxu0 %v3794
      %3818 = vmatmul.bf16.gmra.mxu0 %v3720
      %v3819 = vpop.f32.mrf.mxu0
      %v3820 = vadd.f32 0.0, %v3819
      %v3821 = vpop.f32.mrf.mxu0
      %v3822 = vadd.f32 0.0, %v3821
      %3823 = vmatmul.bf16.gmra.mxu0 %v3729
      %v3824 = vpop.f32.mrf.mxu0
      %v3825 = vadd.f32 0.0, %v3824
      %v3826 = vpop.f32.mrf.mxu0
      %v3827 = vadd.f32 0.0, %v3826
      %3828 = vmatmul.bf16.gmra.mxu0 %v3738
      %v3829 = vpop.f32.mrf.mxu0
      %v3830 = vadd.f32 0.0, %v3829
      %v3831 = vpop.f32.mrf.mxu0
      %v3832 = vadd.f32 0.0, %v3831
      %3833 = vmatmul.bf16.gmra.mxu0 %v3747
      %v3834 = vpop.f32.mrf.mxu0
      %v3835 = vadd.f32 0.0, %v3834
      %v3836 = vpop.f32.mrf.mxu0
      %v3837 = vadd.f32 0.0, %v3836
      %3838 = vmatmul.bf16.gmra.mxu0 %v3756
      %v3839 = vpop.f32.mrf.mxu0
      %v3840 = vadd.f32 0.0, %v3839
      %v3841 = vpop.f32.mrf.mxu0
      %v3842 = vadd.f32 0.0, %v3841
      %3843 = vdwg.mxu0
      %v3844 = vadd.f32 %v3673, %v3820
      %v3845 = vadd.f32 %v3674, %v3822
      %v3846 = vadd.f32 %v3675, %v3825
      %v3847 = vadd.f32 %v3676, %v3827
      %v3848 = vadd.f32 %v3677, %v3830
      %v3849 = vadd.f32 %v3678, %v3832
      %v3850 = vadd.f32 %v3679, %v3835
      %v3851 = vadd.f32 %v3680, %v3837
      %v3852 = vadd.f32 %v3681, %v3840
      %v3853 = vadd.f32 %v3682, %v3842
      %v3854 = vld [vmem:[#allocation2 + $0x4] sm:$0xc]
      %s3855 = scalar_lea.vmem %s5, 320
      %v3856 = vld [vmem:[%s3855] sm:$0xf]
      %v3857 = vld [vmem:[%s3855 + $0x4] sm:$0xf]
      %v3858 = vld [vmem:[%s3855 + $0x8] sm:$0xf]
      %v3859 = vld [vmem:[%s3855 + $0xc] sm:$0xf]
      %v3860 = vld [vmem:[%s3855 + $0x10] sm:$0xf]
      %v3861 = vld [vmem:[%s3855 + $0x14] sm:$0xf]
      %v3862 = vld [vmem:[%s3855 + $0x18] sm:$0xf]
      %v3863 = vld [vmem:[%s3855 + $0x1c] sm:$0xf]
      %v3864 = vld [vmem:[%s3855 + $0x20] sm:$0xf]
      %v3865 = vld [vmem:[%s3855 + $0x24] sm:$0xf]
      %v3866 = vld [vmem:[%s3855 + $0x28] sm:$0xf]
      %v3867 = vld [vmem:[%s3855 + $0x2c] sm:$0xf]
      %v3868 = vld [vmem:[%s3855 + $0x30] sm:$0xf]
      %v3869 = vld [vmem:[%s3855 + $0x34] sm:$0xf]
      %v3870 = vld [vmem:[%s3855 + $0x38] sm:$0xf]
      %v3871 = vld [vmem:[%s3855 + $0x3c] sm:$0xf]
      %v3873 = vunpack.c.l.b16 %v3854
      %v3874 = vpack.c.b16 %v3559, %v3873
      %v3875 = vrot.slane %v3874, 2
      %v3876 = vrot.slane %v3570, 2
      %v3877 = vsel %vm2085, %v3875, %v3876
      %v3878 = vrot.slane %v3571, 2
      %v3879 = vsel %vm2085, %v3876, %v3878
      %v3880 = vrot.slane %v3572, 2
      %v3881 = vsel %vm2085, %v3878, %v3880
      %v3882 = vrot.slane %v3573, 2
      %v3883 = vsel %vm2085, %v3880, %v3882
      %v3884 = vrot.slane %v3703, 2
      %v3885 = vsel %vm2085, %v3882, %v3884
      %v3907 = vunpack.c.l.b16 %v3856
      %v3908 = vunpack.c.l.b16 %v3857
      %v3909 = vunpack.c.l.b16 %v3858
      %v3910 = vunpack.c.l.b16 %v3859
      %v3911 = vunpack.c.l.b16 %v3860
      %v3912 = vunpack.c.l.b16 %v3861
      %v3913 = vunpack.c.l.b16 %v3862
      %v3914 = vunpack.c.l.b16 %v3863
      %v3915 = vunpack.c.l.b16 %v3864
      %v3916 = vunpack.c.l.b16 %v3865
      %v3917 = vunpack.c.l.b16 %v3866
      %v3918 = vunpack.c.l.b16 %v3867
      %v3919 = vunpack.c.l.b16 %v3868
      %v3920 = vunpack.c.l.b16 %v3869
      %v3921 = vunpack.c.l.b16 %v3870
      %v3922 = vunpack.c.l.b16 %v3871
      %v3923 = vpack.c.b16 %v3908, %v3907
      %v3924 = vpack.c.b16 %v3910, %v3909
      %v3925 = vpack.c.b16 %v3912, %v3911
      %v3926 = vpack.c.b16 %v3914, %v3913
      %v3927 = vpack.c.b16 %v3916, %v3915
      %v3928 = vpack.c.b16 %v3918, %v3917
      %v3929 = vpack.c.b16 %v3920, %v3919
      %v3930 = vpack.c.b16 %v3922, %v3921
      %3939 = vmatpush.bf16.msra.mxu0 %v3930
      %3940 = vmatpush.bf16.msra.mxu0 %v3929
      %3941 = vmatpush.bf16.msra.mxu0 %v3928
      %3942 = vmatpush.bf16.msra.mxu0 %v3927
      %3943 = vmatpush.bf16.msra.mxu0 %v3926
      %3944 = vmatpush.bf16.msra.mxu0 %v3925
      %3945 = vmatpush.bf16.msra.mxu0 %v3924
      %3946 = vmatpush.bf16.msra.mxu0 %v3923
      %3947 = vmatmul.bf16.gmra.mxu0 %v3877
      %v3948 = vpop.f32.mrf.mxu0
      %v3949 = vadd.f32 0.0, %v3948
      %v3950 = vpop.f32.mrf.mxu0
      %v3951 = vadd.f32 0.0, %v3950
      %3952 = vmatmul.bf16.gmra.mxu0 %v3879
      %v3953 = vpop.f32.mrf.mxu0
      %v3954 = vadd.f32 0.0, %v3953
      %v3955 = vpop.f32.mrf.mxu0
      %v3956 = vadd.f32 0.0, %v3955
      %3957 = vmatmul.bf16.gmra.mxu0 %v3881
      %v3958 = vpop.f32.mrf.mxu0
      %v3959 = vadd.f32 0.0, %v3958
      %v3960 = vpop.f32.mrf.mxu0
      %v3961 = vadd.f32 0.0, %v3960
      %3962 = vmatmul.bf16.gmra.mxu0 %v3883
      %v3963 = vpop.f32.mrf.mxu0
      %v3964 = vadd.f32 0.0, %v3963
      %v3965 = vpop.f32.mrf.mxu0
      %v3966 = vadd.f32 0.0, %v3965
      %3967 = vmatmul.bf16.gmra.mxu0 %v3885
      %v3968 = vpop.f32.mrf.mxu0
      %v3969 = vadd.f32 0.0, %v3968
      %v3970 = vpop.f32.mrf.mxu0
      %v3971 = vadd.f32 0.0, %v3970
      %3972 = vdwg.mxu0
      %v3973 = vadd.f32 %v3844, %v3949
      %v3974 = vadd.f32 %v3845, %v3951
      %v3975 = vadd.f32 %v3846, %v3954
      %v3976 = vadd.f32 %v3847, %v3956
      %v3977 = vadd.f32 %v3848, %v3959
      %v3978 = vadd.f32 %v3849, %v3961
      %v3979 = vadd.f32 %v3850, %v3964
      %v3980 = vadd.f32 %v3851, %v3966
      %v3981 = vadd.f32 %v3852, %v3969
      %v3982 = vadd.f32 %v3853, %v3971
      %v3983 = vld [vmem:[#allocation2 + $0x8] sm:$0xc]
      %v3984 = vld [vmem:[#allocation2 + $0xc] sm:$0xf]
      %v3985 = vld [vmem:[#allocation2 + $0x10] sm:$0xf]
      %v3986 = vld [vmem:[#allocation2 + $0x14] sm:$0xf]
      %v3987 = vld [vmem:[#allocation2 + $0x18] sm:$0xf]
      %v3988 = vld [vmem:[#allocation2 + $0x1c] sm:$0xf]
      %v3989 = vld [vmem:[#allocation2 + $0x20] sm:$0xf]
      %v3990 = vld [vmem:[#allocation2 + $0x24] sm:$0xf]
      %v3991 = vld [vmem:[#allocation2 + $0x28] sm:$0xf]
      %v3992 = vld [vmem:[#allocation2 + $0x2c] sm:$0xf]
      %v3993 = vld [vmem:[#allocation2 + $0x30] sm:$0x3]
      %s3994 = scalar_lea.vmem %s5, 384
      %v3995 = vld [vmem:[%s3994] sm:$0xf]
      %v3996 = vld [vmem:[%s3994 + $0x4] sm:$0xf]
      %v3997 = vld [vmem:[%s3994 + $0x8] sm:$0xf]
      %v3998 = vld [vmem:[%s3994 + $0xc] sm:$0xf]
      %v3999 = vld [vmem:[%s3994 + $0x10] sm:$0xf]
      %v4000 = vld [vmem:[%s3994 + $0x14] sm:$0xf]
      %v4001 = vld [vmem:[%s3994 + $0x18] sm:$0xf]
      %v4002 = vld [vmem:[%s3994 + $0x1c] sm:$0xf]
      %v4003 = vld [vmem:[%s3994 + $0x20] sm:$0xf]
      %v4004 = vld [vmem:[%s3994 + $0x24] sm:$0xf]
      %v4005 = vld [vmem:[%s3994 + $0x28] sm:$0xf]
      %v4006 = vld [vmem:[%s3994 + $0x2c] sm:$0xf]
      %v4007 = vld [vmem:[%s3994 + $0x30] sm:$0xf]
      %v4008 = vld [vmem:[%s3994 + $0x34] sm:$0xf]
      %v4009 = vld [vmem:[%s3994 + $0x38] sm:$0xf]
      %v4010 = vld [vmem:[%s3994 + $0x3c] sm:$0xf]
      %v4022 = vunpack.c.l.b16 %v3983
      %v4023 = vunpack.c.l.b16 %v3984
      %v4024 = vunpack.c.l.b16 %v3985
      %v4025 = vunpack.c.l.b16 %v3986
      %v4026 = vunpack.c.l.b16 %v3987
      %v4027 = vunpack.c.l.b16 %v3988
      %v4028 = vunpack.c.l.b16 %v3989
      %v4029 = vunpack.c.l.b16 %v3990
      %v4030 = vunpack.c.l.b16 %v3991
      %v4031 = vunpack.c.l.b16 %v3992
      %v4032 = vunpack.c.l.b16 %v3993
      %v4033 = vpack.c.b16 %v4023, %v4022
      %v4034 = vpack.c.b16 %v4025, %v4024
      %v4035 = vpack.c.b16 %v4027, %v4026
      %v4036 = vpack.c.b16 %v4029, %v4028
      %v4037 = vpack.c.b16 %v4031, %v4030
      %v4038 = vpack.c.b16 %v4032, %v4032
      %v4039 = vrot.slane %v4033, 2
      %v4040 = vrot.slane %v4034, 2
      %v4041 = vsel %vm2085, %v4039, %v4040
      %v4042 = vrot.slane %v4035, 2
      %v4043 = vsel %vm2085, %v4040, %v4042
      %v4044 = vrot.slane %v4036, 2
      %v4045 = vsel %vm2085, %v4042, %v4044
      %v4046 = vrot.slane %v4037, 2
      %v4047 = vsel %vm2085, %v4044, %v4046
      %v4048 = vrot.slane %v4038, 2
      %v4049 = vsel %vm2085, %v4046, %v4048
      %v4071 = vunpack.c.l.b16 %v3995
      %v4072 = vunpack.c.l.b16 %v3996
      %v4073 = vunpack.c.l.b16 %v3997
      %v4074 = vunpack.c.l.b16 %v3998
      %v4075 = vunpack.c.l.b16 %v3999
      %v4076 = vunpack.c.l.b16 %v4000
      %v4077 = vunpack.c.l.b16 %v4001
      %v4078 = vunpack.c.l.b16 %v4002
      %v4079 = vunpack.c.l.b16 %v4003
      %v4080 = vunpack.c.l.b16 %v4004
      %v4081 = vunpack.c.l.b16 %v4005
      %v4082 = vunpack.c.l.b16 %v4006
      %v4083 = vunpack.c.l.b16 %v4007
      %v4084 = vunpack.c.l.b16 %v4008
      %v4085 = vunpack.c.l.b16 %v4009
      %v4086 = vunpack.c.l.b16 %v4010
      %v4087 = vpack.c.b16 %v4072, %v4071
      %v4088 = vpack.c.b16 %v4074, %v4073
      %v4089 = vpack.c.b16 %v4076, %v4075
      %v4090 = vpack.c.b16 %v4078, %v4077
      %v4091 = vpack.c.b16 %v4080, %v4079
      %v4092 = vpack.c.b16 %v4082, %v4081
      %v4093 = vpack.c.b16 %v4084, %v4083
      %v4094 = vpack.c.b16 %v4086, %v4085
      %4103 = vmatpush.bf16.msra.mxu0 %v4094
      %4104 = vmatpush.bf16.msra.mxu0 %v4093
      %4105 = vmatpush.bf16.msra.mxu0 %v4092
      %4106 = vmatpush.bf16.msra.mxu0 %v4091
      %4107 = vmatpush.bf16.msra.mxu0 %v4090
      %4108 = vmatpush.bf16.msra.mxu0 %v4089
      %4109 = vmatpush.bf16.msra.mxu0 %v4088
      %4110 = vmatpush.bf16.msra.mxu0 %v4087
      %4111 = vmatmul.bf16.gmra.mxu0 %v4041
      %v4112 = vpop.f32.mrf.mxu0
      %v4113 = vadd.f32 0.0, %v4112
      %v4114 = vpop.f32.mrf.mxu0
      %v4115 = vadd.f32 0.0, %v4114
      %4116 = vmatmul.bf16.gmra.mxu0 %v4043
      %v4117 = vpop.f32.mrf.mxu0
      %v4118 = vadd.f32 0.0, %v4117
      %v4119 = vpop.f32.mrf.mxu0
      %v4120 = vadd.f32 0.0, %v4119
      %4121 = vmatmul.bf16.gmra.mxu0 %v4045
      %v4122 = vpop.f32.mrf.mxu0
      %v4123 = vadd.f32 0.0, %v4122
      %v4124 = vpop.f32.mrf.mxu0
      %v4125 = vadd.f32 0.0, %v4124
      %4126 = vmatmul.bf16.gmra.mxu0 %v4047
      %v4127 = vpop.f32.mrf.mxu0
      %v4128 = vadd.f32 0.0, %v4127
      %v4129 = vpop.f32.mrf.mxu0
      %v4130 = vadd.f32 0.0, %v4129
      %4131 = vmatmul.bf16.gmra.mxu0 %v4049
      %v4132 = vpop.f32.mrf.mxu0
      %v4133 = vadd.f32 0.0, %v4132
      %v4134 = vpop.f32.mrf.mxu0
      %v4135 = vadd.f32 0.0, %v4134
      %4136 = vdwg.mxu0
      %v4137 = vadd.f32 %v3973, %v4113
      %v4138 = vadd.f32 %v3974, %v4115
      %v4139 = vadd.f32 %v3975, %v4118
      %v4140 = vadd.f32 %v3976, %v4120
      %v4141 = vadd.f32 %v3977, %v4123
      %v4142 = vadd.f32 %v3978, %v4125
      %v4143 = vadd.f32 %v3979, %v4128
      %v4144 = vadd.f32 %v3980, %v4130
      %v4145 = vadd.f32 %v3981, %v4133
      %v4146 = vadd.f32 %v3982, %v4135
      %v4147 = vld [vmem:[#allocation2 + $0x30] sm:$0x7]
      %s4148 = scalar_lea.vmem %s5, 448
      %v4149 = vld [vmem:[%s4148] sm:$0xf]
      %v4150 = vld [vmem:[%s4148 + $0x4] sm:$0xf]
      %v4151 = vld [vmem:[%s4148 + $0x8] sm:$0xf]
      %v4152 = vld [vmem:[%s4148 + $0xc] sm:$0xf]
      %v4153 = vld [vmem:[%s4148 + $0x10] sm:$0xf]
      %v4154 = vld [vmem:[%s4148 + $0x14] sm:$0xf]
      %v4155 = vld [vmem:[%s4148 + $0x18] sm:$0xf]
      %v4156 = vld [vmem:[%s4148 + $0x1c] sm:$0xf]
      %v4157 = vld [vmem:[%s4148 + $0x20] sm:$0xf]
      %v4158 = vld [vmem:[%s4148 + $0x24] sm:$0xf]
      %v4159 = vld [vmem:[%s4148 + $0x28] sm:$0xf]
      %v4160 = vld [vmem:[%s4148 + $0x2c] sm:$0xf]
      %v4161 = vld [vmem:[%s4148 + $0x30] sm:$0xf]
      %v4162 = vld [vmem:[%s4148 + $0x34] sm:$0xf]
      %v4163 = vld [vmem:[%s4148 + $0x38] sm:$0xf]
      %v4164 = vld [vmem:[%s4148 + $0x3c] sm:$0xf]
      %v4166 = vunpack.c.l.b16 %v4147
      %v4167 = vpack.c.b16 %v4166, %v4166
      %v4169 = vshrl.u32 %v4033, 16
      %v4171 = vrot.slane %v4169, 2
      %v4172 = vshll.u32 %v4033, 16
      %v4174 = vrot.slane %v4172, 3
      %v4175 = vor.u32 %v4171, %v4174
      %v4177 = vshrl.u32 %v4034, 16
      %v4179 = vrot.slane %v4177, 2
      %v4180 = vshll.u32 %v4034, 16
      %v4182 = vrot.slane %v4180, 3
      %v4183 = vor.u32 %v4179, %v4182
      %v4184 = vsel %vm2379, %v4175, %v4183
      %v4186 = vshrl.u32 %v4035, 16
      %v4188 = vrot.slane %v4186, 2
      %v4189 = vshll.u32 %v4035, 16
      %v4191 = vrot.slane %v4189, 3
      %v4192 = vor.u32 %v4188, %v4191
      %v4193 = vsel %vm2379, %v4183, %v4192
      %v4195 = vshrl.u32 %v4036, 16
      %v4197 = vrot.slane %v4195, 2
      %v4198 = vshll.u32 %v4036, 16
      %v4200 = vrot.slane %v4198, 3
      %v4201 = vor.u32 %v4197, %v4200
      %v4202 = vsel %vm2379, %v4192, %v4201
      %v4204 = vshrl.u32 %v4037, 16
      %v4206 = vrot.slane %v4204, 2
      %v4207 = vshll.u32 %v4037, 16
      %v4209 = vrot.slane %v4207, 3
      %v4210 = vor.u32 %v4206, %v4209
      %v4211 = vsel %vm2379, %v4201, %v4210
      %v4213 = vshrl.u32 %v4167, 16
      %v4215 = vrot.slane %v4213, 2
      %v4216 = vshll.u32 %v4167, 16
      %v4218 = vrot.slane %v4216, 3
      %v4219 = vor.u32 %v4215, %v4218
      %v4220 = vsel %vm2379, %v4210, %v4219
      %v4242 = vunpack.c.l.b16 %v4149
      %v4243 = vunpack.c.l.b16 %v4150
      %v4244 = vunpack.c.l.b16 %v4151
      %v4245 = vunpack.c.l.b16 %v4152
      %v4246 = vunpack.c.l.b16 %v4153
      %v4247 = vunpack.c.l.b16 %v4154
      %v4248 = vunpack.c.l.b16 %v4155
      %v4249 = vunpack.c.l.b16 %v4156
      %v4250 = vunpack.c.l.b16 %v4157
      %v4251 = vunpack.c.l.b16 %v4158
      %v4252 = vunpack.c.l.b16 %v4159
      %v4253 = vunpack.c.l.b16 %v4160
      %v4254 = vunpack.c.l.b16 %v4161
      %v4255 = vunpack.c.l.b16 %v4162
      %v4256 = vunpack.c.l.b16 %v4163
      %v4257 = vunpack.c.l.b16 %v4164
      %v4258 = vpack.c.b16 %v4243, %v4242
      %v4259 = vpack.c.b16 %v4245, %v4244
      %v4260 = vpack.c.b16 %v4247, %v4246
      %v4261 = vpack.c.b16 %v4249, %v4248
      %v4262 = vpack.c.b16 %v4251, %v4250
      %v4263 = vpack.c.b16 %v4253, %v4252
      %v4264 = vpack.c.b16 %v4255, %v4254
      %v4265 = vpack.c.b16 %v4257, %v4256
      %4274 = vmatpush.bf16.msra.mxu0 %v4265
      %4275 = vmatpush.bf16.msra.mxu0 %v4264
      %4276 = vmatpush.bf16.msra.mxu0 %v4263
      %4277 = vmatpush.bf16.msra.mxu0 %v4262
      %4278 = vmatpush.bf16.msra.mxu0 %v4261
      %4279 = vmatpush.bf16.msra.mxu0 %v4260
      %4280 = vmatpush.bf16.msra.mxu0 %v4259
      %4281 = vmatpush.bf16.msra.mxu0 %v4258
      %4282 = vmatmul.bf16.gmra.mxu0 %v4184
      %v4283 = vpop.f32.mrf.mxu0
      %v4284 = vadd.f32 0.0, %v4283
      %v4285 = vpop.f32.mrf.mxu0
      %v4286 = vadd.f32 0.0, %v4285
      %4287 = vmatmul.bf16.gmra.mxu0 %v4193
      %v4288 = vpop.f32.mrf.mxu0
      %v4289 = vadd.f32 0.0, %v4288
      %v4290 = vpop.f32.mrf.mxu0
      %v4291 = vadd.f32 0.0, %v4290
      %4292 = vmatmul.bf16.gmra.mxu0 %v4202
      %v4293 = vpop.f32.mrf.mxu0
      %v4294 = vadd.f32 0.0, %v4293
      %v4295 = vpop.f32.mrf.mxu0
      %v4296 = vadd.f32 0.0, %v4295
      %4297 = vmatmul.bf16.gmra.mxu0 %v4211
      %v4298 = vpop.f32.mrf.mxu0
      %v4299 = vadd.f32 0.0, %v4298
      %v4300 = vpop.f32.mrf.mxu0
      %v4301 = vadd.f32 0.0, %v4300
      %4302 = vmatmul.bf16.gmra.mxu0 %v4220
      %v4303 = vpop.f32.mrf.mxu0
      %v4304 = vadd.f32 0.0, %v4303
      %v4305 = vpop.f32.mrf.mxu0
      %v4306 = vadd.f32 0.0, %v4305
      %4307 = vdwg.mxu0
      %v4308 = vadd.f32 %v4137, %v4284
      %v4309 = vadd.f32 %v4138, %v4286
      %v4310 = vadd.f32 %v4139, %v4289
      %v4311 = vadd.f32 %v4140, %v4291
      %v4312 = vadd.f32 %v4141, %v4294
      %v4313 = vadd.f32 %v4142, %v4296
      %v4314 = vadd.f32 %v4143, %v4299
      %v4315 = vadd.f32 %v4144, %v4301
      %v4316 = vadd.f32 %v4145, %v4304
      %v4317 = vadd.f32 %v4146, %v4306
      %v4318 = vld [vmem:[#allocation2 + $0x8] sm:$0x8]
      %s4319 = scalar_lea.vmem %s5, 512
      %v4320 = vld [vmem:[%s4319] sm:$0xf]
      %v4321 = vld [vmem:[%s4319 + $0x4] sm:$0xf]
      %v4322 = vld [vmem:[%s4319 + $0x8] sm:$0xf]
      %v4323 = vld [vmem:[%s4319 + $0xc] sm:$0xf]
      %v4324 = vld [vmem:[%s4319 + $0x10] sm:$0xf]
      %v4325 = vld [vmem:[%s4319 + $0x14] sm:$0xf]
      %v4326 = vld [vmem:[%s4319 + $0x18] sm:$0xf]
      %v4327 = vld [vmem:[%s4319 + $0x1c] sm:$0xf]
      %v4328 = vld [vmem:[%s4319 + $0x20] sm:$0xf]
      %v4329 = vld [vmem:[%s4319 + $0x24] sm:$0xf]
      %v4330 = vld [vmem:[%s4319 + $0x28] sm:$0xf]
      %v4331 = vld [vmem:[%s4319 + $0x2c] sm:$0xf]
      %v4332 = vld [vmem:[%s4319 + $0x30] sm:$0xf]
      %v4333 = vld [vmem:[%s4319 + $0x34] sm:$0xf]
      %v4334 = vld [vmem:[%s4319 + $0x38] sm:$0xf]
      %v4335 = vld [vmem:[%s4319 + $0x3c] sm:$0xf]
      %v4337 = vunpack.c.l.b16 %v4318
      %v4338 = vpack.c.b16 %v4023, %v4337
      %v4339 = vrot.slane %v4338, 3
      %v4340 = vrot.slane %v4034, 3
      %v4341 = vsel %vm2551, %v4339, %v4340
      %v4342 = vrot.slane %v4035, 3
      %v4343 = vsel %vm2551, %v4340, %v4342
      %v4344 = vrot.slane %v4036, 3
      %v4345 = vsel %vm2551, %v4342, %v4344
      %v4346 = vrot.slane %v4037, 3
      %v4347 = vsel %vm2551, %v4344, %v4346
      %v4348 = vrot.slane %v4167, 3
      %v4349 = vsel %vm2551, %v4346, %v4348
      %v4371 = vunpack.c.l.b16 %v4320
      %v4372 = vunpack.c.l.b16 %v4321
      %v4373 = vunpack.c.l.b16 %v4322
      %v4374 = vunpack.c.l.b16 %v4323
      %v4375 = vunpack.c.l.b16 %v4324
      %v4376 = vunpack.c.l.b16 %v4325
      %v4377 = vunpack.c.l.b16 %v4326
      %v4378 = vunpack.c.l.b16 %v4327
      %v4379 = vunpack.c.l.b16 %v4328
      %v4380 = vunpack.c.l.b16 %v4329
      %v4381 = vunpack.c.l.b16 %v4330
      %v4382 = vunpack.c.l.b16 %v4331
      %v4383 = vunpack.c.l.b16 %v4332
      %v4384 = vunpack.c.l.b16 %v4333
      %v4385 = vunpack.c.l.b16 %v4334
      %v4386 = vunpack.c.l.b16 %v4335
      %v4387 = vpack.c.b16 %v4372, %v4371
      %v4388 = vpack.c.b16 %v4374, %v4373
      %v4389 = vpack.c.b16 %v4376, %v4375
      %v4390 = vpack.c.b16 %v4378, %v4377
      %v4391 = vpack.c.b16 %v4380, %v4379
      %v4392 = vpack.c.b16 %v4382, %v4381
      %v4393 = vpack.c.b16 %v4384, %v4383
      %v4394 = vpack.c.b16 %v4386, %v4385
      %4403 = vmatpush.bf16.msra.mxu0 %v4394
      %4404 = vmatpush.bf16.msra.mxu0 %v4393
      %4405 = vmatpush.bf16.msra.mxu0 %v4392
      %4406 = vmatpush.bf16.msra.mxu0 %v4391
      %4407 = vmatpush.bf16.msra.mxu0 %v4390
      %4408 = vmatpush.bf16.msra.mxu0 %v4389
      %4409 = vmatpush.bf16.msra.mxu0 %v4388
      %4410 = vmatpush.bf16.msra.mxu0 %v4387
      %4411 = vmatmul.bf16.gmra.mxu0 %v4341
      %v4412 = vpop.f32.mrf.mxu0
      %v4413 = vadd.f32 0.0, %v4412
      %v4414 = vpop.f32.mrf.mxu0
      %v4415 = vadd.f32 0.0, %v4414
      %4416 = vmatmul.bf16.gmra.mxu0 %v4343
      %v4417 = vpop.f32.mrf.mxu0
      %v4418 = vadd.f32 0.0, %v4417
      %v4419 = vpop.f32.mrf.mxu0
      %v4420 = vadd.f32 0.0, %v4419
      %4421 = vmatmul.bf16.gmra.mxu0 %v4345
      %v4422 = vpop.f32.mrf.mxu0
      %v4423 = vadd.f32 0.0, %v4422
      %v4424 = vpop.f32.mrf.mxu0
      %v4425 = vadd.f32 0.0, %v4424
      %4426 = vmatmul.bf16.gmra.mxu0 %v4347
      %v4427 = vpop.f32.mrf.mxu0
      %v4428 = vadd.f32 0.0, %v4427
      %v4429 = vpop.f32.mrf.mxu0
      %v4430 = vadd.f32 0.0, %v4429
      %4431 = vmatmul.bf16.gmra.mxu0 %v4349
      %v4432 = vpop.f32.mrf.mxu0
      %v4433 = vadd.f32 0.0, %v4432
      %v4434 = vpop.f32.mrf.mxu0
      %v4435 = vadd.f32 0.0, %v4434
      %4436 = vdwg.mxu0
      %v4437 = vadd.f32 %v4308, %v4413
      %v4438 = vadd.f32 %v4309, %v4415
      %v4439 = vadd.f32 %v4310, %v4418
      %v4440 = vadd.f32 %v4311, %v4420
      %v4441 = vadd.f32 %v4312, %v4423
      %v4442 = vadd.f32 %v4313, %v4425
      %v4443 = vadd.f32 %v4314, %v4428
      %v4444 = vadd.f32 %v4315, %v4430
      %v4445 = vadd.f32 %v4316, %v4433
      %v4446 = vadd.f32 %v4317, %v4435
      %v4447 = vld [vmem:[%s6] sm:$0x1]
      %v4449 = vperm.slane %v4447, 0
      %v4451 = vadd.f32 %v4437, %v4449
      %v4452 = vadd.f32 %v4438, %v4449
      %v4453 = vadd.f32 %v4439, %v4449
      %v4454 = vadd.f32 %v4440, %v4449
      %v4455 = vadd.f32 %v4441, %v4449
      %v4456 = vadd.f32 %v4442, %v4449
      %v4457 = vadd.f32 %v4443, %v4449
      %v4458 = vadd.f32 %v4444, %v4449
      %v4459 = vadd.f32 %v4445, %v4449
      %v4460 = vadd.f32 %v4446, %v4449
      %v4461 = vmax.f32 %v4451, 0.0
      %v4462 = vmax.f32 %v4452, 0.0
      %v4463 = vmax.f32 %v4453, 0.0
      %v4464 = vmax.f32 %v4454, 0.0
      %v4465 = vmax.f32 %v4455, 0.0
      %v4466 = vmax.f32 %v4456, 0.0
      %v4467 = vmax.f32 %v4457, 0.0
      %v4468 = vmax.f32 %v4458, 0.0
      %v4469 = vmax.f32 %v4459, 0.0
      %v4470 = vmax.f32 %v4460, 0.0
      %v4471 = vpack.c.bf16 %v4462, %v4461
      %v4472 = vpack.c.bf16 %v4464, %v4463
      %v4473 = vpack.c.bf16 %v4466, %v4465
      %v4474 = vpack.c.bf16 %v4468, %v4467
      %v4475 = vpack.c.bf16 %v4470, %v4469
      %v4476 = vld [vmem:[%s9] sm:$0xf]
      %v4477 = vld [vmem:[%s9 + $0x4] sm:$0xf]
      %v4478 = vld [vmem:[%s9 + $0x8] sm:$0xf]
      %v4479 = vld [vmem:[%s9 + $0xc] sm:$0xf]
      %v4480 = vld [vmem:[%s9 + $0x10] sm:$0xf]
      %v4481 = vld [vmem:[%s9 + $0x14] sm:$0xf]
      %v4482 = vld [vmem:[%s9 + $0x18] sm:$0xf]
      %v4483 = vld [vmem:[%s9 + $0x1c] sm:$0xf]
      %v4484 = vld [vmem:[%s9 + $0x20] sm:$0xf]
      %v4485 = vld [vmem:[%s9 + $0x24] sm:$0xf]
      %v4486 = vld [vmem:[%s9 + $0x28] sm:$0xf]
      %v4487 = vld [vmem:[%s9 + $0x2c] sm:$0xf]
      %v4488 = vld [vmem:[%s9 + $0x30] sm:$0xf]
      %v4489 = vld [vmem:[%s9 + $0x34] sm:$0xf]
      %v4490 = vld [vmem:[%s9 + $0x38] sm:$0xf]
      %v4491 = vld [vmem:[%s9 + $0x3c] sm:$0xf]
      %v4508 = vunpack.c.l.b16 %v4476
      %v4509 = vunpack.c.l.b16 %v4477
      %v4510 = vunpack.c.l.b16 %v4478
      %v4511 = vunpack.c.l.b16 %v4479
      %v4512 = vunpack.c.l.b16 %v4480
      %v4513 = vunpack.c.l.b16 %v4481
      %v4514 = vunpack.c.l.b16 %v4482
      %v4515 = vunpack.c.l.b16 %v4483
      %v4516 = vunpack.c.l.b16 %v4484
      %v4517 = vunpack.c.l.b16 %v4485
      %v4518 = vunpack.c.l.b16 %v4486
      %v4519 = vunpack.c.l.b16 %v4487
      %v4520 = vunpack.c.l.b16 %v4488
      %v4521 = vunpack.c.l.b16 %v4489
      %v4522 = vunpack.c.l.b16 %v4490
      %v4523 = vunpack.c.l.b16 %v4491
      %v4524 = vpack.c.b16 %v4509, %v4508
      %v4525 = vpack.c.b16 %v4511, %v4510
      %v4526 = vpack.c.b16 %v4513, %v4512
      %v4527 = vpack.c.b16 %v4515, %v4514
      %v4528 = vpack.c.b16 %v4517, %v4516
      %v4529 = vpack.c.b16 %v4519, %v4518
      %v4530 = vpack.c.b16 %v4521, %v4520
      %v4531 = vpack.c.b16 %v4523, %v4522
      %4540 = vmatpush.bf16.msra.mxu0 %v4531
      %4541 = vmatpush.bf16.msra.mxu0 %v4530
      %4542 = vmatpush.bf16.msra.mxu0 %v4529
      %4543 = vmatpush.bf16.msra.mxu0 %v4528
      %4544 = vmatpush.bf16.msra.mxu0 %v4527
      %4545 = vmatpush.bf16.msra.mxu0 %v4526
      %4546 = vmatpush.bf16.msra.mxu0 %v4525
      %4547 = vmatpush.bf16.msra.mxu0 %v4524
      %4548 = vmatmul.bf16.gmra.mxu0 %v4471
      %v4549 = vpop.f32.mrf.mxu0
      %v4550 = vadd.f32 0.0, %v4549
      %v4551 = vpop.f32.mrf.mxu0
      %v4552 = vadd.f32 0.0, %v4551
      %4553 = vmatmul.bf16.gmra.mxu0 %v4472
      %v4554 = vpop.f32.mrf.mxu0
      %v4555 = vadd.f32 0.0, %v4554
      %v4556 = vpop.f32.mrf.mxu0
      %v4557 = vadd.f32 0.0, %v4556
      %4558 = vmatmul.bf16.gmra.mxu0 %v4473
      %v4559 = vpop.f32.mrf.mxu0
      %v4560 = vadd.f32 0.0, %v4559
      %v4561 = vpop.f32.mrf.mxu0
      %v4562 = vadd.f32 0.0, %v4561
      %4563 = vmatmul.bf16.gmra.mxu0 %v4474
      %v4564 = vpop.f32.mrf.mxu0
      %v4565 = vadd.f32 0.0, %v4564
      %v4566 = vpop.f32.mrf.mxu0
      %v4567 = vadd.f32 0.0, %v4566
      %4568 = vmatmul.bf16.gmra.mxu0 %v4475
      %v4569 = vpop.f32.mrf.mxu0
      %v4570 = vadd.f32 0.0, %v4569
      %v4571 = vpop.f32.mrf.mxu0
      %v4572 = vadd.f32 0.0, %v4571
      %4573 = vdwg.mxu0
      %v4574 = vadd.f32 %v2931, %v4550
      %v4575 = vadd.f32 %v2933, %v4552
      %v4576 = vadd.f32 %v2936, %v4555
      %v4577 = vadd.f32 %v2938, %v4557
      %v4578 = vadd.f32 %v2941, %v4560
      %v4579 = vadd.f32 %v2943, %v4562
      %v4580 = vadd.f32 %v2946, %v4565
      %v4581 = vadd.f32 %v2948, %v4567
      %v4582 = vadd.f32 %v2951, %v4570
      %v4583 = vadd.f32 %v2953, %v4572
      %v4584 = vld [vmem:[%s10] sm:$0x1]
      %v4586 = vperm.slane %v4584, 0
      %v4588 = vadd.f32 %v4574, %v4586
      %v4589 = vadd.f32 %v4575, %v4586
      %v4590 = vadd.f32 %v4576, %v4586
      %v4591 = vadd.f32 %v4577, %v4586
      %v4592 = vadd.f32 %v4578, %v4586
      %v4593 = vadd.f32 %v4579, %v4586
      %v4594 = vadd.f32 %v4580, %v4586
      %v4595 = vadd.f32 %v4581, %v4586
      %v4596 = vadd.f32 %v4582, %v4586
      %v4597 = vadd.f32 %v4583, %v4586
      %v4598 = vmax.f32 %v4588, 0.0
      %v4599 = vmax.f32 %v4589, 0.0
      %v4600 = vmax.f32 %v4590, 0.0
      %v4601 = vmax.f32 %v4591, 0.0
      %v4602 = vmax.f32 %v4592, 0.0
      %v4603 = vmax.f32 %v4593, 0.0
      %v4604 = vmax.f32 %v4594, 0.0
      %v4605 = vmax.f32 %v4595, 0.0
      %v4606 = vmax.f32 %v4596, 0.0
      %v4607 = vmax.f32 %v4597, 0.0
      %v4608 = vpack.c.bf16 %v4599, %v4598
      %v4609 = vpack.c.bf16 %v4601, %v4600
      %v4610 = vpack.c.bf16 %v4603, %v4602
      %v4611 = vpack.c.bf16 %v4605, %v4604
      %v4612 = vpack.c.bf16 %v4607, %v4606
      %v4613 = vld [vmem:[%s11] sm:$0xf]
      %v4614 = vld [vmem:[%s11 + $0x4] sm:$0xf]
      %v4615 = vld [vmem:[%s11 + $0x8] sm:$0xf]
      %v4616 = vld [vmem:[%s11 + $0xc] sm:$0xf]
      %v4617 = vld [vmem:[%s11 + $0x10] sm:$0xf]
      %v4618 = vld [vmem:[%s11 + $0x14] sm:$0xf]
      %v4619 = vld [vmem:[%s11 + $0x18] sm:$0xf]
      %v4620 = vld [vmem:[%s11 + $0x1c] sm:$0xf]
      %v4621 = vld [vmem:[%s11 + $0x20] sm:$0xf]
      %v4622 = vld [vmem:[%s11 + $0x24] sm:$0xf]
      %v4623 = vld [vmem:[%s11 + $0x28] sm:$0xf]
      %v4624 = vld [vmem:[%s11 + $0x2c] sm:$0xf]
      %v4625 = vld [vmem:[%s11 + $0x30] sm:$0xf]
      %v4626 = vld [vmem:[%s11 + $0x34] sm:$0xf]
      %v4627 = vld [vmem:[%s11 + $0x38] sm:$0xf]
      %v4628 = vld [vmem:[%s11 + $0x3c] sm:$0xf]
      %v4629 = vld [vmem:[%s12] sm:$0x1]
      %v4631 = vperm.slane %v4629, 0
      %v4649 = vunpack.c.l.b16 %v4613
      %v4650 = vunpack.c.l.b16 %v4614
      %v4651 = vunpack.c.l.b16 %v4615
      %v4652 = vunpack.c.l.b16 %v4616
      %v4653 = vunpack.c.l.b16 %v4617
      %v4654 = vunpack.c.l.b16 %v4618
      %v4655 = vunpack.c.l.b16 %v4619
      %v4656 = vunpack.c.l.b16 %v4620
      %v4657 = vunpack.c.l.b16 %v4621
      %v4658 = vunpack.c.l.b16 %v4622
      %v4659 = vunpack.c.l.b16 %v4623
      %v4660 = vunpack.c.l.b16 %v4624
      %v4661 = vunpack.c.l.b16 %v4625
      %v4662 = vunpack.c.l.b16 %v4626
      %v4663 = vunpack.c.l.b16 %v4627
      %v4664 = vunpack.c.l.b16 %v4628
      %v4665 = vpack.c.b16 %v4650, %v4649
      %v4666 = vpack.c.b16 %v4652, %v4651
      %v4667 = vpack.c.b16 %v4654, %v4653
      %v4668 = vpack.c.b16 %v4656, %v4655
      %v4669 = vpack.c.b16 %v4658, %v4657
      %v4670 = vpack.c.b16 %v4660, %v4659
      %v4671 = vpack.c.b16 %v4662, %v4661
      %v4672 = vpack.c.b16 %v4664, %v4663
      %4681 = vmatpush.bf16.msra.mxu0 %v4672
      %4682 = vmatpush.bf16.msra.mxu0 %v4671
      %4683 = vmatpush.bf16.msra.mxu0 %v4670
      %4684 = vmatpush.bf16.msra.mxu0 %v4669
      %4685 = vmatpush.bf16.msra.mxu0 %v4668
      %4686 = vmatpush.bf16.msra.mxu0 %v4667
      %4687 = vmatpush.bf16.msra.mxu0 %v4666
      %4688 = vmatpush.bf16.msra.mxu0 %v4665
      %4689 = vmatmul.bf16.gmra.mxu0 %v4608
      %v4690 = vpop.f32.mrf.mxu0
      %v4691 = vadd.f32 %v4631, %v4690
      %v4692 = vpop.f32.mrf.mxu0
      %v4693 = vadd.f32 %v4631, %v4692
      %4694 = vmatmul.bf16.gmra.mxu0 %v4609
      %v4695 = vpop.f32.mrf.mxu0
      %v4696 = vadd.f32 %v4631, %v4695
      %v4697 = vpop.f32.mrf.mxu0
      %v4698 = vadd.f32 %v4631, %v4697
      %4699 = vmatmul.bf16.gmra.mxu0 %v4610
      %v4700 = vpop.f32.mrf.mxu0
      %v4701 = vadd.f32 %v4631, %v4700
      %v4702 = vpop.f32.mrf.mxu0
      %v4703 = vadd.f32 %v4631, %v4702
      %4704 = vmatmul.bf16.gmra.mxu0 %v4611
      %v4705 = vpop.f32.mrf.mxu0
      %v4706 = vadd.f32 %v4631, %v4705
      %v4707 = vpop.f32.mrf.mxu0
      %v4708 = vadd.f32 %v4631, %v4707
      %4709 = vmatmul.bf16.gmra.mxu0 %v4612
      %v4710 = vpop.f32.mrf.mxu0
      %v4711 = vadd.f32 %v4631, %v4710
      %v4712 = vpop.f32.mrf.mxu0
      %v4713 = vadd.f32 %v4631, %v4712
      %4714 = vdwg.mxu0
      %v4715 = vmax.f32 %v4691, 0.0
      %v4716 = vmax.f32 %v4693, 0.0
      %v4717 = vmax.f32 %v4696, 0.0
      %v4718 = vmax.f32 %v4698, 0.0
      %v4719 = vmax.f32 %v4701, 0.0
      %v4720 = vmax.f32 %v4703, 0.0
      %v4721 = vmax.f32 %v4706, 0.0
      %v4722 = vmax.f32 %v4708, 0.0
      %v4723 = vmax.f32 %v4711, 0.0
      %v4724 = vmax.f32 %v4713, 0.0
      %4725 = vst [vmem:[%s440] sm:$0xf] 0
      %v4726 = vld [vmem:[%s440 + $0x4] sm:$0x3]
      %v4727 = vsel %vm1100, 0, %v4726
      %4728 = vst [vmem:[%s440 + $0x4] sm:$0x3] %v4727
      %v4729 = vld [vmem:[%s440 + $0x2c] sm:$0xe]
      %v4730 = vsel %vm1106, 0, %v4729
      %4731 = vst [vmem:[%s440 + $0x2c] sm:$0xe] %v4730
      %4732 = vst [vmem:[%s440 + $0x30] sm:$0xf] 0
      %v4733 = vmul.f32 %v4715, %v813
      %v4734 = vmul.f32 %v4716, %v814
      %v4735 = vmul.f32 %v4717, %v815
      %v4736 = vmul.f32 %v4718, %v816
      %v4737 = vmul.f32 %v4719, %v817
      %v4738 = vmul.f32 %v4720, %v818
      %v4739 = vmul.f32 %v4721, %v819
      %v4740 = vmul.f32 %v4722, %v820
      %v4741 = vmul.f32 %v4723, %v821
      %v4742 = vmul.f32 %v4724, %v822
      %v4743 = vpack.c.bf16 %v4733, %v4733
      %v4744 = vpack.c.bf16 %v4734, %v4734
      %v4745 = vpack.c.bf16 %v4735, %v4735
      %v4746 = vpack.c.bf16 %v4736, %v4736
      %v4747 = vpack.c.bf16 %v4737, %v4737
      %v4748 = vpack.c.bf16 %v4738, %v4738
      %v4749 = vpack.c.bf16 %v4739, %v4739
      %v4750 = vpack.c.bf16 %v4740, %v4740
      %v4751 = vpack.c.bf16 %v4741, %v4741
      %v4752 = vpack.c.bf16 %v4742, %v4742
      %v4754 = vshrl.u32 %v4743, 16
      %v4756 = vrot.slane %v4754, 6
      %v4757 = vshll.u32 %v4743, 16
      %v4759 = vrot.slane %v4757, 7
      %v4760 = vor.u32 %v4756, %v4759
      %v4761 = vrot.slane %v4760, 4
      %v4763 = vshrl.u32 %v4744, 16
      %v4765 = vrot.slane %v4763, 6
      %v4766 = vshll.u32 %v4744, 16
      %v4768 = vrot.slane %v4766, 7
      %v4769 = vor.u32 %v4765, %v4768
      %v4770 = vsel %vm1146, %v4761, %v4769
      %v4771 = vrot.slane %v4769, 4
      %v4773 = vshrl.u32 %v4745, 16
      %v4775 = vrot.slane %v4773, 6
      %v4776 = vshll.u32 %v4745, 16
      %v4778 = vrot.slane %v4776, 7
      %v4779 = vor.u32 %v4775, %v4778
      %v4780 = vsel %vm1146, %v4771, %v4779
      %v4781 = vrot.slane %v4779, 4
      %v4783 = vshrl.u32 %v4746, 16
      %v4785 = vrot.slane %v4783, 6
      %v4786 = vshll.u32 %v4746, 16
      %v4788 = vrot.slane %v4786, 7
      %v4789 = vor.u32 %v4785, %v4788
      %v4790 = vsel %vm1146, %v4781, %v4789
      %v4791 = vrot.slane %v4789, 4
      %v4793 = vshrl.u32 %v4747, 16
      %v4795 = vrot.slane %v4793, 6
      %v4796 = vshll.u32 %v4747, 16
      %v4798 = vrot.slane %v4796, 7
      %v4799 = vor.u32 %v4795, %v4798
      %v4800 = vsel %vm1146, %v4791, %v4799
      %v4801 = vrot.slane %v4799, 4
      %v4803 = vshrl.u32 %v4748, 16
      %v4805 = vrot.slane %v4803, 6
      %v4806 = vshll.u32 %v4748, 16
      %v4808 = vrot.slane %v4806, 7
      %v4809 = vor.u32 %v4805, %v4808
      %v4810 = vsel %vm1146, %v4801, %v4809
      %v4811 = vrot.slane %v4809, 4
      %v4813 = vshrl.u32 %v4749, 16
      %v4815 = vrot.slane %v4813, 6
      %v4816 = vshll.u32 %v4749, 16
      %v4818 = vrot.slane %v4816, 7
      %v4819 = vor.u32 %v4815, %v4818
      %v4820 = vsel %vm1146, %v4811, %v4819
      %v4821 = vrot.slane %v4819, 4
      %v4823 = vshrl.u32 %v4750, 16
      %v4825 = vrot.slane %v4823, 6
      %v4826 = vshll.u32 %v4750, 16
      %v4828 = vrot.slane %v4826, 7
      %v4829 = vor.u32 %v4825, %v4828
      %v4830 = vsel %vm1146, %v4821, %v4829
      %v4831 = vrot.slane %v4829, 4
      %v4833 = vshrl.u32 %v4751, 16
      %v4835 = vrot.slane %v4833, 6
      %v4836 = vshll.u32 %v4751, 16
      %v4838 = vrot.slane %v4836, 7
      %v4839 = vor.u32 %v4835, %v4838
      %v4840 = vsel %vm1146, %v4831, %v4839
      %v4841 = vrot.slane %v4839, 4
      %v4843 = vshrl.u32 %v4752, 16
      %v4845 = vrot.slane %v4843, 6
      %v4846 = vshll.u32 %v4752, 16
      %v4848 = vrot.slane %v4846, 7
      %v4849 = vor.u32 %v4845, %v4848
      %v4850 = vsel %vm1146, %v4841, %v4849
      %v4851 = vrot.slane %v4849, 4
      %v4863 = vld [vmem:[%s440 + $0x4] sm:$0xe]
      %v4864 = vsel %vm1106, %v4760, %v4863
      %4865 = vst [vmem:[%s440 + $0x4] sm:$0xe] %v4864
      %4866 = vst [vmem:[%s440 + $0x8] sm:$0xf] %v4770
      %4867 = vst [vmem:[%s440 + $0xc] sm:$0xf] %v4780
      %4868 = vst [vmem:[%s440 + $0x10] sm:$0xf] %v4790
      %4869 = vst [vmem:[%s440 + $0x14] sm:$0xf] %v4800
      %4870 = vst [vmem:[%s440 + $0x18] sm:$0xf] %v4810
      %4871 = vst [vmem:[%s440 + $0x1c] sm:$0xf] %v4820
      %4872 = vst [vmem:[%s440 + $0x20] sm:$0xf] %v4830
      %4873 = vst [vmem:[%s440 + $0x24] sm:$0xf] %v4840
      %4874 = vst [vmem:[%s440 + $0x28] sm:$0xf] %v4850
      %v4875 = vld [vmem:[%s440 + $0x2c] sm:$0x3]
      %v4876 = vsel %vm1100, %v4851, %v4875
      %4877 = vst [vmem:[%s440 + $0x2c] sm:$0x3] %v4876
      %p4878 = scmp.lt.s32.totalorder %s24, 1
      %s4879 = scalar_select %p4878, %s24, 1
      %s4880 = smul.addr %s4879, 13
      %s4881 = smul.addr %s4880, 4
      %s4882 = scalar_lea.vmem %s13, %s4881
      // Predicated region
      $region73: #{hg_stage_forward.2} parent=71 // pred_check
        %p4883 = pneg %p320
      $region74: #{hg_stage_forward.2} parent=71 // pred_check_branch
        %4885 = sbr.rel (%p4883) target = $region76
      $region75: #{hg_stage_forward.2} parent=71 // pred_region
        _
      $region76: #{hg_stage_forward.2} parent=71 // pred_fallthru
        _
    $region72: #{hg_stage_forward.2} parent=5 // pred_fallthru
      _
    %p4886 = scmp.le.s32.totalorder 2, %s19
    // Predicated region
    $region77: #{hg_stage_forward.2} parent=5 // pred_check
      %p4887 = pneg %p4886
    $region78: #{hg_stage_forward.2} parent=5 // pred_check_branch
      %4889 = sbr.rel (%p4887) target = $region80
    $region79: #{hg_stage_forward.2} parent=5 // pred_region
      %s4890 = ssub.s32 %s19, 2
      // Predicated region
      $region81: #{hg_stage_forward.2} parent=79 // pred_check
        %p4891 = pneg %p326
      $region82: #{hg_stage_forward.2} parent=79 // pred_check_branch
        %4893 = sbr.rel (%p4891) target = $region84
      $region83: #{hg_stage_forward.2} parent=79 // pred_region
        %p4894 = scmp.lt.s32.totalorder %s25, 1
        %s4895 = scalar_select %p4894, %s25, 1
        %s4896 = smul.addr %s4895, 13
        %s4897 = smul.addr %s4896, 4
        %s4898 = scalar_lea.vmem %s13, %s4897
      $region84: #{hg_stage_forward.2} parent=79 // pred_fallthru
        _
    $region80: #{hg_stage_forward.2} parent=5 // pred_fallthru
      _
  $region6: #{hg_stage_forward.2} parent=0 // loop_footer
    %s23 = sadd.s32 1, %s19
  $region7: #{hg_stage_forward.2} parent=0 // loop_footer_branch
    %18 = sbr.rel target = $region3
  $region8: #{hg_stage_forward.2} parent=0 // loop_exit
    _

</llo_original>
